<compile_context>
chip_gen: v7x
topology: tpu7x:2x2x1
jax: 0.10.0
libtpu: 0.0.40
codegen_flags: <defaults>
</compile_context>

<pallas_src>
import functools

import jax
import jax.numpy as jnp
from jax import lax
from jax.experimental import pallas as pl
from jax.experimental.pallas import tpu as pltpu

# ---------------- small synthetic configuration ----------------
V = 50            # vocabulary size
E = 16            # word embedding dim
H = 16            # dim_hidden
L = 8             # sent_max_len (words per sentence)
N_DOCS = 2
N_SENT = 4        # sentences per doc (equal per doc -> packing is a no-op)
NS = N_DOCS * N_SENT
DIM_OUT = 2

VMEM_SPEC = pl.BlockSpec(memory_space=pltpu.MemorySpace.VMEM)


# ======================= fused bidirectional LSTM layer =======================
#
# One layer, both directions, one kernel.  Weights are packed per direction on
# the output axis:  wih chunk = [Wih_fwd | Wih_bwd] (Dc, 8H), whh = [Whh_fwd |
# Whh_bwd] (H, 8H), bias = [b_fwd | b_bwd] (1, 8H).  Rows 0:B of the stacked
# batch are the forward step (input at time t), rows B:2B the backward step
# (input at time T-1-t read via the index_map).  Gate order is (i, f, g, o).

def _bilstm_layer_kernel(*refs, n_chunks, B, Hd, T):
    t = pl.program_id(0)

    x_views = refs[:2 * n_chunks]                 # pairs: (time t view, time T-1-t view)
    wih_refs = refs[2 * n_chunks:3 * n_chunks]
    whh_ref = refs[3 * n_chunks]
    b_ref = refs[3 * n_chunks + 1]
    out_f_ref = refs[3 * n_chunks + 2]            # resident (T, B, Hd)
    out_b_ref = refs[3 * n_chunks + 3]            # resident (T, B, Hd)
    h_sc = refs[3 * n_chunks + 4]                 # (2B, Hd)  rows 0:B fwd, B:2B bwd
    c_sc = refs[3 * n_chunks + 5]                 # (2B, Hd)

    @pl.when(t == 0)
    def _():
        h_sc[...] = jnp.zeros_like(h_sc)
        c_sc[...] = jnp.zeros_like(c_sc)

    # packed (2B, 8H) gate pre-activation: one recurrent matmul + one matmul per
    # input chunk (layer 1: one chunk, layer 2: fwd/bwd chunks of the previous
    # layer -> no explicit concat of the 2H input anywhere).
    g = jnp.dot(h_sc[...], whh_ref[...], preferred_element_type=jnp.float32) + b_ref[...]
    for c in range(n_chunks):
        xf = x_views[2 * c][0]                    # (B, Dc) input at time t
        xb = x_views[2 * c + 1][0]                # (B, Dc) input at time T-1-t
        xcat = jnp.concatenate([xf, xb], axis=0)  # (2B, Dc)
        g = g + jnp.dot(xcat, wih_refs[c][...], preferred_element_type=jnp.float32)

    # fwd rows use the first 4H gate columns, bwd rows the last 4H.
    row = lax.broadcasted_iota(jnp.int32, (2 * B, 1), 0)
    gates = jnp.where(row < B, g[:, :4 * Hd], g[:, 4 * Hd:])   # (2B, 4H)

    i_g = jax.nn.sigmoid(gates[:, 0 * Hd:1 * Hd])
    f_g = jax.nn.sigmoid(gates[:, 1 * Hd:2 * Hd])
    g_g = jnp.tanh(gates[:, 2 * Hd:3 * Hd])
    o_g = jax.nn.sigmoid(gates[:, 3 * Hd:4 * Hd])
    c_new = f_g * c_sc[...] + i_g * g_g
    h_new = o_g * jnp.tanh(c_new)
    c_sc[...] = c_new
    h_sc[...] = h_new

    out_f_ref[t] = h_new[:B]                      # natural time order
    out_b_ref[T - 1 - t] = h_new[B:]              # natural time order


def bilstm_layer(x_chunks, wih_chunks, whh_cat, b_cat):
    """x_chunks: list of (T, B, Dc) time-major arrays. Returns (fwd, bwd) (T,B,H)."""
    T, B = x_chunks[0].shape[0], x_chunks[0].shape[1]
    Hd = whh_cat.shape[0]

    in_specs = []
    args = []
    for xc in x_chunks:
        Dc = xc.shape[2]
        in_specs.append(pl.BlockSpec((1, B, Dc), lambda t: (t, 0, 0)))
        in_specs.append(pl.BlockSpec((1, B, Dc), lambda t, _T=T: (_T - 1 - t, 0, 0)))
        args += [xc, xc]
    for w in wih_chunks:
        in_specs.append(pl.BlockSpec(w.shape, lambda t: (0, 0)))
        args.append(w)
    in_specs += [pl.BlockSpec(whh_cat.shape, lambda t: (0, 0)),
                 pl.BlockSpec(b_cat.shape, lambda t: (0, 0))]
    args += [whh_cat, b_cat]

    out_spec = pl.BlockSpec((T, B, Hd), lambda t: (0, 0, 0))   # resident output
    fwd, bwd = pl.pallas_call(
        functools.partial(_bilstm_layer_kernel,
                          n_chunks=len(x_chunks), B=B, Hd=Hd, T=T),
        grid=(T,),
        in_specs=in_specs,
        out_specs=[out_spec, out_spec],
        out_shape=[jax.ShapeDtypeStruct((T, B, Hd), jnp.float32),
                   jax.ShapeDtypeStruct((T, B, Hd), jnp.float32)],
        scratch_shapes=[pltpu.VMEM((2 * B, Hd), jnp.float32),
                        pltpu.VMEM((2 * B, Hd), jnp.float32)],
        compiler_params=pltpu.CompilerParams(dimension_semantics=("arbitrary",)),
    )(*args)
    return fwd, bwd


def bilstm_stack(x_tm, layers):
    """2-layer bidirectional LSTM, time-major. Returns (fwd, bwd) of last layer."""
    # TODO(synk): pack_padded_sequence variable-length handling simplified to
    # full-length sequences (driver uses sent_len == sent_max_len), so the plain
    # bi-LSTM is exact.
    chunks = [x_tm]
    for lyr in layers:
        fwd, bwd = bilstm_layer(chunks, lyr["wih"], lyr["whh"], lyr["b"])
        chunks = [fwd, bwd]
    return chunks[0], chunks[1]


# ======================= fused graph chains =======================
#
# TODO(synk): MultiplexGCN source was not provided; modeled as a 2-layer
# relation-mean GCN  H_{l+1} = relu(mean_r(A_r H_l) W_l + b_l).  With shared
# per-relation weights the mean folds exactly into one adjacency matmul.

def _word_graph_kernel(cat_ref, mc_ref, mr_ref, adj_ref,
                       wpr_ref, bpr_ref, w1_ref, b1_ref, w2_ref, b2_ref,
                       wo_ref, bo_ref, o_ref, *, n_fixed_rel):
    cat = cat_ref[0]                              # (L, 2H)  [fwd | bwd] lstm feats
    mc = mc_ref[0]                                # (L, 1)
    mr = mr_ref[0]                                # (1, L)
    ablk = adj_ref[0]                             # (R_fixed, L, L)

    # lstm_word_proj + tanh (folded 2H->H projection of [fwd|bwd])
    e = jnp.tanh(jnp.dot(cat, wpr_ref[...], preferred_element_type=jnp.float32)
                 + bpr_ref[...])                  # (L, H)

    # semantic adjacency  D^-1/2 (|E E^T| * mask + I) D^-1/2
    s = jnp.abs(lax.dot_general(e, e, (((1,), (1,)), ((), ())),
                                preferred_element_type=jnp.float32))
    s = s * mc * mr
    n = s.shape[0]
    row = lax.broadcasted_iota(jnp.int32, (n, n), 0)
    col = lax.broadcasted_iota(jnp.int32, (n, n), 1)
    s = s + jnp.where(row == col, jnp.float32(1.0), jnp.float32(0.0))
    d_row = lax.rsqrt(jnp.sum(s, axis=1, keepdims=True))
    d_col = lax.rsqrt(jnp.sum(s, axis=0, keepdims=True))   # == row sums (symmetric)
    a_sem = s * d_row * d_col

    # relation mean folded into one matmul: mean_r(A_r @ H) == (mean_r A_r) @ H
    a_fixed = ablk[0]
    for r in range(1, n_fixed_rel):
        a_fixed = a_fixed + ablk[r]
    a_mean = (a_fixed + a_sem) * jnp.float32(1.0 / (n_fixed_rel + 1))

    h1 = jnp.maximum(jnp.dot(jnp.dot(a_mean, e, preferred_element_type=jnp.float32),
                             w1_ref[...], preferred_element_type=jnp.float32)
                     + b1_ref[...], 0.0)
    h2 = jnp.maximum(jnp.dot(jnp.dot(a_mean, h1, preferred_element_type=jnp.float32),
                             w2_ref[...], preferred_element_type=jnp.float32)
                     + b2_ref[...], 0.0)

    # max-pool over word nodes + proj_word_level + tanh
    # TODO(synk): like the PyTorch reference, the pool runs over all L positions
    # (padded word nodes included); exact here since sent_len == sent_max_len.
    pooled = jnp.max(h2, axis=0, keepdims=True)   # (1, H)
    o_ref[0] = jnp.tanh(jnp.dot(pooled, wo_ref[...], preferred_element_type=jnp.float32)
                        + bo_ref[...])


def _const_spec(a):
    nd = a.ndim
    return pl.BlockSpec(a.shape, lambda i, _nd=nd: (0,) * _nd)


def word_graph_block(cat_feats, mask_col, mask_row, adjs, p):
    """cat_feats (NS,L,2H), adjs (NS,R,L,L) -> sentence embeddings (NS,1,H)."""
    B, Ln, D2 = cat_feats.shape
    R = adjs.shape[1]
    Hd = p["w1"].shape[1]
    return pl.pallas_call(
        functools.partial(_word_graph_kernel, n_fixed_rel=R),
        grid=(B,),
        in_specs=[
            pl.BlockSpec((1, Ln, D2), lambda i: (i, 0, 0)),
            pl.BlockSpec((1, Ln, 1), lambda i: (i, 0, 0)),
            pl.BlockSpec((1, 1, Ln), lambda i: (i, 0, 0)),
            pl.BlockSpec((1, R, Ln, Ln), lambda i: (i, 0, 0, 0)),
            _const_spec(p["proj_w"]), _const_spec(p["proj_b"]),
            _const_spec(p["w1"]), _const_spec(p["b1"]),
            _const_spec(p["w2"]), _const_spec(p["b2"]),
            _const_spec(p["out_w"]), _const_spec(p["out_b"]),
        ],
        out_specs=pl.BlockSpec((1, 1, Hd), lambda i: (i, 0, 0)),
        out_shape=jax.ShapeDtypeStruct((B, 1, Hd), jnp.float32),
        compiler_params=pltpu.CompilerParams(dimension_semantics=("parallel",)),
    )(cat_feats, mask_col, mask_row, adjs,
      p["proj_w"], p["proj_b"], p["w1"], p["b1"], p["w2"], p["b2"],
      p["out_w"], p["out_b"])


def _sent_graph_kernel(cat_ref, adj_ref, wpr_ref, bpr_ref,
                       w1_ref, b1_ref, w2_ref, b2_ref, wo_ref, bo_ref,
                       feat_ref, doc_ref):
    cat = cat_ref[0]                              # (S, 2H)
    a_fixed = adj_ref[0]                          # (S, S)

    # lstm_proj + tanh
    e = jnp.tanh(jnp.dot(cat, wpr_ref[...], preferred_element_type=jnp.float32)
                 + bpr_ref[...])                  # (S, H)

    # semantic adjacency (no mask at sentence level)
    s = jnp.abs(lax.dot_general(e, e, (((1,), (1,)), ((), ())),
                                preferred_element_type=jnp.float32))
    n = s.shape[0]
    row = lax.broadcasted_iota(jnp.int32, (n, n), 0)
    col = lax.broadcasted_iota(jnp.int32, (n, n), 1)
    s = s + jnp.where(row == col, jnp.float32(1.0), jnp.float32(0.0))
    d_row = lax.rsqrt(jnp.sum(s, axis=1, keepdims=True))
    d_col = lax.rsqrt(jnp.sum(s, axis=0, keepdims=True))
    a_sem = s * d_row * d_col

    a_mean = (a_fixed + a_sem) * jnp.float32(0.5)
    h1 = jnp.maximum(jnp.dot(jnp.dot(a_mean, e, preferred_element_type=jnp.float32),
                             w1_ref[...], preferred_element_type=jnp.float32)
                     + b1_ref[...], 0.0)
    h2 = jnp.maximum(jnp.dot(jnp.dot(a_mean, h1, preferred_element_type=jnp.float32),
                             w2_ref[...], preferred_element_type=jnp.float32)
                     + b2_ref[...], 0.0)

    feat_ref[0] = h2                              # sentence graph feats (pre-projection)
    pooled = jnp.max(h2, axis=0, keepdims=True)   # (1, H)
    doc_ref[0] = jnp.tanh(jnp.dot(pooled, wo_ref[...], preferred_element_type=jnp.float32)
                          + bo_ref[...])          # proj_sent_level + tanh


def sent_graph_block(cat_feats, adjs_sents, p):
    """cat_feats (D,S,2H), adjs_sents (D,S,S) -> (graph feats (D,S,H), doc emb (D,1,H))."""
    B, S, D2 = cat_feats.shape
    Hd = p["w1"].shape[1]
    return pl.pallas_call(
        _sent_graph_kernel,
        grid=(B,),
        in_specs=[
            pl.BlockSpec((1, S, D2), lambda i: (i, 0, 0)),
            pl.BlockSpec((1, S, S), lambda i: (i, 0, 0)),
            _const_spec(p["proj_w"]), _const_spec(p["proj_b"]),
            _const_spec(p["w1"]), _const_spec(p["b1"]),
            _const_spec(p["w2"]), _const_spec(p["b2"]),
            _const_spec(p["out_w"]), _const_spec(p["out_b"]),
        ],
        out_specs=[pl.BlockSpec((1, S, Hd), lambda i: (i, 0, 0)),
                   pl.BlockSpec((1, 1, Hd), lambda i: (i, 0, 0))],
        out_shape=[jax.ShapeDtypeStruct((B, S, Hd), jnp.float32),
                   jax.ShapeDtypeStruct((B, 1, Hd), jnp.float32)],
        compiler_params=pltpu.CompilerParams(dimension_semantics=("parallel",)),
    )(cat_feats, adjs_sents,
      p["proj_w"], p["proj_b"], p["w1"], p["b1"], p["w2"], p["b2"],
      p["out_w"], p["out_b"])


# ======================= sentence selector head =======================

def _selector_kernel(x2_ref, d_ref, s_ref, wr_ref, br_ref,
                     wp1_ref, wp2_ref, wp3_ref, bp_ref, wo_ref, bo_ref, o_ref):
    # feats = tanh(reading(sent_emb2))
    f = jnp.tanh(jnp.dot(x2_ref[...], wr_ref[...],
                         preferred_element_type=jnp.float32) + br_ref[...])
    # cat([feats, doc_feats, sent_emb]) @ W_post  ==  f@Wp1 + d@Wp2 + s@Wp3
    h = jnp.tanh(jnp.dot(f, wp1_ref[...], preferred_element_type=jnp.float32)
                 + jnp.dot(d_ref[...], wp2_ref[...], preferred_element_type=jnp.float32)
                 + jnp.dot(s_ref[...], wp3_ref[...], preferred_element_type=jnp.float32)
                 + bp_ref[...])
    o_ref[...] = jnp.dot(h, wo_ref[...], preferred_element_type=jnp.float32) + bo_ref[...]


def sentence_selector(sent_emb2, doc_feats, sent_emb, p):
    n = sent_emb2.shape[0]
    return pl.pallas_call(
        _selector_kernel,
        out_shape=jax.ShapeDtypeStruct((n, DIM_OUT), jnp.float32),
        in_specs=[VMEM_SPEC] * 11,
        out_specs=VMEM_SPEC,
    )(sent_emb2, doc_feats, sent_emb,
      p["reading_w"], p["reading_b"],
      p["post_w1"], p["post_w2"], p["post_w3"], p["post_b"],
      p["out_w"], p["out_b"])


# ======================= parameters =======================

def init_params(key):
    ks = iter(jax.random.split(key, 64))

    def mat(din, dout, scale=None):
        s = (1.0 / jnp.sqrt(float(din))) if scale is None else scale
        return jax.random.normal(next(ks), (din, dout), jnp.float32) * s

    def vec(dout):
        return jax.random.normal(next(ks), (1, dout), jnp.float32) * 0.01

    def bilstm_lyr(chunk_dims, hd):
        # Packed bi-directional weights: columns 0:4H are fwd (i,f,g,o) gates,
        # 4H:8H are bwd gates.  One wih chunk per input feature chunk.
        return {"wih": [mat(dc, 8 * hd) for dc in chunk_dims],
                "whh": mat(hd, 8 * hd),
                "b": vec(8 * hd)}

    p = {}
    # TODO(synk): pretrained embedding / YAML config loading replaced by a
    # deterministic random embedding table.
    p["emb_table"] = jax.random.normal(next(ks), (V, E), jnp.float32) * 0.1
    p["lstm_word"] = [bilstm_lyr([E], H), bilstm_lyr([H, H], H)]
    p["lstm_sent"] = [bilstm_lyr([H], H), bilstm_lyr([H, H], H)]
    p["word_graph"] = {
        "proj_w": mat(2 * H, H), "proj_b": vec(H),     # lstm_word_proj
        "w1": mat(H, H), "b1": vec(H),                 # mgcn layer 1
        "w2": mat(H, H), "b2": vec(H),                 # mgcn layer 2
        "out_w": mat(H, H), "out_b": vec(H),           # proj_word_level
    }
    p["sent_graph"] = {
        "proj_w": mat(2 * H, H), "proj_b": vec(H),     # lstm_proj
        "w1": mat(H, H), "b1": vec(H),                 # mgcn_sent layer 1
        "w2": mat(H, H), "b2": vec(H),                 # mgcn_sent layer 2
        "out_w": mat(H, H), "out_b": vec(H),           # proj_sent_level
    }
    scale3 = 1.0 / jnp.sqrt(float(3 * H))
    p["selector"] = {
        "reading_w": mat(H, H), "reading_b": vec(H),
        "post_w1": mat(H, H, scale3), "post_w2": mat(H, H, scale3),
        "post_w3": mat(H, H, scale3), "post_b": vec(H),
        "out_w": mat(H, DIM_OUT), "out_b": vec(DIM_OUT),
    }
    return p


# ======================= forward pass =======================

def multigras_forward(params, doc_input, sent_len_list, adjs, n_sent_list, adjs_sents):
    # ---------------- word block ----------------
    # gather embeddings directly time-major (L, NS, E): no float transpose needed
    emb_tm = params["emb_table"][doc_input.T]
    wf, wb = bilstm_stack(emb_tm, params["lstm_word"])                 # (L, NS, H) x2
    cat_w = jnp.transpose(jnp.concatenate([wf, wb], axis=-1), (1, 0, 2))  # (NS, L, 2H)

    pos = jnp.arange(L)[None, :]
    mask = (pos < sent_len_list[:, None]).astype(jnp.float32)          # (NS, L)
    sent_emb = word_graph_block(cat_w, mask[:, :, None], mask[:, None, :],
                                adjs, params["word_graph"])            # (NS, 1, H)
    sent_emb = sent_emb.reshape(NS, H)

    # ---------------- sentence block ----------------
    sent_tm = jnp.transpose(sent_emb.reshape(N_DOCS, N_SENT, H), (1, 0, 2))  # (S, D, H)
    sf, sb = bilstm_stack(sent_tm, params["lstm_sent"])                # (S, N_DOCS, H) x2
    cat_s = jnp.transpose(jnp.concatenate([sf, sb], axis=-1), (1, 0, 2))  # (N_DOCS, S, 2H)
    sent_emb2, doc_emb = sent_graph_block(cat_s, adjs_sents, params["sent_graph"])
    sent_emb2 = sent_emb2.reshape(NS, H)
    doc_emb = doc_emb.reshape(N_DOCS, H)

    # ---------------- sentence selector ----------------
    doc_feats = jnp.repeat(doc_emb, n_sent_list, axis=0, total_repeat_length=NS)  # (NS, H)
    out = sentence_selector(sent_emb2, doc_feats, sent_emb, params["selector"])   # (NS, 2)
    return out


# ======================= driver =======================

if __name__ == "__main__":
    key = jax.random.PRNGKey(0)
    kp, kd, ka, kas = jax.random.split(key, 4)

    params = init_params(kp)
    doc_input = jax.random.randint(kd, (NS, L), 0, V, dtype=jnp.int32)
    sent_len_list = jnp.full((NS,), L, dtype=jnp.int32)
    adjs = jax.random.uniform(ka, (NS, 2, L, L), jnp.float32)
    n_sent_list = jnp.full((N_DOCS,), N_SENT, dtype=jnp.int32)
    adjs_sents = jax.random.uniform(kas, (N_DOCS, N_SENT, N_SENT), jnp.float32)

    fwd_fn = jax.jit(multigras_forward)
    out = fwd_fn(params, doc_input, sent_len_list, adjs, n_sent_list, adjs_sents)
    out = jax.block_until_ready(out)
    assert out.shape == (NS, DIM_OUT)
    assert bool(jnp.all(jnp.isfinite(out)))
    print("KERNEL_OK")
</pallas_src>

<mosaic_0001>
module attributes {stable_mosaic.version = 11 : i64} {
  func.func @_bilstm_layer_kernel(%arg0: i32, %arg1: memref<1x8x16xf32, #tpu.memory_space<vmem>>, %arg2: memref<1x8x16xf32, #tpu.memory_space<vmem>>, %arg3: memref<1x8x16xf32, #tpu.memory_space<vmem>>, %arg4: memref<1x8x16xf32, #tpu.memory_space<vmem>>, %arg5: memref<16x128xf32, #tpu.memory_space<vmem>>, %arg6: memref<16x128xf32, #tpu.memory_space<vmem>>, %arg7: memref<16x128xf32, #tpu.memory_space<vmem>>, %arg8: memref<1x128xf32, #tpu.memory_space<vmem>>, %arg9: memref<8x8x16xf32, #tpu.memory_space<vmem>>, %arg10: memref<8x8x16xf32, #tpu.memory_space<vmem>>, %arg11: memref<16x16xf32, #tpu.memory_space<vmem>>, %arg12: memref<16x16xf32, #tpu.memory_space<vmem>>) attributes {dimension_semantics = [#tpu.dimension_semantics<arbitrary>], iteration_bounds = array<i64: 8>, scalar_prefetch = 0 : i64, scratch_operands = 2 : i64, tpu.core_type = #tpu.core_type<tc>, window_params = [{transform_indices = @transform_0, window_bounds = array<i64: 1, 8, 16>}, {transform_indices = @transform_1, window_bounds = array<i64: 1, 8, 16>}, {transform_indices = @transform_2, window_bounds = array<i64: 1, 8, 16>}, {transform_indices = @transform_3, window_bounds = array<i64: 1, 8, 16>}, {pipeline_mode = #tpu.pipeline_mode<synchronous>, transform_indices = @transform_4, window_bounds = array<i64: 16, 128>}, {pipeline_mode = #tpu.pipeline_mode<synchronous>, transform_indices = @transform_5, window_bounds = array<i64: 16, 128>}, {pipeline_mode = #tpu.pipeline_mode<synchronous>, transform_indices = @transform_6, window_bounds = array<i64: 16, 128>}, {pipeline_mode = #tpu.pipeline_mode<synchronous>, transform_indices = @transform_7, window_bounds = array<i64: 1, 128>}, {pipeline_mode = #tpu.pipeline_mode<synchronous>, transform_indices = @transform_8, window_bounds = array<i64: 8, 8, 16>}, {pipeline_mode = #tpu.pipeline_mode<synchronous>, transform_indices = @transform_9, window_bounds = array<i64: 8, 8, 16>}]} {
    %c0_i32 = arith.constant 0 : i32
    %0 = arith.cmpi eq, %arg0, %c0_i32 : i32
    %1 = arith.extui %0 : i1 to i32
    %c0_i32_0 = arith.constant 0 : i32
    %2 = arith.cmpi ne, %1, %c0_i32_0 : i32
    scf.if %2 {
      %cst_37 = arith.constant 0.000000e+00 : f32
      %72 = vector.broadcast %cst_37 : f32 to vector<16x16xf32>
      %c0_38 = arith.constant 0 : index
      %c0_39 = arith.constant 0 : index
      %73 = vector.load %arg11[%c0_38, %c0_39] : memref<16x16xf32, #tpu.memory_space<vmem>>, vector<16x16xf32>
      tpu.vector_store %arg11[%c0_38, %c0_39], %72 {strides = array<i32>} : memref<16x16xf32, #tpu.memory_space<vmem>>, vector<16x16xf32>,
      %cst_40 = arith.constant 0.000000e+00 : f32
      %74 = vector.broadcast %cst_40 : f32 to vector<16x16xf32>
      %c0_41 = arith.constant 0 : index
      %c0_42 = arith.constant 0 : index
      %75 = vector.load %arg12[%c0_41, %c0_42] : memref<16x16xf32, #tpu.memory_space<vmem>>, vector<16x16xf32>
      tpu.vector_store %arg12[%c0_41, %c0_42], %74 {strides = array<i32>} : memref<16x16xf32, #tpu.memory_space<vmem>>, vector<16x16xf32>,
    } else {
    }
    %c0 = arith.constant 0 : index
    %c0_1 = arith.constant 0 : index
    %3 = vector.load %arg11[%c0, %c0_1] : memref<16x16xf32, #tpu.memory_space<vmem>>, vector<16x16xf32>
    %c0_2 = arith.constant 0 : index
    %c0_3 = arith.constant 0 : index
    %4 = vector.load %arg7[%c0_2, %c0_3] : memref<16x128xf32, #tpu.memory_space<vmem>>, vector<16x128xf32>
    %cst = arith.constant dense<0.000000e+00> : vector<16x128xf32>
    %5 = tpu.matmul %3, %4, %cst {dimension_numbers = #tpu.dot_dimension_numbers<[1], [0], [0], [1], [0, 0, 1, 1], [], []>} : vector<16x16xf32>, vector<16x128xf32>, vector<16x128xf32> -> vector<16x128xf32>
    %c0_4 = arith.constant 0 : index
    %c0_5 = arith.constant 0 : index
    %6 = vector.load %arg8[%c0_4, %c0_5] : memref<1x128xf32, #tpu.memory_space<vmem>>, vector<1x128xf32>
    %7 = vector.broadcast %6 : vector<1x128xf32> to vector<16x128xf32>
    %8 = arith.addf %5, %7 : vector<16x128xf32>
    %c0_6 = arith.constant 0 : index
    %c0_7 = arith.constant 0 : index
    %c0_8 = arith.constant 0 : index
    %9 = vector.load %arg1[%c0_6, %c0_7, %c0_8] : memref<1x8x16xf32, #tpu.memory_space<vmem>>, vector<1x8x16xf32>
    %10 = vector.shape_cast %9 : vector<1x8x16xf32> to vector<8x16xf32>
    %c0_9 = arith.constant 0 : index
    %c0_10 = arith.constant 0 : index
    %c0_11 = arith.constant 0 : index
    %11 = vector.load %arg2[%c0_9, %c0_10, %c0_11] : memref<1x8x16xf32, #tpu.memory_space<vmem>>, vector<1x8x16xf32>
    %12 = vector.shape_cast %11 : vector<1x8x16xf32> to vector<8x16xf32>
    %13 = tpu.concatenate %10, %12 in 0 : vector<8x16xf32>, vector<8x16xf32> -> vector<16x16xf32>
    %c0_12 = arith.constant 0 : index
    %c0_13 = arith.constant 0 : index
    %14 = vector.load %arg5[%c0_12, %c0_13] : memref<16x128xf32, #tpu.memory_space<vmem>>, vector<16x128xf32>
    %cst_14 = arith.constant dense<0.000000e+00> : vector<16x128xf32>
    %15 = tpu.matmul %13, %14, %cst_14 {dimension_numbers = #tpu.dot_dimension_numbers<[1], [0], [0], [1], [0, 0, 1, 1], [], []>} : vector<16x16xf32>, vector<16x128xf32>, vector<16x128xf32> -> vector<16x128xf32>
    %16 = arith.addf %8, %15 : vector<16x128xf32>
    %c0_15 = arith.constant 0 : index
    %c0_16 = arith.constant 0 : index
    %c0_17 = arith.constant 0 : index
    %17 = vector.load %arg3[%c0_15, %c0_16, %c0_17] : memref<1x8x16xf32, #tpu.memory_space<vmem>>, vector<1x8x16xf32>
    %18 = vector.shape_cast %17 : vector<1x8x16xf32> to vector<8x16xf32>
    %c0_18 = arith.constant 0 : index
    %c0_19 = arith.constant 0 : index
    %c0_20 = arith.constant 0 : index
    %19 = vector.load %arg4[%c0_18, %c0_19, %c0_20] : memref<1x8x16xf32, #tpu.memory_space<vmem>>, vector<1x8x16xf32>
    %20 = vector.shape_cast %19 : vector<1x8x16xf32> to vector<8x16xf32>
    %21 = tpu.concatenate %18, %20 in 0 : vector<8x16xf32>, vector<8x16xf32> -> vector<16x16xf32>
    %c0_21 = arith.constant 0 : index
    %c0_22 = arith.constant 0 : index
    %22 = vector.load %arg6[%c0_21, %c0_22] : memref<16x128xf32, #tpu.memory_space<vmem>>, vector<16x128xf32>
    %cst_23 = arith.constant dense<0.000000e+00> : vector<16x128xf32>
    %23 = tpu.matmul %21, %22, %cst_23 {dimension_numbers = #tpu.dot_dimension_numbers<[1], [0], [0], [1], [0, 0, 1, 1], [], []>} : vector<16x16xf32>, vector<16x128xf32>, vector<16x128xf32> -> vector<16x128xf32>
    %24 = arith.addf %16, %23 : vector<16x128xf32>
    %25 = tpu.iota {dimensions = array<i32: 0>} : vector<16x1xi32>
    %c8_i32 = arith.constant 8 : i32
    %26 = vector.broadcast %c8_i32 : i32 to vector<16x1xi32>
    %27 = arith.cmpi slt, %25, %26 : vector<16x1xi32>
    %28 = vector.extract_strided_slice %24 {offsets = [0, 0], sizes = [16, 64], strides = [1, 1]} : vector<16x128xf32> to vector<16x64xf32>
    %29 = vector.extract_strided_slice %24 {offsets = [0, 64], sizes = [16, 64], strides = [1, 1]} : vector<16x128xf32> to vector<16x64xf32>
    %30 = vector.shape_cast %27 : vector<16x1xi1> to vector<16x1xi1>
    %31 = vector.broadcast %30 : vector<16x1xi1> to vector<16x64xi1>
    %32 = arith.select %31, %28, %29 : vector<16x64xi1>, vector<16x64xf32>
    %33 = vector.extract_strided_slice %32 {offsets = [0, 0], sizes = [16, 16], strides = [1, 1]} : vector<16x64xf32> to vector<16x16xf32>
    %34 = arith.negf %33 : vector<16x16xf32>
    %35 = math.exp %34 : vector<16x16xf32>
    %cst_24 = arith.constant 1.000000e+00 : f32
    %36 = vector.broadcast %cst_24 : f32 to vector<16x16xf32>
    %37 = arith.addf %36, %35 : vector<16x16xf32>
    %38 = arith.divf %36, %37 : vector<16x16xf32>
    %39 = vector.extract_strided_slice %32 {offsets = [0, 16], sizes = [16, 16], strides = [1, 1]} : vector<16x64xf32> to vector<16x16xf32>
    %40 = arith.negf %39 : vector<16x16xf32>
    %41 = math.exp %40 : vector<16x16xf32>
    %cst_25 = arith.constant 1.000000e+00 : f32
    %42 = vector.broadcast %cst_25 : f32 to vector<16x16xf32>
    %43 = arith.addf %42, %41 : vector<16x16xf32>
    %44 = arith.divf %42, %43 : vector<16x16xf32>
    %45 = vector.extract_strided_slice %32 {offsets = [0, 32], sizes = [16, 16], strides = [1, 1]} : vector<16x64xf32> to vector<16x16xf32>
    %46 = math.tanh %45 : vector<16x16xf32>
    %47 = vector.extract_strided_slice %32 {offsets = [0, 48], sizes = [16, 16], strides = [1, 1]} : vector<16x64xf32> to vector<16x16xf32>
    %48 = arith.negf %47 : vector<16x16xf32>
    %49 = math.exp %48 : vector<16x16xf32>
    %cst_26 = arith.constant 1.000000e+00 : f32
    %50 = vector.broadcast %cst_26 : f32 to vector<16x16xf32>
    %51 = arith.addf %50, %49 : vector<16x16xf32>
    %52 = arith.divf %50, %51 : vector<16x16xf32>
    %c0_27 = arith.constant 0 : index
    %c0_28 = arith.constant 0 : index
    %53 = vector.load %arg12[%c0_27, %c0_28] : memref<16x16xf32, #tpu.memory_space<vmem>>, vector<16x16xf32>
    %54 = arith.mulf %44, %53 : vector<16x16xf32>
    %55 = arith.mulf %38, %46 : vector<16x16xf32>
    %56 = arith.addf %54, %55 : vector<16x16xf32>
    %57 = math.tanh %56 : vector<16x16xf32>
    %58 = arith.mulf %52, %57 : vector<16x16xf32>
    %c0_29 = arith.constant 0 : index
    %c0_30 = arith.constant 0 : index
    %59 = vector.load %arg12[%c0_29, %c0_30] : memref<16x16xf32, #tpu.memory_space<vmem>>, vector<16x16xf32>
    tpu.vector_store %arg12[%c0_29, %c0_30], %56 {strides = array<i32>} : memref<16x16xf32, #tpu.memory_space<vmem>>, vector<16x16xf32>,
    %c0_31 = arith.constant 0 : index
    %c0_32 = arith.constant 0 : index
    %60 = vector.load %arg11[%c0_31, %c0_32] : memref<16x16xf32, #tpu.memory_space<vmem>>, vector<16x16xf32>
    tpu.vector_store %arg11[%c0_31, %c0_32], %58 {strides = array<i32>} : memref<16x16xf32, #tpu.memory_space<vmem>>, vector<16x16xf32>,
    %61 = vector.extract_strided_slice %58 {offsets = [0, 0], sizes = [8, 16], strides = [1, 1]} : vector<16x16xf32> to vector<8x16xf32>
    %62 = arith.index_cast %arg0 : i32 to index
    %c0_33 = arith.constant 0 : index
    %c0_34 = arith.constant 0 : index
    %63 = vector.load %arg9[%62, %c0_33, %c0_34] : memref<8x8x16xf32, #tpu.memory_space<vmem>>, vector<1x8x16xf32>
    %64 = vector.shape_cast %63 : vector<1x8x16xf32> to vector<8x16xf32>
    %65 = vector.shape_cast %61 : vector<8x16xf32> to vector<1x8x16xf32>
    tpu.vector_store %arg9[%62, %c0_33, %c0_34], %65 {strides = array<i32>} : memref<8x8x16xf32, #tpu.memory_space<vmem>>, vector<1x8x16xf32>,
    %66 = vector.extract_strided_slice %58 {offsets = [8, 0], sizes = [8, 16], strides = [1, 1]} : vector<16x16xf32> to vector<8x16xf32>
    %c7_i32 = arith.constant 7 : i32
    %67 = arith.subi %c7_i32, %arg0 : i32
    %68 = arith.index_cast %67 : i32 to index
    %c0_35 = arith.constant 0 : index
    %c0_36 = arith.constant 0 : index
    %69 = vector.load %arg10[%68, %c0_35, %c0_36] : memref<8x8x16xf32, #tpu.memory_space<vmem>>, vector<1x8x16xf32>
    %70 = vector.shape_cast %69 : vector<1x8x16xf32> to vector<8x16xf32>
    %71 = vector.shape_cast %66 : vector<8x16xf32> to vector<1x8x16xf32>
    tpu.vector_store %arg10[%68, %c0_35, %c0_36], %71 {strides = array<i32>} : memref<8x8x16xf32, #tpu.memory_space<vmem>>, vector<1x8x16xf32>,
    return
  }
  func.func @transform_0(%arg0: i32) -> (i32, i32, i32) {
    %c0_i32 = arith.constant 0 : i32
    %c0_i32_0 = arith.constant 0 : i32
    %c0_i32_1 = arith.constant 0 : i32
    return %arg0, %c0_i32, %c0_i32_0 : i32, i32, i32
  }
  func.func @transform_1(%arg0: i32) -> (i32, i32, i32) {
    %c7_i32 = arith.constant 7 : i32
    %0 = arith.subi %c7_i32, %arg0 : i32
    %c0_i32 = arith.constant 0 : i32
    %c0_i32_0 = arith.constant 0 : i32
    %c0_i32_1 = arith.constant 0 : i32
    return %0, %c0_i32, %c0_i32_0 : i32, i32, i32
  }
  func.func @transform_2(%arg0: i32) -> (i32, i32, i32) {
    %c0_i32 = arith.constant 0 : i32
    %c0_i32_0 = arith.constant 0 : i32
    %c0_i32_1 = arith.constant 0 : i32
    return %arg0, %c0_i32, %c0_i32_0 : i32, i32, i32
  }
  func.func @transform_3(%arg0: i32) -> (i32, i32, i32) {
    %c7_i32 = arith.constant 7 : i32
    %0 = arith.subi %c7_i32, %arg0 : i32
    %c0_i32 = arith.constant 0 : i32
    %c0_i32_0 = arith.constant 0 : i32
    %c0_i32_1 = arith.constant 0 : i32
    return %0, %c0_i32, %c0_i32_0 : i32, i32, i32
  }
  func.func @transform_4(%arg0: i32) -> (i32, i32) {
    %c0_i32 = arith.constant 0 : i32
    %c0_i32_0 = arith.constant 0 : i32
    %c0_i32_1 = arith.constant 0 : i32
    return %c0_i32, %c0_i32_0 : i32, i32
  }
  func.func @transform_5(%arg0: i32) -> (i32, i32) {
    %c0_i32 = arith.constant 0 : i32
    %c0_i32_0 = arith.constant 0 : i32
    %c0_i32_1 = arith.constant 0 : i32
    return %c0_i32, %c0_i32_0 : i32, i32
  }
  func.func @transform_6(%arg0: i32) -> (i32, i32) {
    %c0_i32 = arith.constant 0 : i32
    %c0_i32_0 = arith.constant 0 : i32
    %c0_i32_1 = arith.constant 0 : i32
    return %c0_i32, %c0_i32_0 : i32, i32
  }
  func.func @transform_7(%arg0: i32) -> (i32, i32) {
    %c0_i32 = arith.constant 0 : i32
    %c0_i32_0 = arith.constant 0 : i32
    %c0_i32_1 = arith.constant 0 : i32
    return %c0_i32, %c0_i32_0 : i32, i32
  }
  func.func @transform_8(%arg0: i32) -> (i32, i32, i32) {
    %c0_i32 = arith.constant 0 : i32
    %c0_i32_0 = arith.constant 0 : i32
    %c0_i32_1 = arith.constant 0 : i32
    %c0_i32_2 = arith.constant 0 : i32
    return %c0_i32, %c0_i32_0, %c0_i32_1 : i32, i32, i32
  }
  func.func @transform_9(%arg0: i32) -> (i32, i32, i32) {
    %c0_i32 = arith.constant 0 : i32
    %c0_i32_0 = arith.constant 0 : i32
    %c0_i32_1 = arith.constant 0 : i32
    %c0_i32_2 = arith.constant 0 : i32
    return %c0_i32, %c0_i32_0, %c0_i32_1 : i32, i32, i32
  }
}

module attributes {stable_mosaic.version = 11 : i64} {
  func.func @_bilstm_layer_kernel(%arg0: i32, %arg1: memref<1x8x16xf32, #tpu.memory_space<vmem>>, %arg2: memref<1x8x16xf32, #tpu.memory_space<vmem>>, %arg3: memref<16x128xf32, #tpu.memory_space<vmem>>, %arg4: memref<16x128xf32, #tpu.memory_space<vmem>>, %arg5: memref<1x128xf32, #tpu.memory_space<vmem>>, %arg6: memref<8x8x16xf32, #tpu.memory_space<vmem>>, %arg7: memref<8x8x16xf32, #tpu.memory_space<vmem>>, %arg8: memref<16x16xf32, #tpu.memory_space<vmem>>, %arg9: memref<16x16xf32, #tpu.memory_space<vmem>>) attributes {dimension_semantics = [#tpu.dimension_semantics<arbitrary>], iteration_bounds = array<i64: 8>, scalar_prefetch = 0 : i64, scratch_operands = 2 : i64, tpu.core_type = #tpu.core_type<tc>, window_params = [{transform_indices = @transform_0, window_bounds = array<i64: 1, 8, 16>}, {transform_indices = @transform_1, window_bounds = array<i64: 1, 8, 16>}, {pipeline_mode = #tpu.pipeline_mode<synchronous>, transform_indices = @transform_2, window_bounds = array<i64: 16, 128>}, {pipeline_mode = #tpu.pipeline_mode<synchronous>, transform_indices = @transform_3, window_bounds = array<i64: 16, 128>}, {pipeline_mode = #tpu.pipeline_mode<synchronous>, transform_indices = @transform_4, window_bounds = array<i64: 1, 128>}, {pipeline_mode = #tpu.pipeline_mode<synchronous>, transform_indices = @transform_5, window_bounds = array<i64: 8, 8, 16>}, {pipeline_mode = #tpu.pipeline_mode<synchronous>, transform_indices = @transform_6, window_bounds = array<i64: 8, 8, 16>}]} {
    %c0_i32 = arith.constant 0 : i32
    %0 = arith.cmpi eq, %arg0, %c0_i32 : i32
    %1 = arith.extui %0 : i1 to i32
    %c0_i32_0 = arith.constant 0 : i32
    %2 = arith.cmpi ne, %1, %c0_i32_0 : i32
    scf.if %2 {
      %cst_28 = arith.constant 0.000000e+00 : f32
      %64 = vector.broadcast %cst_28 : f32 to vector<16x16xf32>
      %c0_29 = arith.constant 0 : index
      %c0_30 = arith.constant 0 : index
      %65 = vector.load %arg8[%c0_29, %c0_30] : memref<16x16xf32, #tpu.memory_space<vmem>>, vector<16x16xf32>
      tpu.vector_store %arg8[%c0_29, %c0_30], %64 {strides = array<i32>} : memref<16x16xf32, #tpu.memory_space<vmem>>, vector<16x16xf32>,
      %cst_31 = arith.constant 0.000000e+00 : f32
      %66 = vector.broadcast %cst_31 : f32 to vector<16x16xf32>
      %c0_32 = arith.constant 0 : index
      %c0_33 = arith.constant 0 : index
      %67 = vector.load %arg9[%c0_32, %c0_33] : memref<16x16xf32, #tpu.memory_space<vmem>>, vector<16x16xf32>
      tpu.vector_store %arg9[%c0_32, %c0_33], %66 {strides = array<i32>} : memref<16x16xf32, #tpu.memory_space<vmem>>, vector<16x16xf32>,
    } else {
    }
    %c0 = arith.constant 0 : index
    %c0_1 = arith.constant 0 : index
    %3 = vector.load %arg8[%c0, %c0_1] : memref<16x16xf32, #tpu.memory_space<vmem>>, vector<16x16xf32>
    %c0_2 = arith.constant 0 : index
    %c0_3 = arith.constant 0 : index
    %4 = vector.load %arg4[%c0_2, %c0_3] : memref<16x128xf32, #tpu.memory_space<vmem>>, vector<16x128xf32>
    %cst = arith.constant dense<0.000000e+00> : vector<16x128xf32>
    %5 = tpu.matmul %3, %4, %cst {dimension_numbers = #tpu.dot_dimension_numbers<[1], [0], [0], [1], [0, 0, 1, 1], [], []>} : vector<16x16xf32>, vector<16x128xf32>, vector<16x128xf32> -> vector<16x128xf32>
    %c0_4 = arith.constant 0 : index
    %c0_5 = arith.constant 0 : index
    %6 = vector.load %arg5[%c0_4, %c0_5] : memref<1x128xf32, #tpu.memory_space<vmem>>, vector<1x128xf32>
    %7 = vector.broadcast %6 : vector<1x128xf32> to vector<16x128xf32>
    %8 = arith.addf %5, %7 : vector<16x128xf32>
    %c0_6 = arith.constant 0 : index
    %c0_7 = arith.constant 0 : index
    %c0_8 = arith.constant 0 : index
    %9 = vector.load %arg1[%c0_6, %c0_7, %c0_8] : memref<1x8x16xf32, #tpu.memory_space<vmem>>, vector<1x8x16xf32>
    %10 = vector.shape_cast %9 : vector<1x8x16xf32> to vector<8x16xf32>
    %c0_9 = arith.constant 0 : index
    %c0_10 = arith.constant 0 : index
    %c0_11 = arith.constant 0 : index
    %11 = vector.load %arg2[%c0_9, %c0_10, %c0_11] : memref<1x8x16xf32, #tpu.memory_space<vmem>>, vector<1x8x16xf32>
    %12 = vector.shape_cast %11 : vector<1x8x16xf32> to vector<8x16xf32>
    %13 = tpu.concatenate %10, %12 in 0 : vector<8x16xf32>, vector<8x16xf32> -> vector<16x16xf32>
    %c0_12 = arith.constant 0 : index
    %c0_13 = arith.constant 0 : index
    %14 = vector.load %arg3[%c0_12, %c0_13] : memref<16x128xf32, #tpu.memory_space<vmem>>, vector<16x128xf32>
    %cst_14 = arith.constant dense<0.000000e+00> : vector<16x128xf32>
    %15 = tpu.matmul %13, %14, %cst_14 {dimension_numbers = #tpu.dot_dimension_numbers<[1], [0], [0], [1], [0, 0, 1, 1], [], []>} : vector<16x16xf32>, vector<16x128xf32>, vector<16x128xf32> -> vector<16x128xf32>
    %16 = arith.addf %8, %15 : vector<16x128xf32>
    %17 = tpu.iota {dimensions = array<i32: 0>} : vector<16x1xi32>
    %c8_i32 = arith.constant 8 : i32
    %18 = vector.broadcast %c8_i32 : i32 to vector<16x1xi32>
    %19 = arith.cmpi slt, %17, %18 : vector<16x1xi32>
    %20 = vector.extract_strided_slice %16 {offsets = [0, 0], sizes = [16, 64], strides = [1, 1]} : vector<16x128xf32> to vector<16x64xf32>
    %21 = vector.extract_strided_slice %16 {offsets = [0, 64], sizes = [16, 64], strides = [1, 1]} : vector<16x128xf32> to vector<16x64xf32>
    %22 = vector.shape_cast %19 : vector<16x1xi1> to vector<16x1xi1>
    %23 = vector.broadcast %22 : vector<16x1xi1> to vector<16x64xi1>
    %24 = arith.select %23, %20, %21 : vector<16x64xi1>, vector<16x64xf32>
    %25 = vector.extract_strided_slice %24 {offsets = [0, 0], sizes = [16, 16], strides = [1, 1]} : vector<16x64xf32> to vector<16x16xf32>
    %26 = arith.negf %25 : vector<16x16xf32>
    %27 = math.exp %26 : vector<16x16xf32>
    %cst_15 = arith.constant 1.000000e+00 : f32
    %28 = vector.broadcast %cst_15 : f32 to vector<16x16xf32>
    %29 = arith.addf %28, %27 : vector<16x16xf32>
    %30 = arith.divf %28, %29 : vector<16x16xf32>
    %31 = vector.extract_strided_slice %24 {offsets = [0, 16], sizes = [16, 16], strides = [1, 1]} : vector<16x64xf32> to vector<16x16xf32>
    %32 = arith.negf %31 : vector<16x16xf32>
    %33 = math.exp %32 : vector<16x16xf32>
    %cst_16 = arith.constant 1.000000e+00 : f32
    %34 = vector.broadcast %cst_16 : f32 to vector<16x16xf32>
    %35 = arith.addf %34, %33 : vector<16x16xf32>
    %36 = arith.divf %34, %35 : vector<16x16xf32>
    %37 = vector.extract_strided_slice %24 {offsets = [0, 32], sizes = [16, 16], strides = [1, 1]} : vector<16x64xf32> to vector<16x16xf32>
    %38 = math.tanh %37 : vector<16x16xf32>
    %39 = vector.extract_strided_slice %24 {offsets = [0, 48], sizes = [16, 16], strides = [1, 1]} : vector<16x64xf32> to vector<16x16xf32>
    %40 = arith.negf %39 : vector<16x16xf32>
    %41 = math.exp %40 : vector<16x16xf32>
    %cst_17 = arith.constant 1.000000e+00 : f32
    %42 = vector.broadcast %cst_17 : f32 to vector<16x16xf32>
    %43 = arith.addf %42, %41 : vector<16x16xf32>
    %44 = arith.divf %42, %43 : vector<16x16xf32>
    %c0_18 = arith.constant 0 : index
    %c0_19 = arith.constant 0 : index
    %45 = vector.load %arg9[%c0_18, %c0_19] : memref<16x16xf32, #tpu.memory_space<vmem>>, vector<16x16xf32>
    %46 = arith.mulf %36, %45 : vector<16x16xf32>
    %47 = arith.mulf %30, %38 : vector<16x16xf32>
    %48 = arith.addf %46, %47 : vector<16x16xf32>
    %49 = math.tanh %48 : vector<16x16xf32>
    %50 = arith.mulf %44, %49 : vector<16x16xf32>
    %c0_20 = arith.constant 0 : index
    %c0_21 = arith.constant 0 : index
    %51 = vector.load %arg9[%c0_20, %c0_21] : memref<16x16xf32, #tpu.memory_space<vmem>>, vector<16x16xf32>
    tpu.vector_store %arg9[%c0_20, %c0_21], %48 {strides = array<i32>} : memref<16x16xf32, #tpu.memory_space<vmem>>, vector<16x16xf32>,
    %c0_22 = arith.constant 0 : index
    %c0_23 = arith.constant 0 : index
    %52 = vector.load %arg8[%c0_22, %c0_23] : memref<16x16xf32, #tpu.memory_space<vmem>>, vector<16x16xf32>
    tpu.vector_store %arg8[%c0_22, %c0_23], %50 {strides = array<i32>} : memref<16x16xf32, #tpu.memory_space<vmem>>, vector<16x16xf32>,
    %53 = vector.extract_strided_slice %50 {offsets = [0, 0], sizes = [8, 16], strides = [1, 1]} : vector<16x16xf32> to vector<8x16xf32>
    %54 = arith.index_cast %arg0 : i32 to index
    %c0_24 = arith.constant 0 : index
    %c0_25 = arith.constant 0 : index
    %55 = vector.load %arg6[%54, %c0_24, %c0_25] : memref<8x8x16xf32, #tpu.memory_space<vmem>>, vector<1x8x16xf32>
    %56 = vector.shape_cast %55 : vector<1x8x16xf32> to vector<8x16xf32>
    %57 = vector.shape_cast %53 : vector<8x16xf32> to vector<1x8x16xf32>
    tpu.vector_store %arg6[%54, %c0_24, %c0_25], %57 {strides = array<i32>} : memref<8x8x16xf32, #tpu.memory_space<vmem>>, vector<1x8x16xf32>,
    %58 = vector.extract_strided_slice %50 {offsets = [8, 0], sizes = [8, 16], strides = [1, 1]} : vector<16x16xf32> to vector<8x16xf32>
    %c7_i32 = arith.constant 7 : i32
    %59 = arith.subi %c7_i32, %arg0 : i32
    %60 = arith.index_cast %59 : i32 to index
    %c0_26 = arith.constant 0 : index
    %c0_27 = arith.constant 0 : index
    %61 = vector.load %arg7[%60, %c0_26, %c0_27] : memref<8x8x16xf32, #tpu.memory_space<vmem>>, vector<1x8x16xf32>
    %62 = vector.shape_cast %61 : vector<1x8x16xf32> to vector<8x16xf32>
    %63 = vector.shape_cast %58 : vector<8x16xf32> to vector<1x8x16xf32>
    tpu.vector_store %arg7[%60, %c0_26, %c0_27], %63 {strides = array<i32>} : memref<8x8x16xf32, #tpu.memory_space<vmem>>, vector<1x8x16xf32>,
    return
  }
  func.func @transform_0(%arg0: i32) -> (i32, i32, i32) {
    %c0_i32 = arith.constant 0 : i32
    %c0_i32_0 = arith.constant 0 : i32
    %c0_i32_1 = arith.constant 0 : i32
    return %arg0, %c0_i32, %c0_i32_0 : i32, i32, i32
  }
  func.func @transform_1(%arg0: i32) -> (i32, i32, i32) {
    %c7_i32 = arith.constant 7 : i32
    %0 = arith.subi %c7_i32, %arg0 : i32
    %c0_i32 = arith.constant 0 : i32
    %c0_i32_0 = arith.constant 0 : i32
    %c0_i32_1 = arith.constant 0 : i32
    return %0, %c0_i32, %c0_i32_0 : i32, i32, i32
  }
  func.func @transform_2(%arg0: i32) -> (i32, i32) {
    %c0_i32 = arith.constant 0 : i32
    %c0_i32_0 = arith.constant 0 : i32
    %c0_i32_1 = arith.constant 0 : i32
    return %c0_i32, %c0_i32_0 : i32, i32
  }
  func.func @transform_3(%arg0: i32) -> (i32, i32) {
    %c0_i32 = arith.constant 0 : i32
    %c0_i32_0 = arith.constant 0 : i32
    %c0_i32_1 = arith.constant 0 : i32
    return %c0_i32, %c0_i32_0 : i32, i32
  }
  func.func @transform_4(%arg0: i32) -> (i32, i32) {
    %c0_i32 = arith.constant 0 : i32
    %c0_i32_0 = arith.constant 0 : i32
    %c0_i32_1 = arith.constant 0 : i32
    return %c0_i32, %c0_i32_0 : i32, i32
  }
  func.func @transform_5(%arg0: i32) -> (i32, i32, i32) {
    %c0_i32 = arith.constant 0 : i32
    %c0_i32_0 = arith.constant 0 : i32
    %c0_i32_1 = arith.constant 0 : i32
    %c0_i32_2 = arith.constant 0 : i32
    return %c0_i32, %c0_i32_0, %c0_i32_1 : i32, i32, i32
  }
  func.func @transform_6(%arg0: i32) -> (i32, i32, i32) {
    %c0_i32 = arith.constant 0 : i32
    %c0_i32_0 = arith.constant 0 : i32
    %c0_i32_1 = arith.constant 0 : i32
    %c0_i32_2 = arith.constant 0 : i32
    return %c0_i32, %c0_i32_0, %c0_i32_1 : i32, i32, i32
  }
}

module attributes {stable_mosaic.version = 11 : i64} {
  func.func @_bilstm_layer_kernel(%arg0: i32, %arg1: memref<1x2x16xf32, #tpu.memory_space<vmem>>, %arg2: memref<1x2x16xf32, #tpu.memory_space<vmem>>, %arg3: memref<16x128xf32, #tpu.memory_space<vmem>>, %arg4: memref<16x128xf32, #tpu.memory_space<vmem>>, %arg5: memref<1x128xf32, #tpu.memory_space<vmem>>, %arg6: memref<4x2x16xf32, #tpu.memory_space<vmem>>, %arg7: memref<4x2x16xf32, #tpu.memory_space<vmem>>, %arg8: memref<4x16xf32, #tpu.memory_space<vmem>>, %arg9: memref<4x16xf32, #tpu.memory_space<vmem>>) attributes {dimension_semantics = [#tpu.dimension_semantics<arbitrary>], iteration_bounds = array<i64: 4>, scalar_prefetch = 0 : i64, scratch_operands = 2 : i64, tpu.core_type = #tpu.core_type<tc>, window_params = [{transform_indices = @transform_0, window_bounds = array<i64: 1, 2, 16>}, {transform_indices = @transform_1, window_bounds = array<i64: 1, 2, 16>}, {pipeline_mode = #tpu.pipeline_mode<synchronous>, transform_indices = @transform_2, window_bounds = array<i64: 16, 128>}, {pipeline_mode = #tpu.pipeline_mode<synchronous>, transform_indices = @transform_3, window_bounds = array<i64: 16, 128>}, {pipeline_mode = #tpu.pipeline_mode<synchronous>, transform_indices = @transform_4, window_bounds = array<i64: 1, 128>}, {pipeline_mode = #tpu.pipeline_mode<synchronous>, transform_indices = @transform_5, window_bounds = array<i64: 4, 2, 16>}, {pipeline_mode = #tpu.pipeline_mode<synchronous>, transform_indices = @transform_6, window_bounds = array<i64: 4, 2, 16>}]} {
    %c0_i32 = arith.constant 0 : i32
    %0 = arith.cmpi eq, %arg0, %c0_i32 : i32
    %1 = arith.extui %0 : i1 to i32
    %c0_i32_0 = arith.constant 0 : i32
    %2 = arith.cmpi ne, %1, %c0_i32_0 : i32
    scf.if %2 {
      %cst_28 = arith.constant 0.000000e+00 : f32
      %64 = vector.broadcast %cst_28 : f32 to vector<4x16xf32>
      %c0_29 = arith.constant 0 : index
      %c0_30 = arith.constant 0 : index
      %65 = vector.load %arg8[%c0_29, %c0_30] : memref<4x16xf32, #tpu.memory_space<vmem>>, vector<4x16xf32>
      tpu.vector_store %arg8[%c0_29, %c0_30], %64 {strides = array<i32>} : memref<4x16xf32, #tpu.memory_space<vmem>>, vector<4x16xf32>,
      %cst_31 = arith.constant 0.000000e+00 : f32
      %66 = vector.broadcast %cst_31 : f32 to vector<4x16xf32>
      %c0_32 = arith.constant 0 : index
      %c0_33 = arith.constant 0 : index
      %67 = vector.load %arg9[%c0_32, %c0_33] : memref<4x16xf32, #tpu.memory_space<vmem>>, vector<4x16xf32>
      tpu.vector_store %arg9[%c0_32, %c0_33], %66 {strides = array<i32>} : memref<4x16xf32, #tpu.memory_space<vmem>>, vector<4x16xf32>,
    } else {
    }
    %c0 = arith.constant 0 : index
    %c0_1 = arith.constant 0 : index
    %3 = vector.load %arg8[%c0, %c0_1] : memref<4x16xf32, #tpu.memory_space<vmem>>, vector<4x16xf32>
    %c0_2 = arith.constant 0 : index
    %c0_3 = arith.constant 0 : index
    %4 = vector.load %arg4[%c0_2, %c0_3] : memref<16x128xf32, #tpu.memory_space<vmem>>, vector<16x128xf32>
    %cst = arith.constant dense<0.000000e+00> : vector<4x128xf32>
    %5 = tpu.matmul %3, %4, %cst {dimension_numbers = #tpu.dot_dimension_numbers<[1], [0], [0], [1], [0, 0, 1, 1], [], []>} : vector<4x16xf32>, vector<16x128xf32>, vector<4x128xf32> -> vector<4x128xf32>
    %c0_4 = arith.constant 0 : index
    %c0_5 = arith.constant 0 : index
    %6 = vector.load %arg5[%c0_4, %c0_5] : memref<1x128xf32, #tpu.memory_space<vmem>>, vector<1x128xf32>
    %7 = vector.broadcast %6 : vector<1x128xf32> to vector<4x128xf32>
    %8 = arith.addf %5, %7 : vector<4x128xf32>
    %c0_6 = arith.constant 0 : index
    %c0_7 = arith.constant 0 : index
    %c0_8 = arith.constant 0 : index
    %9 = vector.load %arg1[%c0_6, %c0_7, %c0_8] : memref<1x2x16xf32, #tpu.memory_space<vmem>>, vector<1x2x16xf32>
    %10 = vector.shape_cast %9 : vector<1x2x16xf32> to vector<2x16xf32>
    %c0_9 = arith.constant 0 : index
    %c0_10 = arith.constant 0 : index
    %c0_11 = arith.constant 0 : index
    %11 = vector.load %arg2[%c0_9, %c0_10, %c0_11] : memref<1x2x16xf32, #tpu.memory_space<vmem>>, vector<1x2x16xf32>
    %12 = vector.shape_cast %11 : vector<1x2x16xf32> to vector<2x16xf32>
    %13 = tpu.concatenate %10, %12 in 0 : vector<2x16xf32>, vector<2x16xf32> -> vector<4x16xf32>
    %c0_12 = arith.constant 0 : index
    %c0_13 = arith.constant 0 : index
    %14 = vector.load %arg3[%c0_12, %c0_13] : memref<16x128xf32, #tpu.memory_space<vmem>>, vector<16x128xf32>
    %cst_14 = arith.constant dense<0.000000e+00> : vector<4x128xf32>
    %15 = tpu.matmul %13, %14, %cst_14 {dimension_numbers = #tpu.dot_dimension_numbers<[1], [0], [0], [1], [0, 0, 1, 1], [], []>} : vector<4x16xf32>, vector<16x128xf32>, vector<4x128xf32> -> vector<4x128xf32>
    %16 = arith.addf %8, %15 : vector<4x128xf32>
    %17 = tpu.iota {dimensions = array<i32: 0>} : vector<4x1xi32>
    %c2_i32 = arith.constant 2 : i32
    %18 = vector.broadcast %c2_i32 : i32 to vector<4x1xi32>
    %19 = arith.cmpi slt, %17, %18 : vector<4x1xi32>
    %20 = vector.extract_strided_slice %16 {offsets = [0, 0], sizes = [4, 64], strides = [1, 1]} : vector<4x128xf32> to vector<4x64xf32>
    %21 = vector.extract_strided_slice %16 {offsets = [0, 64], sizes = [4, 64], strides = [1, 1]} : vector<4x128xf32> to vector<4x64xf32>
    %22 = vector.shape_cast %19 : vector<4x1xi1> to vector<4x1xi1>
    %23 = vector.broadcast %22 : vector<4x1xi1> to vector<4x64xi1>
    %24 = arith.select %23, %20, %21 : vector<4x64xi1>, vector<4x64xf32>
    %25 = vector.extract_strided_slice %24 {offsets = [0, 0], sizes = [4, 16], strides = [1, 1]} : vector<4x64xf32> to vector<4x16xf32>
    %26 = arith.negf %25 : vector<4x16xf32>
    %27 = math.exp %26 : vector<4x16xf32>
    %cst_15 = arith.constant 1.000000e+00 : f32
    %28 = vector.broadcast %cst_15 : f32 to vector<4x16xf32>
    %29 = arith.addf %28, %27 : vector<4x16xf32>
    %30 = arith.divf %28, %29 : vector<4x16xf32>
    %31 = vector.extract_strided_slice %24 {offsets = [0, 16], sizes = [4, 16], strides = [1, 1]} : vector<4x64xf32> to vector<4x16xf32>
    %32 = arith.negf %31 : vector<4x16xf32>
    %33 = math.exp %32 : vector<4x16xf32>
    %cst_16 = arith.constant 1.000000e+00 : f32
    %34 = vector.broadcast %cst_16 : f32 to vector<4x16xf32>
    %35 = arith.addf %34, %33 : vector<4x16xf32>
    %36 = arith.divf %34, %35 : vector<4x16xf32>
    %37 = vector.extract_strided_slice %24 {offsets = [0, 32], sizes = [4, 16], strides = [1, 1]} : vector<4x64xf32> to vector<4x16xf32>
    %38 = math.tanh %37 : vector<4x16xf32>
    %39 = vector.extract_strided_slice %24 {offsets = [0, 48], sizes = [4, 16], strides = [1, 1]} : vector<4x64xf32> to vector<4x16xf32>
    %40 = arith.negf %39 : vector<4x16xf32>
    %41 = math.exp %40 : vector<4x16xf32>
    %cst_17 = arith.constant 1.000000e+00 : f32
    %42 = vector.broadcast %cst_17 : f32 to vector<4x16xf32>
    %43 = arith.addf %42, %41 : vector<4x16xf32>
    %44 = arith.divf %42, %43 : vector<4x16xf32>
    %c0_18 = arith.constant 0 : index
    %c0_19 = arith.constant 0 : index
    %45 = vector.load %arg9[%c0_18, %c0_19] : memref<4x16xf32, #tpu.memory_space<vmem>>, vector<4x16xf32>
    %46 = arith.mulf %36, %45 : vector<4x16xf32>
    %47 = arith.mulf %30, %38 : vector<4x16xf32>
    %48 = arith.addf %46, %47 : vector<4x16xf32>
    %49 = math.tanh %48 : vector<4x16xf32>
    %50 = arith.mulf %44, %49 : vector<4x16xf32>
    %c0_20 = arith.constant 0 : index
    %c0_21 = arith.constant 0 : index
    %51 = vector.load %arg9[%c0_20, %c0_21] : memref<4x16xf32, #tpu.memory_space<vmem>>, vector<4x16xf32>
    tpu.vector_store %arg9[%c0_20, %c0_21], %48 {strides = array<i32>} : memref<4x16xf32, #tpu.memory_space<vmem>>, vector<4x16xf32>,
    %c0_22 = arith.constant 0 : index
    %c0_23 = arith.constant 0 : index
    %52 = vector.load %arg8[%c0_22, %c0_23] : memref<4x16xf32, #tpu.memory_space<vmem>>, vector<4x16xf32>
    tpu.vector_store %arg8[%c0_22, %c0_23], %50 {strides = array<i32>} : memref<4x16xf32, #tpu.memory_space<vmem>>, vector<4x16xf32>,
    %53 = vector.extract_strided_slice %50 {offsets = [0, 0], sizes = [2, 16], strides = [1, 1]} : vector<4x16xf32> to vector<2x16xf32>
    %54 = arith.index_cast %arg0 : i32 to index
    %c0_24 = arith.constant 0 : index
    %c0_25 = arith.constant 0 : index
    %55 = vector.load %arg6[%54, %c0_24, %c0_25] : memref<4x2x16xf32, #tpu.memory_space<vmem>>, vector<1x2x16xf32>
    %56 = vector.shape_cast %55 : vector<1x2x16xf32> to vector<2x16xf32>
    %57 = vector.shape_cast %53 : vector<2x16xf32> to vector<1x2x16xf32>
    tpu.vector_store %arg6[%54, %c0_24, %c0_25], %57 {strides = array<i32>} : memref<4x2x16xf32, #tpu.memory_space<vmem>>, vector<1x2x16xf32>,
    %58 = vector.extract_strided_slice %50 {offsets = [2, 0], sizes = [2, 16], strides = [1, 1]} : vector<4x16xf32> to vector<2x16xf32>
    %c3_i32 = arith.constant 3 : i32
    %59 = arith.subi %c3_i32, %arg0 : i32
    %60 = arith.index_cast %59 : i32 to index
    %c0_26 = arith.constant 0 : index
    %c0_27 = arith.constant 0 : index
    %61 = vector.load %arg7[%60, %c0_26, %c0_27] : memref<4x2x16xf32, #tpu.memory_space<vmem>>, vector<1x2x16xf32>
    %62 = vector.shape_cast %61 : vector<1x2x16xf32> to vector<2x16xf32>
    %63 = vector.shape_cast %58 : vector<2x16xf32> to vector<1x2x16xf32>
    tpu.vector_store %arg7[%60, %c0_26, %c0_27], %63 {strides = array<i32>} : memref<4x2x16xf32, #tpu.memory_space<vmem>>, vector<1x2x16xf32>,
    return
  }
  func.func @transform_0(%arg0: i32) -> (i32, i32, i32) {
    %c0_i32 = arith.constant 0 : i32
    %c0_i32_0 = arith.constant 0 : i32
    %c0_i32_1 = arith.constant 0 : i32
    return %arg0, %c0_i32, %c0_i32_0 : i32, i32, i32
  }
  func.func @transform_1(%arg0: i32) -> (i32, i32, i32) {
    %c3_i32 = arith.constant 3 : i32
    %0 = arith.subi %c3_i32, %arg0 : i32
    %c0_i32 = arith.constant 0 : i32
    %c0_i32_0 = arith.constant 0 : i32
    %c0_i32_1 = arith.constant 0 : i32
    return %0, %c0_i32, %c0_i32_0 : i32, i32, i32
  }
  func.func @transform_2(%arg0: i32) -> (i32, i32) {
    %c0_i32 = arith.constant 0 : i32
    %c0_i32_0 = arith.constant 0 : i32
    %c0_i32_1 = arith.constant 0 : i32
    return %c0_i32, %c0_i32_0 : i32, i32
  }
  func.func @transform_3(%arg0: i32) -> (i32, i32) {
    %c0_i32 = arith.constant 0 : i32
    %c0_i32_0 = arith.constant 0 : i32
    %c0_i32_1 = arith.constant 0 : i32
    return %c0_i32, %c0_i32_0 : i32, i32
  }
  func.func @transform_4(%arg0: i32) -> (i32, i32) {
    %c0_i32 = arith.constant 0 : i32
    %c0_i32_0 = arith.constant 0 : i32
    %c0_i32_1 = arith.constant 0 : i32
    return %c0_i32, %c0_i32_0 : i32, i32
  }
  func.func @transform_5(%arg0: i32) -> (i32, i32, i32) {
    %c0_i32 = arith.constant 0 : i32
    %c0_i32_0 = arith.constant 0 : i32
    %c0_i32_1 = arith.constant 0 : i32
    %c0_i32_2 = arith.constant 0 : i32
    return %c0_i32, %c0_i32_0, %c0_i32_1 : i32, i32, i32
  }
  func.func @transform_6(%arg0: i32) -> (i32, i32, i32) {
    %c0_i32 = arith.constant 0 : i32
    %c0_i32_0 = arith.constant 0 : i32
    %c0_i32_1 = arith.constant 0 : i32
    %c0_i32_2 = arith.constant 0 : i32
    return %c0_i32, %c0_i32_0, %c0_i32_1 : i32, i32, i32
  }
}

module attributes {stable_mosaic.version = 11 : i64} {
  func.func @_word_graph_kernel(%arg0: i32, %arg1: memref<1x8x32xf32, #tpu.memory_space<vmem>>, %arg2: memref<1x8x1xf32, #tpu.memory_space<vmem>>, %arg3: memref<1x1x8xf32, #tpu.memory_space<vmem>>, %arg4: memref<1x2x8x8xf32, #tpu.memory_space<vmem>>, %arg5: memref<32x16xf32, #tpu.memory_space<vmem>>, %arg6: memref<1x16xf32, #tpu.memory_space<vmem>>, %arg7: memref<16x16xf32, #tpu.memory_space<vmem>>, %arg8: memref<1x16xf32, #tpu.memory_space<vmem>>, %arg9: memref<16x16xf32, #tpu.memory_space<vmem>>, %arg10: memref<1x16xf32, #tpu.memory_space<vmem>>, %arg11: memref<16x16xf32, #tpu.memory_space<vmem>>, %arg12: memref<1x16xf32, #tpu.memory_space<vmem>>, %arg13: memref<1x1x16xf32, #tpu.memory_space<vmem>>) attributes {dimension_semantics = [#tpu.dimension_semantics<parallel>], iteration_bounds = array<i64: 8>, scalar_prefetch = 0 : i64, scratch_operands = 0 : i64, tpu.core_type = #tpu.core_type<tc>, window_params = [{transform_indices = @transform_0, window_bounds = array<i64: 1, 8, 32>}, {transform_indices = @transform_1, window_bounds = array<i64: 1, 8, 1>}, {transform_indices = @transform_2, window_bounds = array<i64: 1, 1, 8>}, {transform_indices = @transform_3, window_bounds = array<i64: 1, 2, 8, 8>}, {pipeline_mode = #tpu.pipeline_mode<synchronous>, transform_indices = @transform_4, window_bounds = array<i64: 32, 16>}, {pipeline_mode = #tpu.pipeline_mode<synchronous>, transform_indices = @transform_5, window_bounds = array<i64: 1, 16>}, {pipeline_mode = #tpu.pipeline_mode<synchronous>, transform_indices = @transform_6, window_bounds = array<i64: 16, 16>}, {pipeline_mode = #tpu.pipeline_mode<synchronous>, transform_indices = @transform_7, window_bounds = array<i64: 1, 16>}, {pipeline_mode = #tpu.pipeline_mode<synchronous>, transform_indices = @transform_8, window_bounds = array<i64: 16, 16>}, {pipeline_mode = #tpu.pipeline_mode<synchronous>, transform_indices = @transform_9, window_bounds = array<i64: 1, 16>}, {pipeline_mode = #tpu.pipeline_mode<synchronous>, transform_indices = @transform_10, window_bounds = array<i64: 16, 16>}, {pipeline_mode = #tpu.pipeline_mode<synchronous>, transform_indices = @transform_11, window_bounds = array<i64: 1, 16>}, {transform_indices = @transform_12, window_bounds = array<i64: 1, 1, 16>}]} {
    %c0 = arith.constant 0 : index
    %c0_0 = arith.constant 0 : index
    %c0_1 = arith.constant 0 : index
    %0 = vector.load %arg1[%c0, %c0_0, %c0_1] : memref<1x8x32xf32, #tpu.memory_space<vmem>>, vector<1x8x32xf32>
    %1 = vector.shape_cast %0 : vector<1x8x32xf32> to vector<8x32xf32>
    %c0_2 = arith.constant 0 : index
    %c0_3 = arith.constant 0 : index
    %c0_4 = arith.constant 0 : index
    %2 = vector.load %arg2[%c0_2, %c0_3, %c0_4] : memref<1x8x1xf32, #tpu.memory_space<vmem>>, vector<1x8x1xf32>
    %3 = vector.shape_cast %2 : vector<1x8x1xf32> to vector<8x1xf32>
    %c0_5 = arith.constant 0 : index
    %c0_6 = arith.constant 0 : index
    %c0_7 = arith.constant 0 : index
    %4 = vector.load %arg3[%c0_5, %c0_6, %c0_7] : memref<1x1x8xf32, #tpu.memory_space<vmem>>, vector<1x1x8xf32>
    %5 = vector.shape_cast %4 : vector<1x1x8xf32> to vector<1x8xf32>
    %c0_8 = arith.constant 0 : index
    %c0_9 = arith.constant 0 : index
    %c0_10 = arith.constant 0 : index
    %c0_11 = arith.constant 0 : index
    %6 = vector.load %arg4[%c0_8, %c0_9, %c0_10, %c0_11] : memref<1x2x8x8xf32, #tpu.memory_space<vmem>>, vector<1x2x8x8xf32>
    %7 = vector.shape_cast %6 : vector<1x2x8x8xf32> to vector<2x8x8xf32>
    %c0_12 = arith.constant 0 : index
    %c0_13 = arith.constant 0 : index
    %8 = vector.load %arg5[%c0_12, %c0_13] : memref<32x16xf32, #tpu.memory_space<vmem>>, vector<32x16xf32>
    %cst = arith.constant dense<0.000000e+00> : vector<8x16xf32>
    %9 = tpu.matmul %1, %8, %cst {dimension_numbers = #tpu.dot_dimension_numbers<[1], [0], [0], [1], [0, 0, 1, 1], [], []>} : vector<8x32xf32>, vector<32x16xf32>, vector<8x16xf32> -> vector<8x16xf32>
    %c0_14 = arith.constant 0 : index
    %c0_15 = arith.constant 0 : index
    %10 = vector.load %arg6[%c0_14, %c0_15] : memref<1x16xf32, #tpu.memory_space<vmem>>, vector<1x16xf32>
    %11 = vector.broadcast %10 : vector<1x16xf32> to vector<8x16xf32>
    %12 = arith.addf %9, %11 : vector<8x16xf32>
    %13 = math.tanh %12 : vector<8x16xf32>
    %cst_16 = arith.constant dense<0.000000e+00> : vector<8x8xf32>
    %14 = tpu.matmul %13, %13, %cst_16 {dimension_numbers = #tpu.dot_dimension_numbers<[1], [1], [0], [0], [0, 0, 1, 0], [], []>} : vector<8x16xf32>, vector<8x16xf32>, vector<8x8xf32> -> vector<8x8xf32>
    %15 = math.absf %14 : vector<8x8xf32>
    %16 = vector.broadcast %3 : vector<8x1xf32> to vector<8x8xf32>
    %17 = arith.mulf %15, %16 : vector<8x8xf32>
    %18 = vector.broadcast %5 : vector<1x8xf32> to vector<8x8xf32>
    %19 = arith.mulf %17, %18 : vector<8x8xf32>
    %20 = tpu.iota {dimensions = array<i32: 0>} : vector<8x8xi32>
    %21 = tpu.iota {dimensions = array<i32: 1>} : vector<8x8xi32>
    %22 = arith.cmpi eq, %20, %21 : vector<8x8xi32>
    %cst_17 = arith.constant 1.000000e+00 : f32
    %cst_18 = arith.constant 0.000000e+00 : f32
    %23 = vector.broadcast %cst_17 : f32 to vector<8x8xf32>
    %24 = vector.broadcast %cst_18 : f32 to vector<8x8xf32>
    %25 = arith.select %22, %23, %24 : vector<8x8xi1>, vector<8x8xf32>
    %26 = arith.addf %19, %25 : vector<8x8xf32>
    %cst_19 = arith.constant dense<0.000000e+00> : vector<8xf32>
    %27 = vector.multi_reduction <add>, %26, %cst_19 [1] : vector<8x8xf32> to vector<8xf32>
    %28 = vector.shape_cast %27 : vector<8xf32> to vector<8x1xf32>
    %29 = math.rsqrt %28 : vector<8x1xf32>
    %cst_20 = arith.constant dense<0.000000e+00> : vector<8xf32>
    %30 = vector.multi_reduction <add>, %26, %cst_20 [0] : vector<8x8xf32> to vector<8xf32>
    %31 = vector.shape_cast %30 : vector<8xf32> to vector<1x8xf32>
    %32 = math.rsqrt %31 : vector<1x8xf32>
    %33 = vector.broadcast %29 : vector<8x1xf32> to vector<8x8xf32>
    %34 = arith.mulf %26, %33 : vector<8x8xf32>
    %35 = vector.broadcast %32 : vector<1x8xf32> to vector<8x8xf32>
    %36 = arith.mulf %34, %35 : vector<8x8xf32>
    %37 = vector.extract_strided_slice %7 {offsets = [0, 0, 0], sizes = [1, 8, 8], strides = [1, 1, 1]} : vector<2x8x8xf32> to vector<1x8x8xf32>
    %38 = vector.shape_cast %37 : vector<1x8x8xf32> to vector<8x8xf32>
    %39 = vector.extract_strided_slice %7 {offsets = [1, 0, 0], sizes = [1, 8, 8], strides = [1, 1, 1]} : vector<2x8x8xf32> to vector<1x8x8xf32>
    %40 = vector.shape_cast %39 : vector<1x8x8xf32> to vector<8x8xf32>
    %41 = arith.addf %38, %40 : vector<8x8xf32>
    %42 = arith.addf %41, %36 : vector<8x8xf32>
    %cst_21 = arith.constant 0.333333343 : f32
    %43 = vector.broadcast %cst_21 : f32 to vector<8x8xf32>
    %44 = arith.mulf %42, %43 : vector<8x8xf32>
    %cst_22 = arith.constant dense<0.000000e+00> : vector<8x16xf32>
    %45 = tpu.matmul %44, %13, %cst_22 {dimension_numbers = #tpu.dot_dimension_numbers<[1], [0], [0], [1], [0, 0, 1, 1], [], []>} : vector<8x8xf32>, vector<8x16xf32>, vector<8x16xf32> -> vector<8x16xf32>
    %c0_23 = arith.constant 0 : index
    %c0_24 = arith.constant 0 : index
    %46 = vector.load %arg7[%c0_23, %c0_24] : memref<16x16xf32, #tpu.memory_space<vmem>>, vector<16x16xf32>
    %cst_25 = arith.constant dense<0.000000e+00> : vector<8x16xf32>
    %47 = tpu.matmul %45, %46, %cst_25 {dimension_numbers = #tpu.dot_dimension_numbers<[1], [0], [0], [1], [0, 0, 1, 1], [], []>} : vector<8x16xf32>, vector<16x16xf32>, vector<8x16xf32> -> vector<8x16xf32>
    %c0_26 = arith.constant 0 : index
    %c0_27 = arith.constant 0 : index
    %48 = vector.load %arg8[%c0_26, %c0_27] : memref<1x16xf32, #tpu.memory_space<vmem>>, vector<1x16xf32>
    %49 = vector.broadcast %48 : vector<1x16xf32> to vector<8x16xf32>
    %50 = arith.addf %47, %49 : vector<8x16xf32>
    %cst_28 = arith.constant 0.000000e+00 : f32
    %51 = vector.broadcast %cst_28 : f32 to vector<8x16xf32>
    %52 = arith.maximumf %50, %51 : vector<8x16xf32>
    %cst_29 = arith.constant dense<0.000000e+00> : vector<8x16xf32>
    %53 = tpu.matmul %44, %52, %cst_29 {dimension_numbers = #tpu.dot_dimension_numbers<[1], [0], [0], [1], [0, 0, 1, 1], [], []>} : vector<8x8xf32>, vector<8x16xf32>, vector<8x16xf32> -> vector<8x16xf32>
    %c0_30 = arith.constant 0 : index
    %c0_31 = arith.constant 0 : index
    %54 = vector.load %arg9[%c0_30, %c0_31] : memref<16x16xf32, #tpu.memory_space<vmem>>, vector<16x16xf32>
    %cst_32 = arith.constant dense<0.000000e+00> : vector<8x16xf32>
    %55 = tpu.matmul %53, %54, %cst_32 {dimension_numbers = #tpu.dot_dimension_numbers<[1], [0], [0], [1], [0, 0, 1, 1], [], []>} : vector<8x16xf32>, vector<16x16xf32>, vector<8x16xf32> -> vector<8x16xf32>
    %c0_33 = arith.constant 0 : index
    %c0_34 = arith.constant 0 : index
    %56 = vector.load %arg10[%c0_33, %c0_34] : memref<1x16xf32, #tpu.memory_space<vmem>>, vector<1x16xf32>
    %57 = vector.broadcast %56 : vector<1x16xf32> to vector<8x16xf32>
    %58 = arith.addf %55, %57 : vector<8x16xf32>
    %cst_35 = arith.constant 0.000000e+00 : f32
    %59 = vector.broadcast %cst_35 : f32 to vector<8x16xf32>
    %60 = arith.maximumf %58, %59 : vector<8x16xf32>
    %cst_36 = arith.constant dense<0xFF800000> : vector<16xf32>
    %61 = vector.multi_reduction <maximumf>, %60, %cst_36 [0] : vector<8x16xf32> to vector<16xf32>
    %62 = vector.shape_cast %61 : vector<16xf32> to vector<1x16xf32>
    %c0_37 = arith.constant 0 : index
    %c0_38 = arith.constant 0 : index
    %63 = vector.load %arg11[%c0_37, %c0_38] : memref<16x16xf32, #tpu.memory_space<vmem>>, vector<16x16xf32>
    %cst_39 = arith.constant dense<0.000000e+00> : vector<1x16xf32>
    %64 = tpu.matmul %62, %63, %cst_39 {dimension_numbers = #tpu.dot_dimension_numbers<[1], [0], [0], [1], [0, 0, 1, 1], [], []>} : vector<1x16xf32>, vector<16x16xf32>, vector<1x16xf32> -> vector<1x16xf32>
    %c0_40 = arith.constant 0 : index
    %c0_41 = arith.constant 0 : index
    %65 = vector.load %arg12[%c0_40, %c0_41] : memref<1x16xf32, #tpu.memory_space<vmem>>, vector<1x16xf32>
    %66 = arith.addf %64, %65 : vector<1x16xf32>
    %67 = math.tanh %66 : vector<1x16xf32>
    %c0_42 = arith.constant 0 : index
    %c0_43 = arith.constant 0 : index
    %c0_44 = arith.constant 0 : index
    %68 = vector.load %arg13[%c0_42, %c0_43, %c0_44] : memref<1x1x16xf32, #tpu.memory_space<vmem>>, vector<1x1x16xf32>
    %69 = vector.shape_cast %68 : vector<1x1x16xf32> to vector<1x16xf32>
    %70 = vector.shape_cast %67 : vector<1x16xf32> to vector<1x1x16xf32>
    tpu.vector_store %arg13[%c0_42, %c0_43, %c0_44], %70 {strides = array<i32>} : memref<1x1x16xf32, #tpu.memory_space<vmem>>, vector<1x1x16xf32>,
    return
  }
  func.func @transform_0(%arg0: i32) -> (i32, i32, i32) {
    %c0_i32 = arith.constant 0 : i32
    %c0_i32_0 = arith.constant 0 : i32
    %c0_i32_1 = arith.constant 0 : i32
    return %arg0, %c0_i32, %c0_i32_0 : i32, i32, i32
  }
  func.func @transform_1(%arg0: i32) -> (i32, i32, i32) {
    %c0_i32 = arith.constant 0 : i32
    %c0_i32_0 = arith.constant 0 : i32
    %c0_i32_1 = arith.constant 0 : i32
    return %arg0, %c0_i32, %c0_i32_0 : i32, i32, i32
  }
  func.func @transform_2(%arg0: i32) -> (i32, i32, i32) {
    %c0_i32 = arith.constant 0 : i32
    %c0_i32_0 = arith.constant 0 : i32
    %c0_i32_1 = arith.constant 0 : i32
    return %arg0, %c0_i32, %c0_i32_0 : i32, i32, i32
  }
  func.func @transform_3(%arg0: i32) -> (i32, i32, i32, i32) {
    %c0_i32 = arith.constant 0 : i32
    %c0_i32_0 = arith.constant 0 : i32
    %c0_i32_1 = arith.constant 0 : i32
    %c0_i32_2 = arith.constant 0 : i32
    return %arg0, %c0_i32, %c0_i32_0, %c0_i32_1 : i32, i32, i32, i32
  }
  func.func @transform_4(%arg0: i32) -> (i32, i32) {
    %c0_i32 = arith.constant 0 : i32
    %c0_i32_0 = arith.constant 0 : i32
    %c0_i32_1 = arith.constant 0 : i32
    return %c0_i32, %c0_i32_0 : i32, i32
  }
  func.func @transform_5(%arg0: i32) -> (i32, i32) {
    %c0_i32 = arith.constant 0 : i32
    %c0_i32_0 = arith.constant 0 : i32
    %c0_i32_1 = arith.constant 0 : i32
    return %c0_i32, %c0_i32_0 : i32, i32
  }
  func.func @transform_6(%arg0: i32) -> (i32, i32) {
    %c0_i32 = arith.constant 0 : i32
    %c0_i32_0 = arith.constant 0 : i32
    %c0_i32_1 = arith.constant 0 : i32
    return %c0_i32, %c0_i32_0 : i32, i32
  }
  func.func @transform_7(%arg0: i32) -> (i32, i32) {
    %c0_i32 = arith.constant 0 : i32
    %c0_i32_0 = arith.constant 0 : i32
    %c0_i32_1 = arith.constant 0 : i32
    return %c0_i32, %c0_i32_0 : i32, i32
  }
  func.func @transform_8(%arg0: i32) -> (i32, i32) {
    %c0_i32 = arith.constant 0 : i32
    %c0_i32_0 = arith.constant 0 : i32
    %c0_i32_1 = arith.constant 0 : i32
    return %c0_i32, %c0_i32_0 : i32, i32
  }
  func.func @transform_9(%arg0: i32) -> (i32, i32) {
    %c0_i32 = arith.constant 0 : i32
    %c0_i32_0 = arith.constant 0 : i32
    %c0_i32_1 = arith.constant 0 : i32
    return %c0_i32, %c0_i32_0 : i32, i32
  }
  func.func @transform_10(%arg0: i32) -> (i32, i32) {
    %c0_i32 = arith.constant 0 : i32
    %c0_i32_0 = arith.constant 0 : i32
    %c0_i32_1 = arith.constant 0 : i32
    return %c0_i32, %c0_i32_0 : i32, i32
  }
  func.func @transform_11(%arg0: i32) -> (i32, i32) {
    %c0_i32 = arith.constant 0 : i32
    %c0_i32_0 = arith.constant 0 : i32
    %c0_i32_1 = arith.constant 0 : i32
    return %c0_i32, %c0_i32_0 : i32, i32
  }
  func.func @transform_12(%arg0: i32) -> (i32, i32, i32) {
    %c0_i32 = arith.constant 0 : i32
    %c0_i32_0 = arith.constant 0 : i32
    %c0_i32_1 = arith.constant 0 : i32
    return %arg0, %c0_i32, %c0_i32_0 : i32, i32, i32
  }
}

module attributes {stable_mosaic.version = 11 : i64} {
  func.func @_bilstm_layer_kernel(%arg0: i32, %arg1: memref<1x2x16xf32, #tpu.memory_space<vmem>>, %arg2: memref<1x2x16xf32, #tpu.memory_space<vmem>>, %arg3: memref<1x2x16xf32, #tpu.memory_space<vmem>>, %arg4: memref<1x2x16xf32, #tpu.memory_space<vmem>>, %arg5: memref<16x128xf32, #tpu.memory_space<vmem>>, %arg6: memref<16x128xf32, #tpu.memory_space<vmem>>, %arg7: memref<16x128xf32, #tpu.memory_space<vmem>>, %arg8: memref<1x128xf32, #tpu.memory_space<vmem>>, %arg9: memref<4x2x16xf32, #tpu.memory_space<vmem>>, %arg10: memref<4x2x16xf32, #tpu.memory_space<vmem>>, %arg11: memref<4x16xf32, #tpu.memory_space<vmem>>, %arg12: memref<4x16xf32, #tpu.memory_space<vmem>>) attributes {dimension_semantics = [#tpu.dimension_semantics<arbitrary>], iteration_bounds = array<i64: 4>, scalar_prefetch = 0 : i64, scratch_operands = 2 : i64, tpu.core_type = #tpu.core_type<tc>, window_params = [{transform_indices = @transform_0, window_bounds = array<i64: 1, 2, 16>}, {transform_indices = @transform_1, window_bounds = array<i64: 1, 2, 16>}, {transform_indices = @transform_2, window_bounds = array<i64: 1, 2, 16>}, {transform_indices = @transform_3, window_bounds = array<i64: 1, 2, 16>}, {pipeline_mode = #tpu.pipeline_mode<synchronous>, transform_indices = @transform_4, window_bounds = array<i64: 16, 128>}, {pipeline_mode = #tpu.pipeline_mode<synchronous>, transform_indices = @transform_5, window_bounds = array<i64: 16, 128>}, {pipeline_mode = #tpu.pipeline_mode<synchronous>, transform_indices = @transform_6, window_bounds = array<i64: 16, 128>}, {pipeline_mode = #tpu.pipeline_mode<synchronous>, transform_indices = @transform_7, window_bounds = array<i64: 1, 128>}, {pipeline_mode = #tpu.pipeline_mode<synchronous>, transform_indices = @transform_8, window_bounds = array<i64: 4, 2, 16>}, {pipeline_mode = #tpu.pipeline_mode<synchronous>, transform_indices = @transform_9, window_bounds = array<i64: 4, 2, 16>}]} {
    %c0_i32 = arith.constant 0 : i32
    %0 = arith.cmpi eq, %arg0, %c0_i32 : i32
    %1 = arith.extui %0 : i1 to i32
    %c0_i32_0 = arith.constant 0 : i32
    %2 = arith.cmpi ne, %1, %c0_i32_0 : i32
    scf.if %2 {
      %cst_37 = arith.constant 0.000000e+00 : f32
      %72 = vector.broadcast %cst_37 : f32 to vector<4x16xf32>
      %c0_38 = arith.constant 0 : index
      %c0_39 = arith.constant 0 : index
      %73 = vector.load %arg11[%c0_38, %c0_39] : memref<4x16xf32, #tpu.memory_space<vmem>>, vector<4x16xf32>
      tpu.vector_store %arg11[%c0_38, %c0_39], %72 {strides = array<i32>} : memref<4x16xf32, #tpu.memory_space<vmem>>, vector<4x16xf32>,
      %cst_40 = arith.constant 0.000000e+00 : f32
      %74 = vector.broadcast %cst_40 : f32 to vector<4x16xf32>
      %c0_41 = arith.constant 0 : index
      %c0_42 = arith.constant 0 : index
      %75 = vector.load %arg12[%c0_41, %c0_42] : memref<4x16xf32, #tpu.memory_space<vmem>>, vector<4x16xf32>
      tpu.vector_store %arg12[%c0_41, %c0_42], %74 {strides = array<i32>} : memref<4x16xf32, #tpu.memory_space<vmem>>, vector<4x16xf32>,
    } else {
    }
    %c0 = arith.constant 0 : index
    %c0_1 = arith.constant 0 : index
    %3 = vector.load %arg11[%c0, %c0_1] : memref<4x16xf32, #tpu.memory_space<vmem>>, vector<4x16xf32>
    %c0_2 = arith.constant 0 : index
    %c0_3 = arith.constant 0 : index
    %4 = vector.load %arg7[%c0_2, %c0_3] : memref<16x128xf32, #tpu.memory_space<vmem>>, vector<16x128xf32>
    %cst = arith.constant dense<0.000000e+00> : vector<4x128xf32>
    %5 = tpu.matmul %3, %4, %cst {dimension_numbers = #tpu.dot_dimension_numbers<[1], [0], [0], [1], [0, 0, 1, 1], [], []>} : vector<4x16xf32>, vector<16x128xf32>, vector<4x128xf32> -> vector<4x128xf32>
    %c0_4 = arith.constant 0 : index
    %c0_5 = arith.constant 0 : index
    %6 = vector.load %arg8[%c0_4, %c0_5] : memref<1x128xf32, #tpu.memory_space<vmem>>, vector<1x128xf32>
    %7 = vector.broadcast %6 : vector<1x128xf32> to vector<4x128xf32>
    %8 = arith.addf %5, %7 : vector<4x128xf32>
    %c0_6 = arith.constant 0 : index
    %c0_7 = arith.constant 0 : index
    %c0_8 = arith.constant 0 : index
    %9 = vector.load %arg1[%c0_6, %c0_7, %c0_8] : memref<1x2x16xf32, #tpu.memory_space<vmem>>, vector<1x2x16xf32>
    %10 = vector.shape_cast %9 : vector<1x2x16xf32> to vector<2x16xf32>
    %c0_9 = arith.constant 0 : index
    %c0_10 = arith.constant 0 : index
    %c0_11 = arith.constant 0 : index
    %11 = vector.load %arg2[%c0_9, %c0_10, %c0_11] : memref<1x2x16xf32, #tpu.memory_space<vmem>>, vector<1x2x16xf32>
    %12 = vector.shape_cast %11 : vector<1x2x16xf32> to vector<2x16xf32>
    %13 = tpu.concatenate %10, %12 in 0 : vector<2x16xf32>, vector<2x16xf32> -> vector<4x16xf32>
    %c0_12 = arith.constant 0 : index
    %c0_13 = arith.constant 0 : index
    %14 = vector.load %arg5[%c0_12, %c0_13] : memref<16x128xf32, #tpu.memory_space<vmem>>, vector<16x128xf32>
    %cst_14 = arith.constant dense<0.000000e+00> : vector<4x128xf32>
    %15 = tpu.matmul %13, %14, %cst_14 {dimension_numbers = #tpu.dot_dimension_numbers<[1], [0], [0], [1], [0, 0, 1, 1], [], []>} : vector<4x16xf32>, vector<16x128xf32>, vector<4x128xf32> -> vector<4x128xf32>
    %16 = arith.addf %8, %15 : vector<4x128xf32>
    %c0_15 = arith.constant 0 : index
    %c0_16 = arith.constant 0 : index
    %c0_17 = arith.constant 0 : index
    %17 = vector.load %arg3[%c0_15, %c0_16, %c0_17] : memref<1x2x16xf32, #tpu.memory_space<vmem>>, vector<1x2x16xf32>
    %18 = vector.shape_cast %17 : vector<1x2x16xf32> to vector<2x16xf32>
    %c0_18 = arith.constant 0 : index
    %c0_19 = arith.constant 0 : index
    %c0_20 = arith.constant 0 : index
    %19 = vector.load %arg4[%c0_18, %c0_19, %c0_20] : memref<1x2x16xf32, #tpu.memory_space<vmem>>, vector<1x2x16xf32>
    %20 = vector.shape_cast %19 : vector<1x2x16xf32> to vector<2x16xf32>
    %21 = tpu.concatenate %18, %20 in 0 : vector<2x16xf32>, vector<2x16xf32> -> vector<4x16xf32>
    %c0_21 = arith.constant 0 : index
    %c0_22 = arith.constant 0 : index
    %22 = vector.load %arg6[%c0_21, %c0_22] : memref<16x128xf32, #tpu.memory_space<vmem>>, vector<16x128xf32>
    %cst_23 = arith.constant dense<0.000000e+00> : vector<4x128xf32>
    %23 = tpu.matmul %21, %22, %cst_23 {dimension_numbers = #tpu.dot_dimension_numbers<[1], [0], [0], [1], [0, 0, 1, 1], [], []>} : vector<4x16xf32>, vector<16x128xf32>, vector<4x128xf32> -> vector<4x128xf32>
    %24 = arith.addf %16, %23 : vector<4x128xf32>
    %25 = tpu.iota {dimensions = array<i32: 0>} : vector<4x1xi32>
    %c2_i32 = arith.constant 2 : i32
    %26 = vector.broadcast %c2_i32 : i32 to vector<4x1xi32>
    %27 = arith.cmpi slt, %25, %26 : vector<4x1xi32>
    %28 = vector.extract_strided_slice %24 {offsets = [0, 0], sizes = [4, 64], strides = [1, 1]} : vector<4x128xf32> to vector<4x64xf32>
    %29 = vector.extract_strided_slice %24 {offsets = [0, 64], sizes = [4, 64], strides = [1, 1]} : vector<4x128xf32> to vector<4x64xf32>
    %30 = vector.shape_cast %27 : vector<4x1xi1> to vector<4x1xi1>
    %31 = vector.broadcast %30 : vector<4x1xi1> to vector<4x64xi1>
    %32 = arith.select %31, %28, %29 : vector<4x64xi1>, vector<4x64xf32>
    %33 = vector.extract_strided_slice %32 {offsets = [0, 0], sizes = [4, 16], strides = [1, 1]} : vector<4x64xf32> to vector<4x16xf32>
    %34 = arith.negf %33 : vector<4x16xf32>
    %35 = math.exp %34 : vector<4x16xf32>
    %cst_24 = arith.constant 1.000000e+00 : f32
    %36 = vector.broadcast %cst_24 : f32 to vector<4x16xf32>
    %37 = arith.addf %36, %35 : vector<4x16xf32>
    %38 = arith.divf %36, %37 : vector<4x16xf32>
    %39 = vector.extract_strided_slice %32 {offsets = [0, 16], sizes = [4, 16], strides = [1, 1]} : vector<4x64xf32> to vector<4x16xf32>
    %40 = arith.negf %39 : vector<4x16xf32>
    %41 = math.exp %40 : vector<4x16xf32>
    %cst_25 = arith.constant 1.000000e+00 : f32
    %42 = vector.broadcast %cst_25 : f32 to vector<4x16xf32>
    %43 = arith.addf %42, %41 : vector<4x16xf32>
    %44 = arith.divf %42, %43 : vector<4x16xf32>
    %45 = vector.extract_strided_slice %32 {offsets = [0, 32], sizes = [4, 16], strides = [1, 1]} : vector<4x64xf32> to vector<4x16xf32>
    %46 = math.tanh %45 : vector<4x16xf32>
    %47 = vector.extract_strided_slice %32 {offsets = [0, 48], sizes = [4, 16], strides = [1, 1]} : vector<4x64xf32> to vector<4x16xf32>
    %48 = arith.negf %47 : vector<4x16xf32>
    %49 = math.exp %48 : vector<4x16xf32>
    %cst_26 = arith.constant 1.000000e+00 : f32
    %50 = vector.broadcast %cst_26 : f32 to vector<4x16xf32>
    %51 = arith.addf %50, %49 : vector<4x16xf32>
    %52 = arith.divf %50, %51 : vector<4x16xf32>
    %c0_27 = arith.constant 0 : index
    %c0_28 = arith.constant 0 : index
    %53 = vector.load %arg12[%c0_27, %c0_28] : memref<4x16xf32, #tpu.memory_space<vmem>>, vector<4x16xf32>
    %54 = arith.mulf %44, %53 : vector<4x16xf32>
    %55 = arith.mulf %38, %46 : vector<4x16xf32>
    %56 = arith.addf %54, %55 : vector<4x16xf32>
    %57 = math.tanh %56 : vector<4x16xf32>
    %58 = arith.mulf %52, %57 : vector<4x16xf32>
    %c0_29 = arith.constant 0 : index
    %c0_30 = arith.constant 0 : index
    %59 = vector.load %arg12[%c0_29, %c0_30] : memref<4x16xf32, #tpu.memory_space<vmem>>, vector<4x16xf32>
    tpu.vector_store %arg12[%c0_29, %c0_30], %56 {strides = array<i32>} : memref<4x16xf32, #tpu.memory_space<vmem>>, vector<4x16xf32>,
    %c0_31 = arith.constant 0 : index
    %c0_32 = arith.constant 0 : index
    %60 = vector.load %arg11[%c0_31, %c0_32] : memref<4x16xf32, #tpu.memory_space<vmem>>, vector<4x16xf32>
    tpu.vector_store %arg11[%c0_31, %c0_32], %58 {strides = array<i32>} : memref<4x16xf32, #tpu.memory_space<vmem>>, vector<4x16xf32>,
    %61 = vector.extract_strided_slice %58 {offsets = [0, 0], sizes = [2, 16], strides = [1, 1]} : vector<4x16xf32> to vector<2x16xf32>
    %62 = arith.index_cast %arg0 : i32 to index
    %c0_33 = arith.constant 0 : index
    %c0_34 = arith.constant 0 : index
    %63 = vector.load %arg9[%62, %c0_33, %c0_34] : memref<4x2x16xf32, #tpu.memory_space<vmem>>, vector<1x2x16xf32>
    %64 = vector.shape_cast %63 : vector<1x2x16xf32> to vector<2x16xf32>
    %65 = vector.shape_cast %61 : vector<2x16xf32> to vector<1x2x16xf32>
    tpu.vector_store %arg9[%62, %c0_33, %c0_34], %65 {strides = array<i32>} : memref<4x2x16xf32, #tpu.memory_space<vmem>>, vector<1x2x16xf32>,
    %66 = vector.extract_strided_slice %58 {offsets = [2, 0], sizes = [2, 16], strides = [1, 1]} : vector<4x16xf32> to vector<2x16xf32>
    %c3_i32 = arith.constant 3 : i32
    %67 = arith.subi %c3_i32, %arg0 : i32
    %68 = arith.index_cast %67 : i32 to index
    %c0_35 = arith.constant 0 : index
    %c0_36 = arith.constant 0 : index
    %69 = vector.load %arg10[%68, %c0_35, %c0_36] : memref<4x2x16xf32, #tpu.memory_space<vmem>>, vector<1x2x16xf32>
    %70 = vector.shape_cast %69 : vector<1x2x16xf32> to vector<2x16xf32>
    %71 = vector.shape_cast %66 : vector<2x16xf32> to vector<1x2x16xf32>
    tpu.vector_store %arg10[%68, %c0_35, %c0_36], %71 {strides = array<i32>} : memref<4x2x16xf32, #tpu.memory_space<vmem>>, vector<1x2x16xf32>,
    return
  }
  func.func @transform_0(%arg0: i32) -> (i32, i32, i32) {
    %c0_i32 = arith.constant 0 : i32
    %c0_i32_0 = arith.constant 0 : i32
    %c0_i32_1 = arith.constant 0 : i32
    return %arg0, %c0_i32, %c0_i32_0 : i32, i32, i32
  }
  func.func @transform_1(%arg0: i32) -> (i32, i32, i32) {
    %c3_i32 = arith.constant 3 : i32
    %0 = arith.subi %c3_i32, %arg0 : i32
    %c0_i32 = arith.constant 0 : i32
    %c0_i32_0 = arith.constant 0 : i32
    %c0_i32_1 = arith.constant 0 : i32
    return %0, %c0_i32, %c0_i32_0 : i32, i32, i32
  }
  func.func @transform_2(%arg0: i32) -> (i32, i32, i32) {
    %c0_i32 = arith.constant 0 : i32
    %c0_i32_0 = arith.constant 0 : i32
    %c0_i32_1 = arith.constant 0 : i32
    return %arg0, %c0_i32, %c0_i32_0 : i32, i32, i32
  }
  func.func @transform_3(%arg0: i32) -> (i32, i32, i32) {
    %c3_i32 = arith.constant 3 : i32
    %0 = arith.subi %c3_i32, %arg0 : i32
    %c0_i32 = arith.constant 0 : i32
    %c0_i32_0 = arith.constant 0 : i32
    %c0_i32_1 = arith.constant 0 : i32
    return %0, %c0_i32, %c0_i32_0 : i32, i32, i32
  }
  func.func @transform_4(%arg0: i32) -> (i32, i32) {
    %c0_i32 = arith.constant 0 : i32
    %c0_i32_0 = arith.constant 0 : i32
    %c0_i32_1 = arith.constant 0 : i32
    return %c0_i32, %c0_i32_0 : i32, i32
  }
  func.func @transform_5(%arg0: i32) -> (i32, i32) {
    %c0_i32 = arith.constant 0 : i32
    %c0_i32_0 = arith.constant 0 : i32
    %c0_i32_1 = arith.constant 0 : i32
    return %c0_i32, %c0_i32_0 : i32, i32
  }
  func.func @transform_6(%arg0: i32) -> (i32, i32) {
    %c0_i32 = arith.constant 0 : i32
    %c0_i32_0 = arith.constant 0 : i32
    %c0_i32_1 = arith.constant 0 : i32
    return %c0_i32, %c0_i32_0 : i32, i32
  }
  func.func @transform_7(%arg0: i32) -> (i32, i32) {
    %c0_i32 = arith.constant 0 : i32
    %c0_i32_0 = arith.constant 0 : i32
    %c0_i32_1 = arith.constant 0 : i32
    return %c0_i32, %c0_i32_0 : i32, i32
  }
  func.func @transform_8(%arg0: i32) -> (i32, i32, i32) {
    %c0_i32 = arith.constant 0 : i32
    %c0_i32_0 = arith.constant 0 : i32
    %c0_i32_1 = arith.constant 0 : i32
    %c0_i32_2 = arith.constant 0 : i32
    return %c0_i32, %c0_i32_0, %c0_i32_1 : i32, i32, i32
  }
  func.func @transform_9(%arg0: i32) -> (i32, i32, i32) {
    %c0_i32 = arith.constant 0 : i32
    %c0_i32_0 = arith.constant 0 : i32
    %c0_i32_1 = arith.constant 0 : i32
    %c0_i32_2 = arith.constant 0 : i32
    return %c0_i32, %c0_i32_0, %c0_i32_1 : i32, i32, i32
  }
}

module attributes {stable_mosaic.version = 11 : i64} {
  func.func @_sent_graph_kernel(%arg0: i32, %arg1: memref<1x4x32xf32, #tpu.memory_space<vmem>>, %arg2: memref<1x4x4xf32, #tpu.memory_space<vmem>>, %arg3: memref<32x16xf32, #tpu.memory_space<vmem>>, %arg4: memref<1x16xf32, #tpu.memory_space<vmem>>, %arg5: memref<16x16xf32, #tpu.memory_space<vmem>>, %arg6: memref<1x16xf32, #tpu.memory_space<vmem>>, %arg7: memref<16x16xf32, #tpu.memory_space<vmem>>, %arg8: memref<1x16xf32, #tpu.memory_space<vmem>>, %arg9: memref<16x16xf32, #tpu.memory_space<vmem>>, %arg10: memref<1x16xf32, #tpu.memory_space<vmem>>, %arg11: memref<1x4x16xf32, #tpu.memory_space<vmem>>, %arg12: memref<1x1x16xf32, #tpu.memory_space<vmem>>) attributes {dimension_semantics = [#tpu.dimension_semantics<parallel>], iteration_bounds = array<i64: 2>, scalar_prefetch = 0 : i64, scratch_operands = 0 : i64, tpu.core_type = #tpu.core_type<tc>, window_params = [{transform_indices = @transform_0, window_bounds = array<i64: 1, 4, 32>}, {transform_indices = @transform_1, window_bounds = array<i64: 1, 4, 4>}, {pipeline_mode = #tpu.pipeline_mode<synchronous>, transform_indices = @transform_2, window_bounds = array<i64: 32, 16>}, {pipeline_mode = #tpu.pipeline_mode<synchronous>, transform_indices = @transform_3, window_bounds = array<i64: 1, 16>}, {pipeline_mode = #tpu.pipeline_mode<synchronous>, transform_indices = @transform_4, window_bounds = array<i64: 16, 16>}, {pipeline_mode = #tpu.pipeline_mode<synchronous>, transform_indices = @transform_5, window_bounds = array<i64: 1, 16>}, {pipeline_mode = #tpu.pipeline_mode<synchronous>, transform_indices = @transform_6, window_bounds = array<i64: 16, 16>}, {pipeline_mode = #tpu.pipeline_mode<synchronous>, transform_indices = @transform_7, window_bounds = array<i64: 1, 16>}, {pipeline_mode = #tpu.pipeline_mode<synchronous>, transform_indices = @transform_8, window_bounds = array<i64: 16, 16>}, {pipeline_mode = #tpu.pipeline_mode<synchronous>, transform_indices = @transform_9, window_bounds = array<i64: 1, 16>}, {transform_indices = @transform_10, window_bounds = array<i64: 1, 4, 16>}, {transform_indices = @transform_11, window_bounds = array<i64: 1, 1, 16>}]} {
    %c0 = arith.constant 0 : index
    %c0_0 = arith.constant 0 : index
    %c0_1 = arith.constant 0 : index
    %0 = vector.load %arg1[%c0, %c0_0, %c0_1] : memref<1x4x32xf32, #tpu.memory_space<vmem>>, vector<1x4x32xf32>
    %1 = vector.shape_cast %0 : vector<1x4x32xf32> to vector<4x32xf32>
    %c0_2 = arith.constant 0 : index
    %c0_3 = arith.constant 0 : index
    %c0_4 = arith.constant 0 : index
    %2 = vector.load %arg2[%c0_2, %c0_3, %c0_4] : memref<1x4x4xf32, #tpu.memory_space<vmem>>, vector<1x4x4xf32>
    %3 = vector.shape_cast %2 : vector<1x4x4xf32> to vector<4x4xf32>
    %c0_5 = arith.constant 0 : index
    %c0_6 = arith.constant 0 : index
    %4 = vector.load %arg3[%c0_5, %c0_6] : memref<32x16xf32, #tpu.memory_space<vmem>>, vector<32x16xf32>
    %cst = arith.constant dense<0.000000e+00> : vector<4x16xf32>
    %5 = tpu.matmul %1, %4, %cst {dimension_numbers = #tpu.dot_dimension_numbers<[1], [0], [0], [1], [0, 0, 1, 1], [], []>} : vector<4x32xf32>, vector<32x16xf32>, vector<4x16xf32> -> vector<4x16xf32>
    %c0_7 = arith.constant 0 : index
    %c0_8 = arith.constant 0 : index
    %6 = vector.load %arg4[%c0_7, %c0_8] : memref<1x16xf32, #tpu.memory_space<vmem>>, vector<1x16xf32>
    %7 = vector.broadcast %6 : vector<1x16xf32> to vector<4x16xf32>
    %8 = arith.addf %5, %7 : vector<4x16xf32>
    %9 = math.tanh %8 : vector<4x16xf32>
    %cst_9 = arith.constant dense<0.000000e+00> : vector<4x4xf32>
    %10 = tpu.matmul %9, %9, %cst_9 {dimension_numbers = #tpu.dot_dimension_numbers<[1], [1], [0], [0], [0, 0, 1, 0], [], []>} : vector<4x16xf32>, vector<4x16xf32>, vector<4x4xf32> -> vector<4x4xf32>
    %11 = math.absf %10 : vector<4x4xf32>
    %12 = tpu.iota {dimensions = array<i32: 0>} : vector<4x4xi32>
    %13 = tpu.iota {dimensions = array<i32: 1>} : vector<4x4xi32>
    %14 = arith.cmpi eq, %12, %13 : vector<4x4xi32>
    %cst_10 = arith.constant 1.000000e+00 : f32
    %cst_11 = arith.constant 0.000000e+00 : f32
    %15 = vector.broadcast %cst_10 : f32 to vector<4x4xf32>
    %16 = vector.broadcast %cst_11 : f32 to vector<4x4xf32>
    %17 = arith.select %14, %15, %16 : vector<4x4xi1>, vector<4x4xf32>
    %18 = arith.addf %11, %17 : vector<4x4xf32>
    %cst_12 = arith.constant dense<0.000000e+00> : vector<4xf32>
    %19 = vector.multi_reduction <add>, %18, %cst_12 [1] : vector<4x4xf32> to vector<4xf32>
    %20 = vector.shape_cast %19 : vector<4xf32> to vector<4x1xf32>
    %21 = math.rsqrt %20 : vector<4x1xf32>
    %cst_13 = arith.constant dense<0.000000e+00> : vector<4xf32>
    %22 = vector.multi_reduction <add>, %18, %cst_13 [0] : vector<4x4xf32> to vector<4xf32>
    %23 = vector.shape_cast %22 : vector<4xf32> to vector<1x4xf32>
    %24 = math.rsqrt %23 : vector<1x4xf32>
    %25 = vector.broadcast %21 : vector<4x1xf32> to vector<4x4xf32>
    %26 = arith.mulf %18, %25 : vector<4x4xf32>
    %27 = vector.broadcast %24 : vector<1x4xf32> to vector<4x4xf32>
    %28 = arith.mulf %26, %27 : vector<4x4xf32>
    %29 = arith.addf %3, %28 : vector<4x4xf32>
    %cst_14 = arith.constant 5.000000e-01 : f32
    %30 = vector.broadcast %cst_14 : f32 to vector<4x4xf32>
    %31 = arith.mulf %29, %30 : vector<4x4xf32>
    %cst_15 = arith.constant dense<0.000000e+00> : vector<4x16xf32>
    %32 = tpu.matmul %31, %9, %cst_15 {dimension_numbers = #tpu.dot_dimension_numbers<[1], [0], [0], [1], [0, 0, 1, 1], [], []>} : vector<4x4xf32>, vector<4x16xf32>, vector<4x16xf32> -> vector<4x16xf32>
    %c0_16 = arith.constant 0 : index
    %c0_17 = arith.constant 0 : index
    %33 = vector.load %arg5[%c0_16, %c0_17] : memref<16x16xf32, #tpu.memory_space<vmem>>, vector<16x16xf32>
    %cst_18 = arith.constant dense<0.000000e+00> : vector<4x16xf32>
    %34 = tpu.matmul %32, %33, %cst_18 {dimension_numbers = #tpu.dot_dimension_numbers<[1], [0], [0], [1], [0, 0, 1, 1], [], []>} : vector<4x16xf32>, vector<16x16xf32>, vector<4x16xf32> -> vector<4x16xf32>
    %c0_19 = arith.constant 0 : index
    %c0_20 = arith.constant 0 : index
    %35 = vector.load %arg6[%c0_19, %c0_20] : memref<1x16xf32, #tpu.memory_space<vmem>>, vector<1x16xf32>
    %36 = vector.broadcast %35 : vector<1x16xf32> to vector<4x16xf32>
    %37 = arith.addf %34, %36 : vector<4x16xf32>
    %cst_21 = arith.constant 0.000000e+00 : f32
    %38 = vector.broadcast %cst_21 : f32 to vector<4x16xf32>
    %39 = arith.maximumf %37, %38 : vector<4x16xf32>
    %cst_22 = arith.constant dense<0.000000e+00> : vector<4x16xf32>
    %40 = tpu.matmul %31, %39, %cst_22 {dimension_numbers = #tpu.dot_dimension_numbers<[1], [0], [0], [1], [0, 0, 1, 1], [], []>} : vector<4x4xf32>, vector<4x16xf32>, vector<4x16xf32> -> vector<4x16xf32>
    %c0_23 = arith.constant 0 : index
    %c0_24 = arith.constant 0 : index
    %41 = vector.load %arg7[%c0_23, %c0_24] : memref<16x16xf32, #tpu.memory_space<vmem>>, vector<16x16xf32>
    %cst_25 = arith.constant dense<0.000000e+00> : vector<4x16xf32>
    %42 = tpu.matmul %40, %41, %cst_25 {dimension_numbers = #tpu.dot_dimension_numbers<[1], [0], [0], [1], [0, 0, 1, 1], [], []>} : vector<4x16xf32>, vector<16x16xf32>, vector<4x16xf32> -> vector<4x16xf32>
    %c0_26 = arith.constant 0 : index
    %c0_27 = arith.constant 0 : index
    %43 = vector.load %arg8[%c0_26, %c0_27] : memref<1x16xf32, #tpu.memory_space<vmem>>, vector<1x16xf32>
    %44 = vector.broadcast %43 : vector<1x16xf32> to vector<4x16xf32>
    %45 = arith.addf %42, %44 : vector<4x16xf32>
    %cst_28 = arith.constant 0.000000e+00 : f32
    %46 = vector.broadcast %cst_28 : f32 to vector<4x16xf32>
    %47 = arith.maximumf %45, %46 : vector<4x16xf32>
    %c0_29 = arith.constant 0 : index
    %c0_30 = arith.constant 0 : index
    %c0_31 = arith.constant 0 : index
    %48 = vector.load %arg11[%c0_29, %c0_30, %c0_31] : memref<1x4x16xf32, #tpu.memory_space<vmem>>, vector<1x4x16xf32>
    %49 = vector.shape_cast %48 : vector<1x4x16xf32> to vector<4x16xf32>
    %50 = vector.shape_cast %47 : vector<4x16xf32> to vector<1x4x16xf32>
    tpu.vector_store %arg11[%c0_29, %c0_30, %c0_31], %50 {strides = array<i32>} : memref<1x4x16xf32, #tpu.memory_space<vmem>>, vector<1x4x16xf32>,
    %cst_32 = arith.constant dense<0xFF800000> : vector<16xf32>
    %51 = vector.multi_reduction <maximumf>, %47, %cst_32 [0] : vector<4x16xf32> to vector<16xf32>
    %52 = vector.shape_cast %51 : vector<16xf32> to vector<1x16xf32>
    %c0_33 = arith.constant 0 : index
    %c0_34 = arith.constant 0 : index
    %53 = vector.load %arg9[%c0_33, %c0_34] : memref<16x16xf32, #tpu.memory_space<vmem>>, vector<16x16xf32>
    %cst_35 = arith.constant dense<0.000000e+00> : vector<1x16xf32>
    %54 = tpu.matmul %52, %53, %cst_35 {dimension_numbers = #tpu.dot_dimension_numbers<[1], [0], [0], [1], [0, 0, 1, 1], [], []>} : vector<1x16xf32>, vector<16x16xf32>, vector<1x16xf32> -> vector<1x16xf32>
    %c0_36 = arith.constant 0 : index
    %c0_37 = arith.constant 0 : index
    %55 = vector.load %arg10[%c0_36, %c0_37] : memref<1x16xf32, #tpu.memory_space<vmem>>, vector<1x16xf32>
    %56 = arith.addf %54, %55 : vector<1x16xf32>
    %57 = math.tanh %56 : vector<1x16xf32>
    %c0_38 = arith.constant 0 : index
    %c0_39 = arith.constant 0 : index
    %c0_40 = arith.constant 0 : index
    %58 = vector.load %arg12[%c0_38, %c0_39, %c0_40] : memref<1x1x16xf32, #tpu.memory_space<vmem>>, vector<1x1x16xf32>
    %59 = vector.shape_cast %58 : vector<1x1x16xf32> to vector<1x16xf32>
    %60 = vector.shape_cast %57 : vector<1x16xf32> to vector<1x1x16xf32>
    tpu.vector_store %arg12[%c0_38, %c0_39, %c0_40], %60 {strides = array<i32>} : memref<1x1x16xf32, #tpu.memory_space<vmem>>, vector<1x1x16xf32>,
    return
  }
  func.func @transform_0(%arg0: i32) -> (i32, i32, i32) {
    %c0_i32 = arith.constant 0 : i32
    %c0_i32_0 = arith.constant 0 : i32
    %c0_i32_1 = arith.constant 0 : i32
    return %arg0, %c0_i32, %c0_i32_0 : i32, i32, i32
  }
  func.func @transform_1(%arg0: i32) -> (i32, i32, i32) {
    %c0_i32 = arith.constant 0 : i32
    %c0_i32_0 = arith.constant 0 : i32
    %c0_i32_1 = arith.constant 0 : i32
    return %arg0, %c0_i32, %c0_i32_0 : i32, i32, i32
  }
  func.func @transform_2(%arg0: i32) -> (i32, i32) {
    %c0_i32 = arith.constant 0 : i32
    %c0_i32_0 = arith.constant 0 : i32
    %c0_i32_1 = arith.constant 0 : i32
    return %c0_i32, %c0_i32_0 : i32, i32
  }
  func.func @transform_3(%arg0: i32) -> (i32, i32) {
    %c0_i32 = arith.constant 0 : i32
    %c0_i32_0 = arith.constant 0 : i32
    %c0_i32_1 = arith.constant 0 : i32
    return %c0_i32, %c0_i32_0 : i32, i32
  }
  func.func @transform_4(%arg0: i32) -> (i32, i32) {
    %c0_i32 = arith.constant 0 : i32
    %c0_i32_0 = arith.constant 0 : i32
    %c0_i32_1 = arith.constant 0 : i32
    return %c0_i32, %c0_i32_0 : i32, i32
  }
  func.func @transform_5(%arg0: i32) -> (i32, i32) {
    %c0_i32 = arith.constant 0 : i32
    %c0_i32_0 = arith.constant 0 : i32
    %c0_i32_1 = arith.constant 0 : i32
    return %c0_i32, %c0_i32_0 : i32, i32
  }
  func.func @transform_6(%arg0: i32) -> (i32, i32) {
    %c0_i32 = arith.constant 0 : i32
    %c0_i32_0 = arith.constant 0 : i32
    %c0_i32_1 = arith.constant 0 : i32
    return %c0_i32, %c0_i32_0 : i32, i32
  }
  func.func @transform_7(%arg0: i32) -> (i32, i32) {
    %c0_i32 = arith.constant 0 : i32
    %c0_i32_0 = arith.constant 0 : i32
    %c0_i32_1 = arith.constant 0 : i32
    return %c0_i32, %c0_i32_0 : i32, i32
  }
  func.func @transform_8(%arg0: i32) -> (i32, i32) {
    %c0_i32 = arith.constant 0 : i32
    %c0_i32_0 = arith.constant 0 : i32
    %c0_i32_1 = arith.constant 0 : i32
    return %c0_i32, %c0_i32_0 : i32, i32
  }
  func.func @transform_9(%arg0: i32) -> (i32, i32) {
    %c0_i32 = arith.constant 0 : i32
    %c0_i32_0 = arith.constant 0 : i32
    %c0_i32_1 = arith.constant 0 : i32
    return %c0_i32, %c0_i32_0 : i32, i32
  }
  func.func @transform_10(%arg0: i32) -> (i32, i32, i32) {
    %c0_i32 = arith.constant 0 : i32
    %c0_i32_0 = arith.constant 0 : i32
    %c0_i32_1 = arith.constant 0 : i32
    return %arg0, %c0_i32, %c0_i32_0 : i32, i32, i32
  }
  func.func @transform_11(%arg0: i32) -> (i32, i32, i32) {
    %c0_i32 = arith.constant 0 : i32
    %c0_i32_0 = arith.constant 0 : i32
    %c0_i32_1 = arith.constant 0 : i32
    return %arg0, %c0_i32, %c0_i32_0 : i32, i32, i32
  }
}

module attributes {stable_mosaic.version = 11 : i64} {
  func.func @_selector_kernel(%arg0: memref<8x16xf32, #tpu.memory_space<vmem>>, %arg1: memref<8x16xf32, #tpu.memory_space<vmem>>, %arg2: memref<8x16xf32, #tpu.memory_space<vmem>>, %arg3: memref<16x16xf32, #tpu.memory_space<vmem>>, %arg4: memref<1x16xf32, #tpu.memory_space<vmem>>, %arg5: memref<16x16xf32, #tpu.memory_space<vmem>>, %arg6: memref<16x16xf32, #tpu.memory_space<vmem>>, %arg7: memref<16x16xf32, #tpu.memory_space<vmem>>, %arg8: memref<1x16xf32, #tpu.memory_space<vmem>>, %arg9: memref<16x2xf32, #tpu.memory_space<vmem>>, %arg10: memref<1x2xf32, #tpu.memory_space<vmem>>, %arg11: memref<8x2xf32, #tpu.memory_space<vmem>>) attributes {dimension_semantics = [], scalar_prefetch = 0 : i64, scratch_operands = 0 : i64, tpu.core_type = #tpu.core_type<tc>} {
    %c0 = arith.constant 0 : index
    %c0_0 = arith.constant 0 : index
    %0 = vector.load %arg0[%c0, %c0_0] : memref<8x16xf32, #tpu.memory_space<vmem>>, vector<8x16xf32>
    %c0_1 = arith.constant 0 : index
    %c0_2 = arith.constant 0 : index
    %1 = vector.load %arg3[%c0_1, %c0_2] : memref<16x16xf32, #tpu.memory_space<vmem>>, vector<16x16xf32>
    %cst = arith.constant dense<0.000000e+00> : vector<8x16xf32>
    %2 = tpu.matmul %0, %1, %cst {dimension_numbers = #tpu.dot_dimension_numbers<[1], [0], [0], [1], [0, 0, 1, 1], [], []>} : vector<8x16xf32>, vector<16x16xf32>, vector<8x16xf32> -> vector<8x16xf32>
    %c0_3 = arith.constant 0 : index
    %c0_4 = arith.constant 0 : index
    %3 = vector.load %arg4[%c0_3, %c0_4] : memref<1x16xf32, #tpu.memory_space<vmem>>, vector<1x16xf32>
    %4 = vector.broadcast %3 : vector<1x16xf32> to vector<8x16xf32>
    %5 = arith.addf %2, %4 : vector<8x16xf32>
    %6 = math.tanh %5 : vector<8x16xf32>
    %c0_5 = arith.constant 0 : index
    %c0_6 = arith.constant 0 : index
    %7 = vector.load %arg5[%c0_5, %c0_6] : memref<16x16xf32, #tpu.memory_space<vmem>>, vector<16x16xf32>
    %cst_7 = arith.constant dense<0.000000e+00> : vector<8x16xf32>
    %8 = tpu.matmul %6, %7, %cst_7 {dimension_numbers = #tpu.dot_dimension_numbers<[1], [0], [0], [1], [0, 0, 1, 1], [], []>} : vector<8x16xf32>, vector<16x16xf32>, vector<8x16xf32> -> vector<8x16xf32>
    %c0_8 = arith.constant 0 : index
    %c0_9 = arith.constant 0 : index
    %9 = vector.load %arg1[%c0_8, %c0_9] : memref<8x16xf32, #tpu.memory_space<vmem>>, vector<8x16xf32>
    %c0_10 = arith.constant 0 : index
    %c0_11 = arith.constant 0 : index
    %10 = vector.load %arg6[%c0_10, %c0_11] : memref<16x16xf32, #tpu.memory_space<vmem>>, vector<16x16xf32>
    %cst_12 = arith.constant dense<0.000000e+00> : vector<8x16xf32>
    %11 = tpu.matmul %9, %10, %cst_12 {dimension_numbers = #tpu.dot_dimension_numbers<[1], [0], [0], [1], [0, 0, 1, 1], [], []>} : vector<8x16xf32>, vector<16x16xf32>, vector<8x16xf32> -> vector<8x16xf32>
    %12 = arith.addf %8, %11 : vector<8x16xf32>
    %c0_13 = arith.constant 0 : index
    %c0_14 = arith.constant 0 : index
    %13 = vector.load %arg2[%c0_13, %c0_14] : memref<8x16xf32, #tpu.memory_space<vmem>>, vector<8x16xf32>
    %c0_15 = arith.constant 0 : index
    %c0_16 = arith.constant 0 : index
    %14 = vector.load %arg7[%c0_15, %c0_16] : memref<16x16xf32, #tpu.memory_space<vmem>>, vector<16x16xf32>
    %cst_17 = arith.constant dense<0.000000e+00> : vector<8x16xf32>
    %15 = tpu.matmul %13, %14, %cst_17 {dimension_numbers = #tpu.dot_dimension_numbers<[1], [0], [0], [1], [0, 0, 1, 1], [], []>} : vector<8x16xf32>, vector<16x16xf32>, vector<8x16xf32> -> vector<8x16xf32>
    %16 = arith.addf %12, %15 : vector<8x16xf32>
    %c0_18 = arith.constant 0 : index
    %c0_19 = arith.constant 0 : index
    %17 = vector.load %arg8[%c0_18, %c0_19] : memref<1x16xf32, #tpu.memory_space<vmem>>, vector<1x16xf32>
    %18 = vector.broadcast %17 : vector<1x16xf32> to vector<8x16xf32>
    %19 = arith.addf %16, %18 : vector<8x16xf32>
    %20 = math.tanh %19 : vector<8x16xf32>
    %c0_20 = arith.constant 0 : index
    %c0_21 = arith.constant 0 : index
    %21 = vector.load %arg9[%c0_20, %c0_21] : memref<16x2xf32, #tpu.memory_space<vmem>>, vector<16x2xf32>
    %cst_22 = arith.constant dense<0.000000e+00> : vector<8x2xf32>
    %22 = tpu.matmul %20, %21, %cst_22 {dimension_numbers = #tpu.dot_dimension_numbers<[1], [0], [0], [1], [0, 0, 1, 1], [], []>} : vector<8x16xf32>, vector<16x2xf32>, vector<8x2xf32> -> vector<8x2xf32>
    %c0_23 = arith.constant 0 : index
    %c0_24 = arith.constant 0 : index
    %23 = vector.load %arg10[%c0_23, %c0_24] : memref<1x2xf32, #tpu.memory_space<vmem>>, vector<1x2xf32>
    %24 = vector.broadcast %23 : vector<1x2xf32> to vector<8x2xf32>
    %25 = arith.addf %22, %24 : vector<8x2xf32>
    %c0_25 = arith.constant 0 : index
    %c0_26 = arith.constant 0 : index
    %26 = vector.load %arg11[%c0_25, %c0_26] : memref<8x2xf32, #tpu.memory_space<vmem>>, vector<8x2xf32>
    tpu.vector_store %arg11[%c0_25, %c0_26], %25 {strides = array<i32>} : memref<8x2xf32, #tpu.memory_space<vmem>>, vector<8x2xf32>,
    return
  }
}

</mosaic_0001>

<llo_original>
// kernel: multigras_forward.10
$region0: #{multigras_forward.10}
  #allocation0 [shape = 'u32[]', space=smem, size = 0x4, offset = 0x4, fixed_abs, tag = 'smem constant byte address 0x4 - core index']
  #allocation1 [shape = 'u32[144,128]{1,0:T(1,128)}', space=vmem, size = 0x12000, scoped, tag = 'internal scratch']
  #allocation2 [shape = 'f32[4,16]{1,0:T(4,128)}', space=vmem, size = 0x800, scoped, tag = 'scratch operand']
  #allocation3 [shape = 'f32[4,16]{1,0:T(4,128)}', space=vmem, size = 0x800, scoped, tag = 'scratch operand']
  %s0 = inlined_call_operand.vmem [shape: f32[4,2,16], index: 0, kind: input, shape index: {}, may-alias: {0,1}]
  %s1 = inlined_call_operand.vmem [shape: f32[4,2,16], index: 1, kind: input, shape index: {}, may-alias: {0,1}]
  %s2 = inlined_call_operand.vmem [shape: f32[16,128], index: 2, kind: input, shape index: {}]
  %s3 = inlined_call_operand.vmem [shape: f32[16,128], index: 3, kind: input, shape index: {}]
  %s4 = inlined_call_operand.vmem [shape: f32[1,128], index: 4, kind: input, shape index: {}]
  %s5 = inlined_call_operand.vmem [shape: f32[4,2,16], index: 5, kind: output, shape index: {0}]
  %s6 = inlined_call_operand.vmem [shape: f32[4,2,16], index: 6, kind: output, shape index: {1}]
  %7 = xla_tuple %s5, %s6
  %s8 = sld [smem:[#allocation0]]
  $region65: #{multigras_forward.10} parent=0
    _
  %s10 = ssub.s32 1, %s8
  %s11 = scalar_select 0, %s10, %s8
  loop: start=0, step=1, limit=6
  $region2: #{multigras_forward.10} parent=0 // loop_pre_header
    _
  $region3: #{multigras_forward.10} parent=0 // loop_header
    %s13 = sphi 0, %s17
    %p14 = scmp.ge.s32.totalorder %s13, 6
    %s23 = sphi 0, %s25
    %s26 = sphi 0, %s23
    %s27 = sphi 0, %s26
    %s43 = sphi 0, %s27
    %s51 = sphi 0, %s53
    %s54 = sphi 0, %s51
    %s55 = sphi 0, %s54
    %s71 = sphi 0, %s55
    %s75 = sphi 0, %s75
    %s77 = sphi 0, %s75
    %s78 = sphi 0, %s77
    %s92 = sphi 0, %s78
    %s96 = sphi 0, %s96
    %s98 = sphi 0, %s96
    %s99 = sphi 0, %s98
    %s113 = sphi 0, %s99
    %s117 = sphi 0, %s117
    %s119 = sphi 0, %s117
    %s120 = sphi 0, %s119
    %s134 = sphi 0, %s120
    %s138 = sphi 0, %s138
    %s140 = sphi 0, %s138
    %s141 = sphi 0, %s140
    %s155 = sphi 0, %s141
    %s159 = sphi 0, %s159
    %s161 = sphi 0, %s159
    %s162 = sphi 0, %s161
    %s176 = sphi 0, %s162
  $region4: #{multigras_forward.10} parent=0 // loop_header_branch
    %16 = sbr.rel (%p14) target = $region8
  $region5: #{multigras_forward.10} parent=0 // loop_body
    %s18 = ssub.s32 %s13, 1
    %s19 = ssub.s32 %s13, 2
    %s20 = sadd.s32 %s13, 1
    %s21 = ssub.s32 %s13, %s20
    %p22 = scmp.eq.s32.totalorder %s21, 0
    %s24 = sadd.s32 %s23, 1
    %s25 = scalar_select %p22, %s23, %s24
    %p28 = pneg %p22
    %p29 = scmp.eq.s32.totalorder %s13, 3
    %p30 = por %p28, %p29
    %p31 = scmp.ne.s32.totalorder %s23, %s26
    %p32 = scmp.eq.s32.totalorder %s13, 0
    %p33 = por %p31, %p32
    %p34 = scmp.ne.s32.totalorder %s23, %s26
    %p35 = scmp.eq.s32.totalorder %s18, 3
    %p36 = por %p34, %p35
    %p37 = scmp.ne.s32.totalorder %s26, %s27
    %p38 = scmp.eq.s32.totalorder %s18, 0
    %p39 = por %p37, %p38
    %p40 = scmp.ne.s32.totalorder %s26, %s27
    %p41 = scmp.eq.s32.totalorder %s19, 3
    %p42 = por %p40, %p41
    %p44 = scmp.ne.s32.totalorder %s27, %s43
    %p45 = scmp.eq.s32.totalorder %s19, 0
    %p46 = por %p44, %p45
    %s47 = ssub.s32 3, %s13
    %s48 = ssub.s32 3, %s20
    %s49 = ssub.s32 %s47, %s48
    %p50 = scmp.eq.s32.totalorder %s49, 0
    %s52 = sadd.s32 %s51, 1
    %s53 = scalar_select %p50, %s51, %s52
    %p56 = pneg %p50
    %p57 = scmp.eq.s32.totalorder %s13, 3
    %p58 = por %p56, %p57
    %p59 = scmp.ne.s32.totalorder %s51, %s54
    %p60 = scmp.eq.s32.totalorder %s13, 0
    %p61 = por %p59, %p60
    %p62 = scmp.ne.s32.totalorder %s51, %s54
    %p63 = scmp.eq.s32.totalorder %s18, 3
    %p64 = por %p62, %p63
    %p65 = scmp.ne.s32.totalorder %s54, %s55
    %p66 = scmp.eq.s32.totalorder %s18, 0
    %p67 = por %p65, %p66
    %p68 = scmp.ne.s32.totalorder %s54, %s55
    %p69 = scmp.eq.s32.totalorder %s19, 3
    %p70 = por %p68, %p69
    %p72 = scmp.ne.s32.totalorder %s55, %s71
    %p73 = scmp.eq.s32.totalorder %s19, 0
    %p74 = por %p72, %p73
    %s76 = sadd.s32 %s75, 1
    %p79 = scmp.eq.s32.totalorder %s13, 3
    %p80 = scmp.ne.s32.totalorder %s75, %s77
    %p81 = scmp.eq.s32.totalorder %s13, 0
    %p82 = por %p80, %p81
    %p83 = scmp.ne.s32.totalorder %s75, %s77
    %p84 = scmp.eq.s32.totalorder %s18, 3
    %p85 = por %p83, %p84
    %p86 = scmp.ne.s32.totalorder %s77, %s78
    %p87 = scmp.eq.s32.totalorder %s18, 0
    %p88 = por %p86, %p87
    %p89 = scmp.ne.s32.totalorder %s77, %s78
    %p90 = scmp.eq.s32.totalorder %s19, 3
    %p91 = por %p89, %p90
    %p93 = scmp.ne.s32.totalorder %s78, %s92
    %p94 = scmp.eq.s32.totalorder %s19, 0
    %p95 = por %p93, %p94
    %s97 = sadd.s32 %s96, 1
    %p100 = scmp.eq.s32.totalorder %s13, 3
    %p101 = scmp.ne.s32.totalorder %s96, %s98
    %p102 = scmp.eq.s32.totalorder %s13, 0
    %p103 = por %p101, %p102
    %p104 = scmp.ne.s32.totalorder %s96, %s98
    %p105 = scmp.eq.s32.totalorder %s18, 3
    %p106 = por %p104, %p105
    %p107 = scmp.ne.s32.totalorder %s98, %s99
    %p108 = scmp.eq.s32.totalorder %s18, 0
    %p109 = por %p107, %p108
    %p110 = scmp.ne.s32.totalorder %s98, %s99
    %p111 = scmp.eq.s32.totalorder %s19, 3
    %p112 = por %p110, %p111
    %p114 = scmp.ne.s32.totalorder %s99, %s113
    %p115 = scmp.eq.s32.totalorder %s19, 0
    %p116 = por %p114, %p115
    %s118 = sadd.s32 %s117, 1
    %p121 = scmp.eq.s32.totalorder %s13, 3
    %p122 = scmp.ne.s32.totalorder %s117, %s119
    %p123 = scmp.eq.s32.totalorder %s13, 0
    %p124 = por %p122, %p123
    %p125 = scmp.ne.s32.totalorder %s117, %s119
    %p126 = scmp.eq.s32.totalorder %s18, 3
    %p127 = por %p125, %p126
    %p128 = scmp.ne.s32.totalorder %s119, %s120
    %p129 = scmp.eq.s32.totalorder %s18, 0
    %p130 = por %p128, %p129
    %p131 = scmp.ne.s32.totalorder %s119, %s120
    %p132 = scmp.eq.s32.totalorder %s19, 3
    %p133 = por %p131, %p132
    %p135 = scmp.ne.s32.totalorder %s120, %s134
    %p136 = scmp.eq.s32.totalorder %s19, 0
    %p137 = por %p135, %p136
    %s139 = sadd.s32 %s138, 1
    %p142 = scmp.eq.s32.totalorder %s13, 3
    %p143 = scmp.ne.s32.totalorder %s138, %s140
    %p144 = scmp.eq.s32.totalorder %s13, 0
    %p145 = por %p143, %p144
    %p146 = scmp.ne.s32.totalorder %s138, %s140
    %p147 = scmp.eq.s32.totalorder %s18, 3
    %p148 = por %p146, %p147
    %p149 = scmp.ne.s32.totalorder %s140, %s141
    %p150 = scmp.eq.s32.totalorder %s18, 0
    %p151 = por %p149, %p150
    %p152 = scmp.ne.s32.totalorder %s140, %s141
    %p153 = scmp.eq.s32.totalorder %s19, 3
    %p154 = por %p152, %p153
    %p156 = scmp.ne.s32.totalorder %s141, %s155
    %p157 = scmp.eq.s32.totalorder %s19, 0
    %p158 = por %p156, %p157
    %s160 = sadd.s32 %s159, 1
    %p163 = scmp.eq.s32.totalorder %s13, 3
    %p164 = scmp.ne.s32.totalorder %s159, %s161
    %p165 = scmp.eq.s32.totalorder %s13, 0
    %p166 = por %p164, %p165
    %p167 = scmp.ne.s32.totalorder %s159, %s161
    %p168 = scmp.eq.s32.totalorder %s18, 3
    %p169 = por %p167, %p168
    %p170 = scmp.ne.s32.totalorder %s161, %s162
    %p171 = scmp.eq.s32.totalorder %s18, 0
    %p172 = por %p170, %p171
    %p173 = scmp.ne.s32.totalorder %s161, %s162
    %p174 = scmp.eq.s32.totalorder %s19, 3
    %p175 = por %p173, %p174
    %p177 = scmp.ne.s32.totalorder %s162, %s176
    %p178 = scmp.eq.s32.totalorder %s19, 0
    %p179 = por %p177, %p178
    %p180 = scmp.le.s32.totalorder 1, %s13
    %p181 = scmp.lt.s32.totalorder %s13, 5
    %p182 = pnand %p180, %p181
    %p183 = pneg %p182
    // Predicated region
    $region9: #{multigras_forward.10} parent=5 // pred_check
      _
    $region10: #{multigras_forward.10} parent=5 // pred_check_branch
      %185 = sbr.rel (%p182) target = $region12
    $region11: #{multigras_forward.10} parent=5 // pred_region
      %s186 = ssub.s32 %s13, 1
      // Predicated region
      $region13: #{multigras_forward.10} parent=11 // pred_check
        %p187 = pneg %p88
      $region14: #{multigras_forward.10} parent=11 // pred_check_branch
        %189 = sbr.rel (%p187) target = $region16
      $region15: #{multigras_forward.10} parent=11 // pred_region
        _
      $region16: #{multigras_forward.10} parent=11 // pred_fallthru
        _
      // Predicated region
      $region17: #{multigras_forward.10} parent=11 // pred_check
        %p190 = pneg %p109
      $region18: #{multigras_forward.10} parent=11 // pred_check_branch
        %192 = sbr.rel (%p190) target = $region20
      $region19: #{multigras_forward.10} parent=11 // pred_region
        _
      $region20: #{multigras_forward.10} parent=11 // pred_fallthru
        _
      // Predicated region
      $region21: #{multigras_forward.10} parent=11 // pred_check
        %p193 = pneg %p130
      $region22: #{multigras_forward.10} parent=11 // pred_check_branch
        %195 = sbr.rel (%p193) target = $region24
      $region23: #{multigras_forward.10} parent=11 // pred_region
        _
      $region24: #{multigras_forward.10} parent=11 // pred_fallthru
        _
    $region12: #{multigras_forward.10} parent=5 // pred_fallthru
      _
    %p196 = scmp.lt.s32.totalorder %s13, 4
    // Predicated region
    $region25: #{multigras_forward.10} parent=5 // pred_check
      %p197 = pneg %p196
    $region26: #{multigras_forward.10} parent=5 // pred_check_branch
      %199 = sbr.rel (%p197) target = $region28
    $region27: #{multigras_forward.10} parent=5 // pred_region
      // Predicated region
      $region29: #{multigras_forward.10} parent=27 // pred_check
        %p200 = pneg %p33
      $region30: #{multigras_forward.10} parent=27 // pred_check_branch
        %202 = sbr.rel (%p200) target = $region32
      $region31: #{multigras_forward.10} parent=27 // pred_region
        %p203 = scmp.lt.s32.totalorder %s13, 3
        %s204 = scalar_select %p203, %s13, 3
        %s205 = smul.addr %s204, 2
        %s206 = scalar_lea.vmem %s0, %s205
      $region32: #{multigras_forward.10} parent=27 // pred_fallthru
        _
      // Predicated region
      $region33: #{multigras_forward.10} parent=27 // pred_check
        %p207 = pneg %p61
      $region34: #{multigras_forward.10} parent=27 // pred_check_branch
        %209 = sbr.rel (%p207) target = $region36
      $region35: #{multigras_forward.10} parent=27 // pred_region
        %s210 = ssub.s32 3, %s13
        %p211 = scmp.lt.s32.totalorder %s210, 3
        %s212 = scalar_select %p211, %s210, 3
        %s213 = smul.addr %s212, 2
        %s214 = scalar_lea.vmem %s1, %s213
        %s215 = ssub.s32 3, %s13
      $region36: #{multigras_forward.10} parent=27 // pred_fallthru
        _
    $region28: #{multigras_forward.10} parent=5 // pred_fallthru
      _
    %p216 = scmp.le.s32.totalorder 1, %s13
    %p217 = scmp.lt.s32.totalorder %s13, 5
    %p218 = pnand %p216, %p217
    %p219 = pneg %p218
    // Predicated region
    $region37: #{multigras_forward.10} parent=5 // pred_check
      _
    $region38: #{multigras_forward.10} parent=5 // pred_check_branch
      %221 = sbr.rel (%p218) target = $region40
    $region39: #{multigras_forward.10} parent=5 // pred_region
      %s222 = ssub.s32 %s13, 1
      %p223 = scmp.lt.s32.totalorder %s18, 3
      %s224 = scalar_select %p223, %s18, 3
      %s225 = smul.addr %s224, 2
      %s226 = scalar_lea.vmem %s0, %s225
      %p227 = pneg %p39
      %p228 = pneg %p36
      %s229 = ssub.s32 3, %s18
      %p230 = scmp.lt.s32.totalorder %s229, 3
      %s231 = scalar_select %p230, %s229, 3
      %s232 = smul.addr %s231, 2
      %s233 = scalar_lea.vmem %s1, %s232
      %p234 = pneg %p67
      %p235 = pneg %p64
      %p236 = pneg %p88
      %p237 = pneg %p85
      %p238 = pneg %p109
      %p239 = pneg %p106
      %p240 = pneg %p130
      %p241 = pneg %p127
      %p242 = pneg %p151
      %p243 = pneg %p148
      %p244 = pneg %p172
      %p245 = pneg %p169
      %p246 = scmp.lt.s32.totalorder %s18, 3
      %s247 = scalar_select %p246, %s18, 3
      %s248 = smul.addr %s247, 2
      %s249 = scalar_lea.vmem %s0, %s248
      %s250 = ssub.s32 3, %s18
      %p251 = scmp.lt.s32.totalorder %s250, 3
      %s252 = scalar_select %p251, %s250, 3
      %s253 = smul.addr %s252, 2
      %s254 = scalar_lea.vmem %s1, %s253
      %s255 = ssub.s32 3, %s18
      %p256 = scmp.eq.s32.totalorder %s18, 0
      // Predicated region
      $region41: #{multigras_forward.10} parent=39 // pred_check
        %p257 = pneg %p256
      $region42: #{multigras_forward.10} parent=39 // pred_check_branch
        %259 = sbr.rel (%p257) target = $region44
      $region43: #{multigras_forward.10} parent=39 // pred_region
        %vm260 = vcmask 125952
        %261 = vst.msk [vmem:[#allocation2] sm:$0xf] %vm260, 0.0
        %262 = vst.msk [vmem:[#allocation3] sm:$0xf] %vm260, 0.0
      $region44: #{multigras_forward.10} parent=39 // pred_fallthru
        _
      %v263 = vld [vmem:[#allocation2] sm:$0xf]
      %v264 = vld [vmem:[%s3] sm:$0xff]
      %v265 = vld [vmem:[%s3 + $0x8] sm:$0xff]
      %v266 = vld [vmem:[%s4] sm:$0x1]
      %v268 = vlaneseq
      %v269 = vshrl.u32 %v268, 7
      %v270 = vsub.s32 0, %v269
      %v271 = vrot.slane %v266, %v270
      %vm273 = vcmask 130048
      %v275 = vsel %vm273, %v263, 0
      %277 = vmatprep.subr.mxu0 0.0
      %278 = vmatpush1.msra.mxu0 %v264
      %279 = vmatprep.subr.mxu0 0.0
      %280 = vmatpush1.msra.mxu0 %v265
      %281 = vmatprep.subr.mxu0 0.0
      %282 = vmatpush1.msra.mxu0 0.0
      %283 = vmatprep.subr.mxu0 0.0
      %284 = vmatpush1.msra.mxu0 0.0
      %285 = vmatprep.subr.mxu0 0.0
      %286 = vmatpush1.msra.mxu0 0.0
      %287 = vmatprep.subr.mxu0 0.0
      %288 = vmatpush1.msra.mxu0 0.0
      %289 = vmatprep.subr.mxu0 0.0
      %290 = vmatpush1.msra.mxu0 0.0
      %291 = vmatprep.subr.mxu0 0.0
      %292 = vmatpush1.msra.mxu0 0.0
      %293 = vmatprep.subr.mxu0 0.0
      %294 = vmatpush1.msra.mxu0 0.0
      %295 = vmatprep.subr.mxu0 0.0
      %296 = vmatpush1.msra.mxu0 0.0
      %297 = vmatprep.subr.mxu0 0.0
      %298 = vmatpush1.msra.mxu0 0.0
      %299 = vmatprep.subr.mxu0 0.0
      %300 = vmatpush1.msra.mxu0 0.0
      %301 = vmatprep.subr.mxu0 0.0
      %302 = vmatpush1.msra.mxu0 0.0
      %303 = vmatprep.subr.mxu0 0.0
      %304 = vmatpush1.msra.mxu0 0.0
      %305 = vmatprep.subr.mxu0 0.0
      %306 = vmatpush1.msra.mxu0 0.0
      %307 = vmatprep.subr.mxu0 0.0
      %308 = vmatpush1.msra.mxu0 0.0
      %309 = vmatprep.subr.mxu0 0.0
      %310 = vmatpush1.msra.mxu0 0.0
      %311 = vmatprep.subr.mxu0 0.0
      %312 = vmatpush1.msra.mxu0 0.0
      %313 = vmatprep.subr.mxu0 0.0
      %314 = vmatpush1.msra.mxu0 0.0
      %315 = vmatprep.subr.mxu0 0.0
      %316 = vmatpush1.msra.mxu0 0.0
      %317 = vmatprep.subr.mxu0 0.0
      %318 = vmatpush1.msra.mxu0 0.0
      %319 = vmatprep.subr.mxu0 0.0
      %320 = vmatpush1.msra.mxu0 0.0
      %321 = vmatprep.subr.mxu0 0.0
      %322 = vmatpush1.msra.mxu0 0.0
      %323 = vmatprep.subr.mxu0 0.0
      %324 = vmatpush1.msra.mxu0 0.0
      %325 = vmatprep.subr.mxu0 0.0
      %326 = vmatpush1.msra.mxu0 0.0
      %327 = vmatprep.subr.mxu0 0.0
      %328 = vmatpush1.msra.mxu0 0.0
      %329 = vmatprep.subr.mxu0 0.0
      %330 = vmatpush1.msra.mxu0 0.0
      %331 = vmatprep.subr.mxu0 0.0
      %332 = vmatpush1.msra.mxu0 0.0
      %333 = vmatprep.subr.mxu0 0.0
      %334 = vmatpush1.msra.mxu0 0.0
      %335 = vmatprep.subr.mxu0 0.0
      %336 = vmatpush1.msra.mxu0 0.0
      %337 = vmatprep.subr.mxu0 0.0
      %338 = vmatpush1.msra.mxu0 0.0
      %339 = vmatprep.subr.mxu0 0.0
      %340 = vmatpush1.msra.mxu0 0.0
      %341 = vmatprep.mubr.f32.mxu0 0.0
      %342 = vmatmul.mubr.f32.gmra.mrb[0].mxu0 %v275
      %v343 = vpop.f32.mrb[0].mxu0
      %v344 = vadd.f32 %v271, %v343
      %v345 = vpop.f32.mrb[0].mxu0
      %346 = vdwg.mxu0
      %v347 = vld [vmem:[%s249] sm:$0x3]
      %v348 = vld [vmem:[%s254] sm:$0x3]
      %v350 = vrot.slane %v348, 6
      %vm352 = vcmask 1041408
      %v353 = vsel %vm352, %v347, %v350
      %v354 = vld [vmem:[%s2] sm:$0xff]
      %v355 = vld [vmem:[%s2 + $0x8] sm:$0xff]
      %v357 = vsel %vm273, %v353, 0
      %359 = vmatprep.subr.mxu0 0.0
      %360 = vmatpush1.msra.mxu0 %v354
      %361 = vmatprep.subr.mxu0 0.0
      %362 = vmatpush1.msra.mxu0 %v355
      %363 = vmatprep.subr.mxu0 0.0
      %364 = vmatpush1.msra.mxu0 0.0
      %365 = vmatprep.subr.mxu0 0.0
      %366 = vmatpush1.msra.mxu0 0.0
      %367 = vmatprep.subr.mxu0 0.0
      %368 = vmatpush1.msra.mxu0 0.0
      %369 = vmatprep.subr.mxu0 0.0
      %370 = vmatpush1.msra.mxu0 0.0
      %371 = vmatprep.subr.mxu0 0.0
      %372 = vmatpush1.msra.mxu0 0.0
      %373 = vmatprep.subr.mxu0 0.0
      %374 = vmatpush1.msra.mxu0 0.0
      %375 = vmatprep.subr.mxu0 0.0
      %376 = vmatpush1.msra.mxu0 0.0
      %377 = vmatprep.subr.mxu0 0.0
      %378 = vmatpush1.msra.mxu0 0.0
      %379 = vmatprep.subr.mxu0 0.0
      %380 = vmatpush1.msra.mxu0 0.0
      %381 = vmatprep.subr.mxu0 0.0
      %382 = vmatpush1.msra.mxu0 0.0
      %383 = vmatprep.subr.mxu0 0.0
      %384 = vmatpush1.msra.mxu0 0.0
      %385 = vmatprep.subr.mxu0 0.0
      %386 = vmatpush1.msra.mxu0 0.0
      %387 = vmatprep.subr.mxu0 0.0
      %388 = vmatpush1.msra.mxu0 0.0
      %389 = vmatprep.subr.mxu0 0.0
      %390 = vmatpush1.msra.mxu0 0.0
      %391 = vmatprep.subr.mxu0 0.0
      %392 = vmatpush1.msra.mxu0 0.0
      %393 = vmatprep.subr.mxu0 0.0
      %394 = vmatpush1.msra.mxu0 0.0
      %395 = vmatprep.subr.mxu0 0.0
      %396 = vmatpush1.msra.mxu0 0.0
      %397 = vmatprep.subr.mxu0 0.0
      %398 = vmatpush1.msra.mxu0 0.0
      %399 = vmatprep.subr.mxu0 0.0
      %400 = vmatpush1.msra.mxu0 0.0
      %401 = vmatprep.subr.mxu0 0.0
      %402 = vmatpush1.msra.mxu0 0.0
      %403 = vmatprep.subr.mxu0 0.0
      %404 = vmatpush1.msra.mxu0 0.0
      %405 = vmatprep.subr.mxu0 0.0
      %406 = vmatpush1.msra.mxu0 0.0
      %407 = vmatprep.subr.mxu0 0.0
      %408 = vmatpush1.msra.mxu0 0.0
      %409 = vmatprep.subr.mxu0 0.0
      %410 = vmatpush1.msra.mxu0 0.0
      %411 = vmatprep.subr.mxu0 0.0
      %412 = vmatpush1.msra.mxu0 0.0
      %413 = vmatprep.subr.mxu0 0.0
      %414 = vmatpush1.msra.mxu0 0.0
      %415 = vmatprep.subr.mxu0 0.0
      %416 = vmatpush1.msra.mxu0 0.0
      %417 = vmatprep.subr.mxu0 0.0
      %418 = vmatpush1.msra.mxu0 0.0
      %419 = vmatprep.subr.mxu0 0.0
      %420 = vmatpush1.msra.mxu0 0.0
      %421 = vmatprep.subr.mxu0 0.0
      %422 = vmatpush1.msra.mxu0 0.0
      %423 = vmatprep.mubr.f32.mxu0 0.0
      %424 = vmatmul.mubr.f32.gmra.mrb[0].mxu0 %v357
      %v425 = vpop.f32.mrb[0].mxu0
      %v426 = vadd.f32 0.0, %v425
      %v427 = vpop.f32.mrb[0].mxu0
      %428 = vdwg.mxu0
      %v429 = vadd.f32 %v344, %v426
      %v430 = vlaneseq
      %v431 = vshrl.u32 %v430, 7
      %vm432 = vcmp.lt.s32.totalorder %v431, 2
      %v433 = vsel %vm432, 1, 0
      %vm434 = vcmp.eq.s32.totalorder %v433, 1
      %436 = vrot.lane.b32.xlu0 %v429, 64
      %v437 = vpop.permute.xlu0 %436
      %v439 = vsel %vm434, %v429, %v437
      %v440 = vxor.u32 %v439, 2147483648
      %v441 = vmul.f32 %v440, 1.442695
      %v442 = vpow.pop %v441
      %v443 = vadd.f32 %v442, 1.0
      %v444 = vrcp.pop %v443
      %v445 = vmul.f32 1.0, %v444
      %v446 = vtanh.pop %v439
      %v447 = vld [vmem:[#allocation3] sm:$0xf]
      %449 = vrot.lane.b32.xlu0 %v447, 16
      %v450 = vpop.permute.xlu0 %449
      %v452 = vmul.f32 %v445, %v450
      %454 = vrot.lane.b32.xlu0 %v446, 96
      %v455 = vpop.permute.xlu0 %454
      %v457 = vmul.f32 %v445, %v455
      %459 = vrot.lane.b32.xlu0 %v457, 16
      %v460 = vpop.permute.xlu0 %459
      %v462 = vadd.f32 %v452, %v460
      %v463 = vtanh.pop %v462
      %465 = vrot.lane.b32.xlu0 %v463, 32
      %v466 = vpop.permute.xlu0 %465
      %v468 = vmul.f32 %v445, %v466
      %470 = vrot.lane.b32.xlu0 %v462, 112
      %v471 = vpop.permute.xlu0 %470
      %vm473 = vcmask 125952
      %474 = vst.msk [vmem:[#allocation3] sm:$0xf] %vm473, %v471
      %476 = vrot.lane.b32.xlu0 %v468, 80
      %v477 = vpop.permute.xlu0 %476
      %479 = vst.msk [vmem:[#allocation2] sm:$0xf] %vm473, %v477
      %s480 = smul.u32 %s18, 2
      %s481 = scalar_lea.vmem %s5, %s480
      %vm482 = vcmask 123904
      %483 = vst.msk [vmem:[%s481] sm:$0x3] %vm482, %v477
      %s484 = ssub.s32 3, %s18
      %s485 = smul.u32 %s484, 2
      %s486 = scalar_lea.vmem %s6, %s485
      %vm487 = vcmask 125954
      %488 = vst.msk [vmem:[%s486 - $0x2] sm:$0xc] %vm487, %v477
      // Predicated region
      $region45: #{multigras_forward.10} parent=39 // pred_check
        %p489 = pneg %p148
      $region46: #{multigras_forward.10} parent=39 // pred_check_branch
        %491 = sbr.rel (%p489) target = $region48
      $region47: #{multigras_forward.10} parent=39 // pred_region
        _
      $region48: #{multigras_forward.10} parent=39 // pred_fallthru
        _
      // Predicated region
      $region49: #{multigras_forward.10} parent=39 // pred_check
        %p492 = pneg %p169
      $region50: #{multigras_forward.10} parent=39 // pred_check_branch
        %494 = sbr.rel (%p492) target = $region52
      $region51: #{multigras_forward.10} parent=39 // pred_region
        _
      $region52: #{multigras_forward.10} parent=39 // pred_fallthru
        _
      // Predicated region
      $region53: #{multigras_forward.10} parent=39 // pred_check
        %p495 = pneg %p148
      $region54: #{multigras_forward.10} parent=39 // pred_check_branch
        %497 = sbr.rel (%p495) target = $region56
      $region55: #{multigras_forward.10} parent=39 // pred_region
        _
      $region56: #{multigras_forward.10} parent=39 // pred_fallthru
        _
      // Predicated region
      $region57: #{multigras_forward.10} parent=39 // pred_check
        %p498 = pneg %p169
      $region58: #{multigras_forward.10} parent=39 // pred_check_branch
        %500 = sbr.rel (%p498) target = $region60
      $region59: #{multigras_forward.10} parent=39 // pred_region
        _
      $region60: #{multigras_forward.10} parent=39 // pred_fallthru
        _
    $region40: #{multigras_forward.10} parent=5 // pred_fallthru
      _
    %p501 = scmp.le.s32.totalorder 2, %s13
    // Predicated region
    $region61: #{multigras_forward.10} parent=5 // pred_check
      %p502 = pneg %p501
    $region62: #{multigras_forward.10} parent=5 // pred_check_branch
      %504 = sbr.rel (%p502) target = $region64
    $region63: #{multigras_forward.10} parent=5 // pred_region
      %s505 = ssub.s32 %s13, 2
    $region64: #{multigras_forward.10} parent=5 // pred_fallthru
      _
  $region6: #{multigras_forward.10} parent=0 // loop_footer
    %s17 = sadd.s32 1, %s13
  $region7: #{multigras_forward.10} parent=0 // loop_footer_branch
    %12 = sbr.rel target = $region3
  $region8: #{multigras_forward.10} parent=0 // loop_exit
    _

// kernel: multigras_forward.7
$region0: #{multigras_forward.7}
  #allocation0 [shape = 'u32[]', space=smem, size = 0x4, offset = 0x4, fixed_abs, tag = 'smem constant byte address 0x4 - core index']
  #allocation1 [shape = 'u32[144,128]{1,0:T(1,128)}', space=vmem, size = 0x12000, scoped, tag = 'internal scratch']
  #allocation2 [shape = 'f32[16,16]{1,0:T(8,128)}', space=vmem, size = 0x2000, scoped, tag = 'scratch operand']
  #allocation3 [shape = 'f32[16,16]{1,0:T(8,128)}', space=vmem, size = 0x2000, scoped, tag = 'scratch operand']
  %s0 = inlined_call_operand.vmem [shape: f32[8,8,16], index: 0, kind: input, shape index: {}, may-alias: {0,1}]
  %s1 = inlined_call_operand.vmem [shape: f32[8,8,16], index: 1, kind: input, shape index: {}, may-alias: {0,1}]
  %s2 = inlined_call_operand.vmem [shape: f32[16,128], index: 2, kind: input, shape index: {}]
  %s3 = inlined_call_operand.vmem [shape: f32[16,128], index: 3, kind: input, shape index: {}]
  %s4 = inlined_call_operand.vmem [shape: f32[1,128], index: 4, kind: input, shape index: {}]
  %s5 = inlined_call_operand.vmem [shape: f32[8,8,16], index: 5, kind: output, shape index: {0}]
  %s6 = inlined_call_operand.vmem [shape: f32[8,8,16], index: 6, kind: output, shape index: {1}]
  %7 = xla_tuple %s5, %s6
  %s8 = sld [smem:[#allocation0]]
  $region65: #{multigras_forward.7} parent=0
    _
  %s10 = ssub.s32 1, %s8
  %s11 = scalar_select 0, %s10, %s8
  loop: start=0, step=1, limit=10
  $region2: #{multigras_forward.7} parent=0 // loop_pre_header
    _
  $region3: #{multigras_forward.7} parent=0 // loop_header
    %s13 = sphi 0, %s17
    %p14 = scmp.ge.s32.totalorder %s13, 10
    %s23 = sphi 0, %s25
    %s26 = sphi 0, %s23
    %s27 = sphi 0, %s26
    %s43 = sphi 0, %s27
    %s51 = sphi 0, %s53
    %s54 = sphi 0, %s51
    %s55 = sphi 0, %s54
    %s71 = sphi 0, %s55
    %s75 = sphi 0, %s75
    %s77 = sphi 0, %s75
    %s78 = sphi 0, %s77
    %s92 = sphi 0, %s78
    %s96 = sphi 0, %s96
    %s98 = sphi 0, %s96
    %s99 = sphi 0, %s98
    %s113 = sphi 0, %s99
    %s117 = sphi 0, %s117
    %s119 = sphi 0, %s117
    %s120 = sphi 0, %s119
    %s134 = sphi 0, %s120
    %s138 = sphi 0, %s138
    %s140 = sphi 0, %s138
    %s141 = sphi 0, %s140
    %s155 = sphi 0, %s141
    %s159 = sphi 0, %s159
    %s161 = sphi 0, %s159
    %s162 = sphi 0, %s161
    %s176 = sphi 0, %s162
  $region4: #{multigras_forward.7} parent=0 // loop_header_branch
    %16 = sbr.rel (%p14) target = $region8
  $region5: #{multigras_forward.7} parent=0 // loop_body
    %s18 = ssub.s32 %s13, 1
    %s19 = ssub.s32 %s13, 2
    %s20 = sadd.s32 %s13, 1
    %s21 = ssub.s32 %s13, %s20
    %p22 = scmp.eq.s32.totalorder %s21, 0
    %s24 = sadd.s32 %s23, 1
    %s25 = scalar_select %p22, %s23, %s24
    %p28 = pneg %p22
    %p29 = scmp.eq.s32.totalorder %s13, 7
    %p30 = por %p28, %p29
    %p31 = scmp.ne.s32.totalorder %s23, %s26
    %p32 = scmp.eq.s32.totalorder %s13, 0
    %p33 = por %p31, %p32
    %p34 = scmp.ne.s32.totalorder %s23, %s26
    %p35 = scmp.eq.s32.totalorder %s18, 7
    %p36 = por %p34, %p35
    %p37 = scmp.ne.s32.totalorder %s26, %s27
    %p38 = scmp.eq.s32.totalorder %s18, 0
    %p39 = por %p37, %p38
    %p40 = scmp.ne.s32.totalorder %s26, %s27
    %p41 = scmp.eq.s32.totalorder %s19, 7
    %p42 = por %p40, %p41
    %p44 = scmp.ne.s32.totalorder %s27, %s43
    %p45 = scmp.eq.s32.totalorder %s19, 0
    %p46 = por %p44, %p45
    %s47 = ssub.s32 7, %s13
    %s48 = ssub.s32 7, %s20
    %s49 = ssub.s32 %s47, %s48
    %p50 = scmp.eq.s32.totalorder %s49, 0
    %s52 = sadd.s32 %s51, 1
    %s53 = scalar_select %p50, %s51, %s52
    %p56 = pneg %p50
    %p57 = scmp.eq.s32.totalorder %s13, 7
    %p58 = por %p56, %p57
    %p59 = scmp.ne.s32.totalorder %s51, %s54
    %p60 = scmp.eq.s32.totalorder %s13, 0
    %p61 = por %p59, %p60
    %p62 = scmp.ne.s32.totalorder %s51, %s54
    %p63 = scmp.eq.s32.totalorder %s18, 7
    %p64 = por %p62, %p63
    %p65 = scmp.ne.s32.totalorder %s54, %s55
    %p66 = scmp.eq.s32.totalorder %s18, 0
    %p67 = por %p65, %p66
    %p68 = scmp.ne.s32.totalorder %s54, %s55
    %p69 = scmp.eq.s32.totalorder %s19, 7
    %p70 = por %p68, %p69
    %p72 = scmp.ne.s32.totalorder %s55, %s71
    %p73 = scmp.eq.s32.totalorder %s19, 0
    %p74 = por %p72, %p73
    %s76 = sadd.s32 %s75, 1
    %p79 = scmp.eq.s32.totalorder %s13, 7
    %p80 = scmp.ne.s32.totalorder %s75, %s77
    %p81 = scmp.eq.s32.totalorder %s13, 0
    %p82 = por %p80, %p81
    %p83 = scmp.ne.s32.totalorder %s75, %s77
    %p84 = scmp.eq.s32.totalorder %s18, 7
    %p85 = por %p83, %p84
    %p86 = scmp.ne.s32.totalorder %s77, %s78
    %p87 = scmp.eq.s32.totalorder %s18, 0
    %p88 = por %p86, %p87
    %p89 = scmp.ne.s32.totalorder %s77, %s78
    %p90 = scmp.eq.s32.totalorder %s19, 7
    %p91 = por %p89, %p90
    %p93 = scmp.ne.s32.totalorder %s78, %s92
    %p94 = scmp.eq.s32.totalorder %s19, 0
    %p95 = por %p93, %p94
    %s97 = sadd.s32 %s96, 1
    %p100 = scmp.eq.s32.totalorder %s13, 7
    %p101 = scmp.ne.s32.totalorder %s96, %s98
    %p102 = scmp.eq.s32.totalorder %s13, 0
    %p103 = por %p101, %p102
    %p104 = scmp.ne.s32.totalorder %s96, %s98
    %p105 = scmp.eq.s32.totalorder %s18, 7
    %p106 = por %p104, %p105
    %p107 = scmp.ne.s32.totalorder %s98, %s99
    %p108 = scmp.eq.s32.totalorder %s18, 0
    %p109 = por %p107, %p108
    %p110 = scmp.ne.s32.totalorder %s98, %s99
    %p111 = scmp.eq.s32.totalorder %s19, 7
    %p112 = por %p110, %p111
    %p114 = scmp.ne.s32.totalorder %s99, %s113
    %p115 = scmp.eq.s32.totalorder %s19, 0
    %p116 = por %p114, %p115
    %s118 = sadd.s32 %s117, 1
    %p121 = scmp.eq.s32.totalorder %s13, 7
    %p122 = scmp.ne.s32.totalorder %s117, %s119
    %p123 = scmp.eq.s32.totalorder %s13, 0
    %p124 = por %p122, %p123
    %p125 = scmp.ne.s32.totalorder %s117, %s119
    %p126 = scmp.eq.s32.totalorder %s18, 7
    %p127 = por %p125, %p126
    %p128 = scmp.ne.s32.totalorder %s119, %s120
    %p129 = scmp.eq.s32.totalorder %s18, 0
    %p130 = por %p128, %p129
    %p131 = scmp.ne.s32.totalorder %s119, %s120
    %p132 = scmp.eq.s32.totalorder %s19, 7
    %p133 = por %p131, %p132
    %p135 = scmp.ne.s32.totalorder %s120, %s134
    %p136 = scmp.eq.s32.totalorder %s19, 0
    %p137 = por %p135, %p136
    %s139 = sadd.s32 %s138, 1
    %p142 = scmp.eq.s32.totalorder %s13, 7
    %p143 = scmp.ne.s32.totalorder %s138, %s140
    %p144 = scmp.eq.s32.totalorder %s13, 0
    %p145 = por %p143, %p144
    %p146 = scmp.ne.s32.totalorder %s138, %s140
    %p147 = scmp.eq.s32.totalorder %s18, 7
    %p148 = por %p146, %p147
    %p149 = scmp.ne.s32.totalorder %s140, %s141
    %p150 = scmp.eq.s32.totalorder %s18, 0
    %p151 = por %p149, %p150
    %p152 = scmp.ne.s32.totalorder %s140, %s141
    %p153 = scmp.eq.s32.totalorder %s19, 7
    %p154 = por %p152, %p153
    %p156 = scmp.ne.s32.totalorder %s141, %s155
    %p157 = scmp.eq.s32.totalorder %s19, 0
    %p158 = por %p156, %p157
    %s160 = sadd.s32 %s159, 1
    %p163 = scmp.eq.s32.totalorder %s13, 7
    %p164 = scmp.ne.s32.totalorder %s159, %s161
    %p165 = scmp.eq.s32.totalorder %s13, 0
    %p166 = por %p164, %p165
    %p167 = scmp.ne.s32.totalorder %s159, %s161
    %p168 = scmp.eq.s32.totalorder %s18, 7
    %p169 = por %p167, %p168
    %p170 = scmp.ne.s32.totalorder %s161, %s162
    %p171 = scmp.eq.s32.totalorder %s18, 0
    %p172 = por %p170, %p171
    %p173 = scmp.ne.s32.totalorder %s161, %s162
    %p174 = scmp.eq.s32.totalorder %s19, 7
    %p175 = por %p173, %p174
    %p177 = scmp.ne.s32.totalorder %s162, %s176
    %p178 = scmp.eq.s32.totalorder %s19, 0
    %p179 = por %p177, %p178
    %p180 = scmp.le.s32.totalorder 1, %s13
    %p181 = scmp.lt.s32.totalorder %s13, 9
    %p182 = pnand %p180, %p181
    %p183 = pneg %p182
    // Predicated region
    $region9: #{multigras_forward.7} parent=5 // pred_check
      _
    $region10: #{multigras_forward.7} parent=5 // pred_check_branch
      %185 = sbr.rel (%p182) target = $region12
    $region11: #{multigras_forward.7} parent=5 // pred_region
      %s186 = ssub.s32 %s13, 1
      // Predicated region
      $region13: #{multigras_forward.7} parent=11 // pred_check
        %p187 = pneg %p88
      $region14: #{multigras_forward.7} parent=11 // pred_check_branch
        %189 = sbr.rel (%p187) target = $region16
      $region15: #{multigras_forward.7} parent=11 // pred_region
        _
      $region16: #{multigras_forward.7} parent=11 // pred_fallthru
        _
      // Predicated region
      $region17: #{multigras_forward.7} parent=11 // pred_check
        %p190 = pneg %p109
      $region18: #{multigras_forward.7} parent=11 // pred_check_branch
        %192 = sbr.rel (%p190) target = $region20
      $region19: #{multigras_forward.7} parent=11 // pred_region
        _
      $region20: #{multigras_forward.7} parent=11 // pred_fallthru
        _
      // Predicated region
      $region21: #{multigras_forward.7} parent=11 // pred_check
        %p193 = pneg %p130
      $region22: #{multigras_forward.7} parent=11 // pred_check_branch
        %195 = sbr.rel (%p193) target = $region24
      $region23: #{multigras_forward.7} parent=11 // pred_region
        _
      $region24: #{multigras_forward.7} parent=11 // pred_fallthru
        _
    $region12: #{multigras_forward.7} parent=5 // pred_fallthru
      _
    %p196 = scmp.lt.s32.totalorder %s13, 8
    // Predicated region
    $region25: #{multigras_forward.7} parent=5 // pred_check
      %p197 = pneg %p196
    $region26: #{multigras_forward.7} parent=5 // pred_check_branch
      %199 = sbr.rel (%p197) target = $region28
    $region27: #{multigras_forward.7} parent=5 // pred_region
      // Predicated region
      $region29: #{multigras_forward.7} parent=27 // pred_check
        %p200 = pneg %p33
      $region30: #{multigras_forward.7} parent=27 // pred_check_branch
        %202 = sbr.rel (%p200) target = $region32
      $region31: #{multigras_forward.7} parent=27 // pred_region
        %p203 = scmp.lt.s32.totalorder %s13, 7
        %s204 = scalar_select %p203, %s13, 7
        %s205 = smul.addr %s204, 8
        %s206 = scalar_lea.vmem %s0, %s205
      $region32: #{multigras_forward.7} parent=27 // pred_fallthru
        _
      // Predicated region
      $region33: #{multigras_forward.7} parent=27 // pred_check
        %p207 = pneg %p61
      $region34: #{multigras_forward.7} parent=27 // pred_check_branch
        %209 = sbr.rel (%p207) target = $region36
      $region35: #{multigras_forward.7} parent=27 // pred_region
        %s210 = ssub.s32 7, %s13
        %p211 = scmp.lt.s32.totalorder %s210, 7
        %s212 = scalar_select %p211, %s210, 7
        %s213 = smul.addr %s212, 8
        %s214 = scalar_lea.vmem %s1, %s213
        %s215 = ssub.s32 7, %s13
      $region36: #{multigras_forward.7} parent=27 // pred_fallthru
        _
    $region28: #{multigras_forward.7} parent=5 // pred_fallthru
      _
    %p216 = scmp.le.s32.totalorder 1, %s13
    %p217 = scmp.lt.s32.totalorder %s13, 9
    %p218 = pnand %p216, %p217
    %p219 = pneg %p218
    // Predicated region
    $region37: #{multigras_forward.7} parent=5 // pred_check
      _
    $region38: #{multigras_forward.7} parent=5 // pred_check_branch
      %221 = sbr.rel (%p218) target = $region40
    $region39: #{multigras_forward.7} parent=5 // pred_region
      %s222 = ssub.s32 %s13, 1
      %p223 = scmp.lt.s32.totalorder %s18, 7
      %s224 = scalar_select %p223, %s18, 7
      %s225 = smul.addr %s224, 8
      %s226 = scalar_lea.vmem %s0, %s225
      %p227 = pneg %p39
      %p228 = pneg %p36
      %s229 = ssub.s32 7, %s18
      %p230 = scmp.lt.s32.totalorder %s229, 7
      %s231 = scalar_select %p230, %s229, 7
      %s232 = smul.addr %s231, 8
      %s233 = scalar_lea.vmem %s1, %s232
      %p234 = pneg %p67
      %p235 = pneg %p64
      %p236 = pneg %p88
      %p237 = pneg %p85
      %p238 = pneg %p109
      %p239 = pneg %p106
      %p240 = pneg %p130
      %p241 = pneg %p127
      %p242 = pneg %p151
      %p243 = pneg %p148
      %p244 = pneg %p172
      %p245 = pneg %p169
      %p246 = scmp.lt.s32.totalorder %s18, 7
      %s247 = scalar_select %p246, %s18, 7
      %s248 = smul.addr %s247, 8
      %s249 = scalar_lea.vmem %s0, %s248
      %s250 = ssub.s32 7, %s18
      %p251 = scmp.lt.s32.totalorder %s250, 7
      %s252 = scalar_select %p251, %s250, 7
      %s253 = smul.addr %s252, 8
      %s254 = scalar_lea.vmem %s1, %s253
      %s255 = ssub.s32 7, %s18
      %p256 = scmp.eq.s32.totalorder %s18, 0
      // Predicated region
      $region41: #{multigras_forward.7} parent=39 // pred_check
        %p257 = pneg %p256
      $region42: #{multigras_forward.7} parent=39 // pred_check_branch
        %259 = sbr.rel (%p257) target = $region44
      $region43: #{multigras_forward.7} parent=39 // pred_region
        %vm260 = vcmask 130048
        %261 = vst.msk [vmem:[#allocation2] sm:$0xff] %vm260, 0.0
        %262 = vst.msk [vmem:[#allocation2 + $0x8] sm:$0xff] %vm260, 0.0
        %263 = vst.msk [vmem:[#allocation3] sm:$0xff] %vm260, 0.0
        %264 = vst.msk [vmem:[#allocation3 + $0x8] sm:$0xff] %vm260, 0.0
      $region44: #{multigras_forward.7} parent=39 // pred_fallthru
        _
      %v265 = vld [vmem:[#allocation2] sm:$0xff]
      %v266 = vld [vmem:[#allocation2 + $0x8] sm:$0xff]
      %v267 = vld [vmem:[%s3] sm:$0xff]
      %v268 = vld [vmem:[%s3 + $0x8] sm:$0xff]
      %v269 = vld [vmem:[%s4] sm:$0x1]
      %v271 = vlaneseq
      %v272 = vshrl.u32 %v271, 7
      %v273 = vsub.s32 0, %v272
      %v274 = vrot.slane %v269, %v273
      %vm276 = vcmask 130048
      %v278 = vsel %vm276, %v265, 0
      %v281 = vsel %vm276, %v266, 0
      %283 = vmatprep.subr.mxu0 0.0
      %284 = vmatpush1.msra.mxu0 %v267
      %285 = vmatprep.subr.mxu0 0.0
      %286 = vmatpush1.msra.mxu0 %v268
      %287 = vmatprep.subr.mxu0 0.0
      %288 = vmatpush1.msra.mxu0 0.0
      %289 = vmatprep.subr.mxu0 0.0
      %290 = vmatpush1.msra.mxu0 0.0
      %291 = vmatprep.subr.mxu0 0.0
      %292 = vmatpush1.msra.mxu0 0.0
      %293 = vmatprep.subr.mxu0 0.0
      %294 = vmatpush1.msra.mxu0 0.0
      %295 = vmatprep.subr.mxu0 0.0
      %296 = vmatpush1.msra.mxu0 0.0
      %297 = vmatprep.subr.mxu0 0.0
      %298 = vmatpush1.msra.mxu0 0.0
      %299 = vmatprep.subr.mxu0 0.0
      %300 = vmatpush1.msra.mxu0 0.0
      %301 = vmatprep.subr.mxu0 0.0
      %302 = vmatpush1.msra.mxu0 0.0
      %303 = vmatprep.subr.mxu0 0.0
      %304 = vmatpush1.msra.mxu0 0.0
      %305 = vmatprep.subr.mxu0 0.0
      %306 = vmatpush1.msra.mxu0 0.0
      %307 = vmatprep.subr.mxu0 0.0
      %308 = vmatpush1.msra.mxu0 0.0
      %309 = vmatprep.subr.mxu0 0.0
      %310 = vmatpush1.msra.mxu0 0.0
      %311 = vmatprep.subr.mxu0 0.0
      %312 = vmatpush1.msra.mxu0 0.0
      %313 = vmatprep.subr.mxu0 0.0
      %314 = vmatpush1.msra.mxu0 0.0
      %315 = vmatprep.subr.mxu0 0.0
      %316 = vmatpush1.msra.mxu0 0.0
      %317 = vmatprep.subr.mxu0 0.0
      %318 = vmatpush1.msra.mxu0 0.0
      %319 = vmatprep.subr.mxu0 0.0
      %320 = vmatpush1.msra.mxu0 0.0
      %321 = vmatprep.subr.mxu0 0.0
      %322 = vmatpush1.msra.mxu0 0.0
      %323 = vmatprep.subr.mxu0 0.0
      %324 = vmatpush1.msra.mxu0 0.0
      %325 = vmatprep.subr.mxu0 0.0
      %326 = vmatpush1.msra.mxu0 0.0
      %327 = vmatprep.subr.mxu0 0.0
      %328 = vmatpush1.msra.mxu0 0.0
      %329 = vmatprep.subr.mxu0 0.0
      %330 = vmatpush1.msra.mxu0 0.0
      %331 = vmatprep.subr.mxu0 0.0
      %332 = vmatpush1.msra.mxu0 0.0
      %333 = vmatprep.subr.mxu0 0.0
      %334 = vmatpush1.msra.mxu0 0.0
      %335 = vmatprep.subr.mxu0 0.0
      %336 = vmatpush1.msra.mxu0 0.0
      %337 = vmatprep.subr.mxu0 0.0
      %338 = vmatpush1.msra.mxu0 0.0
      %339 = vmatprep.subr.mxu0 0.0
      %340 = vmatpush1.msra.mxu0 0.0
      %341 = vmatprep.subr.mxu0 0.0
      %342 = vmatpush1.msra.mxu0 0.0
      %343 = vmatprep.subr.mxu0 0.0
      %344 = vmatpush1.msra.mxu0 0.0
      %345 = vmatprep.subr.mxu0 0.0
      %346 = vmatpush1.msra.mxu0 0.0
      %347 = vmatprep.mubr.f32.mxu0 0.0
      %348 = vmatmul.mubr.f32.gmra.mrb[0].mxu0 %v278
      %v349 = vpop.f32.mrb[0].mxu0
      %v350 = vadd.f32 %v274, %v349
      %v351 = vpop.f32.mrb[0].mxu0
      %352 = vmatprep.mubr.f32.mxu0 0.0
      %353 = vmatmul.mubr.f32.gmra.mrb[0].mxu0 %v281
      %v354 = vpop.f32.mrb[0].mxu0
      %v355 = vadd.f32 %v274, %v354
      %v356 = vpop.f32.mrb[0].mxu0
      %357 = vdwg.mxu0
      %v358 = vld [vmem:[%s249] sm:$0xff]
      %v359 = vld [vmem:[%s254] sm:$0xff]
      %v360 = vld [vmem:[%s2] sm:$0xff]
      %v361 = vld [vmem:[%s2 + $0x8] sm:$0xff]
      %v363 = vsel %vm276, %v358, 0
      %v366 = vsel %vm276, %v359, 0
      %368 = vmatprep.subr.mxu0 0.0
      %369 = vmatpush1.msra.mxu0 %v360
      %370 = vmatprep.subr.mxu0 0.0
      %371 = vmatpush1.msra.mxu0 %v361
      %372 = vmatprep.subr.mxu0 0.0
      %373 = vmatpush1.msra.mxu0 0.0
      %374 = vmatprep.subr.mxu0 0.0
      %375 = vmatpush1.msra.mxu0 0.0
      %376 = vmatprep.subr.mxu0 0.0
      %377 = vmatpush1.msra.mxu0 0.0
      %378 = vmatprep.subr.mxu0 0.0
      %379 = vmatpush1.msra.mxu0 0.0
      %380 = vmatprep.subr.mxu0 0.0
      %381 = vmatpush1.msra.mxu0 0.0
      %382 = vmatprep.subr.mxu0 0.0
      %383 = vmatpush1.msra.mxu0 0.0
      %384 = vmatprep.subr.mxu0 0.0
      %385 = vmatpush1.msra.mxu0 0.0
      %386 = vmatprep.subr.mxu0 0.0
      %387 = vmatpush1.msra.mxu0 0.0
      %388 = vmatprep.subr.mxu0 0.0
      %389 = vmatpush1.msra.mxu0 0.0
      %390 = vmatprep.subr.mxu0 0.0
      %391 = vmatpush1.msra.mxu0 0.0
      %392 = vmatprep.subr.mxu0 0.0
      %393 = vmatpush1.msra.mxu0 0.0
      %394 = vmatprep.subr.mxu0 0.0
      %395 = vmatpush1.msra.mxu0 0.0
      %396 = vmatprep.subr.mxu0 0.0
      %397 = vmatpush1.msra.mxu0 0.0
      %398 = vmatprep.subr.mxu0 0.0
      %399 = vmatpush1.msra.mxu0 0.0
      %400 = vmatprep.subr.mxu0 0.0
      %401 = vmatpush1.msra.mxu0 0.0
      %402 = vmatprep.subr.mxu0 0.0
      %403 = vmatpush1.msra.mxu0 0.0
      %404 = vmatprep.subr.mxu0 0.0
      %405 = vmatpush1.msra.mxu0 0.0
      %406 = vmatprep.subr.mxu0 0.0
      %407 = vmatpush1.msra.mxu0 0.0
      %408 = vmatprep.subr.mxu0 0.0
      %409 = vmatpush1.msra.mxu0 0.0
      %410 = vmatprep.subr.mxu0 0.0
      %411 = vmatpush1.msra.mxu0 0.0
      %412 = vmatprep.subr.mxu0 0.0
      %413 = vmatpush1.msra.mxu0 0.0
      %414 = vmatprep.subr.mxu0 0.0
      %415 = vmatpush1.msra.mxu0 0.0
      %416 = vmatprep.subr.mxu0 0.0
      %417 = vmatpush1.msra.mxu0 0.0
      %418 = vmatprep.subr.mxu0 0.0
      %419 = vmatpush1.msra.mxu0 0.0
      %420 = vmatprep.subr.mxu0 0.0
      %421 = vmatpush1.msra.mxu0 0.0
      %422 = vmatprep.subr.mxu0 0.0
      %423 = vmatpush1.msra.mxu0 0.0
      %424 = vmatprep.subr.mxu0 0.0
      %425 = vmatpush1.msra.mxu0 0.0
      %426 = vmatprep.subr.mxu0 0.0
      %427 = vmatpush1.msra.mxu0 0.0
      %428 = vmatprep.subr.mxu0 0.0
      %429 = vmatpush1.msra.mxu0 0.0
      %430 = vmatprep.subr.mxu0 0.0
      %431 = vmatpush1.msra.mxu0 0.0
      %432 = vmatprep.mubr.f32.mxu0 0.0
      %433 = vmatmul.mubr.f32.gmra.mrb[0].mxu0 %v363
      %v434 = vpop.f32.mrb[0].mxu0
      %v435 = vadd.f32 0.0, %v434
      %v436 = vpop.f32.mrb[0].mxu0
      %437 = vmatprep.mubr.f32.mxu0 0.0
      %438 = vmatmul.mubr.f32.gmra.mrb[0].mxu0 %v366
      %v439 = vpop.f32.mrb[0].mxu0
      %v440 = vadd.f32 0.0, %v439
      %v441 = vpop.f32.mrb[0].mxu0
      %442 = vdwg.mxu0
      %v443 = vadd.f32 %v350, %v435
      %v444 = vadd.f32 %v355, %v440
      %v445 = vlaneseq
      %v446 = vshrl.u32 %v445, 7
      %v447 = vadd.s32 %v446, 8
      %vm448 = vcmp.lt.s32.totalorder %v446, 8
      %vm449 = vcmp.lt.s32.totalorder %v447, 8
      %v450 = vsel %vm448, 1, 0
      %v451 = vsel %vm449, 1, 0
      %vm452 = vcmp.eq.s32.totalorder %v450, 1
      %vm453 = vcmp.eq.s32.totalorder %v451, 1
      %456 = vrot.lane.b32.xlu0 %v443, 64
      %v457 = vpop.permute.xlu0 %456
      %458 = vrot.lane.b32.xlu0 %v444, 64
      %v459 = vpop.permute.xlu0 %458
      %v462 = vsel %vm452, %v443, %v457
      %v463 = vsel %vm453, %v444, %v459
      %v464 = vxor.u32 %v462, 2147483648
      %v465 = vxor.u32 %v463, 2147483648
      %v466 = vmul.f32 %v464, 1.442695
      %v467 = vpow.pop %v466
      %v468 = vmul.f32 %v465, 1.442695
      %v469 = vpow.pop %v468
      %v470 = vadd.f32 %v467, 1.0
      %v471 = vadd.f32 %v469, 1.0
      %v472 = vrcp.pop %v470
      %v473 = vmul.f32 1.0, %v472
      %v474 = vrcp.pop %v471
      %v475 = vmul.f32 1.0, %v474
      %v476 = vtanh.pop %v462
      %v477 = vtanh.pop %v463
      %v478 = vld [vmem:[#allocation3] sm:$0xff]
      %v479 = vld [vmem:[#allocation3 + $0x8] sm:$0xff]
      %482 = vrot.lane.b32.xlu0 %v478, 16
      %v483 = vpop.permute.xlu0 %482
      %484 = vrot.lane.b32.xlu0 %v479, 16
      %v485 = vpop.permute.xlu0 %484
      %v488 = vmul.f32 %v473, %v483
      %v489 = vmul.f32 %v475, %v485
      %492 = vrot.lane.b32.xlu0 %v476, 96
      %v493 = vpop.permute.xlu0 %492
      %494 = vrot.lane.b32.xlu0 %v477, 96
      %v495 = vpop.permute.xlu0 %494
      %v498 = vmul.f32 %v473, %v493
      %v499 = vmul.f32 %v475, %v495
      %502 = vrot.lane.b32.xlu0 %v498, 16
      %v503 = vpop.permute.xlu0 %502
      %504 = vrot.lane.b32.xlu0 %v499, 16
      %v505 = vpop.permute.xlu0 %504
      %v508 = vadd.f32 %v488, %v503
      %v509 = vadd.f32 %v489, %v505
      %v510 = vtanh.pop %v508
      %v511 = vtanh.pop %v509
      %514 = vrot.lane.b32.xlu0 %v510, 32
      %v515 = vpop.permute.xlu0 %514
      %516 = vrot.lane.b32.xlu0 %v511, 32
      %v517 = vpop.permute.xlu0 %516
      %v520 = vmul.f32 %v473, %v515
      %v521 = vmul.f32 %v475, %v517
      %524 = vrot.lane.b32.xlu0 %v508, 112
      %v525 = vpop.permute.xlu0 %524
      %526 = vrot.lane.b32.xlu0 %v509, 112
      %v527 = vpop.permute.xlu0 %526
      %530 = vst.msk [vmem:[#allocation3] sm:$0xff] %vm276, %v525
      %531 = vst.msk [vmem:[#allocation3 + $0x8] sm:$0xff] %vm276, %v527
      %534 = vrot.lane.b32.xlu0 %v520, 80
      %v535 = vpop.permute.xlu0 %534
      %536 = vrot.lane.b32.xlu0 %v521, 80
      %v537 = vpop.permute.xlu0 %536
      %540 = vst.msk [vmem:[#allocation2] sm:$0xff] %vm276, %v535
      %541 = vst.msk [vmem:[#allocation2 + $0x8] sm:$0xff] %vm276, %v537
      %s542 = smul.u32 %s18, 8
      %s543 = scalar_lea.vmem %s5, %s542
      %544 = vst.msk [vmem:[%s543] sm:$0xff] %vm276, %v535
      %s545 = ssub.s32 7, %s18
      %s546 = smul.u32 %s545, 8
      %s547 = scalar_lea.vmem %s6, %s546
      %548 = vst.msk [vmem:[%s547] sm:$0xff] %vm276, %v537
      // Predicated region
      $region45: #{multigras_forward.7} parent=39 // pred_check
        %p549 = pneg %p148
      $region46: #{multigras_forward.7} parent=39 // pred_check_branch
        %551 = sbr.rel (%p549) target = $region48
      $region47: #{multigras_forward.7} parent=39 // pred_region
        _
      $region48: #{multigras_forward.7} parent=39 // pred_fallthru
        _
      // Predicated region
      $region49: #{multigras_forward.7} parent=39 // pred_check
        %p552 = pneg %p169
      $region50: #{multigras_forward.7} parent=39 // pred_check_branch
        %554 = sbr.rel (%p552) target = $region52
      $region51: #{multigras_forward.7} parent=39 // pred_region
        _
      $region52: #{multigras_forward.7} parent=39 // pred_fallthru
        _
      // Predicated region
      $region53: #{multigras_forward.7} parent=39 // pred_check
        %p555 = pneg %p148
      $region54: #{multigras_forward.7} parent=39 // pred_check_branch
        %557 = sbr.rel (%p555) target = $region56
      $region55: #{multigras_forward.7} parent=39 // pred_region
        _
      $region56: #{multigras_forward.7} parent=39 // pred_fallthru
        _
      // Predicated region
      $region57: #{multigras_forward.7} parent=39 // pred_check
        %p558 = pneg %p169
      $region58: #{multigras_forward.7} parent=39 // pred_check_branch
        %560 = sbr.rel (%p558) target = $region60
      $region59: #{multigras_forward.7} parent=39 // pred_region
        _
      $region60: #{multigras_forward.7} parent=39 // pred_fallthru
        _
    $region40: #{multigras_forward.7} parent=5 // pred_fallthru
      _
    %p561 = scmp.le.s32.totalorder 2, %s13
    // Predicated region
    $region61: #{multigras_forward.7} parent=5 // pred_check
      %p562 = pneg %p561
    $region62: #{multigras_forward.7} parent=5 // pred_check_branch
      %564 = sbr.rel (%p562) target = $region64
    $region63: #{multigras_forward.7} parent=5 // pred_region
      %s565 = ssub.s32 %s13, 2
    $region64: #{multigras_forward.7} parent=5 // pred_fallthru
      _
  $region6: #{multigras_forward.7} parent=0 // loop_footer
    %s17 = sadd.s32 1, %s13
  $region7: #{multigras_forward.7} parent=0 // loop_footer_branch
    %12 = sbr.rel target = $region3
  $region8: #{multigras_forward.7} parent=0 // loop_exit
    _

// kernel: multigras_forward.8
$region0: #{multigras_forward.8}
  #allocation0 [shape = 'u32[]', space=smem, size = 0x4, offset = 0x4, fixed_abs, tag = 'smem constant byte address 0x4 - core index']
  #allocation1 [shape = 'u32[144,128]{1,0:T(1,128)}', space=vmem, size = 0x12000, scoped, tag = 'internal scratch']
  #allocation2 [shape = 'f32[16,16]{1,0:T(8,128)}', space=vmem, size = 0x2000, scoped, tag = 'scratch operand']
  #allocation3 [shape = 'f32[16,16]{1,0:T(8,128)}', space=vmem, size = 0x2000, scoped, tag = 'scratch operand']
  %s0 = inlined_call_operand.vmem [shape: f32[8,8,16], index: 0, kind: input, shape index: {}, may-alias: {0,1}]
  %s1 = inlined_call_operand.vmem [shape: f32[8,8,16], index: 1, kind: input, shape index: {}, may-alias: {0,1}]
  %s2 = inlined_call_operand.vmem [shape: f32[8,8,16], index: 2, kind: input, shape index: {}, may-alias: {2,3}]
  %s3 = inlined_call_operand.vmem [shape: f32[8,8,16], index: 3, kind: input, shape index: {}, may-alias: {2,3}]
  %s4 = inlined_call_operand.vmem [shape: f32[16,128], index: 4, kind: input, shape index: {}]
  %s5 = inlined_call_operand.vmem [shape: f32[16,128], index: 5, kind: input, shape index: {}]
  %s6 = inlined_call_operand.vmem [shape: f32[16,128], index: 6, kind: input, shape index: {}]
  %s7 = inlined_call_operand.vmem [shape: f32[1,128], index: 7, kind: input, shape index: {}]
  %s8 = inlined_call_operand.vmem [shape: f32[8,8,16], index: 8, kind: output, shape index: {0}]
  %s9 = inlined_call_operand.vmem [shape: f32[8,8,16], index: 9, kind: output, shape index: {1}]
  %10 = xla_tuple %s8, %s9
  %s11 = sld [smem:[#allocation0]]
  $region77: #{multigras_forward.8} parent=0
    _
  %s13 = ssub.s32 1, %s11
  %s14 = scalar_select 0, %s13, %s11
  loop: start=0, step=1, limit=10
  $region2: #{multigras_forward.8} parent=0 // loop_pre_header
    _
  $region3: #{multigras_forward.8} parent=0 // loop_header
    %s16 = sphi 0, %s20
    %p17 = scmp.ge.s32.totalorder %s16, 10
    %s26 = sphi 0, %s28
    %s29 = sphi 0, %s26
    %s30 = sphi 0, %s29
    %s46 = sphi 0, %s30
    %s54 = sphi 0, %s56
    %s57 = sphi 0, %s54
    %s58 = sphi 0, %s57
    %s74 = sphi 0, %s58
    %s80 = sphi 0, %s82
    %s83 = sphi 0, %s80
    %s84 = sphi 0, %s83
    %s100 = sphi 0, %s84
    %s108 = sphi 0, %s110
    %s111 = sphi 0, %s108
    %s112 = sphi 0, %s111
    %s128 = sphi 0, %s112
    %s132 = sphi 0, %s132
    %s134 = sphi 0, %s132
    %s135 = sphi 0, %s134
    %s149 = sphi 0, %s135
    %s153 = sphi 0, %s153
    %s155 = sphi 0, %s153
    %s156 = sphi 0, %s155
    %s170 = sphi 0, %s156
    %s174 = sphi 0, %s174
    %s176 = sphi 0, %s174
    %s177 = sphi 0, %s176
    %s191 = sphi 0, %s177
    %s195 = sphi 0, %s195
    %s197 = sphi 0, %s195
    %s198 = sphi 0, %s197
    %s212 = sphi 0, %s198
    %s216 = sphi 0, %s216
    %s218 = sphi 0, %s216
    %s219 = sphi 0, %s218
    %s233 = sphi 0, %s219
    %s237 = sphi 0, %s237
    %s239 = sphi 0, %s237
    %s240 = sphi 0, %s239
    %s254 = sphi 0, %s240
  $region4: #{multigras_forward.8} parent=0 // loop_header_branch
    %19 = sbr.rel (%p17) target = $region8
  $region5: #{multigras_forward.8} parent=0 // loop_body
    %s21 = ssub.s32 %s16, 1
    %s22 = ssub.s32 %s16, 2
    %s23 = sadd.s32 %s16, 1
    %s24 = ssub.s32 %s16, %s23
    %p25 = scmp.eq.s32.totalorder %s24, 0
    %s27 = sadd.s32 %s26, 1
    %s28 = scalar_select %p25, %s26, %s27
    %p31 = pneg %p25
    %p32 = scmp.eq.s32.totalorder %s16, 7
    %p33 = por %p31, %p32
    %p34 = scmp.ne.s32.totalorder %s26, %s29
    %p35 = scmp.eq.s32.totalorder %s16, 0
    %p36 = por %p34, %p35
    %p37 = scmp.ne.s32.totalorder %s26, %s29
    %p38 = scmp.eq.s32.totalorder %s21, 7
    %p39 = por %p37, %p38
    %p40 = scmp.ne.s32.totalorder %s29, %s30
    %p41 = scmp.eq.s32.totalorder %s21, 0
    %p42 = por %p40, %p41
    %p43 = scmp.ne.s32.totalorder %s29, %s30
    %p44 = scmp.eq.s32.totalorder %s22, 7
    %p45 = por %p43, %p44
    %p47 = scmp.ne.s32.totalorder %s30, %s46
    %p48 = scmp.eq.s32.totalorder %s22, 0
    %p49 = por %p47, %p48
    %s50 = ssub.s32 7, %s16
    %s51 = ssub.s32 7, %s23
    %s52 = ssub.s32 %s50, %s51
    %p53 = scmp.eq.s32.totalorder %s52, 0
    %s55 = sadd.s32 %s54, 1
    %s56 = scalar_select %p53, %s54, %s55
    %p59 = pneg %p53
    %p60 = scmp.eq.s32.totalorder %s16, 7
    %p61 = por %p59, %p60
    %p62 = scmp.ne.s32.totalorder %s54, %s57
    %p63 = scmp.eq.s32.totalorder %s16, 0
    %p64 = por %p62, %p63
    %p65 = scmp.ne.s32.totalorder %s54, %s57
    %p66 = scmp.eq.s32.totalorder %s21, 7
    %p67 = por %p65, %p66
    %p68 = scmp.ne.s32.totalorder %s57, %s58
    %p69 = scmp.eq.s32.totalorder %s21, 0
    %p70 = por %p68, %p69
    %p71 = scmp.ne.s32.totalorder %s57, %s58
    %p72 = scmp.eq.s32.totalorder %s22, 7
    %p73 = por %p71, %p72
    %p75 = scmp.ne.s32.totalorder %s58, %s74
    %p76 = scmp.eq.s32.totalorder %s22, 0
    %p77 = por %p75, %p76
    %s78 = ssub.s32 %s16, %s23
    %p79 = scmp.eq.s32.totalorder %s78, 0
    %s81 = sadd.s32 %s80, 1
    %s82 = scalar_select %p79, %s80, %s81
    %p85 = pneg %p79
    %p86 = scmp.eq.s32.totalorder %s16, 7
    %p87 = por %p85, %p86
    %p88 = scmp.ne.s32.totalorder %s80, %s83
    %p89 = scmp.eq.s32.totalorder %s16, 0
    %p90 = por %p88, %p89
    %p91 = scmp.ne.s32.totalorder %s80, %s83
    %p92 = scmp.eq.s32.totalorder %s21, 7
    %p93 = por %p91, %p92
    %p94 = scmp.ne.s32.totalorder %s83, %s84
    %p95 = scmp.eq.s32.totalorder %s21, 0
    %p96 = por %p94, %p95
    %p97 = scmp.ne.s32.totalorder %s83, %s84
    %p98 = scmp.eq.s32.totalorder %s22, 7
    %p99 = por %p97, %p98
    %p101 = scmp.ne.s32.totalorder %s84, %s100
    %p102 = scmp.eq.s32.totalorder %s22, 0
    %p103 = por %p101, %p102
    %s104 = ssub.s32 7, %s16
    %s105 = ssub.s32 7, %s23
    %s106 = ssub.s32 %s104, %s105
    %p107 = scmp.eq.s32.totalorder %s106, 0
    %s109 = sadd.s32 %s108, 1
    %s110 = scalar_select %p107, %s108, %s109
    %p113 = pneg %p107
    %p114 = scmp.eq.s32.totalorder %s16, 7
    %p115 = por %p113, %p114
    %p116 = scmp.ne.s32.totalorder %s108, %s111
    %p117 = scmp.eq.s32.totalorder %s16, 0
    %p118 = por %p116, %p117
    %p119 = scmp.ne.s32.totalorder %s108, %s111
    %p120 = scmp.eq.s32.totalorder %s21, 7
    %p121 = por %p119, %p120
    %p122 = scmp.ne.s32.totalorder %s111, %s112
    %p123 = scmp.eq.s32.totalorder %s21, 0
    %p124 = por %p122, %p123
    %p125 = scmp.ne.s32.totalorder %s111, %s112
    %p126 = scmp.eq.s32.totalorder %s22, 7
    %p127 = por %p125, %p126
    %p129 = scmp.ne.s32.totalorder %s112, %s128
    %p130 = scmp.eq.s32.totalorder %s22, 0
    %p131 = por %p129, %p130
    %s133 = sadd.s32 %s132, 1
    %p136 = scmp.eq.s32.totalorder %s16, 7
    %p137 = scmp.ne.s32.totalorder %s132, %s134
    %p138 = scmp.eq.s32.totalorder %s16, 0
    %p139 = por %p137, %p138
    %p140 = scmp.ne.s32.totalorder %s132, %s134
    %p141 = scmp.eq.s32.totalorder %s21, 7
    %p142 = por %p140, %p141
    %p143 = scmp.ne.s32.totalorder %s134, %s135
    %p144 = scmp.eq.s32.totalorder %s21, 0
    %p145 = por %p143, %p144
    %p146 = scmp.ne.s32.totalorder %s134, %s135
    %p147 = scmp.eq.s32.totalorder %s22, 7
    %p148 = por %p146, %p147
    %p150 = scmp.ne.s32.totalorder %s135, %s149
    %p151 = scmp.eq.s32.totalorder %s22, 0
    %p152 = por %p150, %p151
    %s154 = sadd.s32 %s153, 1
    %p157 = scmp.eq.s32.totalorder %s16, 7
    %p158 = scmp.ne.s32.totalorder %s153, %s155
    %p159 = scmp.eq.s32.totalorder %s16, 0
    %p160 = por %p158, %p159
    %p161 = scmp.ne.s32.totalorder %s153, %s155
    %p162 = scmp.eq.s32.totalorder %s21, 7
    %p163 = por %p161, %p162
    %p164 = scmp.ne.s32.totalorder %s155, %s156
    %p165 = scmp.eq.s32.totalorder %s21, 0
    %p166 = por %p164, %p165
    %p167 = scmp.ne.s32.totalorder %s155, %s156
    %p168 = scmp.eq.s32.totalorder %s22, 7
    %p169 = por %p167, %p168
    %p171 = scmp.ne.s32.totalorder %s156, %s170
    %p172 = scmp.eq.s32.totalorder %s22, 0
    %p173 = por %p171, %p172
    %s175 = sadd.s32 %s174, 1
    %p178 = scmp.eq.s32.totalorder %s16, 7
    %p179 = scmp.ne.s32.totalorder %s174, %s176
    %p180 = scmp.eq.s32.totalorder %s16, 0
    %p181 = por %p179, %p180
    %p182 = scmp.ne.s32.totalorder %s174, %s176
    %p183 = scmp.eq.s32.totalorder %s21, 7
    %p184 = por %p182, %p183
    %p185 = scmp.ne.s32.totalorder %s176, %s177
    %p186 = scmp.eq.s32.totalorder %s21, 0
    %p187 = por %p185, %p186
    %p188 = scmp.ne.s32.totalorder %s176, %s177
    %p189 = scmp.eq.s32.totalorder %s22, 7
    %p190 = por %p188, %p189
    %p192 = scmp.ne.s32.totalorder %s177, %s191
    %p193 = scmp.eq.s32.totalorder %s22, 0
    %p194 = por %p192, %p193
    %s196 = sadd.s32 %s195, 1
    %p199 = scmp.eq.s32.totalorder %s16, 7
    %p200 = scmp.ne.s32.totalorder %s195, %s197
    %p201 = scmp.eq.s32.totalorder %s16, 0
    %p202 = por %p200, %p201
    %p203 = scmp.ne.s32.totalorder %s195, %s197
    %p204 = scmp.eq.s32.totalorder %s21, 7
    %p205 = por %p203, %p204
    %p206 = scmp.ne.s32.totalorder %s197, %s198
    %p207 = scmp.eq.s32.totalorder %s21, 0
    %p208 = por %p206, %p207
    %p209 = scmp.ne.s32.totalorder %s197, %s198
    %p210 = scmp.eq.s32.totalorder %s22, 7
    %p211 = por %p209, %p210
    %p213 = scmp.ne.s32.totalorder %s198, %s212
    %p214 = scmp.eq.s32.totalorder %s22, 0
    %p215 = por %p213, %p214
    %s217 = sadd.s32 %s216, 1
    %p220 = scmp.eq.s32.totalorder %s16, 7
    %p221 = scmp.ne.s32.totalorder %s216, %s218
    %p222 = scmp.eq.s32.totalorder %s16, 0
    %p223 = por %p221, %p222
    %p224 = scmp.ne.s32.totalorder %s216, %s218
    %p225 = scmp.eq.s32.totalorder %s21, 7
    %p226 = por %p224, %p225
    %p227 = scmp.ne.s32.totalorder %s218, %s219
    %p228 = scmp.eq.s32.totalorder %s21, 0
    %p229 = por %p227, %p228
    %p230 = scmp.ne.s32.totalorder %s218, %s219
    %p231 = scmp.eq.s32.totalorder %s22, 7
    %p232 = por %p230, %p231
    %p234 = scmp.ne.s32.totalorder %s219, %s233
    %p235 = scmp.eq.s32.totalorder %s22, 0
    %p236 = por %p234, %p235
    %s238 = sadd.s32 %s237, 1
    %p241 = scmp.eq.s32.totalorder %s16, 7
    %p242 = scmp.ne.s32.totalorder %s237, %s239
    %p243 = scmp.eq.s32.totalorder %s16, 0
    %p244 = por %p242, %p243
    %p245 = scmp.ne.s32.totalorder %s237, %s239
    %p246 = scmp.eq.s32.totalorder %s21, 7
    %p247 = por %p245, %p246
    %p248 = scmp.ne.s32.totalorder %s239, %s240
    %p249 = scmp.eq.s32.totalorder %s21, 0
    %p250 = por %p248, %p249
    %p251 = scmp.ne.s32.totalorder %s239, %s240
    %p252 = scmp.eq.s32.totalorder %s22, 7
    %p253 = por %p251, %p252
    %p255 = scmp.ne.s32.totalorder %s240, %s254
    %p256 = scmp.eq.s32.totalorder %s22, 0
    %p257 = por %p255, %p256
    %p258 = scmp.le.s32.totalorder 1, %s16
    %p259 = scmp.lt.s32.totalorder %s16, 9
    %p260 = pnand %p258, %p259
    %p261 = pneg %p260
    // Predicated region
    $region9: #{multigras_forward.8} parent=5 // pred_check
      _
    $region10: #{multigras_forward.8} parent=5 // pred_check_branch
      %263 = sbr.rel (%p260) target = $region12
    $region11: #{multigras_forward.8} parent=5 // pred_region
      %s264 = ssub.s32 %s16, 1
      // Predicated region
      $region13: #{multigras_forward.8} parent=11 // pred_check
        %p265 = pneg %p145
      $region14: #{multigras_forward.8} parent=11 // pred_check_branch
        %267 = sbr.rel (%p265) target = $region16
      $region15: #{multigras_forward.8} parent=11 // pred_region
        _
      $region16: #{multigras_forward.8} parent=11 // pred_fallthru
        _
      // Predicated region
      $region17: #{multigras_forward.8} parent=11 // pred_check
        %p268 = pneg %p166
      $region18: #{multigras_forward.8} parent=11 // pred_check_branch
        %270 = sbr.rel (%p268) target = $region20
      $region19: #{multigras_forward.8} parent=11 // pred_region
        _
      $region20: #{multigras_forward.8} parent=11 // pred_fallthru
        _
      // Predicated region
      $region21: #{multigras_forward.8} parent=11 // pred_check
        %p271 = pneg %p187
      $region22: #{multigras_forward.8} parent=11 // pred_check_branch
        %273 = sbr.rel (%p271) target = $region24
      $region23: #{multigras_forward.8} parent=11 // pred_region
        _
      $region24: #{multigras_forward.8} parent=11 // pred_fallthru
        _
      // Predicated region
      $region25: #{multigras_forward.8} parent=11 // pred_check
        %p274 = pneg %p208
      $region26: #{multigras_forward.8} parent=11 // pred_check_branch
        %276 = sbr.rel (%p274) target = $region28
      $region27: #{multigras_forward.8} parent=11 // pred_region
        _
      $region28: #{multigras_forward.8} parent=11 // pred_fallthru
        _
    $region12: #{multigras_forward.8} parent=5 // pred_fallthru
      _
    %p277 = scmp.lt.s32.totalorder %s16, 8
    // Predicated region
    $region29: #{multigras_forward.8} parent=5 // pred_check
      %p278 = pneg %p277
    $region30: #{multigras_forward.8} parent=5 // pred_check_branch
      %280 = sbr.rel (%p278) target = $region32
    $region31: #{multigras_forward.8} parent=5 // pred_region
      // Predicated region
      $region33: #{multigras_forward.8} parent=31 // pred_check
        %p281 = pneg %p36
      $region34: #{multigras_forward.8} parent=31 // pred_check_branch
        %283 = sbr.rel (%p281) target = $region36
      $region35: #{multigras_forward.8} parent=31 // pred_region
        %p284 = scmp.lt.s32.totalorder %s16, 7
        %s285 = scalar_select %p284, %s16, 7
        %s286 = smul.addr %s285, 8
        %s287 = scalar_lea.vmem %s0, %s286
      $region36: #{multigras_forward.8} parent=31 // pred_fallthru
        _
      // Predicated region
      $region37: #{multigras_forward.8} parent=31 // pred_check
        %p288 = pneg %p64
      $region38: #{multigras_forward.8} parent=31 // pred_check_branch
        %290 = sbr.rel (%p288) target = $region40
      $region39: #{multigras_forward.8} parent=31 // pred_region
        %s291 = ssub.s32 7, %s16
        %p292 = scmp.lt.s32.totalorder %s291, 7
        %s293 = scalar_select %p292, %s291, 7
        %s294 = smul.addr %s293, 8
        %s295 = scalar_lea.vmem %s1, %s294
        %s296 = ssub.s32 7, %s16
      $region40: #{multigras_forward.8} parent=31 // pred_fallthru
        _
      // Predicated region
      $region41: #{multigras_forward.8} parent=31 // pred_check
        %p297 = pneg %p90
      $region42: #{multigras_forward.8} parent=31 // pred_check_branch
        %299 = sbr.rel (%p297) target = $region44
      $region43: #{multigras_forward.8} parent=31 // pred_region
        %p300 = scmp.lt.s32.totalorder %s16, 7
        %s301 = scalar_select %p300, %s16, 7
        %s302 = smul.addr %s301, 8
        %s303 = scalar_lea.vmem %s2, %s302
      $region44: #{multigras_forward.8} parent=31 // pred_fallthru
        _
      // Predicated region
      $region45: #{multigras_forward.8} parent=31 // pred_check
        %p304 = pneg %p118
      $region46: #{multigras_forward.8} parent=31 // pred_check_branch
        %306 = sbr.rel (%p304) target = $region48
      $region47: #{multigras_forward.8} parent=31 // pred_region
        %s307 = ssub.s32 7, %s16
        %p308 = scmp.lt.s32.totalorder %s307, 7
        %s309 = scalar_select %p308, %s307, 7
        %s310 = smul.addr %s309, 8
        %s311 = scalar_lea.vmem %s3, %s310
        %s312 = ssub.s32 7, %s16
      $region48: #{multigras_forward.8} parent=31 // pred_fallthru
        _
    $region32: #{multigras_forward.8} parent=5 // pred_fallthru
      _
    %p313 = scmp.le.s32.totalorder 1, %s16
    %p314 = scmp.lt.s32.totalorder %s16, 9
    %p315 = pnand %p313, %p314
    %p316 = pneg %p315
    // Predicated region
    $region49: #{multigras_forward.8} parent=5 // pred_check
      _
    $region50: #{multigras_forward.8} parent=5 // pred_check_branch
      %318 = sbr.rel (%p315) target = $region52
    $region51: #{multigras_forward.8} parent=5 // pred_region
      %s319 = ssub.s32 %s16, 1
      %p320 = scmp.lt.s32.totalorder %s21, 7
      %s321 = scalar_select %p320, %s21, 7
      %s322 = smul.addr %s321, 8
      %s323 = scalar_lea.vmem %s0, %s322
      %p324 = pneg %p42
      %p325 = pneg %p39
      %s326 = ssub.s32 7, %s21
      %p327 = scmp.lt.s32.totalorder %s326, 7
      %s328 = scalar_select %p327, %s326, 7
      %s329 = smul.addr %s328, 8
      %s330 = scalar_lea.vmem %s1, %s329
      %p331 = pneg %p70
      %p332 = pneg %p67
      %p333 = scmp.lt.s32.totalorder %s21, 7
      %s334 = scalar_select %p333, %s21, 7
      %s335 = smul.addr %s334, 8
      %s336 = scalar_lea.vmem %s2, %s335
      %p337 = pneg %p96
      %p338 = pneg %p93
      %s339 = ssub.s32 7, %s21
      %p340 = scmp.lt.s32.totalorder %s339, 7
      %s341 = scalar_select %p340, %s339, 7
      %s342 = smul.addr %s341, 8
      %s343 = scalar_lea.vmem %s3, %s342
      %p344 = pneg %p124
      %p345 = pneg %p121
      %p346 = pneg %p145
      %p347 = pneg %p142
      %p348 = pneg %p166
      %p349 = pneg %p163
      %p350 = pneg %p187
      %p351 = pneg %p184
      %p352 = pneg %p208
      %p353 = pneg %p205
      %p354 = pneg %p229
      %p355 = pneg %p226
      %p356 = pneg %p250
      %p357 = pneg %p247
      %p358 = scmp.lt.s32.totalorder %s21, 7
      %s359 = scalar_select %p358, %s21, 7
      %s360 = smul.addr %s359, 8
      %s361 = scalar_lea.vmem %s0, %s360
      %s362 = ssub.s32 7, %s21
      %p363 = scmp.lt.s32.totalorder %s362, 7
      %s364 = scalar_select %p363, %s362, 7
      %s365 = smul.addr %s364, 8
      %s366 = scalar_lea.vmem %s1, %s365
      %s367 = ssub.s32 7, %s21
      %p368 = scmp.lt.s32.totalorder %s21, 7
      %s369 = scalar_select %p368, %s21, 7
      %s370 = smul.addr %s369, 8
      %s371 = scalar_lea.vmem %s2, %s370
      %s372 = ssub.s32 7, %s21
      %p373 = scmp.lt.s32.totalorder %s372, 7
      %s374 = scalar_select %p373, %s372, 7
      %s375 = smul.addr %s374, 8
      %s376 = scalar_lea.vmem %s3, %s375
      %s377 = ssub.s32 7, %s21
      %p378 = scmp.eq.s32.totalorder %s21, 0
      // Predicated region
      $region53: #{multigras_forward.8} parent=51 // pred_check
        %p379 = pneg %p378
      $region54: #{multigras_forward.8} parent=51 // pred_check_branch
        %381 = sbr.rel (%p379) target = $region56
      $region55: #{multigras_forward.8} parent=51 // pred_region
        %vm382 = vcmask 130048
        %383 = vst.msk [vmem:[#allocation2] sm:$0xff] %vm382, 0.0
        %384 = vst.msk [vmem:[#allocation2 + $0x8] sm:$0xff] %vm382, 0.0
        %385 = vst.msk [vmem:[#allocation3] sm:$0xff] %vm382, 0.0
        %386 = vst.msk [vmem:[#allocation3 + $0x8] sm:$0xff] %vm382, 0.0
      $region56: #{multigras_forward.8} parent=51 // pred_fallthru
        _
      %v387 = vld [vmem:[#allocation2] sm:$0xff]
      %v388 = vld [vmem:[#allocation2 + $0x8] sm:$0xff]
      %v389 = vld [vmem:[%s6] sm:$0xff]
      %v390 = vld [vmem:[%s6 + $0x8] sm:$0xff]
      %v391 = vld [vmem:[%s7] sm:$0x1]
      %v393 = vlaneseq
      %v394 = vshrl.u32 %v393, 7
      %v395 = vsub.s32 0, %v394
      %v396 = vrot.slane %v391, %v395
      %vm398 = vcmask 130048
      %v400 = vsel %vm398, %v387, 0
      %v403 = vsel %vm398, %v388, 0
      %405 = vmatprep.subr.mxu0 0.0
      %406 = vmatpush1.msra.mxu0 %v389
      %407 = vmatprep.subr.mxu0 0.0
      %408 = vmatpush1.msra.mxu0 %v390
      %409 = vmatprep.subr.mxu0 0.0
      %410 = vmatpush1.msra.mxu0 0.0
      %411 = vmatprep.subr.mxu0 0.0
      %412 = vmatpush1.msra.mxu0 0.0
      %413 = vmatprep.subr.mxu0 0.0
      %414 = vmatpush1.msra.mxu0 0.0
      %415 = vmatprep.subr.mxu0 0.0
      %416 = vmatpush1.msra.mxu0 0.0
      %417 = vmatprep.subr.mxu0 0.0
      %418 = vmatpush1.msra.mxu0 0.0
      %419 = vmatprep.subr.mxu0 0.0
      %420 = vmatpush1.msra.mxu0 0.0
      %421 = vmatprep.subr.mxu0 0.0
      %422 = vmatpush1.msra.mxu0 0.0
      %423 = vmatprep.subr.mxu0 0.0
      %424 = vmatpush1.msra.mxu0 0.0
      %425 = vmatprep.subr.mxu0 0.0
      %426 = vmatpush1.msra.mxu0 0.0
      %427 = vmatprep.subr.mxu0 0.0
      %428 = vmatpush1.msra.mxu0 0.0
      %429 = vmatprep.subr.mxu0 0.0
      %430 = vmatpush1.msra.mxu0 0.0
      %431 = vmatprep.subr.mxu0 0.0
      %432 = vmatpush1.msra.mxu0 0.0
      %433 = vmatprep.subr.mxu0 0.0
      %434 = vmatpush1.msra.mxu0 0.0
      %435 = vmatprep.subr.mxu0 0.0
      %436 = vmatpush1.msra.mxu0 0.0
      %437 = vmatprep.subr.mxu0 0.0
      %438 = vmatpush1.msra.mxu0 0.0
      %439 = vmatprep.subr.mxu0 0.0
      %440 = vmatpush1.msra.mxu0 0.0
      %441 = vmatprep.subr.mxu0 0.0
      %442 = vmatpush1.msra.mxu0 0.0
      %443 = vmatprep.subr.mxu0 0.0
      %444 = vmatpush1.msra.mxu0 0.0
      %445 = vmatprep.subr.mxu0 0.0
      %446 = vmatpush1.msra.mxu0 0.0
      %447 = vmatprep.subr.mxu0 0.0
      %448 = vmatpush1.msra.mxu0 0.0
      %449 = vmatprep.subr.mxu0 0.0
      %450 = vmatpush1.msra.mxu0 0.0
      %451 = vmatprep.subr.mxu0 0.0
      %452 = vmatpush1.msra.mxu0 0.0
      %453 = vmatprep.subr.mxu0 0.0
      %454 = vmatpush1.msra.mxu0 0.0
      %455 = vmatprep.subr.mxu0 0.0
      %456 = vmatpush1.msra.mxu0 0.0
      %457 = vmatprep.subr.mxu0 0.0
      %458 = vmatpush1.msra.mxu0 0.0
      %459 = vmatprep.subr.mxu0 0.0
      %460 = vmatpush1.msra.mxu0 0.0
      %461 = vmatprep.subr.mxu0 0.0
      %462 = vmatpush1.msra.mxu0 0.0
      %463 = vmatprep.subr.mxu0 0.0
      %464 = vmatpush1.msra.mxu0 0.0
      %465 = vmatprep.subr.mxu0 0.0
      %466 = vmatpush1.msra.mxu0 0.0
      %467 = vmatprep.subr.mxu0 0.0
      %468 = vmatpush1.msra.mxu0 0.0
      %469 = vmatprep.mubr.f32.mxu0 0.0
      %470 = vmatmul.mubr.f32.gmra.mrb[0].mxu0 %v400
      %v471 = vpop.f32.mrb[0].mxu0
      %v472 = vadd.f32 %v396, %v471
      %v473 = vpop.f32.mrb[0].mxu0
      %474 = vmatprep.mubr.f32.mxu0 0.0
      %475 = vmatmul.mubr.f32.gmra.mrb[0].mxu0 %v403
      %v476 = vpop.f32.mrb[0].mxu0
      %v477 = vadd.f32 %v396, %v476
      %v478 = vpop.f32.mrb[0].mxu0
      %479 = vdwg.mxu0
      %v480 = vld [vmem:[%s361] sm:$0xff]
      %v481 = vld [vmem:[%s366] sm:$0xff]
      %v482 = vld [vmem:[%s4] sm:$0xff]
      %v483 = vld [vmem:[%s4 + $0x8] sm:$0xff]
      %v485 = vsel %vm398, %v480, 0
      %v488 = vsel %vm398, %v481, 0
      %490 = vmatprep.subr.mxu0 0.0
      %491 = vmatpush1.msra.mxu0 %v482
      %492 = vmatprep.subr.mxu0 0.0
      %493 = vmatpush1.msra.mxu0 %v483
      %494 = vmatprep.subr.mxu0 0.0
      %495 = vmatpush1.msra.mxu0 0.0
      %496 = vmatprep.subr.mxu0 0.0
      %497 = vmatpush1.msra.mxu0 0.0
      %498 = vmatprep.subr.mxu0 0.0
      %499 = vmatpush1.msra.mxu0 0.0
      %500 = vmatprep.subr.mxu0 0.0
      %501 = vmatpush1.msra.mxu0 0.0
      %502 = vmatprep.subr.mxu0 0.0
      %503 = vmatpush1.msra.mxu0 0.0
      %504 = vmatprep.subr.mxu0 0.0
      %505 = vmatpush1.msra.mxu0 0.0
      %506 = vmatprep.subr.mxu0 0.0
      %507 = vmatpush1.msra.mxu0 0.0
      %508 = vmatprep.subr.mxu0 0.0
      %509 = vmatpush1.msra.mxu0 0.0
      %510 = vmatprep.subr.mxu0 0.0
      %511 = vmatpush1.msra.mxu0 0.0
      %512 = vmatprep.subr.mxu0 0.0
      %513 = vmatpush1.msra.mxu0 0.0
      %514 = vmatprep.subr.mxu0 0.0
      %515 = vmatpush1.msra.mxu0 0.0
      %516 = vmatprep.subr.mxu0 0.0
      %517 = vmatpush1.msra.mxu0 0.0
      %518 = vmatprep.subr.mxu0 0.0
      %519 = vmatpush1.msra.mxu0 0.0
      %520 = vmatprep.subr.mxu0 0.0
      %521 = vmatpush1.msra.mxu0 0.0
      %522 = vmatprep.subr.mxu0 0.0
      %523 = vmatpush1.msra.mxu0 0.0
      %524 = vmatprep.subr.mxu0 0.0
      %525 = vmatpush1.msra.mxu0 0.0
      %526 = vmatprep.subr.mxu0 0.0
      %527 = vmatpush1.msra.mxu0 0.0
      %528 = vmatprep.subr.mxu0 0.0
      %529 = vmatpush1.msra.mxu0 0.0
      %530 = vmatprep.subr.mxu0 0.0
      %531 = vmatpush1.msra.mxu0 0.0
      %532 = vmatprep.subr.mxu0 0.0
      %533 = vmatpush1.msra.mxu0 0.0
      %534 = vmatprep.subr.mxu0 0.0
      %535 = vmatpush1.msra.mxu0 0.0
      %536 = vmatprep.subr.mxu0 0.0
      %537 = vmatpush1.msra.mxu0 0.0
      %538 = vmatprep.subr.mxu0 0.0
      %539 = vmatpush1.msra.mxu0 0.0
      %540 = vmatprep.subr.mxu0 0.0
      %541 = vmatpush1.msra.mxu0 0.0
      %542 = vmatprep.subr.mxu0 0.0
      %543 = vmatpush1.msra.mxu0 0.0
      %544 = vmatprep.subr.mxu0 0.0
      %545 = vmatpush1.msra.mxu0 0.0
      %546 = vmatprep.subr.mxu0 0.0
      %547 = vmatpush1.msra.mxu0 0.0
      %548 = vmatprep.subr.mxu0 0.0
      %549 = vmatpush1.msra.mxu0 0.0
      %550 = vmatprep.subr.mxu0 0.0
      %551 = vmatpush1.msra.mxu0 0.0
      %552 = vmatprep.subr.mxu0 0.0
      %553 = vmatpush1.msra.mxu0 0.0
      %554 = vmatprep.mubr.f32.mxu0 0.0
      %555 = vmatmul.mubr.f32.gmra.mrb[0].mxu0 %v485
      %v556 = vpop.f32.mrb[0].mxu0
      %v557 = vadd.f32 0.0, %v556
      %v558 = vpop.f32.mrb[0].mxu0
      %559 = vmatprep.mubr.f32.mxu0 0.0
      %560 = vmatmul.mubr.f32.gmra.mrb[0].mxu0 %v488
      %v561 = vpop.f32.mrb[0].mxu0
      %v562 = vadd.f32 0.0, %v561
      %v563 = vpop.f32.mrb[0].mxu0
      %564 = vdwg.mxu0
      %v565 = vadd.f32 %v472, %v557
      %v566 = vadd.f32 %v477, %v562
      %v567 = vld [vmem:[%s371] sm:$0xff]
      %v568 = vld [vmem:[%s376] sm:$0xff]
      %v569 = vld [vmem:[%s5] sm:$0xff]
      %v570 = vld [vmem:[%s5 + $0x8] sm:$0xff]
      %v572 = vsel %vm398, %v567, 0
      %v575 = vsel %vm398, %v568, 0
      %577 = vmatprep.subr.mxu0 0.0
      %578 = vmatpush1.msra.mxu0 %v569
      %579 = vmatprep.subr.mxu0 0.0
      %580 = vmatpush1.msra.mxu0 %v570
      %581 = vmatprep.subr.mxu0 0.0
      %582 = vmatpush1.msra.mxu0 0.0
      %583 = vmatprep.subr.mxu0 0.0
      %584 = vmatpush1.msra.mxu0 0.0
      %585 = vmatprep.subr.mxu0 0.0
      %586 = vmatpush1.msra.mxu0 0.0
      %587 = vmatprep.subr.mxu0 0.0
      %588 = vmatpush1.msra.mxu0 0.0
      %589 = vmatprep.subr.mxu0 0.0
      %590 = vmatpush1.msra.mxu0 0.0
      %591 = vmatprep.subr.mxu0 0.0
      %592 = vmatpush1.msra.mxu0 0.0
      %593 = vmatprep.subr.mxu0 0.0
      %594 = vmatpush1.msra.mxu0 0.0
      %595 = vmatprep.subr.mxu0 0.0
      %596 = vmatpush1.msra.mxu0 0.0
      %597 = vmatprep.subr.mxu0 0.0
      %598 = vmatpush1.msra.mxu0 0.0
      %599 = vmatprep.subr.mxu0 0.0
      %600 = vmatpush1.msra.mxu0 0.0
      %601 = vmatprep.subr.mxu0 0.0
      %602 = vmatpush1.msra.mxu0 0.0
      %603 = vmatprep.subr.mxu0 0.0
      %604 = vmatpush1.msra.mxu0 0.0
      %605 = vmatprep.subr.mxu0 0.0
      %606 = vmatpush1.msra.mxu0 0.0
      %607 = vmatprep.subr.mxu0 0.0
      %608 = vmatpush1.msra.mxu0 0.0
      %609 = vmatprep.subr.mxu0 0.0
      %610 = vmatpush1.msra.mxu0 0.0
      %611 = vmatprep.subr.mxu0 0.0
      %612 = vmatpush1.msra.mxu0 0.0
      %613 = vmatprep.subr.mxu0 0.0
      %614 = vmatpush1.msra.mxu0 0.0
      %615 = vmatprep.subr.mxu0 0.0
      %616 = vmatpush1.msra.mxu0 0.0
      %617 = vmatprep.subr.mxu0 0.0
      %618 = vmatpush1.msra.mxu0 0.0
      %619 = vmatprep.subr.mxu0 0.0
      %620 = vmatpush1.msra.mxu0 0.0
      %621 = vmatprep.subr.mxu0 0.0
      %622 = vmatpush1.msra.mxu0 0.0
      %623 = vmatprep.subr.mxu0 0.0
      %624 = vmatpush1.msra.mxu0 0.0
      %625 = vmatprep.subr.mxu0 0.0
      %626 = vmatpush1.msra.mxu0 0.0
      %627 = vmatprep.subr.mxu0 0.0
      %628 = vmatpush1.msra.mxu0 0.0
      %629 = vmatprep.subr.mxu0 0.0
      %630 = vmatpush1.msra.mxu0 0.0
      %631 = vmatprep.subr.mxu0 0.0
      %632 = vmatpush1.msra.mxu0 0.0
      %633 = vmatprep.subr.mxu0 0.0
      %634 = vmatpush1.msra.mxu0 0.0
      %635 = vmatprep.subr.mxu0 0.0
      %636 = vmatpush1.msra.mxu0 0.0
      %637 = vmatprep.subr.mxu0 0.0
      %638 = vmatpush1.msra.mxu0 0.0
      %639 = vmatprep.subr.mxu0 0.0
      %640 = vmatpush1.msra.mxu0 0.0
      %641 = vmatprep.mubr.f32.mxu0 0.0
      %642 = vmatmul.mubr.f32.gmra.mrb[0].mxu0 %v572
      %v643 = vpop.f32.mrb[0].mxu0
      %v644 = vadd.f32 0.0, %v643
      %v645 = vpop.f32.mrb[0].mxu0
      %646 = vmatprep.mubr.f32.mxu0 0.0
      %647 = vmatmul.mubr.f32.gmra.mrb[0].mxu0 %v575
      %v648 = vpop.f32.mrb[0].mxu0
      %v649 = vadd.f32 0.0, %v648
      %v650 = vpop.f32.mrb[0].mxu0
      %651 = vdwg.mxu0
      %v652 = vadd.f32 %v565, %v644
      %v653 = vadd.f32 %v566, %v649
      %v654 = vlaneseq
      %v655 = vshrl.u32 %v654, 7
      %v656 = vadd.s32 %v655, 8
      %vm657 = vcmp.lt.s32.totalorder %v655, 8
      %vm658 = vcmp.lt.s32.totalorder %v656, 8
      %v659 = vsel %vm657, 1, 0
      %v660 = vsel %vm658, 1, 0
      %vm661 = vcmp.eq.s32.totalorder %v659, 1
      %vm662 = vcmp.eq.s32.totalorder %v660, 1
      %665 = vrot.lane.b32.xlu0 %v652, 64
      %v666 = vpop.permute.xlu0 %665
      %667 = vrot.lane.b32.xlu0 %v653, 64
      %v668 = vpop.permute.xlu0 %667
      %v671 = vsel %vm661, %v652, %v666
      %v672 = vsel %vm662, %v653, %v668
      %v673 = vxor.u32 %v671, 2147483648
      %v674 = vxor.u32 %v672, 2147483648
      %v675 = vmul.f32 %v673, 1.442695
      %v676 = vpow.pop %v675
      %v677 = vmul.f32 %v674, 1.442695
      %v678 = vpow.pop %v677
      %v679 = vadd.f32 %v676, 1.0
      %v680 = vadd.f32 %v678, 1.0
      %v681 = vrcp.pop %v679
      %v682 = vmul.f32 1.0, %v681
      %v683 = vrcp.pop %v680
      %v684 = vmul.f32 1.0, %v683
      %v685 = vtanh.pop %v671
      %v686 = vtanh.pop %v672
      %v687 = vld [vmem:[#allocation3] sm:$0xff]
      %v688 = vld [vmem:[#allocation3 + $0x8] sm:$0xff]
      %691 = vrot.lane.b32.xlu0 %v687, 16
      %v692 = vpop.permute.xlu0 %691
      %693 = vrot.lane.b32.xlu0 %v688, 16
      %v694 = vpop.permute.xlu0 %693
      %v697 = vmul.f32 %v682, %v692
      %v698 = vmul.f32 %v684, %v694
      %701 = vrot.lane.b32.xlu0 %v685, 96
      %v702 = vpop.permute.xlu0 %701
      %703 = vrot.lane.b32.xlu0 %v686, 96
      %v704 = vpop.permute.xlu0 %703
      %v707 = vmul.f32 %v682, %v702
      %v708 = vmul.f32 %v684, %v704
      %711 = vrot.lane.b32.xlu0 %v707, 16
      %v712 = vpop.permute.xlu0 %711
      %713 = vrot.lane.b32.xlu0 %v708, 16
      %v714 = vpop.permute.xlu0 %713
      %v717 = vadd.f32 %v697, %v712
      %v718 = vadd.f32 %v698, %v714
      %v719 = vtanh.pop %v717
      %v720 = vtanh.pop %v718
      %723 = vrot.lane.b32.xlu0 %v719, 32
      %v724 = vpop.permute.xlu0 %723
      %725 = vrot.lane.b32.xlu0 %v720, 32
      %v726 = vpop.permute.xlu0 %725
      %v729 = vmul.f32 %v682, %v724
      %v730 = vmul.f32 %v684, %v726
      %733 = vrot.lane.b32.xlu0 %v717, 112
      %v734 = vpop.permute.xlu0 %733
      %735 = vrot.lane.b32.xlu0 %v718, 112
      %v736 = vpop.permute.xlu0 %735
      %739 = vst.msk [vmem:[#allocation3] sm:$0xff] %vm398, %v734
      %740 = vst.msk [vmem:[#allocation3 + $0x8] sm:$0xff] %vm398, %v736
      %743 = vrot.lane.b32.xlu0 %v729, 80
      %v744 = vpop.permute.xlu0 %743
      %745 = vrot.lane.b32.xlu0 %v730, 80
      %v746 = vpop.permute.xlu0 %745
      %749 = vst.msk [vmem:[#allocation2] sm:$0xff] %vm398, %v744
      %750 = vst.msk [vmem:[#allocation2 + $0x8] sm:$0xff] %vm398, %v746
      %s751 = smul.u32 %s21, 8
      %s752 = scalar_lea.vmem %s8, %s751
      %753 = vst.msk [vmem:[%s752] sm:$0xff] %vm398, %v744
      %s754 = ssub.s32 7, %s21
      %s755 = smul.u32 %s754, 8
      %s756 = scalar_lea.vmem %s9, %s755
      %757 = vst.msk [vmem:[%s756] sm:$0xff] %vm398, %v746
      // Predicated region
      $region57: #{multigras_forward.8} parent=51 // pred_check
        %p758 = pneg %p226
      $region58: #{multigras_forward.8} parent=51 // pred_check_branch
        %760 = sbr.rel (%p758) target = $region60
      $region59: #{multigras_forward.8} parent=51 // pred_region
        _
      $region60: #{multigras_forward.8} parent=51 // pred_fallthru
        _
      // Predicated region
      $region61: #{multigras_forward.8} parent=51 // pred_check
        %p761 = pneg %p247
      $region62: #{multigras_forward.8} parent=51 // pred_check_branch
        %763 = sbr.rel (%p761) target = $region64
      $region63: #{multigras_forward.8} parent=51 // pred_region
        _
      $region64: #{multigras_forward.8} parent=51 // pred_fallthru
        _
      // Predicated region
      $region65: #{multigras_forward.8} parent=51 // pred_check
        %p764 = pneg %p226
      $region66: #{multigras_forward.8} parent=51 // pred_check_branch
        %766 = sbr.rel (%p764) target = $region68
      $region67: #{multigras_forward.8} parent=51 // pred_region
        _
      $region68: #{multigras_forward.8} parent=51 // pred_fallthru
        _
      // Predicated region
      $region69: #{multigras_forward.8} parent=51 // pred_check
        %p767 = pneg %p247
      $region70: #{multigras_forward.8} parent=51 // pred_check_branch
        %769 = sbr.rel (%p767) target = $region72
      $region71: #{multigras_forward.8} parent=51 // pred_region
        _
      $region72: #{multigras_forward.8} parent=51 // pred_fallthru
        _
    $region52: #{multigras_forward.8} parent=5 // pred_fallthru
      _
    %p770 = scmp.le.s32.totalorder 2, %s16
    // Predicated region
    $region73: #{multigras_forward.8} parent=5 // pred_check
      %p771 = pneg %p770
    $region74: #{multigras_forward.8} parent=5 // pred_check_branch
      %773 = sbr.rel (%p771) target = $region76
    $region75: #{multigras_forward.8} parent=5 // pred_region
      %s774 = ssub.s32 %s16, 2
    $region76: #{multigras_forward.8} parent=5 // pred_fallthru
      _
  $region6: #{multigras_forward.8} parent=0 // loop_footer
    %s20 = sadd.s32 1, %s16
  $region7: #{multigras_forward.8} parent=0 // loop_footer_branch
    %15 = sbr.rel target = $region3
  $region8: #{multigras_forward.8} parent=0 // loop_exit
    _

// kernel: multigras_forward.9
$region0: #{multigras_forward.9}
  #allocation0 [shape = 'u32[]', space=smem, size = 0x4, offset = 0x4, fixed_abs, tag = 'smem constant byte address 0x4 - core index']
  #allocation1 [shape = 'u32[144,128]{1,0:T(1,128)}', space=vmem, size = 0x12000, scoped, tag = 'internal scratch']
  %s0 = inlined_call_operand.vmem [shape: f32[8,8,32], index: 0, kind: input, shape index: {}]
  %s1 = inlined_call_operand.vmem [shape: f32[8,8,1], index: 1, kind: input, shape index: {}]
  %s2 = inlined_call_operand.vmem [shape: f32[8,1,8], index: 2, kind: input, shape index: {}]
  %s3 = inlined_call_operand.vmem [shape: f32[8,2,8,8], index: 3, kind: input, shape index: {}]
  %s4 = inlined_call_operand.vmem [shape: f32[32,16], index: 4, kind: input, shape index: {}]
  %s5 = inlined_call_operand.vmem [shape: f32[1,16], index: 5, kind: input, shape index: {}]
  %s6 = inlined_call_operand.vmem [shape: f32[16,16], index: 6, kind: input, shape index: {}]
  %s7 = inlined_call_operand.vmem [shape: f32[1,16], index: 7, kind: input, shape index: {}]
  %s8 = inlined_call_operand.vmem [shape: f32[16,16], index: 8, kind: input, shape index: {}]
  %s9 = inlined_call_operand.vmem [shape: f32[1,16], index: 9, kind: input, shape index: {}]
  %s10 = inlined_call_operand.vmem [shape: f32[16,16], index: 10, kind: input, shape index: {}]
  %s11 = inlined_call_operand.vmem [shape: f32[1,16], index: 11, kind: input, shape index: {}]
  %s12 = inlined_call_operand.vmem [shape: f32[8,1,16], index: 12, kind: output, shape index: {}]
  %s13 = sld [smem:[#allocation0]]
  $region81: #{multigras_forward.9} parent=0
    _
  %s15 = ssub.s32 1, %s13
  %s16 = scalar_select 0, %s15, %s13
  loop: start=0, step=1, limit=10
  $region2: #{multigras_forward.9} parent=0 // loop_pre_header
    _
  $region3: #{multigras_forward.9} parent=0 // loop_header
    %s18 = sphi 0, %s22
    %p19 = scmp.ge.s32.totalorder %s18, 10
    %s28 = sphi 0, %s30
    %s31 = sphi 0, %s28
    %s32 = sphi 0, %s31
    %s48 = sphi 0, %s32
    %s54 = sphi 0, %s56
    %s57 = sphi 0, %s54
    %s58 = sphi 0, %s57
    %s74 = sphi 0, %s58
    %s80 = sphi 0, %s82
    %s83 = sphi 0, %s80
    %s84 = sphi 0, %s83
    %s100 = sphi 0, %s84
    %s106 = sphi 0, %s108
    %s109 = sphi 0, %s106
    %s110 = sphi 0, %s109
    %s126 = sphi 0, %s110
    %s130 = sphi 0, %s130
    %s132 = sphi 0, %s130
    %s133 = sphi 0, %s132
    %s147 = sphi 0, %s133
    %s151 = sphi 0, %s151
    %s153 = sphi 0, %s151
    %s154 = sphi 0, %s153
    %s168 = sphi 0, %s154
    %s172 = sphi 0, %s172
    %s174 = sphi 0, %s172
    %s175 = sphi 0, %s174
    %s189 = sphi 0, %s175
    %s193 = sphi 0, %s193
    %s195 = sphi 0, %s193
    %s196 = sphi 0, %s195
    %s210 = sphi 0, %s196
    %s214 = sphi 0, %s214
    %s216 = sphi 0, %s214
    %s217 = sphi 0, %s216
    %s231 = sphi 0, %s217
    %s235 = sphi 0, %s235
    %s237 = sphi 0, %s235
    %s238 = sphi 0, %s237
    %s252 = sphi 0, %s238
    %s256 = sphi 0, %s256
    %s258 = sphi 0, %s256
    %s259 = sphi 0, %s258
    %s273 = sphi 0, %s259
    %s277 = sphi 0, %s277
    %s279 = sphi 0, %s277
    %s280 = sphi 0, %s279
    %s294 = sphi 0, %s280
    %s300 = sphi 0, %s302
    %s303 = sphi 0, %s300
    %s304 = sphi 0, %s303
    %s320 = sphi 0, %s304
  $region4: #{multigras_forward.9} parent=0 // loop_header_branch
    %21 = sbr.rel (%p19) target = $region8
  $region5: #{multigras_forward.9} parent=0 // loop_body
    %s23 = ssub.s32 %s18, 1
    %s24 = ssub.s32 %s18, 2
    %s25 = sadd.s32 %s18, 1
    %s26 = ssub.s32 %s18, %s25
    %p27 = scmp.eq.s32.totalorder %s26, 0
    %s29 = sadd.s32 %s28, 1
    %s30 = scalar_select %p27, %s28, %s29
    %p33 = pneg %p27
    %p34 = scmp.eq.s32.totalorder %s18, 7
    %p35 = por %p33, %p34
    %p36 = scmp.ne.s32.totalorder %s28, %s31
    %p37 = scmp.eq.s32.totalorder %s18, 0
    %p38 = por %p36, %p37
    %p39 = scmp.ne.s32.totalorder %s28, %s31
    %p40 = scmp.eq.s32.totalorder %s23, 7
    %p41 = por %p39, %p40
    %p42 = scmp.ne.s32.totalorder %s31, %s32
    %p43 = scmp.eq.s32.totalorder %s23, 0
    %p44 = por %p42, %p43
    %p45 = scmp.ne.s32.totalorder %s31, %s32
    %p46 = scmp.eq.s32.totalorder %s24, 7
    %p47 = por %p45, %p46
    %p49 = scmp.ne.s32.totalorder %s32, %s48
    %p50 = scmp.eq.s32.totalorder %s24, 0
    %p51 = por %p49, %p50
    %s52 = ssub.s32 %s18, %s25
    %p53 = scmp.eq.s32.totalorder %s52, 0
    %s55 = sadd.s32 %s54, 1
    %s56 = scalar_select %p53, %s54, %s55
    %p59 = pneg %p53
    %p60 = scmp.eq.s32.totalorder %s18, 7
    %p61 = por %p59, %p60
    %p62 = scmp.ne.s32.totalorder %s54, %s57
    %p63 = scmp.eq.s32.totalorder %s18, 0
    %p64 = por %p62, %p63
    %p65 = scmp.ne.s32.totalorder %s54, %s57
    %p66 = scmp.eq.s32.totalorder %s23, 7
    %p67 = por %p65, %p66
    %p68 = scmp.ne.s32.totalorder %s57, %s58
    %p69 = scmp.eq.s32.totalorder %s23, 0
    %p70 = por %p68, %p69
    %p71 = scmp.ne.s32.totalorder %s57, %s58
    %p72 = scmp.eq.s32.totalorder %s24, 7
    %p73 = por %p71, %p72
    %p75 = scmp.ne.s32.totalorder %s58, %s74
    %p76 = scmp.eq.s32.totalorder %s24, 0
    %p77 = por %p75, %p76
    %s78 = ssub.s32 %s18, %s25
    %p79 = scmp.eq.s32.totalorder %s78, 0
    %s81 = sadd.s32 %s80, 1
    %s82 = scalar_select %p79, %s80, %s81
    %p85 = pneg %p79
    %p86 = scmp.eq.s32.totalorder %s18, 7
    %p87 = por %p85, %p86
    %p88 = scmp.ne.s32.totalorder %s80, %s83
    %p89 = scmp.eq.s32.totalorder %s18, 0
    %p90 = por %p88, %p89
    %p91 = scmp.ne.s32.totalorder %s80, %s83
    %p92 = scmp.eq.s32.totalorder %s23, 7
    %p93 = por %p91, %p92
    %p94 = scmp.ne.s32.totalorder %s83, %s84
    %p95 = scmp.eq.s32.totalorder %s23, 0
    %p96 = por %p94, %p95
    %p97 = scmp.ne.s32.totalorder %s83, %s84
    %p98 = scmp.eq.s32.totalorder %s24, 7
    %p99 = por %p97, %p98
    %p101 = scmp.ne.s32.totalorder %s84, %s100
    %p102 = scmp.eq.s32.totalorder %s24, 0
    %p103 = por %p101, %p102
    %s104 = ssub.s32 %s18, %s25
    %p105 = scmp.eq.s32.totalorder %s104, 0
    %s107 = sadd.s32 %s106, 1
    %s108 = scalar_select %p105, %s106, %s107
    %p111 = pneg %p105
    %p112 = scmp.eq.s32.totalorder %s18, 7
    %p113 = por %p111, %p112
    %p114 = scmp.ne.s32.totalorder %s106, %s109
    %p115 = scmp.eq.s32.totalorder %s18, 0
    %p116 = por %p114, %p115
    %p117 = scmp.ne.s32.totalorder %s106, %s109
    %p118 = scmp.eq.s32.totalorder %s23, 7
    %p119 = por %p117, %p118
    %p120 = scmp.ne.s32.totalorder %s109, %s110
    %p121 = scmp.eq.s32.totalorder %s23, 0
    %p122 = por %p120, %p121
    %p123 = scmp.ne.s32.totalorder %s109, %s110
    %p124 = scmp.eq.s32.totalorder %s24, 7
    %p125 = por %p123, %p124
    %p127 = scmp.ne.s32.totalorder %s110, %s126
    %p128 = scmp.eq.s32.totalorder %s24, 0
    %p129 = por %p127, %p128
    %s131 = sadd.s32 %s130, 1
    %p134 = scmp.eq.s32.totalorder %s18, 7
    %p135 = scmp.ne.s32.totalorder %s130, %s132
    %p136 = scmp.eq.s32.totalorder %s18, 0
    %p137 = por %p135, %p136
    %p138 = scmp.ne.s32.totalorder %s130, %s132
    %p139 = scmp.eq.s32.totalorder %s23, 7
    %p140 = por %p138, %p139
    %p141 = scmp.ne.s32.totalorder %s132, %s133
    %p142 = scmp.eq.s32.totalorder %s23, 0
    %p143 = por %p141, %p142
    %p144 = scmp.ne.s32.totalorder %s132, %s133
    %p145 = scmp.eq.s32.totalorder %s24, 7
    %p146 = por %p144, %p145
    %p148 = scmp.ne.s32.totalorder %s133, %s147
    %p149 = scmp.eq.s32.totalorder %s24, 0
    %p150 = por %p148, %p149
    %s152 = sadd.s32 %s151, 1
    %p155 = scmp.eq.s32.totalorder %s18, 7
    %p156 = scmp.ne.s32.totalorder %s151, %s153
    %p157 = scmp.eq.s32.totalorder %s18, 0
    %p158 = por %p156, %p157
    %p159 = scmp.ne.s32.totalorder %s151, %s153
    %p160 = scmp.eq.s32.totalorder %s23, 7
    %p161 = por %p159, %p160
    %p162 = scmp.ne.s32.totalorder %s153, %s154
    %p163 = scmp.eq.s32.totalorder %s23, 0
    %p164 = por %p162, %p163
    %p165 = scmp.ne.s32.totalorder %s153, %s154
    %p166 = scmp.eq.s32.totalorder %s24, 7
    %p167 = por %p165, %p166
    %p169 = scmp.ne.s32.totalorder %s154, %s168
    %p170 = scmp.eq.s32.totalorder %s24, 0
    %p171 = por %p169, %p170
    %s173 = sadd.s32 %s172, 1
    %p176 = scmp.eq.s32.totalorder %s18, 7
    %p177 = scmp.ne.s32.totalorder %s172, %s174
    %p178 = scmp.eq.s32.totalorder %s18, 0
    %p179 = por %p177, %p178
    %p180 = scmp.ne.s32.totalorder %s172, %s174
    %p181 = scmp.eq.s32.totalorder %s23, 7
    %p182 = por %p180, %p181
    %p183 = scmp.ne.s32.totalorder %s174, %s175
    %p184 = scmp.eq.s32.totalorder %s23, 0
    %p185 = por %p183, %p184
    %p186 = scmp.ne.s32.totalorder %s174, %s175
    %p187 = scmp.eq.s32.totalorder %s24, 7
    %p188 = por %p186, %p187
    %p190 = scmp.ne.s32.totalorder %s175, %s189
    %p191 = scmp.eq.s32.totalorder %s24, 0
    %p192 = por %p190, %p191
    %s194 = sadd.s32 %s193, 1
    %p197 = scmp.eq.s32.totalorder %s18, 7
    %p198 = scmp.ne.s32.totalorder %s193, %s195
    %p199 = scmp.eq.s32.totalorder %s18, 0
    %p200 = por %p198, %p199
    %p201 = scmp.ne.s32.totalorder %s193, %s195
    %p202 = scmp.eq.s32.totalorder %s23, 7
    %p203 = por %p201, %p202
    %p204 = scmp.ne.s32.totalorder %s195, %s196
    %p205 = scmp.eq.s32.totalorder %s23, 0
    %p206 = por %p204, %p205
    %p207 = scmp.ne.s32.totalorder %s195, %s196
    %p208 = scmp.eq.s32.totalorder %s24, 7
    %p209 = por %p207, %p208
    %p211 = scmp.ne.s32.totalorder %s196, %s210
    %p212 = scmp.eq.s32.totalorder %s24, 0
    %p213 = por %p211, %p212
    %s215 = sadd.s32 %s214, 1
    %p218 = scmp.eq.s32.totalorder %s18, 7
    %p219 = scmp.ne.s32.totalorder %s214, %s216
    %p220 = scmp.eq.s32.totalorder %s18, 0
    %p221 = por %p219, %p220
    %p222 = scmp.ne.s32.totalorder %s214, %s216
    %p223 = scmp.eq.s32.totalorder %s23, 7
    %p224 = por %p222, %p223
    %p225 = scmp.ne.s32.totalorder %s216, %s217
    %p226 = scmp.eq.s32.totalorder %s23, 0
    %p227 = por %p225, %p226
    %p228 = scmp.ne.s32.totalorder %s216, %s217
    %p229 = scmp.eq.s32.totalorder %s24, 7
    %p230 = por %p228, %p229
    %p232 = scmp.ne.s32.totalorder %s217, %s231
    %p233 = scmp.eq.s32.totalorder %s24, 0
    %p234 = por %p232, %p233
    %s236 = sadd.s32 %s235, 1
    %p239 = scmp.eq.s32.totalorder %s18, 7
    %p240 = scmp.ne.s32.totalorder %s235, %s237
    %p241 = scmp.eq.s32.totalorder %s18, 0
    %p242 = por %p240, %p241
    %p243 = scmp.ne.s32.totalorder %s235, %s237
    %p244 = scmp.eq.s32.totalorder %s23, 7
    %p245 = por %p243, %p244
    %p246 = scmp.ne.s32.totalorder %s237, %s238
    %p247 = scmp.eq.s32.totalorder %s23, 0
    %p248 = por %p246, %p247
    %p249 = scmp.ne.s32.totalorder %s237, %s238
    %p250 = scmp.eq.s32.totalorder %s24, 7
    %p251 = por %p249, %p250
    %p253 = scmp.ne.s32.totalorder %s238, %s252
    %p254 = scmp.eq.s32.totalorder %s24, 0
    %p255 = por %p253, %p254
    %s257 = sadd.s32 %s256, 1
    %p260 = scmp.eq.s32.totalorder %s18, 7
    %p261 = scmp.ne.s32.totalorder %s256, %s258
    %p262 = scmp.eq.s32.totalorder %s18, 0
    %p263 = por %p261, %p262
    %p264 = scmp.ne.s32.totalorder %s256, %s258
    %p265 = scmp.eq.s32.totalorder %s23, 7
    %p266 = por %p264, %p265
    %p267 = scmp.ne.s32.totalorder %s258, %s259
    %p268 = scmp.eq.s32.totalorder %s23, 0
    %p269 = por %p267, %p268
    %p270 = scmp.ne.s32.totalorder %s258, %s259
    %p271 = scmp.eq.s32.totalorder %s24, 7
    %p272 = por %p270, %p271
    %p274 = scmp.ne.s32.totalorder %s259, %s273
    %p275 = scmp.eq.s32.totalorder %s24, 0
    %p276 = por %p274, %p275
    %s278 = sadd.s32 %s277, 1
    %p281 = scmp.eq.s32.totalorder %s18, 7
    %p282 = scmp.ne.s32.totalorder %s277, %s279
    %p283 = scmp.eq.s32.totalorder %s18, 0
    %p284 = por %p282, %p283
    %p285 = scmp.ne.s32.totalorder %s277, %s279
    %p286 = scmp.eq.s32.totalorder %s23, 7
    %p287 = por %p285, %p286
    %p288 = scmp.ne.s32.totalorder %s279, %s280
    %p289 = scmp.eq.s32.totalorder %s23, 0
    %p290 = por %p288, %p289
    %p291 = scmp.ne.s32.totalorder %s279, %s280
    %p292 = scmp.eq.s32.totalorder %s24, 7
    %p293 = por %p291, %p292
    %p295 = scmp.ne.s32.totalorder %s280, %s294
    %p296 = scmp.eq.s32.totalorder %s24, 0
    %p297 = por %p295, %p296
    %s298 = ssub.s32 %s18, %s25
    %p299 = scmp.eq.s32.totalorder %s298, 0
    %s301 = sadd.s32 %s300, 1
    %s302 = scalar_select %p299, %s300, %s301
    %p305 = pneg %p299
    %p306 = scmp.eq.s32.totalorder %s18, 7
    %p307 = por %p305, %p306
    %p308 = scmp.ne.s32.totalorder %s300, %s303
    %p309 = scmp.eq.s32.totalorder %s18, 0
    %p310 = por %p308, %p309
    %p311 = scmp.ne.s32.totalorder %s300, %s303
    %p312 = scmp.eq.s32.totalorder %s23, 7
    %p313 = por %p311, %p312
    %p314 = scmp.ne.s32.totalorder %s303, %s304
    %p315 = scmp.eq.s32.totalorder %s23, 0
    %p316 = por %p314, %p315
    %p317 = scmp.ne.s32.totalorder %s303, %s304
    %p318 = scmp.eq.s32.totalorder %s24, 7
    %p319 = por %p317, %p318
    %p321 = scmp.ne.s32.totalorder %s304, %s320
    %p322 = scmp.eq.s32.totalorder %s24, 0
    %p323 = por %p321, %p322
    %p324 = scmp.le.s32.totalorder 1, %s18
    %p325 = scmp.lt.s32.totalorder %s18, 9
    %p326 = pnand %p324, %p325
    %p327 = pneg %p326
    // Predicated region
    $region9: #{multigras_forward.9} parent=5 // pred_check
      _
    $region10: #{multigras_forward.9} parent=5 // pred_check_branch
      %329 = sbr.rel (%p326) target = $region12
    $region11: #{multigras_forward.9} parent=5 // pred_region
      %s330 = ssub.s32 %s18, 1
      // Predicated region
      $region13: #{multigras_forward.9} parent=11 // pred_check
        %p331 = pneg %p143
      $region14: #{multigras_forward.9} parent=11 // pred_check_branch
        %333 = sbr.rel (%p331) target = $region16
      $region15: #{multigras_forward.9} parent=11 // pred_region
        _
      $region16: #{multigras_forward.9} parent=11 // pred_fallthru
        _
      // Predicated region
      $region17: #{multigras_forward.9} parent=11 // pred_check
        %p334 = pneg %p164
      $region18: #{multigras_forward.9} parent=11 // pred_check_branch
        %336 = sbr.rel (%p334) target = $region20
      $region19: #{multigras_forward.9} parent=11 // pred_region
        _
      $region20: #{multigras_forward.9} parent=11 // pred_fallthru
        _
      // Predicated region
      $region21: #{multigras_forward.9} parent=11 // pred_check
        %p337 = pneg %p185
      $region22: #{multigras_forward.9} parent=11 // pred_check_branch
        %339 = sbr.rel (%p337) target = $region24
      $region23: #{multigras_forward.9} parent=11 // pred_region
        _
      $region24: #{multigras_forward.9} parent=11 // pred_fallthru
        _
      // Predicated region
      $region25: #{multigras_forward.9} parent=11 // pred_check
        %p340 = pneg %p206
      $region26: #{multigras_forward.9} parent=11 // pred_check_branch
        %342 = sbr.rel (%p340) target = $region28
      $region27: #{multigras_forward.9} parent=11 // pred_region
        _
      $region28: #{multigras_forward.9} parent=11 // pred_fallthru
        _
      // Predicated region
      $region29: #{multigras_forward.9} parent=11 // pred_check
        %p343 = pneg %p227
      $region30: #{multigras_forward.9} parent=11 // pred_check_branch
        %345 = sbr.rel (%p343) target = $region32
      $region31: #{multigras_forward.9} parent=11 // pred_region
        _
      $region32: #{multigras_forward.9} parent=11 // pred_fallthru
        _
      // Predicated region
      $region33: #{multigras_forward.9} parent=11 // pred_check
        %p346 = pneg %p248
      $region34: #{multigras_forward.9} parent=11 // pred_check_branch
        %348 = sbr.rel (%p346) target = $region36
      $region35: #{multigras_forward.9} parent=11 // pred_region
        _
      $region36: #{multigras_forward.9} parent=11 // pred_fallthru
        _
      // Predicated region
      $region37: #{multigras_forward.9} parent=11 // pred_check
        %p349 = pneg %p269
      $region38: #{multigras_forward.9} parent=11 // pred_check_branch
        %351 = sbr.rel (%p349) target = $region40
      $region39: #{multigras_forward.9} parent=11 // pred_region
        _
      $region40: #{multigras_forward.9} parent=11 // pred_fallthru
        _
      // Predicated region
      $region41: #{multigras_forward.9} parent=11 // pred_check
        %p352 = pneg %p290
      $region42: #{multigras_forward.9} parent=11 // pred_check_branch
        %354 = sbr.rel (%p352) target = $region44
      $region43: #{multigras_forward.9} parent=11 // pred_region
        _
      $region44: #{multigras_forward.9} parent=11 // pred_fallthru
        _
    $region12: #{multigras_forward.9} parent=5 // pred_fallthru
      _
    %p355 = scmp.lt.s32.totalorder %s18, 8
    // Predicated region
    $region45: #{multigras_forward.9} parent=5 // pred_check
      %p356 = pneg %p355
    $region46: #{multigras_forward.9} parent=5 // pred_check_branch
      %358 = sbr.rel (%p356) target = $region48
    $region47: #{multigras_forward.9} parent=5 // pred_region
      // Predicated region
      $region49: #{multigras_forward.9} parent=47 // pred_check
        %p359 = pneg %p38
      $region50: #{multigras_forward.9} parent=47 // pred_check_branch
        %361 = sbr.rel (%p359) target = $region52
      $region51: #{multigras_forward.9} parent=47 // pred_region
        %p362 = scmp.lt.s32.totalorder %s18, 7
        %s363 = scalar_select %p362, %s18, 7
        %s364 = smul.addr %s363, 8
        %s365 = scalar_lea.vmem %s0, %s364
      $region52: #{multigras_forward.9} parent=47 // pred_fallthru
        _
      // Predicated region
      $region53: #{multigras_forward.9} parent=47 // pred_check
        %p366 = pneg %p64
      $region54: #{multigras_forward.9} parent=47 // pred_check_branch
        %368 = sbr.rel (%p366) target = $region56
      $region55: #{multigras_forward.9} parent=47 // pred_region
        %p369 = scmp.lt.s32.totalorder %s18, 7
        %s370 = scalar_select %p369, %s18, 7
        %s371 = smul.addr %s370, 8
        %s372 = scalar_lea.vmem %s1, %s371
      $region56: #{multigras_forward.9} parent=47 // pred_fallthru
        _
      // Predicated region
      $region57: #{multigras_forward.9} parent=47 // pred_check
        %p373 = pneg %p90
      $region58: #{multigras_forward.9} parent=47 // pred_check_branch
        %375 = sbr.rel (%p373) target = $region60
      $region59: #{multigras_forward.9} parent=47 // pred_region
        %p376 = scmp.lt.s32.totalorder %s18, 7
        %s377 = scalar_select %p376, %s18, 7
        %s378 = scalar_lea.vmem %s2, %s377
      $region60: #{multigras_forward.9} parent=47 // pred_fallthru
        _
      // Predicated region
      $region61: #{multigras_forward.9} parent=47 // pred_check
        %p379 = pneg %p116
      $region62: #{multigras_forward.9} parent=47 // pred_check_branch
        %381 = sbr.rel (%p379) target = $region64
      $region63: #{multigras_forward.9} parent=47 // pred_region
        %p382 = scmp.lt.s32.totalorder %s18, 7
        %s383 = scalar_select %p382, %s18, 7
        %s384 = smul.addr %s383, 2
        %s385 = smul.addr %s384, 8
        %s386 = scalar_lea.vmem %s3, %s385
      $region64: #{multigras_forward.9} parent=47 // pred_fallthru
        _
    $region48: #{multigras_forward.9} parent=5 // pred_fallthru
      _
    %p387 = scmp.le.s32.totalorder 1, %s18
    %p388 = scmp.lt.s32.totalorder %s18, 9
    %p389 = pnand %p387, %p388
    %p390 = pneg %p389
    // Predicated region
    $region65: #{multigras_forward.9} parent=5 // pred_check
      _
    $region66: #{multigras_forward.9} parent=5 // pred_check_branch
      %392 = sbr.rel (%p389) target = $region68
    $region67: #{multigras_forward.9} parent=5 // pred_region
      %s393 = ssub.s32 %s18, 1
      %p394 = scmp.lt.s32.totalorder %s23, 7
      %s395 = scalar_select %p394, %s23, 7
      %s396 = smul.addr %s395, 8
      %s397 = scalar_lea.vmem %s0, %s396
      %p398 = pneg %p44
      %p399 = pneg %p41
      %p400 = scmp.lt.s32.totalorder %s23, 7
      %s401 = scalar_select %p400, %s23, 7
      %s402 = smul.addr %s401, 8
      %s403 = scalar_lea.vmem %s1, %s402
      %p404 = pneg %p70
      %p405 = pneg %p67
      %p406 = scmp.lt.s32.totalorder %s23, 7
      %s407 = scalar_select %p406, %s23, 7
      %s408 = scalar_lea.vmem %s2, %s407
      %p409 = pneg %p96
      %p410 = pneg %p93
      %p411 = scmp.lt.s32.totalorder %s23, 7
      %s412 = scalar_select %p411, %s23, 7
      %s413 = smul.addr %s412, 2
      %s414 = smul.addr %s413, 8
      %s415 = scalar_lea.vmem %s3, %s414
      %p416 = pneg %p122
      %p417 = pneg %p119
      %p418 = pneg %p143
      %p419 = pneg %p140
      %p420 = pneg %p164
      %p421 = pneg %p161
      %p422 = pneg %p185
      %p423 = pneg %p182
      %p424 = pneg %p206
      %p425 = pneg %p203
      %p426 = pneg %p227
      %p427 = pneg %p224
      %p428 = pneg %p248
      %p429 = pneg %p245
      %p430 = pneg %p269
      %p431 = pneg %p266
      %p432 = pneg %p290
      %p433 = pneg %p287
      %p434 = pneg %p316
      %p435 = pneg %p313
      %p436 = scmp.lt.s32.totalorder %s23, 7
      %s437 = scalar_select %p436, %s23, 7
      %s438 = scalar_lea.vmem %s12, %s437
      %p439 = scmp.lt.s32.totalorder %s23, 7
      %s440 = scalar_select %p439, %s23, 7
      %s441 = smul.addr %s440, 8
      %s442 = scalar_lea.vmem %s0, %s441
      %p443 = scmp.lt.s32.totalorder %s23, 7
      %s444 = scalar_select %p443, %s23, 7
      %s445 = smul.addr %s444, 8
      %s446 = scalar_lea.vmem %s1, %s445
      %p447 = scmp.lt.s32.totalorder %s23, 7
      %s448 = scalar_select %p447, %s23, 7
      %s449 = scalar_lea.vmem %s2, %s448
      %p450 = scmp.lt.s32.totalorder %s23, 7
      %s451 = scalar_select %p450, %s23, 7
      %s452 = smul.addr %s451, 2
      %s453 = smul.addr %s452, 8
      %s454 = scalar_lea.vmem %s3, %s453
      %p455 = scmp.lt.s32.totalorder %s23, 7
      %s456 = scalar_select %p455, %s23, 7
      %s457 = scalar_lea.vmem %s12, %s456
      %v458 = vld [vmem:[%s442] sm:$0xff]
      %v459 = vld [vmem:[%s446] sm:$0xff]
      %v460 = vld [vmem:[%s449] sm:$0x1]
      %v461 = vld [vmem:[%s454] sm:$0xff]
      %v462 = vld [vmem:[%s454 + $0x8] sm:$0xff]
      %v463 = vld [vmem:[%s4] sm:$0xff]
      %v464 = vld [vmem:[%s4 + $0x8] sm:$0xff]
      %v465 = vld [vmem:[%s4 + $0x10] sm:$0xff]
      %v466 = vld [vmem:[%s4 + $0x18] sm:$0xff]
      %v467 = vld [vmem:[%s5] sm:$0x1]
      %v469 = vlaneseq
      %v470 = vshrl.u32 %v469, 7
      %v471 = vsub.s32 0, %v470
      %v472 = vrot.slane %v467, %v471
      %vm474 = vcmask 261120
      %v476 = vsel %vm474, %v458, 0
      %478 = vmatprep.subr.mxu0 0.0
      %479 = vmatpush1.msra.mxu0 %v463
      %480 = vmatprep.subr.mxu0 0.0
      %481 = vmatpush1.msra.mxu0 %v464
      %482 = vmatprep.subr.mxu0 0.0
      %483 = vmatpush1.msra.mxu0 %v465
      %484 = vmatprep.subr.mxu0 0.0
      %485 = vmatpush1.msra.mxu0 %v466
      %486 = vmatprep.subr.mxu0 0.0
      %487 = vmatpush1.msra.mxu0 0.0
      %488 = vmatprep.subr.mxu0 0.0
      %489 = vmatpush1.msra.mxu0 0.0
      %490 = vmatprep.subr.mxu0 0.0
      %491 = vmatpush1.msra.mxu0 0.0
      %492 = vmatprep.subr.mxu0 0.0
      %493 = vmatpush1.msra.mxu0 0.0
      %494 = vmatprep.subr.mxu0 0.0
      %495 = vmatpush1.msra.mxu0 0.0
      %496 = vmatprep.subr.mxu0 0.0
      %497 = vmatpush1.msra.mxu0 0.0
      %498 = vmatprep.subr.mxu0 0.0
      %499 = vmatpush1.msra.mxu0 0.0
      %500 = vmatprep.subr.mxu0 0.0
      %501 = vmatpush1.msra.mxu0 0.0
      %502 = vmatprep.subr.mxu0 0.0
      %503 = vmatpush1.msra.mxu0 0.0
      %504 = vmatprep.subr.mxu0 0.0
      %505 = vmatpush1.msra.mxu0 0.0
      %506 = vmatprep.subr.mxu0 0.0
      %507 = vmatpush1.msra.mxu0 0.0
      %508 = vmatprep.subr.mxu0 0.0
      %509 = vmatpush1.msra.mxu0 0.0
      %510 = vmatprep.subr.mxu0 0.0
      %511 = vmatpush1.msra.mxu0 0.0
      %512 = vmatprep.subr.mxu0 0.0
      %513 = vmatpush1.msra.mxu0 0.0
      %514 = vmatprep.subr.mxu0 0.0
      %515 = vmatpush1.msra.mxu0 0.0
      %516 = vmatprep.subr.mxu0 0.0
      %517 = vmatpush1.msra.mxu0 0.0
      %518 = vmatprep.subr.mxu0 0.0
      %519 = vmatpush1.msra.mxu0 0.0
      %520 = vmatprep.subr.mxu0 0.0
      %521 = vmatpush1.msra.mxu0 0.0
      %522 = vmatprep.subr.mxu0 0.0
      %523 = vmatpush1.msra.mxu0 0.0
      %524 = vmatprep.subr.mxu0 0.0
      %525 = vmatpush1.msra.mxu0 0.0
      %526 = vmatprep.subr.mxu0 0.0
      %527 = vmatpush1.msra.mxu0 0.0
      %528 = vmatprep.subr.mxu0 0.0
      %529 = vmatpush1.msra.mxu0 0.0
      %530 = vmatprep.subr.mxu0 0.0
      %531 = vmatpush1.msra.mxu0 0.0
      %532 = vmatprep.subr.mxu0 0.0
      %533 = vmatpush1.msra.mxu0 0.0
      %534 = vmatprep.subr.mxu0 0.0
      %535 = vmatpush1.msra.mxu0 0.0
      %536 = vmatprep.subr.mxu0 0.0
      %537 = vmatpush1.msra.mxu0 0.0
      %538 = vmatprep.subr.mxu0 0.0
      %539 = vmatpush1.msra.mxu0 0.0
      %540 = vmatprep.subr.mxu0 0.0
      %541 = vmatpush1.msra.mxu0 0.0
      %542 = vmatprep.mubr.f32.mxu0 0.0
      %543 = vmatmul.mubr.f32.gmra.mrb[0].mxu0 %v476
      %v544 = vpop.f32.mrb[0].mxu0
      %v545 = vadd.f32 %v472, %v544
      %v546 = vpop.f32.mrb[0].mxu0
      %547 = vdwg.mxu0
      %v548 = vtanh.pop %v545
      %vm549 = vcmask 130048
      %v551 = vsel %vm549, %v548, 0
      %553 = vmatprep.subr.mxu0 0.0
      %554 = vmatpush1.xpose.msra.mxu0 %v551
      %555 = vmatprep.subr.mxu0 0.0
      %556 = vmatpush1.xpose.msra.mxu0 0.0
      %557 = vmatprep.subr.mxu0 0.0
      %558 = vmatpush1.xpose.msra.mxu0 0.0
      %559 = vmatprep.subr.mxu0 0.0
      %560 = vmatpush1.xpose.msra.mxu0 0.0
      %561 = vmatprep.subr.mxu0 0.0
      %562 = vmatpush1.xpose.msra.mxu0 0.0
      %563 = vmatprep.subr.mxu0 0.0
      %564 = vmatpush1.xpose.msra.mxu0 0.0
      %565 = vmatprep.subr.mxu0 0.0
      %566 = vmatpush1.xpose.msra.mxu0 0.0
      %567 = vmatprep.subr.mxu0 0.0
      %568 = vmatpush1.xpose.msra.mxu0 0.0
      %569 = vmatprep.subr.mxu0 0.0
      %570 = vmatpush1.xpose.msra.mxu0 0.0
      %571 = vmatprep.subr.mxu0 0.0
      %572 = vmatpush1.xpose.msra.mxu0 0.0
      %573 = vmatprep.subr.mxu0 0.0
      %574 = vmatpush1.xpose.msra.mxu0 0.0
      %575 = vmatprep.subr.mxu0 0.0
      %576 = vmatpush1.xpose.msra.mxu0 0.0
      %577 = vmatprep.subr.mxu0 0.0
      %578 = vmatpush1.xpose.msra.mxu0 0.0
      %579 = vmatprep.subr.mxu0 0.0
      %580 = vmatpush1.xpose.msra.mxu0 0.0
      %581 = vmatprep.subr.mxu0 0.0
      %582 = vmatpush1.xpose.msra.mxu0 0.0
      %583 = vmatprep.subr.mxu0 0.0
      %584 = vmatpush1.xpose.msra.mxu0 0.0
      %585 = vmatprep.subr.mxu0 0.0
      %586 = vmatpush1.xpose.msra.mxu0 0.0
      %587 = vmatprep.subr.mxu0 0.0
      %588 = vmatpush1.xpose.msra.mxu0 0.0
      %589 = vmatprep.subr.mxu0 0.0
      %590 = vmatpush1.xpose.msra.mxu0 0.0
      %591 = vmatprep.subr.mxu0 0.0
      %592 = vmatpush1.xpose.msra.mxu0 0.0
      %593 = vmatprep.subr.mxu0 0.0
      %594 = vmatpush1.xpose.msra.mxu0 0.0
      %595 = vmatprep.subr.mxu0 0.0
      %596 = vmatpush1.xpose.msra.mxu0 0.0
      %597 = vmatprep.subr.mxu0 0.0
      %598 = vmatpush1.xpose.msra.mxu0 0.0
      %599 = vmatprep.subr.mxu0 0.0
      %600 = vmatpush1.xpose.msra.mxu0 0.0
      %601 = vmatprep.subr.mxu0 0.0
      %602 = vmatpush1.xpose.msra.mxu0 0.0
      %603 = vmatprep.subr.mxu0 0.0
      %604 = vmatpush1.xpose.msra.mxu0 0.0
      %605 = vmatprep.subr.mxu0 0.0
      %606 = vmatpush1.xpose.msra.mxu0 0.0
      %607 = vmatprep.subr.mxu0 0.0
      %608 = vmatpush1.xpose.msra.mxu0 0.0
      %609 = vmatprep.subr.mxu0 0.0
      %610 = vmatpush1.xpose.msra.mxu0 0.0
      %611 = vmatprep.subr.mxu0 0.0
      %612 = vmatpush1.xpose.msra.mxu0 0.0
      %613 = vmatprep.subr.mxu0 0.0
      %614 = vmatpush1.xpose.msra.mxu0 0.0
      %615 = vmatprep.subr.mxu0 0.0
      %616 = vmatpush1.xpose.msra.mxu0 0.0
      %617 = vmatprep.mubr.f32.mxu0 0.0
      %618 = vmatmul.mubr.f32.gmra.mrb[0].mxu0 %v551
      %v619 = vpop.f32.mrb[0].mxu0
      %v620 = vadd.f32 0.0, %v619
      %v621 = vpop.f32.mrb[0].mxu0
      %622 = vdwg.mxu0
      %v623 = vand.u32 2147483647, %v620
      %625 = vset.pattern.permute.xlu0 0
      %626 = vperm.xlu0 %625, %v459
      %v627 = vpop.permute.xlu0 %626
      %v629 = vmul.f32 %v623, %v627
      %v631 = vlaneseq
      %v632 = vshrl.u32 %v631, 7
      %v633 = vsub.s32 0, %v632
      %v634 = vrot.slane %v460, %v633
      %v636 = vmul.f32 %v629, %v634
      %v637 = vlaneseq
      %v638 = vshrl.u32 %v637, 7
      %v639 = vlaneseq
      %v640 = vand.u32 %v639, 127
      %vm641 = vcmp.eq.s32.totalorder %v638, %v640
      %v642 = vsel %vm641, 1.0, 0.0
      %v643 = vadd.f32 %v636, %v642
      %vm644 = vcmask 64512
      %v645 = vsel %vm644, %v643, 0.0
      %646 = vadd.xlane.f32.xlu0 %v645
      %v647 = vpop.xlane.xlu0 %646
      %v648 = vrsqrt.pop %v647
      %v649 = vrot.slane %v645, 4
      %v650 = vadd.f32 %v645, %v649
      %v651 = vrot.slane %v650, 2
      %v652 = vadd.f32 %v650, %v651
      %v653 = vrot.slane %v652, 1
      %v654 = vadd.f32 %v652, %v653
      %v655 = vrsqrt.pop %v654
      %v656 = vmul.f32 %v643, %v648
      %v657 = vmul.f32 %v656, %v655
      %v658 = vadd.f32 %v461, %v462
      %v659 = vadd.f32 %v658, %v657
      %v660 = vmul.f32 %v659, 0.33333334
      %v662 = vsel %vm644, %v660, 0
      %664 = vmatprep.subr.mxu0 0.0
      %665 = vmatpush1.msra.mxu0 %v548
      %666 = vmatprep.subr.mxu0 0.0
      %667 = vmatpush1.msra.mxu0 0.0
      %668 = vmatprep.subr.mxu0 0.0
      %669 = vmatpush1.msra.mxu0 0.0
      %670 = vmatprep.subr.mxu0 0.0
      %671 = vmatpush1.msra.mxu0 0.0
      %672 = vmatprep.subr.mxu0 0.0
      %673 = vmatpush1.msra.mxu0 0.0
      %674 = vmatprep.subr.mxu0 0.0
      %675 = vmatpush1.msra.mxu0 0.0
      %676 = vmatprep.subr.mxu0 0.0
      %677 = vmatpush1.msra.mxu0 0.0
      %678 = vmatprep.subr.mxu0 0.0
      %679 = vmatpush1.msra.mxu0 0.0
      %680 = vmatprep.subr.mxu0 0.0
      %681 = vmatpush1.msra.mxu0 0.0
      %682 = vmatprep.subr.mxu0 0.0
      %683 = vmatpush1.msra.mxu0 0.0
      %684 = vmatprep.subr.mxu0 0.0
      %685 = vmatpush1.msra.mxu0 0.0
      %686 = vmatprep.subr.mxu0 0.0
      %687 = vmatpush1.msra.mxu0 0.0
      %688 = vmatprep.subr.mxu0 0.0
      %689 = vmatpush1.msra.mxu0 0.0
      %690 = vmatprep.subr.mxu0 0.0
      %691 = vmatpush1.msra.mxu0 0.0
      %692 = vmatprep.subr.mxu0 0.0
      %693 = vmatpush1.msra.mxu0 0.0
      %694 = vmatprep.subr.mxu0 0.0
      %695 = vmatpush1.msra.mxu0 0.0
      %696 = vmatprep.subr.mxu0 0.0
      %697 = vmatpush1.msra.mxu0 0.0
      %698 = vmatprep.subr.mxu0 0.0
      %699 = vmatpush1.msra.mxu0 0.0
      %700 = vmatprep.subr.mxu0 0.0
      %701 = vmatpush1.msra.mxu0 0.0
      %702 = vmatprep.subr.mxu0 0.0
      %703 = vmatpush1.msra.mxu0 0.0
      %704 = vmatprep.subr.mxu0 0.0
      %705 = vmatpush1.msra.mxu0 0.0
      %706 = vmatprep.subr.mxu0 0.0
      %707 = vmatpush1.msra.mxu0 0.0
      %708 = vmatprep.subr.mxu0 0.0
      %709 = vmatpush1.msra.mxu0 0.0
      %710 = vmatprep.subr.mxu0 0.0
      %711 = vmatpush1.msra.mxu0 0.0
      %712 = vmatprep.subr.mxu0 0.0
      %713 = vmatpush1.msra.mxu0 0.0
      %714 = vmatprep.subr.mxu0 0.0
      %715 = vmatpush1.msra.mxu0 0.0
      %716 = vmatprep.subr.mxu0 0.0
      %717 = vmatpush1.msra.mxu0 0.0
      %718 = vmatprep.subr.mxu0 0.0
      %719 = vmatpush1.msra.mxu0 0.0
      %720 = vmatprep.subr.mxu0 0.0
      %721 = vmatpush1.msra.mxu0 0.0
      %722 = vmatprep.subr.mxu0 0.0
      %723 = vmatpush1.msra.mxu0 0.0
      %724 = vmatprep.subr.mxu0 0.0
      %725 = vmatpush1.msra.mxu0 0.0
      %726 = vmatprep.subr.mxu0 0.0
      %727 = vmatpush1.msra.mxu0 0.0
      %728 = vmatprep.mubr.f32.mxu0 0.0
      %729 = vmatmul.mubr.f32.gmra.mrb[0].mxu0 %v662
      %v730 = vpop.f32.mrb[0].mxu0
      %v731 = vadd.f32 0.0, %v730
      %v732 = vpop.f32.mrb[0].mxu0
      %733 = vdwg.mxu0
      %v734 = vld [vmem:[%s6] sm:$0xff]
      %v735 = vld [vmem:[%s6 + $0x8] sm:$0xff]
      %v736 = vld [vmem:[%s7] sm:$0x1]
      %v738 = vlaneseq
      %v739 = vshrl.u32 %v738, 7
      %v740 = vsub.s32 0, %v739
      %v741 = vrot.slane %v736, %v740
      %v744 = vsel %vm549, %v731, 0
      %746 = vmatprep.subr.mxu0 0.0
      %747 = vmatpush1.msra.mxu0 %v734
      %748 = vmatprep.subr.mxu0 0.0
      %749 = vmatpush1.msra.mxu0 %v735
      %750 = vmatprep.subr.mxu0 0.0
      %751 = vmatpush1.msra.mxu0 0.0
      %752 = vmatprep.subr.mxu0 0.0
      %753 = vmatpush1.msra.mxu0 0.0
      %754 = vmatprep.subr.mxu0 0.0
      %755 = vmatpush1.msra.mxu0 0.0
      %756 = vmatprep.subr.mxu0 0.0
      %757 = vmatpush1.msra.mxu0 0.0
      %758 = vmatprep.subr.mxu0 0.0
      %759 = vmatpush1.msra.mxu0 0.0
      %760 = vmatprep.subr.mxu0 0.0
      %761 = vmatpush1.msra.mxu0 0.0
      %762 = vmatprep.subr.mxu0 0.0
      %763 = vmatpush1.msra.mxu0 0.0
      %764 = vmatprep.subr.mxu0 0.0
      %765 = vmatpush1.msra.mxu0 0.0
      %766 = vmatprep.subr.mxu0 0.0
      %767 = vmatpush1.msra.mxu0 0.0
      %768 = vmatprep.subr.mxu0 0.0
      %769 = vmatpush1.msra.mxu0 0.0
      %770 = vmatprep.subr.mxu0 0.0
      %771 = vmatpush1.msra.mxu0 0.0
      %772 = vmatprep.subr.mxu0 0.0
      %773 = vmatpush1.msra.mxu0 0.0
      %774 = vmatprep.subr.mxu0 0.0
      %775 = vmatpush1.msra.mxu0 0.0
      %776 = vmatprep.subr.mxu0 0.0
      %777 = vmatpush1.msra.mxu0 0.0
      %778 = vmatprep.subr.mxu0 0.0
      %779 = vmatpush1.msra.mxu0 0.0
      %780 = vmatprep.subr.mxu0 0.0
      %781 = vmatpush1.msra.mxu0 0.0
      %782 = vmatprep.subr.mxu0 0.0
      %783 = vmatpush1.msra.mxu0 0.0
      %784 = vmatprep.subr.mxu0 0.0
      %785 = vmatpush1.msra.mxu0 0.0
      %786 = vmatprep.subr.mxu0 0.0
      %787 = vmatpush1.msra.mxu0 0.0
      %788 = vmatprep.subr.mxu0 0.0
      %789 = vmatpush1.msra.mxu0 0.0
      %790 = vmatprep.subr.mxu0 0.0
      %791 = vmatpush1.msra.mxu0 0.0
      %792 = vmatprep.subr.mxu0 0.0
      %793 = vmatpush1.msra.mxu0 0.0
      %794 = vmatprep.subr.mxu0 0.0
      %795 = vmatpush1.msra.mxu0 0.0
      %796 = vmatprep.subr.mxu0 0.0
      %797 = vmatpush1.msra.mxu0 0.0
      %798 = vmatprep.subr.mxu0 0.0
      %799 = vmatpush1.msra.mxu0 0.0
      %800 = vmatprep.subr.mxu0 0.0
      %801 = vmatpush1.msra.mxu0 0.0
      %802 = vmatprep.subr.mxu0 0.0
      %803 = vmatpush1.msra.mxu0 0.0
      %804 = vmatprep.subr.mxu0 0.0
      %805 = vmatpush1.msra.mxu0 0.0
      %806 = vmatprep.subr.mxu0 0.0
      %807 = vmatpush1.msra.mxu0 0.0
      %808 = vmatprep.subr.mxu0 0.0
      %809 = vmatpush1.msra.mxu0 0.0
      %810 = vmatprep.mubr.f32.mxu0 0.0
      %811 = vmatmul.mubr.f32.gmra.mrb[0].mxu0 %v744
      %v812 = vpop.f32.mrb[0].mxu0
      %v813 = vadd.f32 %v741, %v812
      %v814 = vpop.f32.mrb[0].mxu0
      %815 = vdwg.mxu0
      %v816 = vmax.f32 %v813, 0.0
      %817 = vmatprep.subr.mxu0 0.0
      %818 = vmatpush1.msra.mxu0 %v816
      %819 = vmatprep.subr.mxu0 0.0
      %820 = vmatpush1.msra.mxu0 0.0
      %821 = vmatprep.subr.mxu0 0.0
      %822 = vmatpush1.msra.mxu0 0.0
      %823 = vmatprep.subr.mxu0 0.0
      %824 = vmatpush1.msra.mxu0 0.0
      %825 = vmatprep.subr.mxu0 0.0
      %826 = vmatpush1.msra.mxu0 0.0
      %827 = vmatprep.subr.mxu0 0.0
      %828 = vmatpush1.msra.mxu0 0.0
      %829 = vmatprep.subr.mxu0 0.0
      %830 = vmatpush1.msra.mxu0 0.0
      %831 = vmatprep.subr.mxu0 0.0
      %832 = vmatpush1.msra.mxu0 0.0
      %833 = vmatprep.subr.mxu0 0.0
      %834 = vmatpush1.msra.mxu0 0.0
      %835 = vmatprep.subr.mxu0 0.0
      %836 = vmatpush1.msra.mxu0 0.0
      %837 = vmatprep.subr.mxu0 0.0
      %838 = vmatpush1.msra.mxu0 0.0
      %839 = vmatprep.subr.mxu0 0.0
      %840 = vmatpush1.msra.mxu0 0.0
      %841 = vmatprep.subr.mxu0 0.0
      %842 = vmatpush1.msra.mxu0 0.0
      %843 = vmatprep.subr.mxu0 0.0
      %844 = vmatpush1.msra.mxu0 0.0
      %845 = vmatprep.subr.mxu0 0.0
      %846 = vmatpush1.msra.mxu0 0.0
      %847 = vmatprep.subr.mxu0 0.0
      %848 = vmatpush1.msra.mxu0 0.0
      %849 = vmatprep.subr.mxu0 0.0
      %850 = vmatpush1.msra.mxu0 0.0
      %851 = vmatprep.subr.mxu0 0.0
      %852 = vmatpush1.msra.mxu0 0.0
      %853 = vmatprep.subr.mxu0 0.0
      %854 = vmatpush1.msra.mxu0 0.0
      %855 = vmatprep.subr.mxu0 0.0
      %856 = vmatpush1.msra.mxu0 0.0
      %857 = vmatprep.subr.mxu0 0.0
      %858 = vmatpush1.msra.mxu0 0.0
      %859 = vmatprep.subr.mxu0 0.0
      %860 = vmatpush1.msra.mxu0 0.0
      %861 = vmatprep.subr.mxu0 0.0
      %862 = vmatpush1.msra.mxu0 0.0
      %863 = vmatprep.subr.mxu0 0.0
      %864 = vmatpush1.msra.mxu0 0.0
      %865 = vmatprep.subr.mxu0 0.0
      %866 = vmatpush1.msra.mxu0 0.0
      %867 = vmatprep.subr.mxu0 0.0
      %868 = vmatpush1.msra.mxu0 0.0
      %869 = vmatprep.subr.mxu0 0.0
      %870 = vmatpush1.msra.mxu0 0.0
      %871 = vmatprep.subr.mxu0 0.0
      %872 = vmatpush1.msra.mxu0 0.0
      %873 = vmatprep.subr.mxu0 0.0
      %874 = vmatpush1.msra.mxu0 0.0
      %875 = vmatprep.subr.mxu0 0.0
      %876 = vmatpush1.msra.mxu0 0.0
      %877 = vmatprep.subr.mxu0 0.0
      %878 = vmatpush1.msra.mxu0 0.0
      %879 = vmatprep.subr.mxu0 0.0
      %880 = vmatpush1.msra.mxu0 0.0
      %881 = vmatprep.mubr.f32.mxu0 0.0
      %882 = vmatmul.mubr.f32.gmra.mrb[0].mxu0 %v662
      %v883 = vpop.f32.mrb[0].mxu0
      %v884 = vadd.f32 0.0, %v883
      %v885 = vpop.f32.mrb[0].mxu0
      %886 = vdwg.mxu0
      %v887 = vld [vmem:[%s8] sm:$0xff]
      %v888 = vld [vmem:[%s8 + $0x8] sm:$0xff]
      %v889 = vld [vmem:[%s9] sm:$0x1]
      %v891 = vlaneseq
      %v892 = vshrl.u32 %v891, 7
      %v893 = vsub.s32 0, %v892
      %v894 = vrot.slane %v889, %v893
      %v897 = vsel %vm549, %v884, 0
      %899 = vmatprep.subr.mxu0 0.0
      %900 = vmatpush1.msra.mxu0 %v887
      %901 = vmatprep.subr.mxu0 0.0
      %902 = vmatpush1.msra.mxu0 %v888
      %903 = vmatprep.subr.mxu0 0.0
      %904 = vmatpush1.msra.mxu0 0.0
      %905 = vmatprep.subr.mxu0 0.0
      %906 = vmatpush1.msra.mxu0 0.0
      %907 = vmatprep.subr.mxu0 0.0
      %908 = vmatpush1.msra.mxu0 0.0
      %909 = vmatprep.subr.mxu0 0.0
      %910 = vmatpush1.msra.mxu0 0.0
      %911 = vmatprep.subr.mxu0 0.0
      %912 = vmatpush1.msra.mxu0 0.0
      %913 = vmatprep.subr.mxu0 0.0
      %914 = vmatpush1.msra.mxu0 0.0
      %915 = vmatprep.subr.mxu0 0.0
      %916 = vmatpush1.msra.mxu0 0.0
      %917 = vmatprep.subr.mxu0 0.0
      %918 = vmatpush1.msra.mxu0 0.0
      %919 = vmatprep.subr.mxu0 0.0
      %920 = vmatpush1.msra.mxu0 0.0
      %921 = vmatprep.subr.mxu0 0.0
      %922 = vmatpush1.msra.mxu0 0.0
      %923 = vmatprep.subr.mxu0 0.0
      %924 = vmatpush1.msra.mxu0 0.0
      %925 = vmatprep.subr.mxu0 0.0
      %926 = vmatpush1.msra.mxu0 0.0
      %927 = vmatprep.subr.mxu0 0.0
      %928 = vmatpush1.msra.mxu0 0.0
      %929 = vmatprep.subr.mxu0 0.0
      %930 = vmatpush1.msra.mxu0 0.0
      %931 = vmatprep.subr.mxu0 0.0
      %932 = vmatpush1.msra.mxu0 0.0
      %933 = vmatprep.subr.mxu0 0.0
      %934 = vmatpush1.msra.mxu0 0.0
      %935 = vmatprep.subr.mxu0 0.0
      %936 = vmatpush1.msra.mxu0 0.0
      %937 = vmatprep.subr.mxu0 0.0
      %938 = vmatpush1.msra.mxu0 0.0
      %939 = vmatprep.subr.mxu0 0.0
      %940 = vmatpush1.msra.mxu0 0.0
      %941 = vmatprep.subr.mxu0 0.0
      %942 = vmatpush1.msra.mxu0 0.0
      %943 = vmatprep.subr.mxu0 0.0
      %944 = vmatpush1.msra.mxu0 0.0
      %945 = vmatprep.subr.mxu0 0.0
      %946 = vmatpush1.msra.mxu0 0.0
      %947 = vmatprep.subr.mxu0 0.0
      %948 = vmatpush1.msra.mxu0 0.0
      %949 = vmatprep.subr.mxu0 0.0
      %950 = vmatpush1.msra.mxu0 0.0
      %951 = vmatprep.subr.mxu0 0.0
      %952 = vmatpush1.msra.mxu0 0.0
      %953 = vmatprep.subr.mxu0 0.0
      %954 = vmatpush1.msra.mxu0 0.0
      %955 = vmatprep.subr.mxu0 0.0
      %956 = vmatpush1.msra.mxu0 0.0
      %957 = vmatprep.subr.mxu0 0.0
      %958 = vmatpush1.msra.mxu0 0.0
      %959 = vmatprep.subr.mxu0 0.0
      %960 = vmatpush1.msra.mxu0 0.0
      %961 = vmatprep.subr.mxu0 0.0
      %962 = vmatpush1.msra.mxu0 0.0
      %963 = vmatprep.mubr.f32.mxu0 0.0
      %964 = vmatmul.mubr.f32.gmra.mrb[0].mxu0 %v897
      %v965 = vpop.f32.mrb[0].mxu0
      %v966 = vadd.f32 %v894, %v965
      %v967 = vpop.f32.mrb[0].mxu0
      %968 = vdwg.mxu0
      %v969 = vmax.f32 %v966, 0.0
      %v970 = vsel %vm549, %v969, -inf
      %v971 = vrot.slane %v970, 4
      %v972 = vmax.f32 %v970, %v971
      %v973 = vrot.slane %v972, 2
      %v974 = vmax.f32 %v972, %v973
      %v975 = vrot.slane %v974, 1
      %v976 = vmax.f32 %v974, %v975
      %v977 = vld [vmem:[%s10] sm:$0xff]
      %v978 = vld [vmem:[%s10 + $0x8] sm:$0xff]
      %v979 = vld [vmem:[%s11] sm:$0x1]
      %v981 = vsel %vm549, %v976, 0
      %983 = vmatprep.subr.mxu0 0.0
      %984 = vmatpush1.msra.mxu0 %v977
      %985 = vmatprep.subr.mxu0 0.0
      %986 = vmatpush1.msra.mxu0 %v978
      %987 = vmatprep.subr.mxu0 0.0
      %988 = vmatpush1.msra.mxu0 0.0
      %989 = vmatprep.subr.mxu0 0.0
      %990 = vmatpush1.msra.mxu0 0.0
      %991 = vmatprep.subr.mxu0 0.0
      %992 = vmatpush1.msra.mxu0 0.0
      %993 = vmatprep.subr.mxu0 0.0
      %994 = vmatpush1.msra.mxu0 0.0
      %995 = vmatprep.subr.mxu0 0.0
      %996 = vmatpush1.msra.mxu0 0.0
      %997 = vmatprep.subr.mxu0 0.0
      %998 = vmatpush1.msra.mxu0 0.0
      %999 = vmatprep.subr.mxu0 0.0
      %1000 = vmatpush1.msra.mxu0 0.0
      %1001 = vmatprep.subr.mxu0 0.0
      %1002 = vmatpush1.msra.mxu0 0.0
      %1003 = vmatprep.subr.mxu0 0.0
      %1004 = vmatpush1.msra.mxu0 0.0
      %1005 = vmatprep.subr.mxu0 0.0
      %1006 = vmatpush1.msra.mxu0 0.0
      %1007 = vmatprep.subr.mxu0 0.0
      %1008 = vmatpush1.msra.mxu0 0.0
      %1009 = vmatprep.subr.mxu0 0.0
      %1010 = vmatpush1.msra.mxu0 0.0
      %1011 = vmatprep.subr.mxu0 0.0
      %1012 = vmatpush1.msra.mxu0 0.0
      %1013 = vmatprep.subr.mxu0 0.0
      %1014 = vmatpush1.msra.mxu0 0.0
      %1015 = vmatprep.subr.mxu0 0.0
      %1016 = vmatpush1.msra.mxu0 0.0
      %1017 = vmatprep.subr.mxu0 0.0
      %1018 = vmatpush1.msra.mxu0 0.0
      %1019 = vmatprep.subr.mxu0 0.0
      %1020 = vmatpush1.msra.mxu0 0.0
      %1021 = vmatprep.subr.mxu0 0.0
      %1022 = vmatpush1.msra.mxu0 0.0
      %1023 = vmatprep.subr.mxu0 0.0
      %1024 = vmatpush1.msra.mxu0 0.0
      %1025 = vmatprep.subr.mxu0 0.0
      %1026 = vmatpush1.msra.mxu0 0.0
      %1027 = vmatprep.subr.mxu0 0.0
      %1028 = vmatpush1.msra.mxu0 0.0
      %1029 = vmatprep.subr.mxu0 0.0
      %1030 = vmatpush1.msra.mxu0 0.0
      %1031 = vmatprep.subr.mxu0 0.0
      %1032 = vmatpush1.msra.mxu0 0.0
      %1033 = vmatprep.subr.mxu0 0.0
      %1034 = vmatpush1.msra.mxu0 0.0
      %1035 = vmatprep.subr.mxu0 0.0
      %1036 = vmatpush1.msra.mxu0 0.0
      %1037 = vmatprep.subr.mxu0 0.0
      %1038 = vmatpush1.msra.mxu0 0.0
      %1039 = vmatprep.subr.mxu0 0.0
      %1040 = vmatpush1.msra.mxu0 0.0
      %1041 = vmatprep.subr.mxu0 0.0
      %1042 = vmatpush1.msra.mxu0 0.0
      %1043 = vmatprep.subr.mxu0 0.0
      %1044 = vmatpush1.msra.mxu0 0.0
      %1045 = vmatprep.subr.mxu0 0.0
      %1046 = vmatpush1.msra.mxu0 0.0
      %1047 = vmatprep.mubr.f32.mxu0 0.0
      %1048 = vmatmul.mubr.f32.gmra.mrb[0].mxu0 %v981
      %v1049 = vpop.f32.mrb[0].mxu0
      %v1050 = vadd.f32 %v979, %v1049
      %v1051 = vpop.f32.mrb[0].mxu0
      %1052 = vdwg.mxu0
      %v1053 = vtanh.pop %v1050
      %vm1054 = vcmask 122880
      %1055 = vst.msk [vmem:[%s457] sm:$0x1] %vm1054, %v1053
      %p1056 = scmp.lt.s32.totalorder %s23, 7
      %s1057 = scalar_select %p1056, %s23, 7
      %s1058 = scalar_lea.vmem %s12, %s1057
      // Predicated region
      $region69: #{multigras_forward.9} parent=67 // pred_check
        %p1059 = pneg %p313
      $region70: #{multigras_forward.9} parent=67 // pred_check_branch
        %1061 = sbr.rel (%p1059) target = $region72
      $region71: #{multigras_forward.9} parent=67 // pred_region
        _
      $region72: #{multigras_forward.9} parent=67 // pred_fallthru
        _
    $region68: #{multigras_forward.9} parent=5 // pred_fallthru
      _
    %p1062 = scmp.le.s32.totalorder 2, %s18
    // Predicated region
    $region73: #{multigras_forward.9} parent=5 // pred_check
      %p1063 = pneg %p1062
    $region74: #{multigras_forward.9} parent=5 // pred_check_branch
      %1065 = sbr.rel (%p1063) target = $region76
    $region75: #{multigras_forward.9} parent=5 // pred_region
      %s1066 = ssub.s32 %s18, 2
      // Predicated region
      $region77: #{multigras_forward.9} parent=75 // pred_check
        %p1067 = pneg %p319
      $region78: #{multigras_forward.9} parent=75 // pred_check_branch
        %1069 = sbr.rel (%p1067) target = $region80
      $region79: #{multigras_forward.9} parent=75 // pred_region
        %p1070 = scmp.lt.s32.totalorder %s24, 7
        %s1071 = scalar_select %p1070, %s24, 7
        %s1072 = scalar_lea.vmem %s12, %s1071
      $region80: #{multigras_forward.9} parent=75 // pred_fallthru
        _
    $region76: #{multigras_forward.9} parent=5 // pred_fallthru
      _
  $region6: #{multigras_forward.9} parent=0 // loop_footer
    %s22 = sadd.s32 1, %s18
  $region7: #{multigras_forward.9} parent=0 // loop_footer_branch
    %17 = sbr.rel target = $region3
  $region8: #{multigras_forward.9} parent=0 // loop_exit
    _

// kernel: multigras_forward.11
$region0: #{multigras_forward.11}
  #allocation0 [shape = 'u32[]', space=smem, size = 0x4, offset = 0x4, fixed_abs, tag = 'smem constant byte address 0x4 - core index']
  #allocation1 [shape = 'u32[144,128]{1,0:T(1,128)}', space=vmem, size = 0x12000, scoped, tag = 'internal scratch']
  #allocation2 [shape = 'f32[4,16]{1,0:T(4,128)}', space=vmem, size = 0x800, scoped, tag = 'scratch operand']
  #allocation3 [shape = 'f32[4,16]{1,0:T(4,128)}', space=vmem, size = 0x800, scoped, tag = 'scratch operand']
  %s0 = inlined_call_operand.vmem [shape: f32[4,2,16], index: 0, kind: input, shape index: {}, may-alias: {0,1}]
  %s1 = inlined_call_operand.vmem [shape: f32[4,2,16], index: 1, kind: input, shape index: {}, may-alias: {0,1}]
  %s2 = inlined_call_operand.vmem [shape: f32[4,2,16], index: 2, kind: input, shape index: {}, may-alias: {2,3}]
  %s3 = inlined_call_operand.vmem [shape: f32[4,2,16], index: 3, kind: input, shape index: {}, may-alias: {2,3}]
  %s4 = inlined_call_operand.vmem [shape: f32[16,128], index: 4, kind: input, shape index: {}]
  %s5 = inlined_call_operand.vmem [shape: f32[16,128], index: 5, kind: input, shape index: {}]
  %s6 = inlined_call_operand.vmem [shape: f32[16,128], index: 6, kind: input, shape index: {}]
  %s7 = inlined_call_operand.vmem [shape: f32[1,128], index: 7, kind: input, shape index: {}]
  %s8 = inlined_call_operand.vmem [shape: f32[4,2,16], index: 8, kind: output, shape index: {0}]
  %s9 = inlined_call_operand.vmem [shape: f32[4,2,16], index: 9, kind: output, shape index: {1}]
  %10 = xla_tuple %s8, %s9
  %s11 = sld [smem:[#allocation0]]
  $region77: #{multigras_forward.11} parent=0
    _
  %s13 = ssub.s32 1, %s11
  %s14 = scalar_select 0, %s13, %s11
  loop: start=0, step=1, limit=6
  $region2: #{multigras_forward.11} parent=0 // loop_pre_header
    _
  $region3: #{multigras_forward.11} parent=0 // loop_header
    %s16 = sphi 0, %s20
    %p17 = scmp.ge.s32.totalorder %s16, 6
    %s26 = sphi 0, %s28
    %s29 = sphi 0, %s26
    %s30 = sphi 0, %s29
    %s46 = sphi 0, %s30
    %s54 = sphi 0, %s56
    %s57 = sphi 0, %s54
    %s58 = sphi 0, %s57
    %s74 = sphi 0, %s58
    %s80 = sphi 0, %s82
    %s83 = sphi 0, %s80
    %s84 = sphi 0, %s83
    %s100 = sphi 0, %s84
    %s108 = sphi 0, %s110
    %s111 = sphi 0, %s108
    %s112 = sphi 0, %s111
    %s128 = sphi 0, %s112
    %s132 = sphi 0, %s132
    %s134 = sphi 0, %s132
    %s135 = sphi 0, %s134
    %s149 = sphi 0, %s135
    %s153 = sphi 0, %s153
    %s155 = sphi 0, %s153
    %s156 = sphi 0, %s155
    %s170 = sphi 0, %s156
    %s174 = sphi 0, %s174
    %s176 = sphi 0, %s174
    %s177 = sphi 0, %s176
    %s191 = sphi 0, %s177
    %s195 = sphi 0, %s195
    %s197 = sphi 0, %s195
    %s198 = sphi 0, %s197
    %s212 = sphi 0, %s198
    %s216 = sphi 0, %s216
    %s218 = sphi 0, %s216
    %s219 = sphi 0, %s218
    %s233 = sphi 0, %s219
    %s237 = sphi 0, %s237
    %s239 = sphi 0, %s237
    %s240 = sphi 0, %s239
    %s254 = sphi 0, %s240
  $region4: #{multigras_forward.11} parent=0 // loop_header_branch
    %19 = sbr.rel (%p17) target = $region8
  $region5: #{multigras_forward.11} parent=0 // loop_body
    %s21 = ssub.s32 %s16, 1
    %s22 = ssub.s32 %s16, 2
    %s23 = sadd.s32 %s16, 1
    %s24 = ssub.s32 %s16, %s23
    %p25 = scmp.eq.s32.totalorder %s24, 0
    %s27 = sadd.s32 %s26, 1
    %s28 = scalar_select %p25, %s26, %s27
    %p31 = pneg %p25
    %p32 = scmp.eq.s32.totalorder %s16, 3
    %p33 = por %p31, %p32
    %p34 = scmp.ne.s32.totalorder %s26, %s29
    %p35 = scmp.eq.s32.totalorder %s16, 0
    %p36 = por %p34, %p35
    %p37 = scmp.ne.s32.totalorder %s26, %s29
    %p38 = scmp.eq.s32.totalorder %s21, 3
    %p39 = por %p37, %p38
    %p40 = scmp.ne.s32.totalorder %s29, %s30
    %p41 = scmp.eq.s32.totalorder %s21, 0
    %p42 = por %p40, %p41
    %p43 = scmp.ne.s32.totalorder %s29, %s30
    %p44 = scmp.eq.s32.totalorder %s22, 3
    %p45 = por %p43, %p44
    %p47 = scmp.ne.s32.totalorder %s30, %s46
    %p48 = scmp.eq.s32.totalorder %s22, 0
    %p49 = por %p47, %p48
    %s50 = ssub.s32 3, %s16
    %s51 = ssub.s32 3, %s23
    %s52 = ssub.s32 %s50, %s51
    %p53 = scmp.eq.s32.totalorder %s52, 0
    %s55 = sadd.s32 %s54, 1
    %s56 = scalar_select %p53, %s54, %s55
    %p59 = pneg %p53
    %p60 = scmp.eq.s32.totalorder %s16, 3
    %p61 = por %p59, %p60
    %p62 = scmp.ne.s32.totalorder %s54, %s57
    %p63 = scmp.eq.s32.totalorder %s16, 0
    %p64 = por %p62, %p63
    %p65 = scmp.ne.s32.totalorder %s54, %s57
    %p66 = scmp.eq.s32.totalorder %s21, 3
    %p67 = por %p65, %p66
    %p68 = scmp.ne.s32.totalorder %s57, %s58
    %p69 = scmp.eq.s32.totalorder %s21, 0
    %p70 = por %p68, %p69
    %p71 = scmp.ne.s32.totalorder %s57, %s58
    %p72 = scmp.eq.s32.totalorder %s22, 3
    %p73 = por %p71, %p72
    %p75 = scmp.ne.s32.totalorder %s58, %s74
    %p76 = scmp.eq.s32.totalorder %s22, 0
    %p77 = por %p75, %p76
    %s78 = ssub.s32 %s16, %s23
    %p79 = scmp.eq.s32.totalorder %s78, 0
    %s81 = sadd.s32 %s80, 1
    %s82 = scalar_select %p79, %s80, %s81
    %p85 = pneg %p79
    %p86 = scmp.eq.s32.totalorder %s16, 3
    %p87 = por %p85, %p86
    %p88 = scmp.ne.s32.totalorder %s80, %s83
    %p89 = scmp.eq.s32.totalorder %s16, 0
    %p90 = por %p88, %p89
    %p91 = scmp.ne.s32.totalorder %s80, %s83
    %p92 = scmp.eq.s32.totalorder %s21, 3
    %p93 = por %p91, %p92
    %p94 = scmp.ne.s32.totalorder %s83, %s84
    %p95 = scmp.eq.s32.totalorder %s21, 0
    %p96 = por %p94, %p95
    %p97 = scmp.ne.s32.totalorder %s83, %s84
    %p98 = scmp.eq.s32.totalorder %s22, 3
    %p99 = por %p97, %p98
    %p101 = scmp.ne.s32.totalorder %s84, %s100
    %p102 = scmp.eq.s32.totalorder %s22, 0
    %p103 = por %p101, %p102
    %s104 = ssub.s32 3, %s16
    %s105 = ssub.s32 3, %s23
    %s106 = ssub.s32 %s104, %s105
    %p107 = scmp.eq.s32.totalorder %s106, 0
    %s109 = sadd.s32 %s108, 1
    %s110 = scalar_select %p107, %s108, %s109
    %p113 = pneg %p107
    %p114 = scmp.eq.s32.totalorder %s16, 3
    %p115 = por %p113, %p114
    %p116 = scmp.ne.s32.totalorder %s108, %s111
    %p117 = scmp.eq.s32.totalorder %s16, 0
    %p118 = por %p116, %p117
    %p119 = scmp.ne.s32.totalorder %s108, %s111
    %p120 = scmp.eq.s32.totalorder %s21, 3
    %p121 = por %p119, %p120
    %p122 = scmp.ne.s32.totalorder %s111, %s112
    %p123 = scmp.eq.s32.totalorder %s21, 0
    %p124 = por %p122, %p123
    %p125 = scmp.ne.s32.totalorder %s111, %s112
    %p126 = scmp.eq.s32.totalorder %s22, 3
    %p127 = por %p125, %p126
    %p129 = scmp.ne.s32.totalorder %s112, %s128
    %p130 = scmp.eq.s32.totalorder %s22, 0
    %p131 = por %p129, %p130
    %s133 = sadd.s32 %s132, 1
    %p136 = scmp.eq.s32.totalorder %s16, 3
    %p137 = scmp.ne.s32.totalorder %s132, %s134
    %p138 = scmp.eq.s32.totalorder %s16, 0
    %p139 = por %p137, %p138
    %p140 = scmp.ne.s32.totalorder %s132, %s134
    %p141 = scmp.eq.s32.totalorder %s21, 3
    %p142 = por %p140, %p141
    %p143 = scmp.ne.s32.totalorder %s134, %s135
    %p144 = scmp.eq.s32.totalorder %s21, 0
    %p145 = por %p143, %p144
    %p146 = scmp.ne.s32.totalorder %s134, %s135
    %p147 = scmp.eq.s32.totalorder %s22, 3
    %p148 = por %p146, %p147
    %p150 = scmp.ne.s32.totalorder %s135, %s149
    %p151 = scmp.eq.s32.totalorder %s22, 0
    %p152 = por %p150, %p151
    %s154 = sadd.s32 %s153, 1
    %p157 = scmp.eq.s32.totalorder %s16, 3
    %p158 = scmp.ne.s32.totalorder %s153, %s155
    %p159 = scmp.eq.s32.totalorder %s16, 0
    %p160 = por %p158, %p159
    %p161 = scmp.ne.s32.totalorder %s153, %s155
    %p162 = scmp.eq.s32.totalorder %s21, 3
    %p163 = por %p161, %p162
    %p164 = scmp.ne.s32.totalorder %s155, %s156
    %p165 = scmp.eq.s32.totalorder %s21, 0
    %p166 = por %p164, %p165
    %p167 = scmp.ne.s32.totalorder %s155, %s156
    %p168 = scmp.eq.s32.totalorder %s22, 3
    %p169 = por %p167, %p168
    %p171 = scmp.ne.s32.totalorder %s156, %s170
    %p172 = scmp.eq.s32.totalorder %s22, 0
    %p173 = por %p171, %p172
    %s175 = sadd.s32 %s174, 1
    %p178 = scmp.eq.s32.totalorder %s16, 3
    %p179 = scmp.ne.s32.totalorder %s174, %s176
    %p180 = scmp.eq.s32.totalorder %s16, 0
    %p181 = por %p179, %p180
    %p182 = scmp.ne.s32.totalorder %s174, %s176
    %p183 = scmp.eq.s32.totalorder %s21, 3
    %p184 = por %p182, %p183
    %p185 = scmp.ne.s32.totalorder %s176, %s177
    %p186 = scmp.eq.s32.totalorder %s21, 0
    %p187 = por %p185, %p186
    %p188 = scmp.ne.s32.totalorder %s176, %s177
    %p189 = scmp.eq.s32.totalorder %s22, 3
    %p190 = por %p188, %p189
    %p192 = scmp.ne.s32.totalorder %s177, %s191
    %p193 = scmp.eq.s32.totalorder %s22, 0
    %p194 = por %p192, %p193
    %s196 = sadd.s32 %s195, 1
    %p199 = scmp.eq.s32.totalorder %s16, 3
    %p200 = scmp.ne.s32.totalorder %s195, %s197
    %p201 = scmp.eq.s32.totalorder %s16, 0
    %p202 = por %p200, %p201
    %p203 = scmp.ne.s32.totalorder %s195, %s197
    %p204 = scmp.eq.s32.totalorder %s21, 3
    %p205 = por %p203, %p204
    %p206 = scmp.ne.s32.totalorder %s197, %s198
    %p207 = scmp.eq.s32.totalorder %s21, 0
    %p208 = por %p206, %p207
    %p209 = scmp.ne.s32.totalorder %s197, %s198
    %p210 = scmp.eq.s32.totalorder %s22, 3
    %p211 = por %p209, %p210
    %p213 = scmp.ne.s32.totalorder %s198, %s212
    %p214 = scmp.eq.s32.totalorder %s22, 0
    %p215 = por %p213, %p214
    %s217 = sadd.s32 %s216, 1
    %p220 = scmp.eq.s32.totalorder %s16, 3
    %p221 = scmp.ne.s32.totalorder %s216, %s218
    %p222 = scmp.eq.s32.totalorder %s16, 0
    %p223 = por %p221, %p222
    %p224 = scmp.ne.s32.totalorder %s216, %s218
    %p225 = scmp.eq.s32.totalorder %s21, 3
    %p226 = por %p224, %p225
    %p227 = scmp.ne.s32.totalorder %s218, %s219
    %p228 = scmp.eq.s32.totalorder %s21, 0
    %p229 = por %p227, %p228
    %p230 = scmp.ne.s32.totalorder %s218, %s219
    %p231 = scmp.eq.s32.totalorder %s22, 3
    %p232 = por %p230, %p231
    %p234 = scmp.ne.s32.totalorder %s219, %s233
    %p235 = scmp.eq.s32.totalorder %s22, 0
    %p236 = por %p234, %p235
    %s238 = sadd.s32 %s237, 1
    %p241 = scmp.eq.s32.totalorder %s16, 3
    %p242 = scmp.ne.s32.totalorder %s237, %s239
    %p243 = scmp.eq.s32.totalorder %s16, 0
    %p244 = por %p242, %p243
    %p245 = scmp.ne.s32.totalorder %s237, %s239
    %p246 = scmp.eq.s32.totalorder %s21, 3
    %p247 = por %p245, %p246
    %p248 = scmp.ne.s32.totalorder %s239, %s240
    %p249 = scmp.eq.s32.totalorder %s21, 0
    %p250 = por %p248, %p249
    %p251 = scmp.ne.s32.totalorder %s239, %s240
    %p252 = scmp.eq.s32.totalorder %s22, 3
    %p253 = por %p251, %p252
    %p255 = scmp.ne.s32.totalorder %s240, %s254
    %p256 = scmp.eq.s32.totalorder %s22, 0
    %p257 = por %p255, %p256
    %p258 = scmp.le.s32.totalorder 1, %s16
    %p259 = scmp.lt.s32.totalorder %s16, 5
    %p260 = pnand %p258, %p259
    %p261 = pneg %p260
    // Predicated region
    $region9: #{multigras_forward.11} parent=5 // pred_check
      _
    $region10: #{multigras_forward.11} parent=5 // pred_check_branch
      %263 = sbr.rel (%p260) target = $region12
    $region11: #{multigras_forward.11} parent=5 // pred_region
      %s264 = ssub.s32 %s16, 1
      // Predicated region
      $region13: #{multigras_forward.11} parent=11 // pred_check
        %p265 = pneg %p145
      $region14: #{multigras_forward.11} parent=11 // pred_check_branch
        %267 = sbr.rel (%p265) target = $region16
      $region15: #{multigras_forward.11} parent=11 // pred_region
        _
      $region16: #{multigras_forward.11} parent=11 // pred_fallthru
        _
      // Predicated region
      $region17: #{multigras_forward.11} parent=11 // pred_check
        %p268 = pneg %p166
      $region18: #{multigras_forward.11} parent=11 // pred_check_branch
        %270 = sbr.rel (%p268) target = $region20
      $region19: #{multigras_forward.11} parent=11 // pred_region
        _
      $region20: #{multigras_forward.11} parent=11 // pred_fallthru
        _
      // Predicated region
      $region21: #{multigras_forward.11} parent=11 // pred_check
        %p271 = pneg %p187
      $region22: #{multigras_forward.11} parent=11 // pred_check_branch
        %273 = sbr.rel (%p271) target = $region24
      $region23: #{multigras_forward.11} parent=11 // pred_region
        _
      $region24: #{multigras_forward.11} parent=11 // pred_fallthru
        _
      // Predicated region
      $region25: #{multigras_forward.11} parent=11 // pred_check
        %p274 = pneg %p208
      $region26: #{multigras_forward.11} parent=11 // pred_check_branch
        %276 = sbr.rel (%p274) target = $region28
      $region27: #{multigras_forward.11} parent=11 // pred_region
        _
      $region28: #{multigras_forward.11} parent=11 // pred_fallthru
        _
    $region12: #{multigras_forward.11} parent=5 // pred_fallthru
      _
    %p277 = scmp.lt.s32.totalorder %s16, 4
    // Predicated region
    $region29: #{multigras_forward.11} parent=5 // pred_check
      %p278 = pneg %p277
    $region30: #{multigras_forward.11} parent=5 // pred_check_branch
      %280 = sbr.rel (%p278) target = $region32
    $region31: #{multigras_forward.11} parent=5 // pred_region
      // Predicated region
      $region33: #{multigras_forward.11} parent=31 // pred_check
        %p281 = pneg %p36
      $region34: #{multigras_forward.11} parent=31 // pred_check_branch
        %283 = sbr.rel (%p281) target = $region36
      $region35: #{multigras_forward.11} parent=31 // pred_region
        %p284 = scmp.lt.s32.totalorder %s16, 3
        %s285 = scalar_select %p284, %s16, 3
        %s286 = smul.addr %s285, 2
        %s287 = scalar_lea.vmem %s0, %s286
      $region36: #{multigras_forward.11} parent=31 // pred_fallthru
        _
      // Predicated region
      $region37: #{multigras_forward.11} parent=31 // pred_check
        %p288 = pneg %p64
      $region38: #{multigras_forward.11} parent=31 // pred_check_branch
        %290 = sbr.rel (%p288) target = $region40
      $region39: #{multigras_forward.11} parent=31 // pred_region
        %s291 = ssub.s32 3, %s16
        %p292 = scmp.lt.s32.totalorder %s291, 3
        %s293 = scalar_select %p292, %s291, 3
        %s294 = smul.addr %s293, 2
        %s295 = scalar_lea.vmem %s1, %s294
        %s296 = ssub.s32 3, %s16
      $region40: #{multigras_forward.11} parent=31 // pred_fallthru
        _
      // Predicated region
      $region41: #{multigras_forward.11} parent=31 // pred_check
        %p297 = pneg %p90
      $region42: #{multigras_forward.11} parent=31 // pred_check_branch
        %299 = sbr.rel (%p297) target = $region44
      $region43: #{multigras_forward.11} parent=31 // pred_region
        %p300 = scmp.lt.s32.totalorder %s16, 3
        %s301 = scalar_select %p300, %s16, 3
        %s302 = smul.addr %s301, 2
        %s303 = scalar_lea.vmem %s2, %s302
      $region44: #{multigras_forward.11} parent=31 // pred_fallthru
        _
      // Predicated region
      $region45: #{multigras_forward.11} parent=31 // pred_check
        %p304 = pneg %p118
      $region46: #{multigras_forward.11} parent=31 // pred_check_branch
        %306 = sbr.rel (%p304) target = $region48
      $region47: #{multigras_forward.11} parent=31 // pred_region
        %s307 = ssub.s32 3, %s16
        %p308 = scmp.lt.s32.totalorder %s307, 3
        %s309 = scalar_select %p308, %s307, 3
        %s310 = smul.addr %s309, 2
        %s311 = scalar_lea.vmem %s3, %s310
        %s312 = ssub.s32 3, %s16
      $region48: #{multigras_forward.11} parent=31 // pred_fallthru
        _
    $region32: #{multigras_forward.11} parent=5 // pred_fallthru
      _
    %p313 = scmp.le.s32.totalorder 1, %s16
    %p314 = scmp.lt.s32.totalorder %s16, 5
    %p315 = pnand %p313, %p314
    %p316 = pneg %p315
    // Predicated region
    $region49: #{multigras_forward.11} parent=5 // pred_check
      _
    $region50: #{multigras_forward.11} parent=5 // pred_check_branch
      %318 = sbr.rel (%p315) target = $region52
    $region51: #{multigras_forward.11} parent=5 // pred_region
      %s319 = ssub.s32 %s16, 1
      %p320 = scmp.lt.s32.totalorder %s21, 3
      %s321 = scalar_select %p320, %s21, 3
      %s322 = smul.addr %s321, 2
      %s323 = scalar_lea.vmem %s0, %s322
      %p324 = pneg %p42
      %p325 = pneg %p39
      %s326 = ssub.s32 3, %s21
      %p327 = scmp.lt.s32.totalorder %s326, 3
      %s328 = scalar_select %p327, %s326, 3
      %s329 = smul.addr %s328, 2
      %s330 = scalar_lea.vmem %s1, %s329
      %p331 = pneg %p70
      %p332 = pneg %p67
      %p333 = scmp.lt.s32.totalorder %s21, 3
      %s334 = scalar_select %p333, %s21, 3
      %s335 = smul.addr %s334, 2
      %s336 = scalar_lea.vmem %s2, %s335
      %p337 = pneg %p96
      %p338 = pneg %p93
      %s339 = ssub.s32 3, %s21
      %p340 = scmp.lt.s32.totalorder %s339, 3
      %s341 = scalar_select %p340, %s339, 3
      %s342 = smul.addr %s341, 2
      %s343 = scalar_lea.vmem %s3, %s342
      %p344 = pneg %p124
      %p345 = pneg %p121
      %p346 = pneg %p145
      %p347 = pneg %p142
      %p348 = pneg %p166
      %p349 = pneg %p163
      %p350 = pneg %p187
      %p351 = pneg %p184
      %p352 = pneg %p208
      %p353 = pneg %p205
      %p354 = pneg %p229
      %p355 = pneg %p226
      %p356 = pneg %p250
      %p357 = pneg %p247
      %p358 = scmp.lt.s32.totalorder %s21, 3
      %s359 = scalar_select %p358, %s21, 3
      %s360 = smul.addr %s359, 2
      %s361 = scalar_lea.vmem %s0, %s360
      %s362 = ssub.s32 3, %s21
      %p363 = scmp.lt.s32.totalorder %s362, 3
      %s364 = scalar_select %p363, %s362, 3
      %s365 = smul.addr %s364, 2
      %s366 = scalar_lea.vmem %s1, %s365
      %s367 = ssub.s32 3, %s21
      %p368 = scmp.lt.s32.totalorder %s21, 3
      %s369 = scalar_select %p368, %s21, 3
      %s370 = smul.addr %s369, 2
      %s371 = scalar_lea.vmem %s2, %s370
      %s372 = ssub.s32 3, %s21
      %p373 = scmp.lt.s32.totalorder %s372, 3
      %s374 = scalar_select %p373, %s372, 3
      %s375 = smul.addr %s374, 2
      %s376 = scalar_lea.vmem %s3, %s375
      %s377 = ssub.s32 3, %s21
      %p378 = scmp.eq.s32.totalorder %s21, 0
      // Predicated region
      $region53: #{multigras_forward.11} parent=51 // pred_check
        %p379 = pneg %p378
      $region54: #{multigras_forward.11} parent=51 // pred_check_branch
        %381 = sbr.rel (%p379) target = $region56
      $region55: #{multigras_forward.11} parent=51 // pred_region
        %vm382 = vcmask 125952
        %383 = vst.msk [vmem:[#allocation2] sm:$0xf] %vm382, 0.0
        %384 = vst.msk [vmem:[#allocation3] sm:$0xf] %vm382, 0.0
      $region56: #{multigras_forward.11} parent=51 // pred_fallthru
        _
      %v385 = vld [vmem:[#allocation2] sm:$0xf]
      %v386 = vld [vmem:[%s6] sm:$0xff]
      %v387 = vld [vmem:[%s6 + $0x8] sm:$0xff]
      %v388 = vld [vmem:[%s7] sm:$0x1]
      %v390 = vlaneseq
      %v391 = vshrl.u32 %v390, 7
      %v392 = vsub.s32 0, %v391
      %v393 = vrot.slane %v388, %v392
      %vm395 = vcmask 130048
      %v397 = vsel %vm395, %v385, 0
      %399 = vmatprep.subr.mxu0 0.0
      %400 = vmatpush1.msra.mxu0 %v386
      %401 = vmatprep.subr.mxu0 0.0
      %402 = vmatpush1.msra.mxu0 %v387
      %403 = vmatprep.subr.mxu0 0.0
      %404 = vmatpush1.msra.mxu0 0.0
      %405 = vmatprep.subr.mxu0 0.0
      %406 = vmatpush1.msra.mxu0 0.0
      %407 = vmatprep.subr.mxu0 0.0
      %408 = vmatpush1.msra.mxu0 0.0
      %409 = vmatprep.subr.mxu0 0.0
      %410 = vmatpush1.msra.mxu0 0.0
      %411 = vmatprep.subr.mxu0 0.0
      %412 = vmatpush1.msra.mxu0 0.0
      %413 = vmatprep.subr.mxu0 0.0
      %414 = vmatpush1.msra.mxu0 0.0
      %415 = vmatprep.subr.mxu0 0.0
      %416 = vmatpush1.msra.mxu0 0.0
      %417 = vmatprep.subr.mxu0 0.0
      %418 = vmatpush1.msra.mxu0 0.0
      %419 = vmatprep.subr.mxu0 0.0
      %420 = vmatpush1.msra.mxu0 0.0
      %421 = vmatprep.subr.mxu0 0.0
      %422 = vmatpush1.msra.mxu0 0.0
      %423 = vmatprep.subr.mxu0 0.0
      %424 = vmatpush1.msra.mxu0 0.0
      %425 = vmatprep.subr.mxu0 0.0
      %426 = vmatpush1.msra.mxu0 0.0
      %427 = vmatprep.subr.mxu0 0.0
      %428 = vmatpush1.msra.mxu0 0.0
      %429 = vmatprep.subr.mxu0 0.0
      %430 = vmatpush1.msra.mxu0 0.0
      %431 = vmatprep.subr.mxu0 0.0
      %432 = vmatpush1.msra.mxu0 0.0
      %433 = vmatprep.subr.mxu0 0.0
      %434 = vmatpush1.msra.mxu0 0.0
      %435 = vmatprep.subr.mxu0 0.0
      %436 = vmatpush1.msra.mxu0 0.0
      %437 = vmatprep.subr.mxu0 0.0
      %438 = vmatpush1.msra.mxu0 0.0
      %439 = vmatprep.subr.mxu0 0.0
      %440 = vmatpush1.msra.mxu0 0.0
      %441 = vmatprep.subr.mxu0 0.0
      %442 = vmatpush1.msra.mxu0 0.0
      %443 = vmatprep.subr.mxu0 0.0
      %444 = vmatpush1.msra.mxu0 0.0
      %445 = vmatprep.subr.mxu0 0.0
      %446 = vmatpush1.msra.mxu0 0.0
      %447 = vmatprep.subr.mxu0 0.0
      %448 = vmatpush1.msra.mxu0 0.0
      %449 = vmatprep.subr.mxu0 0.0
      %450 = vmatpush1.msra.mxu0 0.0
      %451 = vmatprep.subr.mxu0 0.0
      %452 = vmatpush1.msra.mxu0 0.0
      %453 = vmatprep.subr.mxu0 0.0
      %454 = vmatpush1.msra.mxu0 0.0
      %455 = vmatprep.subr.mxu0 0.0
      %456 = vmatpush1.msra.mxu0 0.0
      %457 = vmatprep.subr.mxu0 0.0
      %458 = vmatpush1.msra.mxu0 0.0
      %459 = vmatprep.subr.mxu0 0.0
      %460 = vmatpush1.msra.mxu0 0.0
      %461 = vmatprep.subr.mxu0 0.0
      %462 = vmatpush1.msra.mxu0 0.0
      %463 = vmatprep.mubr.f32.mxu0 0.0
      %464 = vmatmul.mubr.f32.gmra.mrb[0].mxu0 %v397
      %v465 = vpop.f32.mrb[0].mxu0
      %v466 = vadd.f32 %v393, %v465
      %v467 = vpop.f32.mrb[0].mxu0
      %468 = vdwg.mxu0
      %v469 = vld [vmem:[%s361] sm:$0x3]
      %v470 = vld [vmem:[%s366] sm:$0x3]
      %v472 = vrot.slane %v470, 6
      %vm474 = vcmask 1041408
      %v475 = vsel %vm474, %v469, %v472
      %v476 = vld [vmem:[%s4] sm:$0xff]
      %v477 = vld [vmem:[%s4 + $0x8] sm:$0xff]
      %v479 = vsel %vm395, %v475, 0
      %481 = vmatprep.subr.mxu0 0.0
      %482 = vmatpush1.msra.mxu0 %v476
      %483 = vmatprep.subr.mxu0 0.0
      %484 = vmatpush1.msra.mxu0 %v477
      %485 = vmatprep.subr.mxu0 0.0
      %486 = vmatpush1.msra.mxu0 0.0
      %487 = vmatprep.subr.mxu0 0.0
      %488 = vmatpush1.msra.mxu0 0.0
      %489 = vmatprep.subr.mxu0 0.0
      %490 = vmatpush1.msra.mxu0 0.0
      %491 = vmatprep.subr.mxu0 0.0
      %492 = vmatpush1.msra.mxu0 0.0
      %493 = vmatprep.subr.mxu0 0.0
      %494 = vmatpush1.msra.mxu0 0.0
      %495 = vmatprep.subr.mxu0 0.0
      %496 = vmatpush1.msra.mxu0 0.0
      %497 = vmatprep.subr.mxu0 0.0
      %498 = vmatpush1.msra.mxu0 0.0
      %499 = vmatprep.subr.mxu0 0.0
      %500 = vmatpush1.msra.mxu0 0.0
      %501 = vmatprep.subr.mxu0 0.0
      %502 = vmatpush1.msra.mxu0 0.0
      %503 = vmatprep.subr.mxu0 0.0
      %504 = vmatpush1.msra.mxu0 0.0
      %505 = vmatprep.subr.mxu0 0.0
      %506 = vmatpush1.msra.mxu0 0.0
      %507 = vmatprep.subr.mxu0 0.0
      %508 = vmatpush1.msra.mxu0 0.0
      %509 = vmatprep.subr.mxu0 0.0
      %510 = vmatpush1.msra.mxu0 0.0
      %511 = vmatprep.subr.mxu0 0.0
      %512 = vmatpush1.msra.mxu0 0.0
      %513 = vmatprep.subr.mxu0 0.0
      %514 = vmatpush1.msra.mxu0 0.0
      %515 = vmatprep.subr.mxu0 0.0
      %516 = vmatpush1.msra.mxu0 0.0
      %517 = vmatprep.subr.mxu0 0.0
      %518 = vmatpush1.msra.mxu0 0.0
      %519 = vmatprep.subr.mxu0 0.0
      %520 = vmatpush1.msra.mxu0 0.0
      %521 = vmatprep.subr.mxu0 0.0
      %522 = vmatpush1.msra.mxu0 0.0
      %523 = vmatprep.subr.mxu0 0.0
      %524 = vmatpush1.msra.mxu0 0.0
      %525 = vmatprep.subr.mxu0 0.0
      %526 = vmatpush1.msra.mxu0 0.0
      %527 = vmatprep.subr.mxu0 0.0
      %528 = vmatpush1.msra.mxu0 0.0
      %529 = vmatprep.subr.mxu0 0.0
      %530 = vmatpush1.msra.mxu0 0.0
      %531 = vmatprep.subr.mxu0 0.0
      %532 = vmatpush1.msra.mxu0 0.0
      %533 = vmatprep.subr.mxu0 0.0
      %534 = vmatpush1.msra.mxu0 0.0
      %535 = vmatprep.subr.mxu0 0.0
      %536 = vmatpush1.msra.mxu0 0.0
      %537 = vmatprep.subr.mxu0 0.0
      %538 = vmatpush1.msra.mxu0 0.0
      %539 = vmatprep.subr.mxu0 0.0
      %540 = vmatpush1.msra.mxu0 0.0
      %541 = vmatprep.subr.mxu0 0.0
      %542 = vmatpush1.msra.mxu0 0.0
      %543 = vmatprep.subr.mxu0 0.0
      %544 = vmatpush1.msra.mxu0 0.0
      %545 = vmatprep.mubr.f32.mxu0 0.0
      %546 = vmatmul.mubr.f32.gmra.mrb[0].mxu0 %v479
      %v547 = vpop.f32.mrb[0].mxu0
      %v548 = vadd.f32 0.0, %v547
      %v549 = vpop.f32.mrb[0].mxu0
      %550 = vdwg.mxu0
      %v551 = vadd.f32 %v466, %v548
      %v552 = vld [vmem:[%s371] sm:$0x3]
      %v553 = vld [vmem:[%s376] sm:$0x3]
      %v555 = vrot.slane %v553, 6
      %v557 = vsel %vm474, %v552, %v555
      %v558 = vld [vmem:[%s5] sm:$0xff]
      %v559 = vld [vmem:[%s5 + $0x8] sm:$0xff]
      %v561 = vsel %vm395, %v557, 0
      %563 = vmatprep.subr.mxu0 0.0
      %564 = vmatpush1.msra.mxu0 %v558
      %565 = vmatprep.subr.mxu0 0.0
      %566 = vmatpush1.msra.mxu0 %v559
      %567 = vmatprep.subr.mxu0 0.0
      %568 = vmatpush1.msra.mxu0 0.0
      %569 = vmatprep.subr.mxu0 0.0
      %570 = vmatpush1.msra.mxu0 0.0
      %571 = vmatprep.subr.mxu0 0.0
      %572 = vmatpush1.msra.mxu0 0.0
      %573 = vmatprep.subr.mxu0 0.0
      %574 = vmatpush1.msra.mxu0 0.0
      %575 = vmatprep.subr.mxu0 0.0
      %576 = vmatpush1.msra.mxu0 0.0
      %577 = vmatprep.subr.mxu0 0.0
      %578 = vmatpush1.msra.mxu0 0.0
      %579 = vmatprep.subr.mxu0 0.0
      %580 = vmatpush1.msra.mxu0 0.0
      %581 = vmatprep.subr.mxu0 0.0
      %582 = vmatpush1.msra.mxu0 0.0
      %583 = vmatprep.subr.mxu0 0.0
      %584 = vmatpush1.msra.mxu0 0.0
      %585 = vmatprep.subr.mxu0 0.0
      %586 = vmatpush1.msra.mxu0 0.0
      %587 = vmatprep.subr.mxu0 0.0
      %588 = vmatpush1.msra.mxu0 0.0
      %589 = vmatprep.subr.mxu0 0.0
      %590 = vmatpush1.msra.mxu0 0.0
      %591 = vmatprep.subr.mxu0 0.0
      %592 = vmatpush1.msra.mxu0 0.0
      %593 = vmatprep.subr.mxu0 0.0
      %594 = vmatpush1.msra.mxu0 0.0
      %595 = vmatprep.subr.mxu0 0.0
      %596 = vmatpush1.msra.mxu0 0.0
      %597 = vmatprep.subr.mxu0 0.0
      %598 = vmatpush1.msra.mxu0 0.0
      %599 = vmatprep.subr.mxu0 0.0
      %600 = vmatpush1.msra.mxu0 0.0
      %601 = vmatprep.subr.mxu0 0.0
      %602 = vmatpush1.msra.mxu0 0.0
      %603 = vmatprep.subr.mxu0 0.0
      %604 = vmatpush1.msra.mxu0 0.0
      %605 = vmatprep.subr.mxu0 0.0
      %606 = vmatpush1.msra.mxu0 0.0
      %607 = vmatprep.subr.mxu0 0.0
      %608 = vmatpush1.msra.mxu0 0.0
      %609 = vmatprep.subr.mxu0 0.0
      %610 = vmatpush1.msra.mxu0 0.0
      %611 = vmatprep.subr.mxu0 0.0
      %612 = vmatpush1.msra.mxu0 0.0
      %613 = vmatprep.subr.mxu0 0.0
      %614 = vmatpush1.msra.mxu0 0.0
      %615 = vmatprep.subr.mxu0 0.0
      %616 = vmatpush1.msra.mxu0 0.0
      %617 = vmatprep.subr.mxu0 0.0
      %618 = vmatpush1.msra.mxu0 0.0
      %619 = vmatprep.subr.mxu0 0.0
      %620 = vmatpush1.msra.mxu0 0.0
      %621 = vmatprep.subr.mxu0 0.0
      %622 = vmatpush1.msra.mxu0 0.0
      %623 = vmatprep.subr.mxu0 0.0
      %624 = vmatpush1.msra.mxu0 0.0
      %625 = vmatprep.subr.mxu0 0.0
      %626 = vmatpush1.msra.mxu0 0.0
      %627 = vmatprep.mubr.f32.mxu0 0.0
      %628 = vmatmul.mubr.f32.gmra.mrb[0].mxu0 %v561
      %v629 = vpop.f32.mrb[0].mxu0
      %v630 = vadd.f32 0.0, %v629
      %v631 = vpop.f32.mrb[0].mxu0
      %632 = vdwg.mxu0
      %v633 = vadd.f32 %v551, %v630
      %v634 = vlaneseq
      %v635 = vshrl.u32 %v634, 7
      %vm636 = vcmp.lt.s32.totalorder %v635, 2
      %v637 = vsel %vm636, 1, 0
      %vm638 = vcmp.eq.s32.totalorder %v637, 1
      %640 = vrot.lane.b32.xlu0 %v633, 64
      %v641 = vpop.permute.xlu0 %640
      %v643 = vsel %vm638, %v633, %v641
      %v644 = vxor.u32 %v643, 2147483648
      %v645 = vmul.f32 %v644, 1.442695
      %v646 = vpow.pop %v645
      %v647 = vadd.f32 %v646, 1.0
      %v648 = vrcp.pop %v647
      %v649 = vmul.f32 1.0, %v648
      %v650 = vtanh.pop %v643
      %v651 = vld [vmem:[#allocation3] sm:$0xf]
      %653 = vrot.lane.b32.xlu0 %v651, 16
      %v654 = vpop.permute.xlu0 %653
      %v656 = vmul.f32 %v649, %v654
      %658 = vrot.lane.b32.xlu0 %v650, 96
      %v659 = vpop.permute.xlu0 %658
      %v661 = vmul.f32 %v649, %v659
      %663 = vrot.lane.b32.xlu0 %v661, 16
      %v664 = vpop.permute.xlu0 %663
      %v666 = vadd.f32 %v656, %v664
      %v667 = vtanh.pop %v666
      %669 = vrot.lane.b32.xlu0 %v667, 32
      %v670 = vpop.permute.xlu0 %669
      %v672 = vmul.f32 %v649, %v670
      %674 = vrot.lane.b32.xlu0 %v666, 112
      %v675 = vpop.permute.xlu0 %674
      %vm677 = vcmask 125952
      %678 = vst.msk [vmem:[#allocation3] sm:$0xf] %vm677, %v675
      %680 = vrot.lane.b32.xlu0 %v672, 80
      %v681 = vpop.permute.xlu0 %680
      %683 = vst.msk [vmem:[#allocation2] sm:$0xf] %vm677, %v681
      %s684 = smul.u32 %s21, 2
      %s685 = scalar_lea.vmem %s8, %s684
      %vm686 = vcmask 123904
      %687 = vst.msk [vmem:[%s685] sm:$0x3] %vm686, %v681
      %s688 = ssub.s32 3, %s21
      %s689 = smul.u32 %s688, 2
      %s690 = scalar_lea.vmem %s9, %s689
      %vm691 = vcmask 125954
      %692 = vst.msk [vmem:[%s690 - $0x2] sm:$0xc] %vm691, %v681
      // Predicated region
      $region57: #{multigras_forward.11} parent=51 // pred_check
        %p693 = pneg %p226
      $region58: #{multigras_forward.11} parent=51 // pred_check_branch
        %695 = sbr.rel (%p693) target = $region60
      $region59: #{multigras_forward.11} parent=51 // pred_region
        _
      $region60: #{multigras_forward.11} parent=51 // pred_fallthru
        _
      // Predicated region
      $region61: #{multigras_forward.11} parent=51 // pred_check
        %p696 = pneg %p247
      $region62: #{multigras_forward.11} parent=51 // pred_check_branch
        %698 = sbr.rel (%p696) target = $region64
      $region63: #{multigras_forward.11} parent=51 // pred_region
        _
      $region64: #{multigras_forward.11} parent=51 // pred_fallthru
        _
      // Predicated region
      $region65: #{multigras_forward.11} parent=51 // pred_check
        %p699 = pneg %p226
      $region66: #{multigras_forward.11} parent=51 // pred_check_branch
        %701 = sbr.rel (%p699) target = $region68
      $region67: #{multigras_forward.11} parent=51 // pred_region
        _
      $region68: #{multigras_forward.11} parent=51 // pred_fallthru
        _
      // Predicated region
      $region69: #{multigras_forward.11} parent=51 // pred_check
        %p702 = pneg %p247
      $region70: #{multigras_forward.11} parent=51 // pred_check_branch
        %704 = sbr.rel (%p702) target = $region72
      $region71: #{multigras_forward.11} parent=51 // pred_region
        _
      $region72: #{multigras_forward.11} parent=51 // pred_fallthru
        _
    $region52: #{multigras_forward.11} parent=5 // pred_fallthru
      _
    %p705 = scmp.le.s32.totalorder 2, %s16
    // Predicated region
    $region73: #{multigras_forward.11} parent=5 // pred_check
      %p706 = pneg %p705
    $region74: #{multigras_forward.11} parent=5 // pred_check_branch
      %708 = sbr.rel (%p706) target = $region76
    $region75: #{multigras_forward.11} parent=5 // pred_region
      %s709 = ssub.s32 %s16, 2
    $region76: #{multigras_forward.11} parent=5 // pred_fallthru
      _
  $region6: #{multigras_forward.11} parent=0 // loop_footer
    %s20 = sadd.s32 1, %s16
  $region7: #{multigras_forward.11} parent=0 // loop_footer_branch
    %15 = sbr.rel target = $region3
  $region8: #{multigras_forward.11} parent=0 // loop_exit
    _

// kernel: multigras_forward.12
$region0: #{multigras_forward.12}
  #allocation0 [shape = 'u32[]', space=smem, size = 0x4, offset = 0x4, fixed_abs, tag = 'smem constant byte address 0x4 - core index']
  #allocation1 [shape = 'u32[144,128]{1,0:T(1,128)}', space=vmem, size = 0x12000, scoped, tag = 'internal scratch']
  %s0 = inlined_call_operand.vmem [shape: f32[2,4,32], index: 0, kind: input, shape index: {}]
  %s1 = inlined_call_operand.vmem [shape: f32[2,4,4], index: 1, kind: input, shape index: {}]
  %s2 = inlined_call_operand.vmem [shape: f32[32,16], index: 2, kind: input, shape index: {}]
  %s3 = inlined_call_operand.vmem [shape: f32[1,16], index: 3, kind: input, shape index: {}]
  %s4 = inlined_call_operand.vmem [shape: f32[16,16], index: 4, kind: input, shape index: {}]
  %s5 = inlined_call_operand.vmem [shape: f32[1,16], index: 5, kind: input, shape index: {}]
  %s6 = inlined_call_operand.vmem [shape: f32[16,16], index: 6, kind: input, shape index: {}]
  %s7 = inlined_call_operand.vmem [shape: f32[1,16], index: 7, kind: input, shape index: {}]
  %s8 = inlined_call_operand.vmem [shape: f32[16,16], index: 8, kind: input, shape index: {}]
  %s9 = inlined_call_operand.vmem [shape: f32[1,16], index: 9, kind: input, shape index: {}]
  %s10 = inlined_call_operand.vmem [shape: f32[2,4,16], index: 10, kind: output, shape index: {0}]
  %s11 = inlined_call_operand.vmem [shape: f32[2,1,16], index: 11, kind: output, shape index: {1}]
  %12 = xla_tuple %s10, %s11
  %s13 = sld [smem:[#allocation0]]
  $region81: #{multigras_forward.12} parent=0
    _
  %s15 = ssub.s32 1, %s13
  %s16 = scalar_select 0, %s15, %s13
  loop: start=0, step=1, limit=4
  $region2: #{multigras_forward.12} parent=0 // loop_pre_header
    _
  $region3: #{multigras_forward.12} parent=0 // loop_header
    %s18 = sphi 0, %s22
    %p19 = scmp.ge.s32.totalorder %s18, 4
    %s28 = sphi 0, %s30
    %s31 = sphi 0, %s28
    %s32 = sphi 0, %s31
    %s48 = sphi 0, %s32
    %s54 = sphi 0, %s56
    %s57 = sphi 0, %s54
    %s58 = sphi 0, %s57
    %s74 = sphi 0, %s58
    %s78 = sphi 0, %s78
    %s80 = sphi 0, %s78
    %s81 = sphi 0, %s80
    %s95 = sphi 0, %s81
    %s99 = sphi 0, %s99
    %s101 = sphi 0, %s99
    %s102 = sphi 0, %s101
    %s116 = sphi 0, %s102
    %s120 = sphi 0, %s120
    %s122 = sphi 0, %s120
    %s123 = sphi 0, %s122
    %s137 = sphi 0, %s123
    %s141 = sphi 0, %s141
    %s143 = sphi 0, %s141
    %s144 = sphi 0, %s143
    %s158 = sphi 0, %s144
    %s162 = sphi 0, %s162
    %s164 = sphi 0, %s162
    %s165 = sphi 0, %s164
    %s179 = sphi 0, %s165
    %s183 = sphi 0, %s183
    %s185 = sphi 0, %s183
    %s186 = sphi 0, %s185
    %s200 = sphi 0, %s186
    %s204 = sphi 0, %s204
    %s206 = sphi 0, %s204
    %s207 = sphi 0, %s206
    %s221 = sphi 0, %s207
    %s225 = sphi 0, %s225
    %s227 = sphi 0, %s225
    %s228 = sphi 0, %s227
    %s242 = sphi 0, %s228
    %s248 = sphi 0, %s250
    %s251 = sphi 0, %s248
    %s252 = sphi 0, %s251
    %s268 = sphi 0, %s252
    %s274 = sphi 0, %s276
    %s277 = sphi 0, %s274
    %s278 = sphi 0, %s277
    %s294 = sphi 0, %s278
  $region4: #{multigras_forward.12} parent=0 // loop_header_branch
    %21 = sbr.rel (%p19) target = $region8
  $region5: #{multigras_forward.12} parent=0 // loop_body
    %s23 = ssub.s32 %s18, 1
    %s24 = ssub.s32 %s18, 2
    %s25 = sadd.s32 %s18, 1
    %s26 = ssub.s32 %s18, %s25
    %p27 = scmp.eq.s32.totalorder %s26, 0
    %s29 = sadd.s32 %s28, 1
    %s30 = scalar_select %p27, %s28, %s29
    %p33 = pneg %p27
    %p34 = scmp.eq.s32.totalorder %s18, 1
    %p35 = por %p33, %p34
    %p36 = scmp.ne.s32.totalorder %s28, %s31
    %p37 = scmp.eq.s32.totalorder %s18, 0
    %p38 = por %p36, %p37
    %p39 = scmp.ne.s32.totalorder %s28, %s31
    %p40 = scmp.eq.s32.totalorder %s23, 1
    %p41 = por %p39, %p40
    %p42 = scmp.ne.s32.totalorder %s31, %s32
    %p43 = scmp.eq.s32.totalorder %s23, 0
    %p44 = por %p42, %p43
    %p45 = scmp.ne.s32.totalorder %s31, %s32
    %p46 = scmp.eq.s32.totalorder %s24, 1
    %p47 = por %p45, %p46
    %p49 = scmp.ne.s32.totalorder %s32, %s48
    %p50 = scmp.eq.s32.totalorder %s24, 0
    %p51 = por %p49, %p50
    %s52 = ssub.s32 %s18, %s25
    %p53 = scmp.eq.s32.totalorder %s52, 0
    %s55 = sadd.s32 %s54, 1
    %s56 = scalar_select %p53, %s54, %s55
    %p59 = pneg %p53
    %p60 = scmp.eq.s32.totalorder %s18, 1
    %p61 = por %p59, %p60
    %p62 = scmp.ne.s32.totalorder %s54, %s57
    %p63 = scmp.eq.s32.totalorder %s18, 0
    %p64 = por %p62, %p63
    %p65 = scmp.ne.s32.totalorder %s54, %s57
    %p66 = scmp.eq.s32.totalorder %s23, 1
    %p67 = por %p65, %p66
    %p68 = scmp.ne.s32.totalorder %s57, %s58
    %p69 = scmp.eq.s32.totalorder %s23, 0
    %p70 = por %p68, %p69
    %p71 = scmp.ne.s32.totalorder %s57, %s58
    %p72 = scmp.eq.s32.totalorder %s24, 1
    %p73 = por %p71, %p72
    %p75 = scmp.ne.s32.totalorder %s58, %s74
    %p76 = scmp.eq.s32.totalorder %s24, 0
    %p77 = por %p75, %p76
    %s79 = sadd.s32 %s78, 1
    %p82 = scmp.eq.s32.totalorder %s18, 1
    %p83 = scmp.ne.s32.totalorder %s78, %s80
    %p84 = scmp.eq.s32.totalorder %s18, 0
    %p85 = por %p83, %p84
    %p86 = scmp.ne.s32.totalorder %s78, %s80
    %p87 = scmp.eq.s32.totalorder %s23, 1
    %p88 = por %p86, %p87
    %p89 = scmp.ne.s32.totalorder %s80, %s81
    %p90 = scmp.eq.s32.totalorder %s23, 0
    %p91 = por %p89, %p90
    %p92 = scmp.ne.s32.totalorder %s80, %s81
    %p93 = scmp.eq.s32.totalorder %s24, 1
    %p94 = por %p92, %p93
    %p96 = scmp.ne.s32.totalorder %s81, %s95
    %p97 = scmp.eq.s32.totalorder %s24, 0
    %p98 = por %p96, %p97
    %s100 = sadd.s32 %s99, 1
    %p103 = scmp.eq.s32.totalorder %s18, 1
    %p104 = scmp.ne.s32.totalorder %s99, %s101
    %p105 = scmp.eq.s32.totalorder %s18, 0
    %p106 = por %p104, %p105
    %p107 = scmp.ne.s32.totalorder %s99, %s101
    %p108 = scmp.eq.s32.totalorder %s23, 1
    %p109 = por %p107, %p108
    %p110 = scmp.ne.s32.totalorder %s101, %s102
    %p111 = scmp.eq.s32.totalorder %s23, 0
    %p112 = por %p110, %p111
    %p113 = scmp.ne.s32.totalorder %s101, %s102
    %p114 = scmp.eq.s32.totalorder %s24, 1
    %p115 = por %p113, %p114
    %p117 = scmp.ne.s32.totalorder %s102, %s116
    %p118 = scmp.eq.s32.totalorder %s24, 0
    %p119 = por %p117, %p118
    %s121 = sadd.s32 %s120, 1
    %p124 = scmp.eq.s32.totalorder %s18, 1
    %p125 = scmp.ne.s32.totalorder %s120, %s122
    %p126 = scmp.eq.s32.totalorder %s18, 0
    %p127 = por %p125, %p126
    %p128 = scmp.ne.s32.totalorder %s120, %s122
    %p129 = scmp.eq.s32.totalorder %s23, 1
    %p130 = por %p128, %p129
    %p131 = scmp.ne.s32.totalorder %s122, %s123
    %p132 = scmp.eq.s32.totalorder %s23, 0
    %p133 = por %p131, %p132
    %p134 = scmp.ne.s32.totalorder %s122, %s123
    %p135 = scmp.eq.s32.totalorder %s24, 1
    %p136 = por %p134, %p135
    %p138 = scmp.ne.s32.totalorder %s123, %s137
    %p139 = scmp.eq.s32.totalorder %s24, 0
    %p140 = por %p138, %p139
    %s142 = sadd.s32 %s141, 1
    %p145 = scmp.eq.s32.totalorder %s18, 1
    %p146 = scmp.ne.s32.totalorder %s141, %s143
    %p147 = scmp.eq.s32.totalorder %s18, 0
    %p148 = por %p146, %p147
    %p149 = scmp.ne.s32.totalorder %s141, %s143
    %p150 = scmp.eq.s32.totalorder %s23, 1
    %p151 = por %p149, %p150
    %p152 = scmp.ne.s32.totalorder %s143, %s144
    %p153 = scmp.eq.s32.totalorder %s23, 0
    %p154 = por %p152, %p153
    %p155 = scmp.ne.s32.totalorder %s143, %s144
    %p156 = scmp.eq.s32.totalorder %s24, 1
    %p157 = por %p155, %p156
    %p159 = scmp.ne.s32.totalorder %s144, %s158
    %p160 = scmp.eq.s32.totalorder %s24, 0
    %p161 = por %p159, %p160
    %s163 = sadd.s32 %s162, 1
    %p166 = scmp.eq.s32.totalorder %s18, 1
    %p167 = scmp.ne.s32.totalorder %s162, %s164
    %p168 = scmp.eq.s32.totalorder %s18, 0
    %p169 = por %p167, %p168
    %p170 = scmp.ne.s32.totalorder %s162, %s164
    %p171 = scmp.eq.s32.totalorder %s23, 1
    %p172 = por %p170, %p171
    %p173 = scmp.ne.s32.totalorder %s164, %s165
    %p174 = scmp.eq.s32.totalorder %s23, 0
    %p175 = por %p173, %p174
    %p176 = scmp.ne.s32.totalorder %s164, %s165
    %p177 = scmp.eq.s32.totalorder %s24, 1
    %p178 = por %p176, %p177
    %p180 = scmp.ne.s32.totalorder %s165, %s179
    %p181 = scmp.eq.s32.totalorder %s24, 0
    %p182 = por %p180, %p181
    %s184 = sadd.s32 %s183, 1
    %p187 = scmp.eq.s32.totalorder %s18, 1
    %p188 = scmp.ne.s32.totalorder %s183, %s185
    %p189 = scmp.eq.s32.totalorder %s18, 0
    %p190 = por %p188, %p189
    %p191 = scmp.ne.s32.totalorder %s183, %s185
    %p192 = scmp.eq.s32.totalorder %s23, 1
    %p193 = por %p191, %p192
    %p194 = scmp.ne.s32.totalorder %s185, %s186
    %p195 = scmp.eq.s32.totalorder %s23, 0
    %p196 = por %p194, %p195
    %p197 = scmp.ne.s32.totalorder %s185, %s186
    %p198 = scmp.eq.s32.totalorder %s24, 1
    %p199 = por %p197, %p198
    %p201 = scmp.ne.s32.totalorder %s186, %s200
    %p202 = scmp.eq.s32.totalorder %s24, 0
    %p203 = por %p201, %p202
    %s205 = sadd.s32 %s204, 1
    %p208 = scmp.eq.s32.totalorder %s18, 1
    %p209 = scmp.ne.s32.totalorder %s204, %s206
    %p210 = scmp.eq.s32.totalorder %s18, 0
    %p211 = por %p209, %p210
    %p212 = scmp.ne.s32.totalorder %s204, %s206
    %p213 = scmp.eq.s32.totalorder %s23, 1
    %p214 = por %p212, %p213
    %p215 = scmp.ne.s32.totalorder %s206, %s207
    %p216 = scmp.eq.s32.totalorder %s23, 0
    %p217 = por %p215, %p216
    %p218 = scmp.ne.s32.totalorder %s206, %s207
    %p219 = scmp.eq.s32.totalorder %s24, 1
    %p220 = por %p218, %p219
    %p222 = scmp.ne.s32.totalorder %s207, %s221
    %p223 = scmp.eq.s32.totalorder %s24, 0
    %p224 = por %p222, %p223
    %s226 = sadd.s32 %s225, 1
    %p229 = scmp.eq.s32.totalorder %s18, 1
    %p230 = scmp.ne.s32.totalorder %s225, %s227
    %p231 = scmp.eq.s32.totalorder %s18, 0
    %p232 = por %p230, %p231
    %p233 = scmp.ne.s32.totalorder %s225, %s227
    %p234 = scmp.eq.s32.totalorder %s23, 1
    %p235 = por %p233, %p234
    %p236 = scmp.ne.s32.totalorder %s227, %s228
    %p237 = scmp.eq.s32.totalorder %s23, 0
    %p238 = por %p236, %p237
    %p239 = scmp.ne.s32.totalorder %s227, %s228
    %p240 = scmp.eq.s32.totalorder %s24, 1
    %p241 = por %p239, %p240
    %p243 = scmp.ne.s32.totalorder %s228, %s242
    %p244 = scmp.eq.s32.totalorder %s24, 0
    %p245 = por %p243, %p244
    %s246 = ssub.s32 %s18, %s25
    %p247 = scmp.eq.s32.totalorder %s246, 0
    %s249 = sadd.s32 %s248, 1
    %s250 = scalar_select %p247, %s248, %s249
    %p253 = pneg %p247
    %p254 = scmp.eq.s32.totalorder %s18, 1
    %p255 = por %p253, %p254
    %p256 = scmp.ne.s32.totalorder %s248, %s251
    %p257 = scmp.eq.s32.totalorder %s18, 0
    %p258 = por %p256, %p257
    %p259 = scmp.ne.s32.totalorder %s248, %s251
    %p260 = scmp.eq.s32.totalorder %s23, 1
    %p261 = por %p259, %p260
    %p262 = scmp.ne.s32.totalorder %s251, %s252
    %p263 = scmp.eq.s32.totalorder %s23, 0
    %p264 = por %p262, %p263
    %p265 = scmp.ne.s32.totalorder %s251, %s252
    %p266 = scmp.eq.s32.totalorder %s24, 1
    %p267 = por %p265, %p266
    %p269 = scmp.ne.s32.totalorder %s252, %s268
    %p270 = scmp.eq.s32.totalorder %s24, 0
    %p271 = por %p269, %p270
    %s272 = ssub.s32 %s18, %s25
    %p273 = scmp.eq.s32.totalorder %s272, 0
    %s275 = sadd.s32 %s274, 1
    %s276 = scalar_select %p273, %s274, %s275
    %p279 = pneg %p273
    %p280 = scmp.eq.s32.totalorder %s18, 1
    %p281 = por %p279, %p280
    %p282 = scmp.ne.s32.totalorder %s274, %s277
    %p283 = scmp.eq.s32.totalorder %s18, 0
    %p284 = por %p282, %p283
    %p285 = scmp.ne.s32.totalorder %s274, %s277
    %p286 = scmp.eq.s32.totalorder %s23, 1
    %p287 = por %p285, %p286
    %p288 = scmp.ne.s32.totalorder %s277, %s278
    %p289 = scmp.eq.s32.totalorder %s23, 0
    %p290 = por %p288, %p289
    %p291 = scmp.ne.s32.totalorder %s277, %s278
    %p292 = scmp.eq.s32.totalorder %s24, 1
    %p293 = por %p291, %p292
    %p295 = scmp.ne.s32.totalorder %s278, %s294
    %p296 = scmp.eq.s32.totalorder %s24, 0
    %p297 = por %p295, %p296
    %p298 = scmp.le.s32.totalorder 1, %s18
    %p299 = scmp.lt.s32.totalorder %s18, 3
    %p300 = pnand %p298, %p299
    %p301 = pneg %p300
    // Predicated region
    $region9: #{multigras_forward.12} parent=5 // pred_check
      _
    $region10: #{multigras_forward.12} parent=5 // pred_check_branch
      %303 = sbr.rel (%p300) target = $region12
    $region11: #{multigras_forward.12} parent=5 // pred_region
      %s304 = ssub.s32 %s18, 1
      // Predicated region
      $region13: #{multigras_forward.12} parent=11 // pred_check
        %p305 = pneg %p91
      $region14: #{multigras_forward.12} parent=11 // pred_check_branch
        %307 = sbr.rel (%p305) target = $region16
      $region15: #{multigras_forward.12} parent=11 // pred_region
        _
      $region16: #{multigras_forward.12} parent=11 // pred_fallthru
        _
      // Predicated region
      $region17: #{multigras_forward.12} parent=11 // pred_check
        %p308 = pneg %p112
      $region18: #{multigras_forward.12} parent=11 // pred_check_branch
        %310 = sbr.rel (%p308) target = $region20
      $region19: #{multigras_forward.12} parent=11 // pred_region
        _
      $region20: #{multigras_forward.12} parent=11 // pred_fallthru
        _
      // Predicated region
      $region21: #{multigras_forward.12} parent=11 // pred_check
        %p311 = pneg %p133
      $region22: #{multigras_forward.12} parent=11 // pred_check_branch
        %313 = sbr.rel (%p311) target = $region24
      $region23: #{multigras_forward.12} parent=11 // pred_region
        _
      $region24: #{multigras_forward.12} parent=11 // pred_fallthru
        _
      // Predicated region
      $region25: #{multigras_forward.12} parent=11 // pred_check
        %p314 = pneg %p154
      $region26: #{multigras_forward.12} parent=11 // pred_check_branch
        %316 = sbr.rel (%p314) target = $region28
      $region27: #{multigras_forward.12} parent=11 // pred_region
        _
      $region28: #{multigras_forward.12} parent=11 // pred_fallthru
        _
      // Predicated region
      $region29: #{multigras_forward.12} parent=11 // pred_check
        %p317 = pneg %p175
      $region30: #{multigras_forward.12} parent=11 // pred_check_branch
        %319 = sbr.rel (%p317) target = $region32
      $region31: #{multigras_forward.12} parent=11 // pred_region
        _
      $region32: #{multigras_forward.12} parent=11 // pred_fallthru
        _
      // Predicated region
      $region33: #{multigras_forward.12} parent=11 // pred_check
        %p320 = pneg %p196
      $region34: #{multigras_forward.12} parent=11 // pred_check_branch
        %322 = sbr.rel (%p320) target = $region36
      $region35: #{multigras_forward.12} parent=11 // pred_region
        _
      $region36: #{multigras_forward.12} parent=11 // pred_fallthru
        _
      // Predicated region
      $region37: #{multigras_forward.12} parent=11 // pred_check
        %p323 = pneg %p217
      $region38: #{multigras_forward.12} parent=11 // pred_check_branch
        %325 = sbr.rel (%p323) target = $region40
      $region39: #{multigras_forward.12} parent=11 // pred_region
        _
      $region40: #{multigras_forward.12} parent=11 // pred_fallthru
        _
      // Predicated region
      $region41: #{multigras_forward.12} parent=11 // pred_check
        %p326 = pneg %p238
      $region42: #{multigras_forward.12} parent=11 // pred_check_branch
        %328 = sbr.rel (%p326) target = $region44
      $region43: #{multigras_forward.12} parent=11 // pred_region
        _
      $region44: #{multigras_forward.12} parent=11 // pred_fallthru
        _
    $region12: #{multigras_forward.12} parent=5 // pred_fallthru
      _
    %p329 = scmp.lt.s32.totalorder %s18, 2
    // Predicated region
    $region45: #{multigras_forward.12} parent=5 // pred_check
      %p330 = pneg %p329
    $region46: #{multigras_forward.12} parent=5 // pred_check_branch
      %332 = sbr.rel (%p330) target = $region48
    $region47: #{multigras_forward.12} parent=5 // pred_region
      // Predicated region
      $region49: #{multigras_forward.12} parent=47 // pred_check
        %p333 = pneg %p38
      $region50: #{multigras_forward.12} parent=47 // pred_check_branch
        %335 = sbr.rel (%p333) target = $region52
      $region51: #{multigras_forward.12} parent=47 // pred_region
        %p336 = scmp.lt.s32.totalorder %s18, 1
        %s337 = scalar_select %p336, %s18, 1
        %s338 = smul.addr %s337, 4
        %s339 = scalar_lea.vmem %s0, %s338
      $region52: #{multigras_forward.12} parent=47 // pred_fallthru
        _
      // Predicated region
      $region53: #{multigras_forward.12} parent=47 // pred_check
        %p340 = pneg %p64
      $region54: #{multigras_forward.12} parent=47 // pred_check_branch
        %342 = sbr.rel (%p340) target = $region56
      $region55: #{multigras_forward.12} parent=47 // pred_region
        %p343 = scmp.lt.s32.totalorder %s18, 1
        %s344 = scalar_select %p343, %s18, 1
        %s345 = smul.addr %s344, 4
        %s346 = scalar_lea.vmem %s1, %s345
      $region56: #{multigras_forward.12} parent=47 // pred_fallthru
        _
    $region48: #{multigras_forward.12} parent=5 // pred_fallthru
      _
    %p347 = scmp.le.s32.totalorder 1, %s18
    %p348 = scmp.lt.s32.totalorder %s18, 3
    %p349 = pnand %p347, %p348
    %p350 = pneg %p349
    // Predicated region
    $region57: #{multigras_forward.12} parent=5 // pred_check
      _
    $region58: #{multigras_forward.12} parent=5 // pred_check_branch
      %352 = sbr.rel (%p349) target = $region60
    $region59: #{multigras_forward.12} parent=5 // pred_region
      %s353 = ssub.s32 %s18, 1
      %p354 = scmp.lt.s32.totalorder %s23, 1
      %s355 = scalar_select %p354, %s23, 1
      %s356 = smul.addr %s355, 4
      %s357 = scalar_lea.vmem %s0, %s356
      %p358 = pneg %p44
      %p359 = pneg %p41
      %p360 = scmp.lt.s32.totalorder %s23, 1
      %s361 = scalar_select %p360, %s23, 1
      %s362 = smul.addr %s361, 4
      %s363 = scalar_lea.vmem %s1, %s362
      %p364 = pneg %p70
      %p365 = pneg %p67
      %p366 = pneg %p91
      %p367 = pneg %p88
      %p368 = pneg %p112
      %p369 = pneg %p109
      %p370 = pneg %p133
      %p371 = pneg %p130
      %p372 = pneg %p154
      %p373 = pneg %p151
      %p374 = pneg %p175
      %p375 = pneg %p172
      %p376 = pneg %p196
      %p377 = pneg %p193
      %p378 = pneg %p217
      %p379 = pneg %p214
      %p380 = pneg %p238
      %p381 = pneg %p235
      %p382 = pneg %p264
      %p383 = pneg %p261
      %p384 = scmp.lt.s32.totalorder %s23, 1
      %s385 = scalar_select %p384, %s23, 1
      %s386 = smul.addr %s385, 4
      %s387 = scalar_lea.vmem %s10, %s386
      %p388 = pneg %p290
      %p389 = pneg %p287
      %p390 = scmp.lt.s32.totalorder %s23, 1
      %s391 = scalar_select %p390, %s23, 1
      %s392 = scalar_lea.vmem %s11, %s391
      %p393 = scmp.lt.s32.totalorder %s23, 1
      %s394 = scalar_select %p393, %s23, 1
      %s395 = smul.addr %s394, 4
      %s396 = scalar_lea.vmem %s0, %s395
      %p397 = scmp.lt.s32.totalorder %s23, 1
      %s398 = scalar_select %p397, %s23, 1
      %s399 = smul.addr %s398, 4
      %s400 = scalar_lea.vmem %s1, %s399
      %p401 = scmp.lt.s32.totalorder %s23, 1
      %s402 = scalar_select %p401, %s23, 1
      %s403 = smul.addr %s402, 4
      %s404 = scalar_lea.vmem %s10, %s403
      %p405 = scmp.lt.s32.totalorder %s23, 1
      %s406 = scalar_select %p405, %s23, 1
      %s407 = scalar_lea.vmem %s11, %s406
      %v408 = vld [vmem:[%s396] sm:$0xf]
      %v409 = vld [vmem:[%s400] sm:$0xf]
      %v410 = vld [vmem:[%s2] sm:$0xff]
      %v411 = vld [vmem:[%s2 + $0x8] sm:$0xff]
      %v412 = vld [vmem:[%s2 + $0x10] sm:$0xff]
      %v413 = vld [vmem:[%s2 + $0x18] sm:$0xff]
      %v414 = vld [vmem:[%s3] sm:$0x1]
      %v416 = vlaneseq
      %v417 = vshrl.u32 %v416, 7
      %v418 = vsub.s32 0, %v417
      %v419 = vrot.slane %v414, %v418
      %vm421 = vcmask 261120
      %v423 = vsel %vm421, %v408, 0
      %425 = vmatprep.subr.mxu0 0.0
      %426 = vmatpush1.msra.mxu0 %v410
      %427 = vmatprep.subr.mxu0 0.0
      %428 = vmatpush1.msra.mxu0 %v411
      %429 = vmatprep.subr.mxu0 0.0
      %430 = vmatpush1.msra.mxu0 %v412
      %431 = vmatprep.subr.mxu0 0.0
      %432 = vmatpush1.msra.mxu0 %v413
      %433 = vmatprep.subr.mxu0 0.0
      %434 = vmatpush1.msra.mxu0 0.0
      %435 = vmatprep.subr.mxu0 0.0
      %436 = vmatpush1.msra.mxu0 0.0
      %437 = vmatprep.subr.mxu0 0.0
      %438 = vmatpush1.msra.mxu0 0.0
      %439 = vmatprep.subr.mxu0 0.0
      %440 = vmatpush1.msra.mxu0 0.0
      %441 = vmatprep.subr.mxu0 0.0
      %442 = vmatpush1.msra.mxu0 0.0
      %443 = vmatprep.subr.mxu0 0.0
      %444 = vmatpush1.msra.mxu0 0.0
      %445 = vmatprep.subr.mxu0 0.0
      %446 = vmatpush1.msra.mxu0 0.0
      %447 = vmatprep.subr.mxu0 0.0
      %448 = vmatpush1.msra.mxu0 0.0
      %449 = vmatprep.subr.mxu0 0.0
      %450 = vmatpush1.msra.mxu0 0.0
      %451 = vmatprep.subr.mxu0 0.0
      %452 = vmatpush1.msra.mxu0 0.0
      %453 = vmatprep.subr.mxu0 0.0
      %454 = vmatpush1.msra.mxu0 0.0
      %455 = vmatprep.subr.mxu0 0.0
      %456 = vmatpush1.msra.mxu0 0.0
      %457 = vmatprep.subr.mxu0 0.0
      %458 = vmatpush1.msra.mxu0 0.0
      %459 = vmatprep.subr.mxu0 0.0
      %460 = vmatpush1.msra.mxu0 0.0
      %461 = vmatprep.subr.mxu0 0.0
      %462 = vmatpush1.msra.mxu0 0.0
      %463 = vmatprep.subr.mxu0 0.0
      %464 = vmatpush1.msra.mxu0 0.0
      %465 = vmatprep.subr.mxu0 0.0
      %466 = vmatpush1.msra.mxu0 0.0
      %467 = vmatprep.subr.mxu0 0.0
      %468 = vmatpush1.msra.mxu0 0.0
      %469 = vmatprep.subr.mxu0 0.0
      %470 = vmatpush1.msra.mxu0 0.0
      %471 = vmatprep.subr.mxu0 0.0
      %472 = vmatpush1.msra.mxu0 0.0
      %473 = vmatprep.subr.mxu0 0.0
      %474 = vmatpush1.msra.mxu0 0.0
      %475 = vmatprep.subr.mxu0 0.0
      %476 = vmatpush1.msra.mxu0 0.0
      %477 = vmatprep.subr.mxu0 0.0
      %478 = vmatpush1.msra.mxu0 0.0
      %479 = vmatprep.subr.mxu0 0.0
      %480 = vmatpush1.msra.mxu0 0.0
      %481 = vmatprep.subr.mxu0 0.0
      %482 = vmatpush1.msra.mxu0 0.0
      %483 = vmatprep.subr.mxu0 0.0
      %484 = vmatpush1.msra.mxu0 0.0
      %485 = vmatprep.subr.mxu0 0.0
      %486 = vmatpush1.msra.mxu0 0.0
      %487 = vmatprep.subr.mxu0 0.0
      %488 = vmatpush1.msra.mxu0 0.0
      %489 = vmatprep.mubr.f32.mxu0 0.0
      %490 = vmatmul.mubr.f32.gmra.mrb[0].mxu0 %v423
      %v491 = vpop.f32.mrb[0].mxu0
      %v492 = vadd.f32 %v419, %v491
      %v493 = vpop.f32.mrb[0].mxu0
      %494 = vdwg.mxu0
      %v495 = vtanh.pop %v492
      %vm496 = vcmask 130048
      %v498 = vsel %vm496, %v495, 0
      %500 = vmatprep.subr.mxu0 0.0
      %501 = vmatpush1.xpose.msra.mxu0 %v498
      %502 = vmatprep.subr.mxu0 0.0
      %503 = vmatpush1.xpose.msra.mxu0 0.0
      %504 = vmatprep.subr.mxu0 0.0
      %505 = vmatpush1.xpose.msra.mxu0 0.0
      %506 = vmatprep.subr.mxu0 0.0
      %507 = vmatpush1.xpose.msra.mxu0 0.0
      %508 = vmatprep.subr.mxu0 0.0
      %509 = vmatpush1.xpose.msra.mxu0 0.0
      %510 = vmatprep.subr.mxu0 0.0
      %511 = vmatpush1.xpose.msra.mxu0 0.0
      %512 = vmatprep.subr.mxu0 0.0
      %513 = vmatpush1.xpose.msra.mxu0 0.0
      %514 = vmatprep.subr.mxu0 0.0
      %515 = vmatpush1.xpose.msra.mxu0 0.0
      %516 = vmatprep.subr.mxu0 0.0
      %517 = vmatpush1.xpose.msra.mxu0 0.0
      %518 = vmatprep.subr.mxu0 0.0
      %519 = vmatpush1.xpose.msra.mxu0 0.0
      %520 = vmatprep.subr.mxu0 0.0
      %521 = vmatpush1.xpose.msra.mxu0 0.0
      %522 = vmatprep.subr.mxu0 0.0
      %523 = vmatpush1.xpose.msra.mxu0 0.0
      %524 = vmatprep.subr.mxu0 0.0
      %525 = vmatpush1.xpose.msra.mxu0 0.0
      %526 = vmatprep.subr.mxu0 0.0
      %527 = vmatpush1.xpose.msra.mxu0 0.0
      %528 = vmatprep.subr.mxu0 0.0
      %529 = vmatpush1.xpose.msra.mxu0 0.0
      %530 = vmatprep.subr.mxu0 0.0
      %531 = vmatpush1.xpose.msra.mxu0 0.0
      %532 = vmatprep.subr.mxu0 0.0
      %533 = vmatpush1.xpose.msra.mxu0 0.0
      %534 = vmatprep.subr.mxu0 0.0
      %535 = vmatpush1.xpose.msra.mxu0 0.0
      %536 = vmatprep.subr.mxu0 0.0
      %537 = vmatpush1.xpose.msra.mxu0 0.0
      %538 = vmatprep.subr.mxu0 0.0
      %539 = vmatpush1.xpose.msra.mxu0 0.0
      %540 = vmatprep.subr.mxu0 0.0
      %541 = vmatpush1.xpose.msra.mxu0 0.0
      %542 = vmatprep.subr.mxu0 0.0
      %543 = vmatpush1.xpose.msra.mxu0 0.0
      %544 = vmatprep.subr.mxu0 0.0
      %545 = vmatpush1.xpose.msra.mxu0 0.0
      %546 = vmatprep.subr.mxu0 0.0
      %547 = vmatpush1.xpose.msra.mxu0 0.0
      %548 = vmatprep.subr.mxu0 0.0
      %549 = vmatpush1.xpose.msra.mxu0 0.0
      %550 = vmatprep.subr.mxu0 0.0
      %551 = vmatpush1.xpose.msra.mxu0 0.0
      %552 = vmatprep.subr.mxu0 0.0
      %553 = vmatpush1.xpose.msra.mxu0 0.0
      %554 = vmatprep.subr.mxu0 0.0
      %555 = vmatpush1.xpose.msra.mxu0 0.0
      %556 = vmatprep.subr.mxu0 0.0
      %557 = vmatpush1.xpose.msra.mxu0 0.0
      %558 = vmatprep.subr.mxu0 0.0
      %559 = vmatpush1.xpose.msra.mxu0 0.0
      %560 = vmatprep.subr.mxu0 0.0
      %561 = vmatpush1.xpose.msra.mxu0 0.0
      %562 = vmatprep.subr.mxu0 0.0
      %563 = vmatpush1.xpose.msra.mxu0 0.0
      %564 = vmatprep.mubr.f32.mxu0 0.0
      %565 = vmatmul.mubr.f32.gmra.mrb[0].mxu0 %v498
      %v566 = vpop.f32.mrb[0].mxu0
      %v567 = vadd.f32 0.0, %v566
      %v568 = vpop.f32.mrb[0].mxu0
      %569 = vdwg.mxu0
      %v570 = vand.u32 2147483647, %v567
      %v571 = vlaneseq
      %v572 = vshrl.u32 %v571, 7
      %v573 = vlaneseq
      %v574 = vand.u32 %v573, 127
      %vm575 = vcmp.eq.s32.totalorder %v572, %v574
      %v576 = vsel %vm575, 1.0, 0.0
      %v577 = vadd.f32 %v570, %v576
      %vm578 = vcmask 27648
      %v579 = vsel %vm578, %v577, 0.0
      %580 = vadd.xlane.f32.xlu0 %v579
      %v581 = vpop.xlane.xlu0 %580
      %v582 = vrsqrt.pop %v581
      %v583 = vrot.slane %v579, 4
      %v584 = vadd.f32 %v579, %v583
      %v585 = vrot.slane %v584, 2
      %v586 = vadd.f32 %v584, %v585
      %v587 = vrot.slane %v586, 1
      %v588 = vadd.f32 %v586, %v587
      %v589 = vrsqrt.pop %v588
      %v590 = vmul.f32 %v577, %v582
      %v591 = vmul.f32 %v590, %v589
      %v592 = vadd.f32 %v409, %v591
      %v593 = vmul.f32 %v592, 0.5
      %vm594 = vcmask 31744
      %v596 = vsel %vm594, %v593, 0
      %vm598 = vcmask 1043456
      %v599 = vsel %vm598, %v495, 0
      %601 = vmatprep.subr.mxu0 0.0
      %602 = vmatpush1.msra.mxu0 %v599
      %603 = vmatprep.subr.mxu0 0.0
      %604 = vmatpush1.msra.mxu0 0.0
      %605 = vmatprep.subr.mxu0 0.0
      %606 = vmatpush1.msra.mxu0 0.0
      %607 = vmatprep.subr.mxu0 0.0
      %608 = vmatpush1.msra.mxu0 0.0
      %609 = vmatprep.subr.mxu0 0.0
      %610 = vmatpush1.msra.mxu0 0.0
      %611 = vmatprep.subr.mxu0 0.0
      %612 = vmatpush1.msra.mxu0 0.0
      %613 = vmatprep.subr.mxu0 0.0
      %614 = vmatpush1.msra.mxu0 0.0
      %615 = vmatprep.subr.mxu0 0.0
      %616 = vmatpush1.msra.mxu0 0.0
      %617 = vmatprep.subr.mxu0 0.0
      %618 = vmatpush1.msra.mxu0 0.0
      %619 = vmatprep.subr.mxu0 0.0
      %620 = vmatpush1.msra.mxu0 0.0
      %621 = vmatprep.subr.mxu0 0.0
      %622 = vmatpush1.msra.mxu0 0.0
      %623 = vmatprep.subr.mxu0 0.0
      %624 = vmatpush1.msra.mxu0 0.0
      %625 = vmatprep.subr.mxu0 0.0
      %626 = vmatpush1.msra.mxu0 0.0
      %627 = vmatprep.subr.mxu0 0.0
      %628 = vmatpush1.msra.mxu0 0.0
      %629 = vmatprep.subr.mxu0 0.0
      %630 = vmatpush1.msra.mxu0 0.0
      %631 = vmatprep.subr.mxu0 0.0
      %632 = vmatpush1.msra.mxu0 0.0
      %633 = vmatprep.subr.mxu0 0.0
      %634 = vmatpush1.msra.mxu0 0.0
      %635 = vmatprep.subr.mxu0 0.0
      %636 = vmatpush1.msra.mxu0 0.0
      %637 = vmatprep.subr.mxu0 0.0
      %638 = vmatpush1.msra.mxu0 0.0
      %639 = vmatprep.subr.mxu0 0.0
      %640 = vmatpush1.msra.mxu0 0.0
      %641 = vmatprep.subr.mxu0 0.0
      %642 = vmatpush1.msra.mxu0 0.0
      %643 = vmatprep.subr.mxu0 0.0
      %644 = vmatpush1.msra.mxu0 0.0
      %645 = vmatprep.subr.mxu0 0.0
      %646 = vmatpush1.msra.mxu0 0.0
      %647 = vmatprep.subr.mxu0 0.0
      %648 = vmatpush1.msra.mxu0 0.0
      %649 = vmatprep.subr.mxu0 0.0
      %650 = vmatpush1.msra.mxu0 0.0
      %651 = vmatprep.subr.mxu0 0.0
      %652 = vmatpush1.msra.mxu0 0.0
      %653 = vmatprep.subr.mxu0 0.0
      %654 = vmatpush1.msra.mxu0 0.0
      %655 = vmatprep.subr.mxu0 0.0
      %656 = vmatpush1.msra.mxu0 0.0
      %657 = vmatprep.subr.mxu0 0.0
      %658 = vmatpush1.msra.mxu0 0.0
      %659 = vmatprep.subr.mxu0 0.0
      %660 = vmatpush1.msra.mxu0 0.0
      %661 = vmatprep.subr.mxu0 0.0
      %662 = vmatpush1.msra.mxu0 0.0
      %663 = vmatprep.subr.mxu0 0.0
      %664 = vmatpush1.msra.mxu0 0.0
      %665 = vmatprep.mubr.f32.mxu0 0.0
      %666 = vmatmul.mubr.f32.gmra.mrb[0].mxu0 %v596
      %v667 = vpop.f32.mrb[0].mxu0
      %v668 = vadd.f32 0.0, %v667
      %v669 = vpop.f32.mrb[0].mxu0
      %670 = vdwg.mxu0
      %v671 = vld [vmem:[%s4] sm:$0xff]
      %v672 = vld [vmem:[%s4 + $0x8] sm:$0xff]
      %v673 = vld [vmem:[%s5] sm:$0x1]
      %v675 = vlaneseq
      %v676 = vshrl.u32 %v675, 7
      %v677 = vsub.s32 0, %v676
      %v678 = vrot.slane %v673, %v677
      %v681 = vsel %vm496, %v668, 0
      %683 = vmatprep.subr.mxu0 0.0
      %684 = vmatpush1.msra.mxu0 %v671
      %685 = vmatprep.subr.mxu0 0.0
      %686 = vmatpush1.msra.mxu0 %v672
      %687 = vmatprep.subr.mxu0 0.0
      %688 = vmatpush1.msra.mxu0 0.0
      %689 = vmatprep.subr.mxu0 0.0
      %690 = vmatpush1.msra.mxu0 0.0
      %691 = vmatprep.subr.mxu0 0.0
      %692 = vmatpush1.msra.mxu0 0.0
      %693 = vmatprep.subr.mxu0 0.0
      %694 = vmatpush1.msra.mxu0 0.0
      %695 = vmatprep.subr.mxu0 0.0
      %696 = vmatpush1.msra.mxu0 0.0
      %697 = vmatprep.subr.mxu0 0.0
      %698 = vmatpush1.msra.mxu0 0.0
      %699 = vmatprep.subr.mxu0 0.0
      %700 = vmatpush1.msra.mxu0 0.0
      %701 = vmatprep.subr.mxu0 0.0
      %702 = vmatpush1.msra.mxu0 0.0
      %703 = vmatprep.subr.mxu0 0.0
      %704 = vmatpush1.msra.mxu0 0.0
      %705 = vmatprep.subr.mxu0 0.0
      %706 = vmatpush1.msra.mxu0 0.0
      %707 = vmatprep.subr.mxu0 0.0
      %708 = vmatpush1.msra.mxu0 0.0
      %709 = vmatprep.subr.mxu0 0.0
      %710 = vmatpush1.msra.mxu0 0.0
      %711 = vmatprep.subr.mxu0 0.0
      %712 = vmatpush1.msra.mxu0 0.0
      %713 = vmatprep.subr.mxu0 0.0
      %714 = vmatpush1.msra.mxu0 0.0
      %715 = vmatprep.subr.mxu0 0.0
      %716 = vmatpush1.msra.mxu0 0.0
      %717 = vmatprep.subr.mxu0 0.0
      %718 = vmatpush1.msra.mxu0 0.0
      %719 = vmatprep.subr.mxu0 0.0
      %720 = vmatpush1.msra.mxu0 0.0
      %721 = vmatprep.subr.mxu0 0.0
      %722 = vmatpush1.msra.mxu0 0.0
      %723 = vmatprep.subr.mxu0 0.0
      %724 = vmatpush1.msra.mxu0 0.0
      %725 = vmatprep.subr.mxu0 0.0
      %726 = vmatpush1.msra.mxu0 0.0
      %727 = vmatprep.subr.mxu0 0.0
      %728 = vmatpush1.msra.mxu0 0.0
      %729 = vmatprep.subr.mxu0 0.0
      %730 = vmatpush1.msra.mxu0 0.0
      %731 = vmatprep.subr.mxu0 0.0
      %732 = vmatpush1.msra.mxu0 0.0
      %733 = vmatprep.subr.mxu0 0.0
      %734 = vmatpush1.msra.mxu0 0.0
      %735 = vmatprep.subr.mxu0 0.0
      %736 = vmatpush1.msra.mxu0 0.0
      %737 = vmatprep.subr.mxu0 0.0
      %738 = vmatpush1.msra.mxu0 0.0
      %739 = vmatprep.subr.mxu0 0.0
      %740 = vmatpush1.msra.mxu0 0.0
      %741 = vmatprep.subr.mxu0 0.0
      %742 = vmatpush1.msra.mxu0 0.0
      %743 = vmatprep.subr.mxu0 0.0
      %744 = vmatpush1.msra.mxu0 0.0
      %745 = vmatprep.subr.mxu0 0.0
      %746 = vmatpush1.msra.mxu0 0.0
      %747 = vmatprep.mubr.f32.mxu0 0.0
      %748 = vmatmul.mubr.f32.gmra.mrb[0].mxu0 %v681
      %v749 = vpop.f32.mrb[0].mxu0
      %v750 = vadd.f32 %v678, %v749
      %v751 = vpop.f32.mrb[0].mxu0
      %752 = vdwg.mxu0
      %v753 = vmax.f32 %v750, 0.0
      %v755 = vsel %vm598, %v753, 0
      %757 = vmatprep.subr.mxu0 0.0
      %758 = vmatpush1.msra.mxu0 %v755
      %759 = vmatprep.subr.mxu0 0.0
      %760 = vmatpush1.msra.mxu0 0.0
      %761 = vmatprep.subr.mxu0 0.0
      %762 = vmatpush1.msra.mxu0 0.0
      %763 = vmatprep.subr.mxu0 0.0
      %764 = vmatpush1.msra.mxu0 0.0
      %765 = vmatprep.subr.mxu0 0.0
      %766 = vmatpush1.msra.mxu0 0.0
      %767 = vmatprep.subr.mxu0 0.0
      %768 = vmatpush1.msra.mxu0 0.0
      %769 = vmatprep.subr.mxu0 0.0
      %770 = vmatpush1.msra.mxu0 0.0
      %771 = vmatprep.subr.mxu0 0.0
      %772 = vmatpush1.msra.mxu0 0.0
      %773 = vmatprep.subr.mxu0 0.0
      %774 = vmatpush1.msra.mxu0 0.0
      %775 = vmatprep.subr.mxu0 0.0
      %776 = vmatpush1.msra.mxu0 0.0
      %777 = vmatprep.subr.mxu0 0.0
      %778 = vmatpush1.msra.mxu0 0.0
      %779 = vmatprep.subr.mxu0 0.0
      %780 = vmatpush1.msra.mxu0 0.0
      %781 = vmatprep.subr.mxu0 0.0
      %782 = vmatpush1.msra.mxu0 0.0
      %783 = vmatprep.subr.mxu0 0.0
      %784 = vmatpush1.msra.mxu0 0.0
      %785 = vmatprep.subr.mxu0 0.0
      %786 = vmatpush1.msra.mxu0 0.0
      %787 = vmatprep.subr.mxu0 0.0
      %788 = vmatpush1.msra.mxu0 0.0
      %789 = vmatprep.subr.mxu0 0.0
      %790 = vmatpush1.msra.mxu0 0.0
      %791 = vmatprep.subr.mxu0 0.0
      %792 = vmatpush1.msra.mxu0 0.0
      %793 = vmatprep.subr.mxu0 0.0
      %794 = vmatpush1.msra.mxu0 0.0
      %795 = vmatprep.subr.mxu0 0.0
      %796 = vmatpush1.msra.mxu0 0.0
      %797 = vmatprep.subr.mxu0 0.0
      %798 = vmatpush1.msra.mxu0 0.0
      %799 = vmatprep.subr.mxu0 0.0
      %800 = vmatpush1.msra.mxu0 0.0
      %801 = vmatprep.subr.mxu0 0.0
      %802 = vmatpush1.msra.mxu0 0.0
      %803 = vmatprep.subr.mxu0 0.0
      %804 = vmatpush1.msra.mxu0 0.0
      %805 = vmatprep.subr.mxu0 0.0
      %806 = vmatpush1.msra.mxu0 0.0
      %807 = vmatprep.subr.mxu0 0.0
      %808 = vmatpush1.msra.mxu0 0.0
      %809 = vmatprep.subr.mxu0 0.0
      %810 = vmatpush1.msra.mxu0 0.0
      %811 = vmatprep.subr.mxu0 0.0
      %812 = vmatpush1.msra.mxu0 0.0
      %813 = vmatprep.subr.mxu0 0.0
      %814 = vmatpush1.msra.mxu0 0.0
      %815 = vmatprep.subr.mxu0 0.0
      %816 = vmatpush1.msra.mxu0 0.0
      %817 = vmatprep.subr.mxu0 0.0
      %818 = vmatpush1.msra.mxu0 0.0
      %819 = vmatprep.subr.mxu0 0.0
      %820 = vmatpush1.msra.mxu0 0.0
      %821 = vmatprep.mubr.f32.mxu0 0.0
      %822 = vmatmul.mubr.f32.gmra.mrb[0].mxu0 %v596
      %v823 = vpop.f32.mrb[0].mxu0
      %v824 = vadd.f32 0.0, %v823
      %v825 = vpop.f32.mrb[0].mxu0
      %826 = vdwg.mxu0
      %v827 = vld [vmem:[%s6] sm:$0xff]
      %v828 = vld [vmem:[%s6 + $0x8] sm:$0xff]
      %v829 = vld [vmem:[%s7] sm:$0x1]
      %v831 = vlaneseq
      %v832 = vshrl.u32 %v831, 7
      %v833 = vsub.s32 0, %v832
      %v834 = vrot.slane %v829, %v833
      %v837 = vsel %vm496, %v824, 0
      %839 = vmatprep.subr.mxu0 0.0
      %840 = vmatpush1.msra.mxu0 %v827
      %841 = vmatprep.subr.mxu0 0.0
      %842 = vmatpush1.msra.mxu0 %v828
      %843 = vmatprep.subr.mxu0 0.0
      %844 = vmatpush1.msra.mxu0 0.0
      %845 = vmatprep.subr.mxu0 0.0
      %846 = vmatpush1.msra.mxu0 0.0
      %847 = vmatprep.subr.mxu0 0.0
      %848 = vmatpush1.msra.mxu0 0.0
      %849 = vmatprep.subr.mxu0 0.0
      %850 = vmatpush1.msra.mxu0 0.0
      %851 = vmatprep.subr.mxu0 0.0
      %852 = vmatpush1.msra.mxu0 0.0
      %853 = vmatprep.subr.mxu0 0.0
      %854 = vmatpush1.msra.mxu0 0.0
      %855 = vmatprep.subr.mxu0 0.0
      %856 = vmatpush1.msra.mxu0 0.0
      %857 = vmatprep.subr.mxu0 0.0
      %858 = vmatpush1.msra.mxu0 0.0
      %859 = vmatprep.subr.mxu0 0.0
      %860 = vmatpush1.msra.mxu0 0.0
      %861 = vmatprep.subr.mxu0 0.0
      %862 = vmatpush1.msra.mxu0 0.0
      %863 = vmatprep.subr.mxu0 0.0
      %864 = vmatpush1.msra.mxu0 0.0
      %865 = vmatprep.subr.mxu0 0.0
      %866 = vmatpush1.msra.mxu0 0.0
      %867 = vmatprep.subr.mxu0 0.0
      %868 = vmatpush1.msra.mxu0 0.0
      %869 = vmatprep.subr.mxu0 0.0
      %870 = vmatpush1.msra.mxu0 0.0
      %871 = vmatprep.subr.mxu0 0.0
      %872 = vmatpush1.msra.mxu0 0.0
      %873 = vmatprep.subr.mxu0 0.0
      %874 = vmatpush1.msra.mxu0 0.0
      %875 = vmatprep.subr.mxu0 0.0
      %876 = vmatpush1.msra.mxu0 0.0
      %877 = vmatprep.subr.mxu0 0.0
      %878 = vmatpush1.msra.mxu0 0.0
      %879 = vmatprep.subr.mxu0 0.0
      %880 = vmatpush1.msra.mxu0 0.0
      %881 = vmatprep.subr.mxu0 0.0
      %882 = vmatpush1.msra.mxu0 0.0
      %883 = vmatprep.subr.mxu0 0.0
      %884 = vmatpush1.msra.mxu0 0.0
      %885 = vmatprep.subr.mxu0 0.0
      %886 = vmatpush1.msra.mxu0 0.0
      %887 = vmatprep.subr.mxu0 0.0
      %888 = vmatpush1.msra.mxu0 0.0
      %889 = vmatprep.subr.mxu0 0.0
      %890 = vmatpush1.msra.mxu0 0.0
      %891 = vmatprep.subr.mxu0 0.0
      %892 = vmatpush1.msra.mxu0 0.0
      %893 = vmatprep.subr.mxu0 0.0
      %894 = vmatpush1.msra.mxu0 0.0
      %895 = vmatprep.subr.mxu0 0.0
      %896 = vmatpush1.msra.mxu0 0.0
      %897 = vmatprep.subr.mxu0 0.0
      %898 = vmatpush1.msra.mxu0 0.0
      %899 = vmatprep.subr.mxu0 0.0
      %900 = vmatpush1.msra.mxu0 0.0
      %901 = vmatprep.subr.mxu0 0.0
      %902 = vmatpush1.msra.mxu0 0.0
      %903 = vmatprep.mubr.f32.mxu0 0.0
      %904 = vmatmul.mubr.f32.gmra.mrb[0].mxu0 %v837
      %v905 = vpop.f32.mrb[0].mxu0
      %v906 = vadd.f32 %v834, %v905
      %v907 = vpop.f32.mrb[0].mxu0
      %908 = vdwg.mxu0
      %v909 = vmax.f32 %v906, 0.0
      %vm910 = vcmask 125952
      %911 = vst.msk [vmem:[%s404] sm:$0xf] %vm910, %v909
      %v912 = vsel %vm910, %v909, -inf
      %v913 = vrot.slane %v912, 4
      %v914 = vmax.f32 %v912, %v913
      %v915 = vrot.slane %v914, 2
      %v916 = vmax.f32 %v914, %v915
      %v917 = vrot.slane %v916, 1
      %v918 = vmax.f32 %v916, %v917
      %v919 = vld [vmem:[%s8] sm:$0xff]
      %v920 = vld [vmem:[%s8 + $0x8] sm:$0xff]
      %v921 = vld [vmem:[%s9] sm:$0x1]
      %v923 = vsel %vm496, %v918, 0
      %925 = vmatprep.subr.mxu0 0.0
      %926 = vmatpush1.msra.mxu0 %v919
      %927 = vmatprep.subr.mxu0 0.0
      %928 = vmatpush1.msra.mxu0 %v920
      %929 = vmatprep.subr.mxu0 0.0
      %930 = vmatpush1.msra.mxu0 0.0
      %931 = vmatprep.subr.mxu0 0.0
      %932 = vmatpush1.msra.mxu0 0.0
      %933 = vmatprep.subr.mxu0 0.0
      %934 = vmatpush1.msra.mxu0 0.0
      %935 = vmatprep.subr.mxu0 0.0
      %936 = vmatpush1.msra.mxu0 0.0
      %937 = vmatprep.subr.mxu0 0.0
      %938 = vmatpush1.msra.mxu0 0.0
      %939 = vmatprep.subr.mxu0 0.0
      %940 = vmatpush1.msra.mxu0 0.0
      %941 = vmatprep.subr.mxu0 0.0
      %942 = vmatpush1.msra.mxu0 0.0
      %943 = vmatprep.subr.mxu0 0.0
      %944 = vmatpush1.msra.mxu0 0.0
      %945 = vmatprep.subr.mxu0 0.0
      %946 = vmatpush1.msra.mxu0 0.0
      %947 = vmatprep.subr.mxu0 0.0
      %948 = vmatpush1.msra.mxu0 0.0
      %949 = vmatprep.subr.mxu0 0.0
      %950 = vmatpush1.msra.mxu0 0.0
      %951 = vmatprep.subr.mxu0 0.0
      %952 = vmatpush1.msra.mxu0 0.0
      %953 = vmatprep.subr.mxu0 0.0
      %954 = vmatpush1.msra.mxu0 0.0
      %955 = vmatprep.subr.mxu0 0.0
      %956 = vmatpush1.msra.mxu0 0.0
      %957 = vmatprep.subr.mxu0 0.0
      %958 = vmatpush1.msra.mxu0 0.0
      %959 = vmatprep.subr.mxu0 0.0
      %960 = vmatpush1.msra.mxu0 0.0
      %961 = vmatprep.subr.mxu0 0.0
      %962 = vmatpush1.msra.mxu0 0.0
      %963 = vmatprep.subr.mxu0 0.0
      %964 = vmatpush1.msra.mxu0 0.0
      %965 = vmatprep.subr.mxu0 0.0
      %966 = vmatpush1.msra.mxu0 0.0
      %967 = vmatprep.subr.mxu0 0.0
      %968 = vmatpush1.msra.mxu0 0.0
      %969 = vmatprep.subr.mxu0 0.0
      %970 = vmatpush1.msra.mxu0 0.0
      %971 = vmatprep.subr.mxu0 0.0
      %972 = vmatpush1.msra.mxu0 0.0
      %973 = vmatprep.subr.mxu0 0.0
      %974 = vmatpush1.msra.mxu0 0.0
      %975 = vmatprep.subr.mxu0 0.0
      %976 = vmatpush1.msra.mxu0 0.0
      %977 = vmatprep.subr.mxu0 0.0
      %978 = vmatpush1.msra.mxu0 0.0
      %979 = vmatprep.subr.mxu0 0.0
      %980 = vmatpush1.msra.mxu0 0.0
      %981 = vmatprep.subr.mxu0 0.0
      %982 = vmatpush1.msra.mxu0 0.0
      %983 = vmatprep.subr.mxu0 0.0
      %984 = vmatpush1.msra.mxu0 0.0
      %985 = vmatprep.subr.mxu0 0.0
      %986 = vmatpush1.msra.mxu0 0.0
      %987 = vmatprep.subr.mxu0 0.0
      %988 = vmatpush1.msra.mxu0 0.0
      %989 = vmatprep.mubr.f32.mxu0 0.0
      %990 = vmatmul.mubr.f32.gmra.mrb[0].mxu0 %v923
      %v991 = vpop.f32.mrb[0].mxu0
      %v992 = vadd.f32 %v921, %v991
      %v993 = vpop.f32.mrb[0].mxu0
      %994 = vdwg.mxu0
      %v995 = vtanh.pop %v992
      %vm996 = vcmask 122880
      %997 = vst.msk [vmem:[%s407] sm:$0x1] %vm996, %v995
      %p998 = scmp.lt.s32.totalorder %s23, 1
      %s999 = scalar_select %p998, %s23, 1
      %s1000 = smul.addr %s999, 4
      %s1001 = scalar_lea.vmem %s10, %s1000
      %p1002 = scmp.lt.s32.totalorder %s23, 1
      %s1003 = scalar_select %p1002, %s23, 1
      %s1004 = scalar_lea.vmem %s11, %s1003
      // Predicated region
      $region61: #{multigras_forward.12} parent=59 // pred_check
        %p1005 = pneg %p261
      $region62: #{multigras_forward.12} parent=59 // pred_check_branch
        %1007 = sbr.rel (%p1005) target = $region64
      $region63: #{multigras_forward.12} parent=59 // pred_region
        _
      $region64: #{multigras_forward.12} parent=59 // pred_fallthru
        _
      // Predicated region
      $region65: #{multigras_forward.12} parent=59 // pred_check
        %p1008 = pneg %p287
      $region66: #{multigras_forward.12} parent=59 // pred_check_branch
        %1010 = sbr.rel (%p1008) target = $region68
      $region67: #{multigras_forward.12} parent=59 // pred_region
        _
      $region68: #{multigras_forward.12} parent=59 // pred_fallthru
        _
    $region60: #{multigras_forward.12} parent=5 // pred_fallthru
      _
    %p1011 = scmp.le.s32.totalorder 2, %s18
    // Predicated region
    $region69: #{multigras_forward.12} parent=5 // pred_check
      %p1012 = pneg %p1011
    $region70: #{multigras_forward.12} parent=5 // pred_check_branch
      %1014 = sbr.rel (%p1012) target = $region72
    $region71: #{multigras_forward.12} parent=5 // pred_region
      %s1015 = ssub.s32 %s18, 2
      // Predicated region
      $region73: #{multigras_forward.12} parent=71 // pred_check
        %p1016 = pneg %p267
      $region74: #{multigras_forward.12} parent=71 // pred_check_branch
        %1018 = sbr.rel (%p1016) target = $region76
      $region75: #{multigras_forward.12} parent=71 // pred_region
        %p1019 = scmp.lt.s32.totalorder %s24, 1
        %s1020 = scalar_select %p1019, %s24, 1
        %s1021 = smul.addr %s1020, 4
        %s1022 = scalar_lea.vmem %s10, %s1021
      $region76: #{multigras_forward.12} parent=71 // pred_fallthru
        _
      // Predicated region
      $region77: #{multigras_forward.12} parent=71 // pred_check
        %p1023 = pneg %p293
      $region78: #{multigras_forward.12} parent=71 // pred_check_branch
        %1025 = sbr.rel (%p1023) target = $region80
      $region79: #{multigras_forward.12} parent=71 // pred_region
        %p1026 = scmp.lt.s32.totalorder %s24, 1
        %s1027 = scalar_select %p1026, %s24, 1
        %s1028 = scalar_lea.vmem %s11, %s1027
      $region80: #{multigras_forward.12} parent=71 // pred_fallthru
        _
    $region72: #{multigras_forward.12} parent=5 // pred_fallthru
      _
  $region6: #{multigras_forward.12} parent=0 // loop_footer
    %s22 = sadd.s32 1, %s18
  $region7: #{multigras_forward.12} parent=0 // loop_footer_branch
    %17 = sbr.rel target = $region3
  $region8: #{multigras_forward.12} parent=0 // loop_exit
    _

// kernel: multigras_forward.13
$region0: #{multigras_forward.13}
  #allocation0 [shape = 'u32[]', space=smem, size = 0x4, offset = 0x4, fixed_abs, tag = 'smem constant byte address 0x4 - core index']
  #allocation1 [shape = 'u32[144,128]{1,0:T(1,128)}', space=vmem, size = 0x12000, scoped, tag = 'internal scratch']
  %s0 = inlined_call_operand.vmem [shape: f32[8,16], index: 0, kind: input, shape index: {}]
  %s1 = inlined_call_operand.vmem [shape: f32[8,16], index: 1, kind: input, shape index: {}]
  %s2 = inlined_call_operand.vmem [shape: f32[8,16], index: 2, kind: input, shape index: {}]
  %s3 = inlined_call_operand.vmem [shape: f32[16,16], index: 3, kind: input, shape index: {}]
  %s4 = inlined_call_operand.vmem [shape: f32[1,16], index: 4, kind: input, shape index: {}]
  %s5 = inlined_call_operand.vmem [shape: f32[16,16], index: 5, kind: input, shape index: {}]
  %s6 = inlined_call_operand.vmem [shape: f32[16,16], index: 6, kind: input, shape index: {}]
  %s7 = inlined_call_operand.vmem [shape: f32[16,16], index: 7, kind: input, shape index: {}]
  %s8 = inlined_call_operand.vmem [shape: f32[1,16], index: 8, kind: input, shape index: {}]
  %s9 = inlined_call_operand.vmem [shape: f32[16,2], index: 9, kind: input, shape index: {}]
  %s10 = inlined_call_operand.vmem [shape: f32[1,2], index: 10, kind: input, shape index: {}]
  %s11 = inlined_call_operand.vmem [shape: f32[8,2], index: 11, kind: output, shape index: {}]
  %s12 = sld [smem:[#allocation0]]
  $region54: #{multigras_forward.13} parent=0
    _
  %s14 = ssub.s32 1, %s12
  %s15 = scalar_select 0, %s14, %s12
  // Predicated region
  $region2: #{multigras_forward.13} parent=0 // pred_check
    _
  $region3: #{multigras_forward.13} parent=0 // pred_check_branch
    %17 = sbr.rel (0) target = $region5
  $region4: #{multigras_forward.13} parent=0 // pred_region
    _
  $region5: #{multigras_forward.13} parent=0 // pred_fallthru
    _
  // Predicated region
  $region6: #{multigras_forward.13} parent=0 // pred_check
    _
  $region7: #{multigras_forward.13} parent=0 // pred_check_branch
    %19 = sbr.rel (0) target = $region9
  $region8: #{multigras_forward.13} parent=0 // pred_region
    _
  $region9: #{multigras_forward.13} parent=0 // pred_fallthru
    _
  // Predicated region
  $region10: #{multigras_forward.13} parent=0 // pred_check
    _
  $region11: #{multigras_forward.13} parent=0 // pred_check_branch
    %21 = sbr.rel (0) target = $region13
  $region12: #{multigras_forward.13} parent=0 // pred_region
    _
  $region13: #{multigras_forward.13} parent=0 // pred_fallthru
    _
  // Predicated region
  $region14: #{multigras_forward.13} parent=0 // pred_check
    _
  $region15: #{multigras_forward.13} parent=0 // pred_check_branch
    %23 = sbr.rel (0) target = $region17
  $region16: #{multigras_forward.13} parent=0 // pred_region
    _
  $region17: #{multigras_forward.13} parent=0 // pred_fallthru
    _
  // Predicated region
  $region18: #{multigras_forward.13} parent=0 // pred_check
    _
  $region19: #{multigras_forward.13} parent=0 // pred_check_branch
    %25 = sbr.rel (0) target = $region21
  $region20: #{multigras_forward.13} parent=0 // pred_region
    _
  $region21: #{multigras_forward.13} parent=0 // pred_fallthru
    _
  // Predicated region
  $region22: #{multigras_forward.13} parent=0 // pred_check
    _
  $region23: #{multigras_forward.13} parent=0 // pred_check_branch
    %27 = sbr.rel (0) target = $region25
  $region24: #{multigras_forward.13} parent=0 // pred_region
    _
  $region25: #{multigras_forward.13} parent=0 // pred_fallthru
    _
  // Predicated region
  $region26: #{multigras_forward.13} parent=0 // pred_check
    _
  $region27: #{multigras_forward.13} parent=0 // pred_check_branch
    %29 = sbr.rel (0) target = $region29
  $region28: #{multigras_forward.13} parent=0 // pred_region
    _
  $region29: #{multigras_forward.13} parent=0 // pred_fallthru
    _
  // Predicated region
  $region30: #{multigras_forward.13} parent=0 // pred_check
    _
  $region31: #{multigras_forward.13} parent=0 // pred_check_branch
    %31 = sbr.rel (0) target = $region33
  $region32: #{multigras_forward.13} parent=0 // pred_region
    _
  $region33: #{multigras_forward.13} parent=0 // pred_fallthru
    _
  // Predicated region
  $region34: #{multigras_forward.13} parent=0 // pred_check
    _
  $region35: #{multigras_forward.13} parent=0 // pred_check_branch
    %33 = sbr.rel (0) target = $region37
  $region36: #{multigras_forward.13} parent=0 // pred_region
    _
  $region37: #{multigras_forward.13} parent=0 // pred_fallthru
    _
  // Predicated region
  $region38: #{multigras_forward.13} parent=0 // pred_check
    _
  $region39: #{multigras_forward.13} parent=0 // pred_check_branch
    %35 = sbr.rel (0) target = $region41
  $region40: #{multigras_forward.13} parent=0 // pred_region
    _
  $region41: #{multigras_forward.13} parent=0 // pred_fallthru
    _
  // Predicated region
  $region42: #{multigras_forward.13} parent=0 // pred_check
    _
  $region43: #{multigras_forward.13} parent=0 // pred_check_branch
    %37 = sbr.rel (0) target = $region45
  $region44: #{multigras_forward.13} parent=0 // pred_region
    _
  $region45: #{multigras_forward.13} parent=0 // pred_fallthru
    _
  %v38 = vld [vmem:[%s0] sm:$0xff]
  %v39 = vld [vmem:[%s3] sm:$0xff]
  %v40 = vld [vmem:[%s3 + $0x8] sm:$0xff]
  %v41 = vld [vmem:[%s4] sm:$0x1]
  %v43 = vlaneseq
  %v44 = vshrl.u32 %v43, 7
  %v45 = vsub.s32 0, %v44
  %v46 = vrot.slane %v41, %v45
  %vm48 = vcmask 130048
  %v50 = vsel %vm48, %v38, 0
  %52 = vmatprep.subr.mxu0 0.0
  %53 = vmatpush1.msra.mxu0 %v39
  %54 = vmatprep.subr.mxu0 0.0
  %55 = vmatpush1.msra.mxu0 %v40
  %56 = vmatprep.subr.mxu0 0.0
  %57 = vmatpush1.msra.mxu0 0.0
  %58 = vmatprep.subr.mxu0 0.0
  %59 = vmatpush1.msra.mxu0 0.0
  %60 = vmatprep.subr.mxu0 0.0
  %61 = vmatpush1.msra.mxu0 0.0
  %62 = vmatprep.subr.mxu0 0.0
  %63 = vmatpush1.msra.mxu0 0.0
  %64 = vmatprep.subr.mxu0 0.0
  %65 = vmatpush1.msra.mxu0 0.0
  %66 = vmatprep.subr.mxu0 0.0
  %67 = vmatpush1.msra.mxu0 0.0
  %68 = vmatprep.subr.mxu0 0.0
  %69 = vmatpush1.msra.mxu0 0.0
  %70 = vmatprep.subr.mxu0 0.0
  %71 = vmatpush1.msra.mxu0 0.0
  %72 = vmatprep.subr.mxu0 0.0
  %73 = vmatpush1.msra.mxu0 0.0
  %74 = vmatprep.subr.mxu0 0.0
  %75 = vmatpush1.msra.mxu0 0.0
  %76 = vmatprep.subr.mxu0 0.0
  %77 = vmatpush1.msra.mxu0 0.0
  %78 = vmatprep.subr.mxu0 0.0
  %79 = vmatpush1.msra.mxu0 0.0
  %80 = vmatprep.subr.mxu0 0.0
  %81 = vmatpush1.msra.mxu0 0.0
  %82 = vmatprep.subr.mxu0 0.0
  %83 = vmatpush1.msra.mxu0 0.0
  %84 = vmatprep.subr.mxu0 0.0
  %85 = vmatpush1.msra.mxu0 0.0
  %86 = vmatprep.subr.mxu0 0.0
  %87 = vmatpush1.msra.mxu0 0.0
  %88 = vmatprep.subr.mxu0 0.0
  %89 = vmatpush1.msra.mxu0 0.0
  %90 = vmatprep.subr.mxu0 0.0
  %91 = vmatpush1.msra.mxu0 0.0
  %92 = vmatprep.subr.mxu0 0.0
  %93 = vmatpush1.msra.mxu0 0.0
  %94 = vmatprep.subr.mxu0 0.0
  %95 = vmatpush1.msra.mxu0 0.0
  %96 = vmatprep.subr.mxu0 0.0
  %97 = vmatpush1.msra.mxu0 0.0
  %98 = vmatprep.subr.mxu0 0.0
  %99 = vmatpush1.msra.mxu0 0.0
  %100 = vmatprep.subr.mxu0 0.0
  %101 = vmatpush1.msra.mxu0 0.0
  %102 = vmatprep.subr.mxu0 0.0
  %103 = vmatpush1.msra.mxu0 0.0
  %104 = vmatprep.subr.mxu0 0.0
  %105 = vmatpush1.msra.mxu0 0.0
  %106 = vmatprep.subr.mxu0 0.0
  %107 = vmatpush1.msra.mxu0 0.0
  %108 = vmatprep.subr.mxu0 0.0
  %109 = vmatpush1.msra.mxu0 0.0
  %110 = vmatprep.subr.mxu0 0.0
  %111 = vmatpush1.msra.mxu0 0.0
  %112 = vmatprep.subr.mxu0 0.0
  %113 = vmatpush1.msra.mxu0 0.0
  %114 = vmatprep.subr.mxu0 0.0
  %115 = vmatpush1.msra.mxu0 0.0
  %116 = vmatprep.mubr.f32.mxu0 0.0
  %117 = vmatmul.mubr.f32.gmra.mrb[0].mxu0 %v50
  %v118 = vpop.f32.mrb[0].mxu0
  %v119 = vadd.f32 %v46, %v118
  %v120 = vpop.f32.mrb[0].mxu0
  %121 = vdwg.mxu0
  %v122 = vtanh.pop %v119
  %v123 = vld [vmem:[%s5] sm:$0xff]
  %v124 = vld [vmem:[%s5 + $0x8] sm:$0xff]
  %v125 = vld [vmem:[%s1] sm:$0xff]
  %v126 = vld [vmem:[%s6] sm:$0xff]
  %v127 = vld [vmem:[%s6 + $0x8] sm:$0xff]
  %v129 = vsel %vm48, %v125, 0
  %131 = vmatprep.subr.mxu0 0.0
  %132 = vmatpush1.msra.mxu0 %v126
  %133 = vmatprep.subr.mxu0 0.0
  %134 = vmatpush1.msra.mxu0 %v127
  %135 = vmatprep.subr.mxu0 0.0
  %136 = vmatpush1.msra.mxu0 0.0
  %137 = vmatprep.subr.mxu0 0.0
  %138 = vmatpush1.msra.mxu0 0.0
  %139 = vmatprep.subr.mxu0 0.0
  %140 = vmatpush1.msra.mxu0 0.0
  %141 = vmatprep.subr.mxu0 0.0
  %142 = vmatpush1.msra.mxu0 0.0
  %143 = vmatprep.subr.mxu0 0.0
  %144 = vmatpush1.msra.mxu0 0.0
  %145 = vmatprep.subr.mxu0 0.0
  %146 = vmatpush1.msra.mxu0 0.0
  %147 = vmatprep.subr.mxu0 0.0
  %148 = vmatpush1.msra.mxu0 0.0
  %149 = vmatprep.subr.mxu0 0.0
  %150 = vmatpush1.msra.mxu0 0.0
  %151 = vmatprep.subr.mxu0 0.0
  %152 = vmatpush1.msra.mxu0 0.0
  %153 = vmatprep.subr.mxu0 0.0
  %154 = vmatpush1.msra.mxu0 0.0
  %155 = vmatprep.subr.mxu0 0.0
  %156 = vmatpush1.msra.mxu0 0.0
  %157 = vmatprep.subr.mxu0 0.0
  %158 = vmatpush1.msra.mxu0 0.0
  %159 = vmatprep.subr.mxu0 0.0
  %160 = vmatpush1.msra.mxu0 0.0
  %161 = vmatprep.subr.mxu0 0.0
  %162 = vmatpush1.msra.mxu0 0.0
  %163 = vmatprep.subr.mxu0 0.0
  %164 = vmatpush1.msra.mxu0 0.0
  %165 = vmatprep.subr.mxu0 0.0
  %166 = vmatpush1.msra.mxu0 0.0
  %167 = vmatprep.subr.mxu0 0.0
  %168 = vmatpush1.msra.mxu0 0.0
  %169 = vmatprep.subr.mxu0 0.0
  %170 = vmatpush1.msra.mxu0 0.0
  %171 = vmatprep.subr.mxu0 0.0
  %172 = vmatpush1.msra.mxu0 0.0
  %173 = vmatprep.subr.mxu0 0.0
  %174 = vmatpush1.msra.mxu0 0.0
  %175 = vmatprep.subr.mxu0 0.0
  %176 = vmatpush1.msra.mxu0 0.0
  %177 = vmatprep.subr.mxu0 0.0
  %178 = vmatpush1.msra.mxu0 0.0
  %179 = vmatprep.subr.mxu0 0.0
  %180 = vmatpush1.msra.mxu0 0.0
  %181 = vmatprep.subr.mxu0 0.0
  %182 = vmatpush1.msra.mxu0 0.0
  %183 = vmatprep.subr.mxu0 0.0
  %184 = vmatpush1.msra.mxu0 0.0
  %185 = vmatprep.subr.mxu0 0.0
  %186 = vmatpush1.msra.mxu0 0.0
  %187 = vmatprep.subr.mxu0 0.0
  %188 = vmatpush1.msra.mxu0 0.0
  %189 = vmatprep.subr.mxu0 0.0
  %190 = vmatpush1.msra.mxu0 0.0
  %191 = vmatprep.subr.mxu0 0.0
  %192 = vmatpush1.msra.mxu0 0.0
  %193 = vmatprep.subr.mxu0 0.0
  %194 = vmatpush1.msra.mxu0 0.0
  %195 = vmatprep.mubr.f32.mxu0 0.0
  %196 = vmatmul.mubr.f32.gmra.mrb[0].mxu0 %v129
  %v197 = vpop.f32.mrb[0].mxu0
  %v198 = vadd.f32 0.0, %v197
  %v199 = vpop.f32.mrb[0].mxu0
  %200 = vdwg.mxu0
  %v202 = vsel %vm48, %v122, 0
  %204 = vmatprep.subr.mxu0 0.0
  %205 = vmatpush1.msra.mxu0 %v123
  %206 = vmatprep.subr.mxu0 0.0
  %207 = vmatpush1.msra.mxu0 %v124
  %208 = vmatprep.subr.mxu0 0.0
  %209 = vmatpush1.msra.mxu0 0.0
  %210 = vmatprep.subr.mxu0 0.0
  %211 = vmatpush1.msra.mxu0 0.0
  %212 = vmatprep.subr.mxu0 0.0
  %213 = vmatpush1.msra.mxu0 0.0
  %214 = vmatprep.subr.mxu0 0.0
  %215 = vmatpush1.msra.mxu0 0.0
  %216 = vmatprep.subr.mxu0 0.0
  %217 = vmatpush1.msra.mxu0 0.0
  %218 = vmatprep.subr.mxu0 0.0
  %219 = vmatpush1.msra.mxu0 0.0
  %220 = vmatprep.subr.mxu0 0.0
  %221 = vmatpush1.msra.mxu0 0.0
  %222 = vmatprep.subr.mxu0 0.0
  %223 = vmatpush1.msra.mxu0 0.0
  %224 = vmatprep.subr.mxu0 0.0
  %225 = vmatpush1.msra.mxu0 0.0
  %226 = vmatprep.subr.mxu0 0.0
  %227 = vmatpush1.msra.mxu0 0.0
  %228 = vmatprep.subr.mxu0 0.0
  %229 = vmatpush1.msra.mxu0 0.0
  %230 = vmatprep.subr.mxu0 0.0
  %231 = vmatpush1.msra.mxu0 0.0
  %232 = vmatprep.subr.mxu0 0.0
  %233 = vmatpush1.msra.mxu0 0.0
  %234 = vmatprep.subr.mxu0 0.0
  %235 = vmatpush1.msra.mxu0 0.0
  %236 = vmatprep.subr.mxu0 0.0
  %237 = vmatpush1.msra.mxu0 0.0
  %238 = vmatprep.subr.mxu0 0.0
  %239 = vmatpush1.msra.mxu0 0.0
  %240 = vmatprep.subr.mxu0 0.0
  %241 = vmatpush1.msra.mxu0 0.0
  %242 = vmatprep.subr.mxu0 0.0
  %243 = vmatpush1.msra.mxu0 0.0
  %244 = vmatprep.subr.mxu0 0.0
  %245 = vmatpush1.msra.mxu0 0.0
  %246 = vmatprep.subr.mxu0 0.0
  %247 = vmatpush1.msra.mxu0 0.0
  %248 = vmatprep.subr.mxu0 0.0
  %249 = vmatpush1.msra.mxu0 0.0
  %250 = vmatprep.subr.mxu0 0.0
  %251 = vmatpush1.msra.mxu0 0.0
  %252 = vmatprep.subr.mxu0 0.0
  %253 = vmatpush1.msra.mxu0 0.0
  %254 = vmatprep.subr.mxu0 0.0
  %255 = vmatpush1.msra.mxu0 0.0
  %256 = vmatprep.subr.mxu0 0.0
  %257 = vmatpush1.msra.mxu0 0.0
  %258 = vmatprep.subr.mxu0 0.0
  %259 = vmatpush1.msra.mxu0 0.0
  %260 = vmatprep.subr.mxu0 0.0
  %261 = vmatpush1.msra.mxu0 0.0
  %262 = vmatprep.subr.mxu0 0.0
  %263 = vmatpush1.msra.mxu0 0.0
  %264 = vmatprep.subr.mxu0 0.0
  %265 = vmatpush1.msra.mxu0 0.0
  %266 = vmatprep.subr.mxu0 0.0
  %267 = vmatpush1.msra.mxu0 0.0
  %268 = vmatprep.mubr.f32.mxu0 0.0
  %269 = vmatmul.mubr.f32.gmra.mrb[0].mxu0 %v202
  %v270 = vpop.f32.mrb[0].mxu0
  %v271 = vadd.f32 %v198, %v270
  %v272 = vpop.f32.mrb[0].mxu0
  %273 = vdwg.mxu0
  %v274 = vld [vmem:[%s2] sm:$0xff]
  %v275 = vld [vmem:[%s7] sm:$0xff]
  %v276 = vld [vmem:[%s7 + $0x8] sm:$0xff]
  %v278 = vsel %vm48, %v274, 0
  %280 = vmatprep.subr.mxu0 0.0
  %281 = vmatpush1.msra.mxu0 %v275
  %282 = vmatprep.subr.mxu0 0.0
  %283 = vmatpush1.msra.mxu0 %v276
  %284 = vmatprep.subr.mxu0 0.0
  %285 = vmatpush1.msra.mxu0 0.0
  %286 = vmatprep.subr.mxu0 0.0
  %287 = vmatpush1.msra.mxu0 0.0
  %288 = vmatprep.subr.mxu0 0.0
  %289 = vmatpush1.msra.mxu0 0.0
  %290 = vmatprep.subr.mxu0 0.0
  %291 = vmatpush1.msra.mxu0 0.0
  %292 = vmatprep.subr.mxu0 0.0
  %293 = vmatpush1.msra.mxu0 0.0
  %294 = vmatprep.subr.mxu0 0.0
  %295 = vmatpush1.msra.mxu0 0.0
  %296 = vmatprep.subr.mxu0 0.0
  %297 = vmatpush1.msra.mxu0 0.0
  %298 = vmatprep.subr.mxu0 0.0
  %299 = vmatpush1.msra.mxu0 0.0
  %300 = vmatprep.subr.mxu0 0.0
  %301 = vmatpush1.msra.mxu0 0.0
  %302 = vmatprep.subr.mxu0 0.0
  %303 = vmatpush1.msra.mxu0 0.0
  %304 = vmatprep.subr.mxu0 0.0
  %305 = vmatpush1.msra.mxu0 0.0
  %306 = vmatprep.subr.mxu0 0.0
  %307 = vmatpush1.msra.mxu0 0.0
  %308 = vmatprep.subr.mxu0 0.0
  %309 = vmatpush1.msra.mxu0 0.0
  %310 = vmatprep.subr.mxu0 0.0
  %311 = vmatpush1.msra.mxu0 0.0
  %312 = vmatprep.subr.mxu0 0.0
  %313 = vmatpush1.msra.mxu0 0.0
  %314 = vmatprep.subr.mxu0 0.0
  %315 = vmatpush1.msra.mxu0 0.0
  %316 = vmatprep.subr.mxu0 0.0
  %317 = vmatpush1.msra.mxu0 0.0
  %318 = vmatprep.subr.mxu0 0.0
  %319 = vmatpush1.msra.mxu0 0.0
  %320 = vmatprep.subr.mxu0 0.0
  %321 = vmatpush1.msra.mxu0 0.0
  %322 = vmatprep.subr.mxu0 0.0
  %323 = vmatpush1.msra.mxu0 0.0
  %324 = vmatprep.subr.mxu0 0.0
  %325 = vmatpush1.msra.mxu0 0.0
  %326 = vmatprep.subr.mxu0 0.0
  %327 = vmatpush1.msra.mxu0 0.0
  %328 = vmatprep.subr.mxu0 0.0
  %329 = vmatpush1.msra.mxu0 0.0
  %330 = vmatprep.subr.mxu0 0.0
  %331 = vmatpush1.msra.mxu0 0.0
  %332 = vmatprep.subr.mxu0 0.0
  %333 = vmatpush1.msra.mxu0 0.0
  %334 = vmatprep.subr.mxu0 0.0
  %335 = vmatpush1.msra.mxu0 0.0
  %336 = vmatprep.subr.mxu0 0.0
  %337 = vmatpush1.msra.mxu0 0.0
  %338 = vmatprep.subr.mxu0 0.0
  %339 = vmatpush1.msra.mxu0 0.0
  %340 = vmatprep.subr.mxu0 0.0
  %341 = vmatpush1.msra.mxu0 0.0
  %342 = vmatprep.subr.mxu0 0.0
  %343 = vmatpush1.msra.mxu0 0.0
  %344 = vmatprep.mubr.f32.mxu0 0.0
  %345 = vmatmul.mubr.f32.gmra.mrb[0].mxu0 %v278
  %v346 = vpop.f32.mrb[0].mxu0
  %v347 = vadd.f32 0.0, %v346
  %v348 = vpop.f32.mrb[0].mxu0
  %349 = vdwg.mxu0
  %v350 = vadd.f32 %v271, %v347
  %v351 = vld [vmem:[%s8] sm:$0x1]
  %v353 = vlaneseq
  %v354 = vshrl.u32 %v353, 7
  %v355 = vsub.s32 0, %v354
  %v356 = vrot.slane %v351, %v355
  %v358 = vadd.f32 %v350, %v356
  %v359 = vtanh.pop %v358
  %v360 = vld [vmem:[%s9] sm:$0xff]
  %v361 = vld [vmem:[%s9 + $0x8] sm:$0xff]
  %v362 = vld [vmem:[%s10] sm:$0x1]
  %v364 = vlaneseq
  %v365 = vshrl.u32 %v364, 7
  %v366 = vsub.s32 0, %v365
  %v367 = vrot.slane %v362, %v366
  %v370 = vsel %vm48, %v359, 0
  %372 = vmatprep.subr.mxu0 0.0
  %373 = vmatpush1.msra.mxu0 %v360
  %374 = vmatprep.subr.mxu0 0.0
  %375 = vmatpush1.msra.mxu0 %v361
  %376 = vmatprep.subr.mxu0 0.0
  %377 = vmatpush1.msra.mxu0 0.0
  %378 = vmatprep.subr.mxu0 0.0
  %379 = vmatpush1.msra.mxu0 0.0
  %380 = vmatprep.subr.mxu0 0.0
  %381 = vmatpush1.msra.mxu0 0.0
  %382 = vmatprep.subr.mxu0 0.0
  %383 = vmatpush1.msra.mxu0 0.0
  %384 = vmatprep.subr.mxu0 0.0
  %385 = vmatpush1.msra.mxu0 0.0
  %386 = vmatprep.subr.mxu0 0.0
  %387 = vmatpush1.msra.mxu0 0.0
  %388 = vmatprep.subr.mxu0 0.0
  %389 = vmatpush1.msra.mxu0 0.0
  %390 = vmatprep.subr.mxu0 0.0
  %391 = vmatpush1.msra.mxu0 0.0
  %392 = vmatprep.subr.mxu0 0.0
  %393 = vmatpush1.msra.mxu0 0.0
  %394 = vmatprep.subr.mxu0 0.0
  %395 = vmatpush1.msra.mxu0 0.0
  %396 = vmatprep.subr.mxu0 0.0
  %397 = vmatpush1.msra.mxu0 0.0
  %398 = vmatprep.subr.mxu0 0.0
  %399 = vmatpush1.msra.mxu0 0.0
  %400 = vmatprep.subr.mxu0 0.0
  %401 = vmatpush1.msra.mxu0 0.0
  %402 = vmatprep.subr.mxu0 0.0
  %403 = vmatpush1.msra.mxu0 0.0
  %404 = vmatprep.subr.mxu0 0.0
  %405 = vmatpush1.msra.mxu0 0.0
  %406 = vmatprep.subr.mxu0 0.0
  %407 = vmatpush1.msra.mxu0 0.0
  %408 = vmatprep.subr.mxu0 0.0
  %409 = vmatpush1.msra.mxu0 0.0
  %410 = vmatprep.subr.mxu0 0.0
  %411 = vmatpush1.msra.mxu0 0.0
  %412 = vmatprep.subr.mxu0 0.0
  %413 = vmatpush1.msra.mxu0 0.0
  %414 = vmatprep.subr.mxu0 0.0
  %415 = vmatpush1.msra.mxu0 0.0
  %416 = vmatprep.subr.mxu0 0.0
  %417 = vmatpush1.msra.mxu0 0.0
  %418 = vmatprep.subr.mxu0 0.0
  %419 = vmatpush1.msra.mxu0 0.0
  %420 = vmatprep.subr.mxu0 0.0
  %421 = vmatpush1.msra.mxu0 0.0
  %422 = vmatprep.subr.mxu0 0.0
  %423 = vmatpush1.msra.mxu0 0.0
  %424 = vmatprep.subr.mxu0 0.0
  %425 = vmatpush1.msra.mxu0 0.0
  %426 = vmatprep.subr.mxu0 0.0
  %427 = vmatpush1.msra.mxu0 0.0
  %428 = vmatprep.subr.mxu0 0.0
  %429 = vmatpush1.msra.mxu0 0.0
  %430 = vmatprep.subr.mxu0 0.0
  %431 = vmatpush1.msra.mxu0 0.0
  %432 = vmatprep.subr.mxu0 0.0
  %433 = vmatpush1.msra.mxu0 0.0
  %434 = vmatprep.subr.mxu0 0.0
  %435 = vmatpush1.msra.mxu0 0.0
  %436 = vmatprep.mubr.f32.mxu0 0.0
  %437 = vmatmul.mubr.f32.gmra.mrb[0].mxu0 %v370
  %v438 = vpop.f32.mrb[0].mxu0
  %v439 = vadd.f32 %v367, %v438
  %v440 = vpop.f32.mrb[0].mxu0
  %441 = vdwg.mxu0
  %vm442 = vcmask 15360
  %443 = vst.msk [vmem:[%s11] sm:$0xff] %vm442, %v439
  // Predicated region
  $region46: #{multigras_forward.13} parent=0 // pred_check
    _
  $region47: #{multigras_forward.13} parent=0 // pred_check_branch
    %445 = sbr.rel (0) target = $region49
  $region48: #{multigras_forward.13} parent=0 // pred_region
    _
  $region49: #{multigras_forward.13} parent=0 // pred_fallthru
    _
  // Predicated region
  $region50: #{multigras_forward.13} parent=0 // pred_check
    _
  $region51: #{multigras_forward.13} parent=0 // pred_check_branch
    %447 = sbr.rel (0) target = $region53
  $region52: #{multigras_forward.13} parent=0 // pred_region
    _
  $region53: #{multigras_forward.13} parent=0 // pred_fallthru
    _

</llo_original>
